<compile_context>
chip_gen: v5e
topology: v5e:2x2
jax: 0.10.0
libtpu: 0.0.40
codegen_flags: <defaults>
</compile_context>

<pallas_src>
import functools
import math

import jax
import jax.numpy as jnp
from jax.experimental import pallas as pl
from jax.experimental.pallas import tpu as pltpu


# ----------------------------------------------------------------------------
# Kernel helpers
# ----------------------------------------------------------------------------
def _layernorm(x, gamma, beta, eps=1e-5):
    # f32 LayerNorm over the last dim (VPU/EUP math stays f32 on all gens).
    mean = jnp.mean(x, axis=-1, keepdims=True)
    var = jnp.mean(jnp.square(x - mean), axis=-1, keepdims=True)
    return (x - mean) * jax.lax.rsqrt(var + eps) * gamma + beta


def _attention_batched(qh, kh, vh, kv_tile, approx):
    """qh/kh/vh: (Bt*H, S, hd) in compute dtype. Returns (Bt*H, S, hd) f32.

    Online-softmax (flash-style) over static KV chunks so the score slab is
    (Bt*H, S, kv_tile) rather than (Bt*H, S, S) -- bounds VMEM at long S.
    (Scale 1/sqrt(hd) is already folded into the Q projection weights.)
    """
    BH, S, hd = qh.shape
    n_kv = S // kv_tile
    if n_kv <= 1:
        s = jnp.einsum("bqd,bkd->bqk", qh, kh,
                       preferred_element_type=jnp.float32)
        s = s - jnp.max(s, axis=-1, keepdims=True)
        p = jnp.exp(s)
        p = p * pl.reciprocal(jnp.sum(p, axis=-1, keepdims=True), approx=approx)
        return jnp.einsum("bqk,bkd->bqd", p.astype(qh.dtype), vh,
                          preferred_element_type=jnp.float32)

    m = jnp.full((BH, S, 1), -jnp.inf, jnp.float32)
    l = jnp.zeros((BH, S, 1), jnp.float32)
    acc = jnp.zeros((BH, S, hd), jnp.float32)
    for c in range(n_kv):                      # static; each chunk = sublane slice
        kc = kh[:, c * kv_tile:(c + 1) * kv_tile, :]
        vc = vh[:, c * kv_tile:(c + 1) * kv_tile, :]
        s = jnp.einsum("bqd,bkd->bqk", qh, kc,
                       preferred_element_type=jnp.float32)
        m_new = jnp.maximum(m, jnp.max(s, axis=-1, keepdims=True))
        alpha = jnp.exp(m - m_new)
        p = jnp.exp(s - m_new)
        l = alpha * l + jnp.sum(p, axis=-1, keepdims=True)
        acc = alpha * acc + jnp.einsum("bqk,bkd->bqd", p.astype(qh.dtype), vc,
                                       preferred_element_type=jnp.float32)
        m = m_new
    return acc * pl.reciprocal(l, approx=approx)


# ----------------------------------------------------------------------------
# Kernel
# ----------------------------------------------------------------------------
def encoder_block_kernel(num_heads, compute_dtype, kv_tile, batched_heads,
                         x_ref, ln1_g_ref, ln1_b_ref,
                         wqkv_ref, bqkv_ref, wo_ref, bo_ref,
                         ln2_g_ref, ln2_b_ref,
                         w1_ref, b1_ref, w2_ref, b2_ref,
                         out_ref):
    Bt, S, D = x_ref.shape
    H = num_heads
    hd = D // H
    approx = jnp.dtype(compute_dtype) != jnp.dtype(jnp.float32)

    x2d = x_ref[...].astype(jnp.float32).reshape(Bt * S, D)   # tall M dim

    # ----- ln_1 (f32) -----
    xn = _layernorm(x2d, ln1_g_ref[...], ln1_b_ref[...])

    # ----- fused QKV projection: weights pre-transposed (+ Q pre-scaled) -----
    qkv = jnp.dot(xn.astype(compute_dtype), wqkv_ref[...],
                  preferred_element_type=jnp.float32) + bqkv_ref[...]

    if batched_heads:
        # Heads collapsed into one (Bt*H) batch dim: single score/PV einsums
        # and ONE K=D output projection (no per-head small-K matmuls).
        qkv_c = qkv.astype(compute_dtype)

        def to_heads(t):                       # (Bt*S, D) -> (Bt*H, S, hd)
            return (t.reshape(Bt, S, H, hd)
                     .transpose(0, 2, 1, 3)
                     .reshape(Bt * H, S, hd))

        qh = to_heads(qkv_c[:, :D])
        kh = to_heads(qkv_c[:, D:2 * D])
        vh = to_heads(qkv_c[:, 2 * D:])
        o = _attention_batched(qh, kh, vh, kv_tile, approx)       # f32
        o2d = (o.reshape(Bt, H, S, hd)
                .transpose(0, 2, 1, 3)
                .reshape(Bt * S, D)).astype(compute_dtype)
        ctx = jnp.dot(o2d, wo_ref[...], preferred_element_type=jnp.float32)
    else:
        # Fallback path (previously verified): per-head loop with the head
        # merge folded into the output projection.  KV chunking not applied.
        q3 = qkv[:, :D].reshape(Bt, S, D)
        k3 = qkv[:, D:2 * D].reshape(Bt, S, D)
        v3 = qkv[:, 2 * D:].reshape(Bt, S, D)
        wo = wo_ref[...]
        ctx = jnp.zeros((Bt * S, D), jnp.float32)
        for h in range(H):                     # static, unrolled (H small)
            lo = h * hd
            qh_ = q3[:, :, lo:lo + hd].astype(compute_dtype)
            kh_ = k3[:, :, lo:lo + hd].astype(compute_dtype)
            vh_ = v3[:, :, lo:lo + hd].astype(compute_dtype)
            s = jnp.einsum("bqd,bkd->bqk", qh_, kh_,
                           preferred_element_type=jnp.float32)
            s = s - jnp.max(s, axis=-1, keepdims=True)
            p = jnp.exp(s)
            p = p * pl.reciprocal(jnp.sum(p, axis=-1, keepdims=True),
                                  approx=approx)
            o_h = jnp.einsum("bqk,bkd->bqd", p.astype(compute_dtype), vh_,
                             preferred_element_type=jnp.float32)
            ctx = ctx + jnp.dot(o_h.reshape(Bt * S, hd).astype(compute_dtype),
                                wo[lo:lo + hd, :],
                                preferred_element_type=jnp.float32)

    x1 = ctx + bo_ref[...] + x2d               # residual with the block input

    # ----- ln_2 + MLP -----
    yn = _layernorm(x1, ln2_g_ref[...], ln2_b_ref[...])
    h1 = jnp.dot(yn.astype(compute_dtype), w1_ref[...],
                 preferred_element_type=jnp.float32) + b1_ref[...]
    h1 = jnp.maximum(h1, 0.0)                  # ReLU
    y = jnp.dot(h1.astype(compute_dtype), w2_ref[...],
                preferred_element_type=jnp.float32) + b2_ref[...]

    out_ref[...] = (x1 + y).reshape(Bt, S, D).astype(out_ref.dtype)


# ----------------------------------------------------------------------------
# Wrapper-side helpers (one-time layout plumbing, tiling heuristics)
# ----------------------------------------------------------------------------
def _tpu_vmem_capacity_bytes(default=128 * 1024 * 1024):
    try:
        cap = getattr(pltpu.get_tpu_info(), "vmem_capacity_bytes", None)
        if cap:
            return int(cap)
    except Exception:
        pass
    return default


def _pick_batch_tile(batch, seq, target_rows):
    # Keep >= 2 grid steps so ("parallel",) can feed both TensorCores on v7x;
    # within that, the largest divisor of `batch` keeping Bt*S near the target.
    max_bt = max(1, batch // 2)
    best = 1
    for bt in range(1, max_bt + 1):
        if batch % bt == 0 and bt * seq <= max(target_rows, seq):
            best = bt
    return best


def _pick_kv_tile(seq, target=512):
    if seq <= target:
        return seq
    for t in range(target, 127, -1):           # largest divisor <= target
        if seq % t == 0:
            return t
    return seq                                 # no divisor; single full-KV chunk


def prepare_params(params, num_heads, compute_dtype=jnp.bfloat16):
    """One-time layout plumbing (do NOT re-run per forward):
       * transpose torch-convention (out, in) weights to (in, out),
       * fold the attention 1/sqrt(hd) scale into the Q projection,
       * cast the big matrices to the MXU compute dtype (bf16 by default;
         accumulation stays f32 inside the kernel)."""
    f32 = jnp.float32
    D = params["w_o"].shape[0]
    hd = D // num_heads
    scale = 1.0 / math.sqrt(hd)
    mlp_dim = params["w1"].shape[0]

    col_scale = jnp.concatenate(
        [jnp.full((D,), scale, f32), jnp.ones((2 * D,), f32)])
    w_qkv_t = params["w_qkv"].astype(f32).T * col_scale[None, :]      # (D, 3D)
    b_qkv = params["b_qkv"].astype(f32).reshape(1, 3 * D) * col_scale[None, :]

    return dict(
        ln1_g=params["ln1_g"].astype(f32).reshape(1, D),
        ln1_b=params["ln1_b"].astype(f32).reshape(1, D),
        w_qkv=w_qkv_t.astype(compute_dtype),
        b_qkv=b_qkv,
        w_o=params["w_o"].astype(f32).T.astype(compute_dtype),        # (D, D)
        b_o=params["b_o"].astype(f32).reshape(1, D),
        ln2_g=params["ln2_g"].astype(f32).reshape(1, D),
        ln2_b=params["ln2_b"].astype(f32).reshape(1, D),
        w1=params["w1"].astype(f32).T.astype(compute_dtype),          # (D, mlp)
        b1=params["b1"].astype(f32).reshape(1, mlp_dim),
        w2=params["w2"].astype(f32).T.astype(compute_dtype),          # (mlp, D)
        b2=params["b2"].astype(f32).reshape(1, D),
    )


_PARAM_ORDER = ("ln1_g", "ln1_b", "w_qkv", "b_qkv", "w_o", "b_o",
                "ln2_g", "ln2_b", "w1", "b1", "w2", "b2")

# (batched_heads, single_buffer_weights) tried in order; the first config that
# lowers is cached.  Fallbacks only exist for Mosaic versions that reject
# pl.Buffered(1) or the in-kernel head transpose.
_IMPL_CONFIGS = [(True, True), (True, False), (False, True), (False, False)]
_IMPL_CACHE = {}


def self_attention_encoder_block(x, prepared, num_heads, kv_tile=None):
    B, S, D = x.shape
    compute_dtype = prepared["w_qkv"].dtype
    mlp_dim = prepared["w1"].shape[1]
    H = num_heads

    vmem_cap = _tpu_vmem_capacity_bytes()
    # Leave headroom below physical VMEM for compiler scratch + double-buffered
    # x/out blocks: ~48 MiB on v7x (64 MiB phys), ~112 MiB on v5e/v6e (128 MiB).
    vmem_limit = int(max(32 << 20, min(vmem_cap - (16 << 20), 112 << 20)))
    target_rows = 512 if vmem_cap >= (96 << 20) else 256

    Bt = _pick_batch_tile(B, S, target_rows)
    if kv_tile is None:
        kv_tile = _pick_kv_tile(S)
    assert S % kv_tile == 0, "kv_tile must divide the sequence length"

    consts = [prepared[k] for k in _PARAM_ORDER]

    # Advisory cost estimate so XLA can overlap surrounding ops.
    flops = 2 * B * S * D * (3 * D)            # QKV projection
    flops += 2 * 2 * B * S * S * D             # scores + PV
    flops += 2 * B * S * D * D                 # output projection
    flops += 2 * 2 * B * S * D * mlp_dim       # MLP
    bytes_accessed = 2 * x.size * x.dtype.itemsize + sum(
        int(a.size) * a.dtype.itemsize for a in consts)
    cost = pl.CostEstimate(flops=int(flops),
                           transcendentals=int(B * H * S * S + 4 * B * S),
                           bytes_accessed=int(bytes_accessed))

    def build(batched_heads, single_buffer_weights):
        def const_spec(arr):
            r = arr.ndim
            kw = {}
            if single_buffer_weights:
                # Resident weights never change across grid steps:
                # don't pay for a second buffer.
                kw["pipeline_mode"] = pl.Buffered(1)
            return pl.BlockSpec(arr.shape, lambda *_i, _r=r: (0,) * _r, **kw)

        kernel = functools.partial(encoder_block_kernel, num_heads,
                                   compute_dtype, kv_tile, batched_heads)
        return pl.pallas_call(
            kernel,
            out_shape=jax.ShapeDtypeStruct((B, S, D), x.dtype),
            grid=(B // Bt,),
            in_specs=[pl.BlockSpec((Bt, S, D), lambda b: (b, 0, 0))]
                     + [const_spec(a) for a in consts],
            out_specs=pl.BlockSpec((Bt, S, D), lambda b: (b, 0, 0)),
            compiler_params=pltpu.CompilerParams(
                dimension_semantics=("parallel",),
                vmem_limit_bytes=vmem_limit,
            ),
            cost_estimate=cost,
        )

    cached = _IMPL_CACHE.get("cfg")
    configs = ([cached] if cached else []) + [c for c in _IMPL_CONFIGS
                                              if c != cached]
    last_err = None
    for batched_heads, single_buf in configs:
        try:
            out = build(batched_heads, single_buf)(x, *consts)
        except Exception as e:                 # lowering unsupported -> next cfg
            last_err = e
            continue
        _IMPL_CACHE["cfg"] = (batched_heads, single_buf)
        return out
    raise last_err


# ----------------------------------------------------------------------------
# Pure-JAX f32 reference (mirrors the PyTorch forward, eval mode)
# ----------------------------------------------------------------------------
def _reference(x, p, num_heads):
    B, S, D = x.shape
    hd = D // num_heads

    def ln(v, g, b):
        m = v.mean(-1, keepdims=True)
        var = ((v - m) ** 2).mean(-1, keepdims=True)
        return (v - m) / jnp.sqrt(var + 1e-5) * g + b

    xn = ln(x, p["ln1_g"][0], p["ln1_b"][0])
    qkv = xn @ p["w_qkv"].T + p["b_qkv"][0]
    q, k, v = jnp.split(qkv, 3, axis=-1)

    def sh(t):
        return t.reshape(B, S, num_heads, hd).transpose(0, 2, 1, 3)

    qh, kh, vh = sh(q), sh(k), sh(v)
    s = jnp.einsum("bhqd,bhkd->bhqk", qh, kh) / jnp.sqrt(hd)
    pw = jax.nn.softmax(s, axis=-1)
    o = jnp.einsum("bhqk,bhkd->bhqd", pw, vh).transpose(0, 2, 1, 3).reshape(B, S, D)
    o = o @ p["w_o"].T + p["b_o"][0]
    x1 = o + x
    yn = ln(x1, p["ln2_g"][0], p["ln2_b"][0])
    y = jax.nn.relu(yn @ p["w1"].T + p["b1"][0]) @ p["w2"].T + p["b2"][0]
    return x1 + y


if __name__ == "__main__":
    num_heads = 4
    B, S, D = 2, 8, 32
    mlp_dim = 64

    key = jax.random.PRNGKey(0)
    ks = jax.random.split(key, 9)

    def init(k, shape, scale=0.05):
        return jax.random.normal(k, shape, jnp.float32) * scale

    params = dict(
        ln1_g=jnp.ones((1, D), jnp.float32),
        ln1_b=jnp.zeros((1, D), jnp.float32),
        w_qkv=init(ks[0], (3 * D, D)),
        b_qkv=init(ks[1], (1, 3 * D)),
        w_o=init(ks[2], (D, D)),
        b_o=init(ks[3], (1, D)),
        ln2_g=jnp.ones((1, D), jnp.float32),
        ln2_b=jnp.zeros((1, D), jnp.float32),
        w1=init(ks[4], (mlp_dim, D)),
        b1=init(ks[5], (1, mlp_dim)),
        w2=init(ks[6], (D, mlp_dim)),
        b2=init(ks[7], (1, D)),
    )
    x = jax.random.normal(ks[8], (B, S, D), jnp.float32)

    ref = _reference(x, params, num_heads)

    # f32 MXU-input path (exact softmax reciprocal): tight check.
    prep_f32 = prepare_params(params, num_heads, compute_dtype=jnp.float32)
    out_f32 = self_attention_encoder_block(x, prep_f32, num_heads)
    jax.block_until_ready(out_f32)
    assert out_f32.shape == (B, S, D)
    assert jnp.allclose(out_f32, ref, atol=1e-3, rtol=1e-3), "f32 mismatch"

    # Exercise the flash-style online-softmax KV-chunk path (2 chunks).
    out_f32_kv = self_attention_encoder_block(x, prep_f32, num_heads,
                                              kv_tile=S // 2)
    jax.block_until_ready(out_f32_kv)
    assert jnp.allclose(out_f32_kv, ref, atol=1e-3, rtol=1e-3), "kv-chunk mismatch"

    # bf16 MXU-input path (f32 accumulation): looser tolerance vs f32 reference.
    prep_bf16 = prepare_params(params, num_heads, compute_dtype=jnp.bfloat16)
    out_bf16 = self_attention_encoder_block(x, prep_bf16, num_heads)
    jax.block_until_ready(out_bf16)
    assert out_bf16.shape == (B, S, D)
    assert jnp.allclose(out_bf16, ref, atol=3e-2, rtol=3e-2), "bf16 mismatch"

    print("KERNEL_OK")
</pallas_src>

<mosaic_0001>
module attributes {stable_mosaic.version = 11 : i64} {
  func.func @encoder_block_kernel(%arg0: i32, %arg1: memref<1x8x32xf32, #tpu.memory_space<vmem>>, %arg2: memref<1x32xf32, #tpu.memory_space<vmem>>, %arg3: memref<1x32xf32, #tpu.memory_space<vmem>>, %arg4: memref<32x96xf32, #tpu.memory_space<vmem>>, %arg5: memref<1x96xf32, #tpu.memory_space<vmem>>, %arg6: memref<32x32xf32, #tpu.memory_space<vmem>>, %arg7: memref<1x32xf32, #tpu.memory_space<vmem>>, %arg8: memref<1x32xf32, #tpu.memory_space<vmem>>, %arg9: memref<1x32xf32, #tpu.memory_space<vmem>>, %arg10: memref<32x64xf32, #tpu.memory_space<vmem>>, %arg11: memref<1x64xf32, #tpu.memory_space<vmem>>, %arg12: memref<64x32xf32, #tpu.memory_space<vmem>>, %arg13: memref<1x32xf32, #tpu.memory_space<vmem>>, %arg14: memref<1x8x32xf32, #tpu.memory_space<vmem>>) attributes {dimension_semantics = [#tpu.dimension_semantics<parallel>], iteration_bounds = array<i64: 2>, scalar_prefetch = 0 : i64, scratch_operands = 0 : i64, tpu.core_type = #tpu.core_type<tc>, window_params = [{transform_indices = @transform_0, window_bounds = array<i64: 1, 8, 32>}, {pipeline_mode = #tpu.pipeline_mode<synchronous>, transform_indices = @transform_1, window_bounds = array<i64: 1, 32>}, {pipeline_mode = #tpu.pipeline_mode<synchronous>, transform_indices = @transform_2, window_bounds = array<i64: 1, 32>}, {pipeline_mode = #tpu.pipeline_mode<synchronous>, transform_indices = @transform_3, window_bounds = array<i64: 32, 96>}, {pipeline_mode = #tpu.pipeline_mode<synchronous>, transform_indices = @transform_4, window_bounds = array<i64: 1, 96>}, {pipeline_mode = #tpu.pipeline_mode<synchronous>, transform_indices = @transform_5, window_bounds = array<i64: 32, 32>}, {pipeline_mode = #tpu.pipeline_mode<synchronous>, transform_indices = @transform_6, window_bounds = array<i64: 1, 32>}, {pipeline_mode = #tpu.pipeline_mode<synchronous>, transform_indices = @transform_7, window_bounds = array<i64: 1, 32>}, {pipeline_mode = #tpu.pipeline_mode<synchronous>, transform_indices = @transform_8, window_bounds = array<i64: 1, 32>}, {pipeline_mode = #tpu.pipeline_mode<synchronous>, transform_indices = @transform_9, window_bounds = array<i64: 32, 64>}, {pipeline_mode = #tpu.pipeline_mode<synchronous>, transform_indices = @transform_10, window_bounds = array<i64: 1, 64>}, {pipeline_mode = #tpu.pipeline_mode<synchronous>, transform_indices = @transform_11, window_bounds = array<i64: 64, 32>}, {pipeline_mode = #tpu.pipeline_mode<synchronous>, transform_indices = @transform_12, window_bounds = array<i64: 1, 32>}, {transform_indices = @transform_13, window_bounds = array<i64: 1, 8, 32>}]} {
    %c0 = arith.constant 0 : index
    %c0_0 = arith.constant 0 : index
    %c0_1 = arith.constant 0 : index
    %0 = vector.load %arg1[%c0, %c0_0, %c0_1] : memref<1x8x32xf32, #tpu.memory_space<vmem>>, vector<1x8x32xf32>
    %1 = vector.shape_cast %0 : vector<1x8x32xf32> to vector<8x32xf32>
    %c0_2 = arith.constant 0 : index
    %c0_3 = arith.constant 0 : index
    %2 = vector.load %arg2[%c0_2, %c0_3] : memref<1x32xf32, #tpu.memory_space<vmem>>, vector<1x32xf32>
    %c0_4 = arith.constant 0 : index
    %c0_5 = arith.constant 0 : index
    %3 = vector.load %arg3[%c0_4, %c0_5] : memref<1x32xf32, #tpu.memory_space<vmem>>, vector<1x32xf32>
    %cst = arith.constant dense<0.000000e+00> : vector<8xf32>
    %4 = vector.multi_reduction <add>, %1, %cst [1] : vector<8x32xf32> to vector<8xf32>
    %5 = vector.shape_cast %4 : vector<8xf32> to vector<8x1xf32>
    %cst_6 = arith.constant 3.200000e+01 : f32
    %6 = vector.broadcast %cst_6 : f32 to vector<8x1xf32>
    %7 = arith.divf %5, %6 : vector<8x1xf32>
    %8 = vector.broadcast %7 : vector<8x1xf32> to vector<8x32xf32>
    %9 = arith.subf %1, %8 : vector<8x32xf32>
    %10 = arith.mulf %9, %9 : vector<8x32xf32>
    %cst_7 = arith.constant dense<0.000000e+00> : vector<8xf32>
    %11 = vector.multi_reduction <add>, %10, %cst_7 [1] : vector<8x32xf32> to vector<8xf32>
    %12 = vector.shape_cast %11 : vector<8xf32> to vector<8x1xf32>
    %cst_8 = arith.constant 3.200000e+01 : f32
    %13 = vector.broadcast %cst_8 : f32 to vector<8x1xf32>
    %14 = arith.divf %12, %13 : vector<8x1xf32>
    %15 = vector.broadcast %7 : vector<8x1xf32> to vector<8x32xf32>
    %16 = arith.subf %1, %15 : vector<8x32xf32>
    %cst_9 = arith.constant 9.99999974E-6 : f32
    %17 = vector.broadcast %cst_9 : f32 to vector<8x1xf32>
    %18 = arith.addf %14, %17 : vector<8x1xf32>
    %19 = math.rsqrt %18 : vector<8x1xf32>
    %20 = vector.broadcast %19 : vector<8x1xf32> to vector<8x32xf32>
    %21 = arith.mulf %16, %20 : vector<8x32xf32>
    %22 = vector.broadcast %2 : vector<1x32xf32> to vector<8x32xf32>
    %23 = arith.mulf %21, %22 : vector<8x32xf32>
    %24 = vector.broadcast %3 : vector<1x32xf32> to vector<8x32xf32>
    %25 = arith.addf %23, %24 : vector<8x32xf32>
    %c0_10 = arith.constant 0 : index
    %c0_11 = arith.constant 0 : index
    %26 = vector.load %arg4[%c0_10, %c0_11] : memref<32x96xf32, #tpu.memory_space<vmem>>, vector<32x96xf32>
    %cst_12 = arith.constant dense<0.000000e+00> : vector<8x96xf32>
    %27 = tpu.matmul %25, %26, %cst_12 {dimension_numbers = #tpu.dot_dimension_numbers<[1], [0], [0], [1], [0, 0, 1, 1], [], []>} : vector<8x32xf32>, vector<32x96xf32>, vector<8x96xf32> -> vector<8x96xf32>
    %c0_13 = arith.constant 0 : index
    %c0_14 = arith.constant 0 : index
    %28 = vector.load %arg5[%c0_13, %c0_14] : memref<1x96xf32, #tpu.memory_space<vmem>>, vector<1x96xf32>
    %29 = vector.broadcast %28 : vector<1x96xf32> to vector<8x96xf32>
    %30 = arith.addf %27, %29 : vector<8x96xf32>
    %31 = vector.extract_strided_slice %30 {offsets = [0, 0], sizes = [8, 32], strides = [1, 1]} : vector<8x96xf32> to vector<8x32xf32>
    %32 = vector.shape_cast %31 : vector<8x32xf32> to vector<1x8x4x8xf32>
    %33 = tpu.transpose %32, [0, 2, 1, 3] : vector<1x8x4x8xf32> -> vector<1x4x8x8xf32>
    %34 = vector.shape_cast %33 : vector<1x4x8x8xf32> to vector<4x8x8xf32>
    %35 = vector.extract_strided_slice %30 {offsets = [0, 32], sizes = [8, 32], strides = [1, 1]} : vector<8x96xf32> to vector<8x32xf32>
    %36 = vector.shape_cast %35 : vector<8x32xf32> to vector<1x8x4x8xf32>
    %37 = tpu.transpose %36, [0, 2, 1, 3] : vector<1x8x4x8xf32> -> vector<1x4x8x8xf32>
    %38 = vector.shape_cast %37 : vector<1x4x8x8xf32> to vector<4x8x8xf32>
    %39 = vector.extract_strided_slice %30 {offsets = [0, 64], sizes = [8, 32], strides = [1, 1]} : vector<8x96xf32> to vector<8x32xf32>
    %40 = vector.shape_cast %39 : vector<8x32xf32> to vector<1x8x4x8xf32>
    %41 = tpu.transpose %40, [0, 2, 1, 3] : vector<1x8x4x8xf32> -> vector<1x4x8x8xf32>
    %42 = vector.shape_cast %41 : vector<1x4x8x8xf32> to vector<4x8x8xf32>
    "tpu.trace_start"() <{level = 10 : i32, message = "bqd,bkd->bqk"}> : () -> ()
    %cst_15 = arith.constant dense<0.000000e+00> : vector<4x8x8xf32>
    %43 = tpu.matmul %34, %38, %cst_15 {dimension_numbers = #tpu.dot_dimension_numbers<[2], [2], [1], [1], [0, 0, 0, 1, 1, 1], [0], [0]>} : vector<4x8x8xf32>, vector<4x8x8xf32>, vector<4x8x8xf32> -> vector<4x8x8xf32>
    "tpu.trace_stop"() : () -> ()
    %cst_16 = arith.constant dense<0xFF800000> : vector<4x8xf32>
    %44 = vector.multi_reduction <maximumf>, %43, %cst_16 [2] : vector<4x8x8xf32> to vector<4x8xf32>
    %45 = vector.shape_cast %44 : vector<4x8xf32> to vector<4x8x1xf32>
    %46 = vector.broadcast %45 : vector<4x8x1xf32> to vector<4x8x8xf32>
    %47 = arith.subf %43, %46 : vector<4x8x8xf32>
    %48 = math.exp %47 : vector<4x8x8xf32>
    %cst_17 = arith.constant dense<0.000000e+00> : vector<4x8xf32>
    %49 = vector.multi_reduction <add>, %48, %cst_17 [2] : vector<4x8x8xf32> to vector<4x8xf32>
    %50 = vector.shape_cast %49 : vector<4x8xf32> to vector<4x8x1xf32>
    %51 = tpu.reciprocal %50 : vector<4x8x1xf32> -> vector<4x8x1xf32>
    %52 = vector.broadcast %51 : vector<4x8x1xf32> to vector<4x8x8xf32>
    %53 = arith.mulf %48, %52 : vector<4x8x8xf32>
    "tpu.trace_start"() <{level = 10 : i32, message = "bqk,bkd->bqd"}> : () -> ()
    %cst_18 = arith.constant dense<0.000000e+00> : vector<4x8x8xf32>
    %54 = tpu.matmul %53, %42, %cst_18 {dimension_numbers = #tpu.dot_dimension_numbers<[2], [1], [1], [2], [0, 0, 0, 1, 1, 2], [0], [0]>} : vector<4x8x8xf32>, vector<4x8x8xf32>, vector<4x8x8xf32> -> vector<4x8x8xf32>
    "tpu.trace_stop"() : () -> ()
    %55 = vector.shape_cast %54 : vector<4x8x8xf32> to vector<1x4x8x8xf32>
    %56 = tpu.transpose %55, [0, 2, 1, 3] : vector<1x4x8x8xf32> -> vector<1x8x4x8xf32>
    %57 = vector.shape_cast %56 : vector<1x8x4x8xf32> to vector<8x32xf32>
    %c0_19 = arith.constant 0 : index
    %c0_20 = arith.constant 0 : index
    %58 = vector.load %arg6[%c0_19, %c0_20] : memref<32x32xf32, #tpu.memory_space<vmem>>, vector<32x32xf32>
    %cst_21 = arith.constant dense<0.000000e+00> : vector<8x32xf32>
    %59 = tpu.matmul %57, %58, %cst_21 {dimension_numbers = #tpu.dot_dimension_numbers<[1], [0], [0], [1], [0, 0, 1, 1], [], []>} : vector<8x32xf32>, vector<32x32xf32>, vector<8x32xf32> -> vector<8x32xf32>
    %c0_22 = arith.constant 0 : index
    %c0_23 = arith.constant 0 : index
    %60 = vector.load %arg7[%c0_22, %c0_23] : memref<1x32xf32, #tpu.memory_space<vmem>>, vector<1x32xf32>
    %61 = vector.broadcast %60 : vector<1x32xf32> to vector<8x32xf32>
    %62 = arith.addf %59, %61 : vector<8x32xf32>
    %63 = arith.addf %62, %1 : vector<8x32xf32>
    %c0_24 = arith.constant 0 : index
    %c0_25 = arith.constant 0 : index
    %64 = vector.load %arg8[%c0_24, %c0_25] : memref<1x32xf32, #tpu.memory_space<vmem>>, vector<1x32xf32>
    %c0_26 = arith.constant 0 : index
    %c0_27 = arith.constant 0 : index
    %65 = vector.load %arg9[%c0_26, %c0_27] : memref<1x32xf32, #tpu.memory_space<vmem>>, vector<1x32xf32>
    %cst_28 = arith.constant dense<0.000000e+00> : vector<8xf32>
    %66 = vector.multi_reduction <add>, %63, %cst_28 [1] : vector<8x32xf32> to vector<8xf32>
    %67 = vector.shape_cast %66 : vector<8xf32> to vector<8x1xf32>
    %cst_29 = arith.constant 3.200000e+01 : f32
    %68 = vector.broadcast %cst_29 : f32 to vector<8x1xf32>
    %69 = arith.divf %67, %68 : vector<8x1xf32>
    %70 = vector.broadcast %69 : vector<8x1xf32> to vector<8x32xf32>
    %71 = arith.subf %63, %70 : vector<8x32xf32>
    %72 = arith.mulf %71, %71 : vector<8x32xf32>
    %cst_30 = arith.constant dense<0.000000e+00> : vector<8xf32>
    %73 = vector.multi_reduction <add>, %72, %cst_30 [1] : vector<8x32xf32> to vector<8xf32>
    %74 = vector.shape_cast %73 : vector<8xf32> to vector<8x1xf32>
    %cst_31 = arith.constant 3.200000e+01 : f32
    %75 = vector.broadcast %cst_31 : f32 to vector<8x1xf32>
    %76 = arith.divf %74, %75 : vector<8x1xf32>
    %77 = vector.broadcast %69 : vector<8x1xf32> to vector<8x32xf32>
    %78 = arith.subf %63, %77 : vector<8x32xf32>
    %cst_32 = arith.constant 9.99999974E-6 : f32
    %79 = vector.broadcast %cst_32 : f32 to vector<8x1xf32>
    %80 = arith.addf %76, %79 : vector<8x1xf32>
    %81 = math.rsqrt %80 : vector<8x1xf32>
    %82 = vector.broadcast %81 : vector<8x1xf32> to vector<8x32xf32>
    %83 = arith.mulf %78, %82 : vector<8x32xf32>
    %84 = vector.broadcast %64 : vector<1x32xf32> to vector<8x32xf32>
    %85 = arith.mulf %83, %84 : vector<8x32xf32>
    %86 = vector.broadcast %65 : vector<1x32xf32> to vector<8x32xf32>
    %87 = arith.addf %85, %86 : vector<8x32xf32>
    %c0_33 = arith.constant 0 : index
    %c0_34 = arith.constant 0 : index
    %88 = vector.load %arg10[%c0_33, %c0_34] : memref<32x64xf32, #tpu.memory_space<vmem>>, vector<32x64xf32>
    %cst_35 = arith.constant dense<0.000000e+00> : vector<8x64xf32>
    %89 = tpu.matmul %87, %88, %cst_35 {dimension_numbers = #tpu.dot_dimension_numbers<[1], [0], [0], [1], [0, 0, 1, 1], [], []>} : vector<8x32xf32>, vector<32x64xf32>, vector<8x64xf32> -> vector<8x64xf32>
    %c0_36 = arith.constant 0 : index
    %c0_37 = arith.constant 0 : index
    %90 = vector.load %arg11[%c0_36, %c0_37] : memref<1x64xf32, #tpu.memory_space<vmem>>, vector<1x64xf32>
    %91 = vector.broadcast %90 : vector<1x64xf32> to vector<8x64xf32>
    %92 = arith.addf %89, %91 : vector<8x64xf32>
    %cst_38 = arith.constant 0.000000e+00 : f32
    %93 = vector.broadcast %cst_38 : f32 to vector<8x64xf32>
    %94 = arith.maximumf %92, %93 : vector<8x64xf32>
    %c0_39 = arith.constant 0 : index
    %c0_40 = arith.constant 0 : index
    %95 = vector.load %arg12[%c0_39, %c0_40] : memref<64x32xf32, #tpu.memory_space<vmem>>, vector<64x32xf32>
    %cst_41 = arith.constant dense<0.000000e+00> : vector<8x32xf32>
    %96 = tpu.matmul %94, %95, %cst_41 {dimension_numbers = #tpu.dot_dimension_numbers<[1], [0], [0], [1], [0, 0, 1, 1], [], []>} : vector<8x64xf32>, vector<64x32xf32>, vector<8x32xf32> -> vector<8x32xf32>
    %c0_42 = arith.constant 0 : index
    %c0_43 = arith.constant 0 : index
    %97 = vector.load %arg13[%c0_42, %c0_43] : memref<1x32xf32, #tpu.memory_space<vmem>>, vector<1x32xf32>
    %98 = vector.broadcast %97 : vector<1x32xf32> to vector<8x32xf32>
    %99 = arith.addf %96, %98 : vector<8x32xf32>
    %100 = arith.addf %63, %99 : vector<8x32xf32>
    %101 = vector.shape_cast %100 : vector<8x32xf32> to vector<1x8x32xf32>
    %c0_44 = arith.constant 0 : index
    %c0_45 = arith.constant 0 : index
    %c0_46 = arith.constant 0 : index
    %102 = vector.load %arg14[%c0_44, %c0_45, %c0_46] : memref<1x8x32xf32, #tpu.memory_space<vmem>>, vector<1x8x32xf32>
    tpu.vector_store %arg14[%c0_44, %c0_45, %c0_46], %101 {strides = array<i32>} : memref<1x8x32xf32, #tpu.memory_space<vmem>>, vector<1x8x32xf32>,
    return
  }
  func.func @transform_0(%arg0: i32) -> (i32, i32, i32) {
    %c0_i32 = arith.constant 0 : i32
    %c0_i32_0 = arith.constant 0 : i32
    %c0_i32_1 = arith.constant 0 : i32
    return %arg0, %c0_i32, %c0_i32_0 : i32, i32, i32
  }
  func.func @transform_1(%arg0: i32) -> (i32, i32) {
    %c0_i32 = arith.constant 0 : i32
    %c0_i32_0 = arith.constant 0 : i32
    %c0_i32_1 = arith.constant 0 : i32
    return %c0_i32, %c0_i32_0 : i32, i32
  }
  func.func @transform_2(%arg0: i32) -> (i32, i32) {
    %c0_i32 = arith.constant 0 : i32
    %c0_i32_0 = arith.constant 0 : i32
    %c0_i32_1 = arith.constant 0 : i32
    return %c0_i32, %c0_i32_0 : i32, i32
  }
  func.func @transform_3(%arg0: i32) -> (i32, i32) {
    %c0_i32 = arith.constant 0 : i32
    %c0_i32_0 = arith.constant 0 : i32
    %c0_i32_1 = arith.constant 0 : i32
    return %c0_i32, %c0_i32_0 : i32, i32
  }
  func.func @transform_4(%arg0: i32) -> (i32, i32) {
    %c0_i32 = arith.constant 0 : i32
    %c0_i32_0 = arith.constant 0 : i32
    %c0_i32_1 = arith.constant 0 : i32
    return %c0_i32, %c0_i32_0 : i32, i32
  }
  func.func @transform_5(%arg0: i32) -> (i32, i32) {
    %c0_i32 = arith.constant 0 : i32
    %c0_i32_0 = arith.constant 0 : i32
    %c0_i32_1 = arith.constant 0 : i32
    return %c0_i32, %c0_i32_0 : i32, i32
  }
  func.func @transform_6(%arg0: i32) -> (i32, i32) {
    %c0_i32 = arith.constant 0 : i32
    %c0_i32_0 = arith.constant 0 : i32
    %c0_i32_1 = arith.constant 0 : i32
    return %c0_i32, %c0_i32_0 : i32, i32
  }
  func.func @transform_7(%arg0: i32) -> (i32, i32) {
    %c0_i32 = arith.constant 0 : i32
    %c0_i32_0 = arith.constant 0 : i32
    %c0_i32_1 = arith.constant 0 : i32
    return %c0_i32, %c0_i32_0 : i32, i32
  }
  func.func @transform_8(%arg0: i32) -> (i32, i32) {
    %c0_i32 = arith.constant 0 : i32
    %c0_i32_0 = arith.constant 0 : i32
    %c0_i32_1 = arith.constant 0 : i32
    return %c0_i32, %c0_i32_0 : i32, i32
  }
  func.func @transform_9(%arg0: i32) -> (i32, i32) {
    %c0_i32 = arith.constant 0 : i32
    %c0_i32_0 = arith.constant 0 : i32
    %c0_i32_1 = arith.constant 0 : i32
    return %c0_i32, %c0_i32_0 : i32, i32
  }
  func.func @transform_10(%arg0: i32) -> (i32, i32) {
    %c0_i32 = arith.constant 0 : i32
    %c0_i32_0 = arith.constant 0 : i32
    %c0_i32_1 = arith.constant 0 : i32
    return %c0_i32, %c0_i32_0 : i32, i32
  }
  func.func @transform_11(%arg0: i32) -> (i32, i32) {
    %c0_i32 = arith.constant 0 : i32
    %c0_i32_0 = arith.constant 0 : i32
    %c0_i32_1 = arith.constant 0 : i32
    return %c0_i32, %c0_i32_0 : i32, i32
  }
  func.func @transform_12(%arg0: i32) -> (i32, i32) {
    %c0_i32 = arith.constant 0 : i32
    %c0_i32_0 = arith.constant 0 : i32
    %c0_i32_1 = arith.constant 0 : i32
    return %c0_i32, %c0_i32_0 : i32, i32
  }
  func.func @transform_13(%arg0: i32) -> (i32, i32, i32) {
    %c0_i32 = arith.constant 0 : i32
    %c0_i32_0 = arith.constant 0 : i32
    %c0_i32_1 = arith.constant 0 : i32
    return %arg0, %c0_i32, %c0_i32_0 : i32, i32, i32
  }
}

module attributes {stable_mosaic.version = 11 : i64} {
  func.func @encoder_block_kernel(%arg0: i32, %arg1: memref<1x8x32xf32, #tpu.memory_space<vmem>>, %arg2: memref<1x32xf32, #tpu.memory_space<vmem>>, %arg3: memref<1x32xf32, #tpu.memory_space<vmem>>, %arg4: memref<32x96xf32, #tpu.memory_space<vmem>>, %arg5: memref<1x96xf32, #tpu.memory_space<vmem>>, %arg6: memref<32x32xf32, #tpu.memory_space<vmem>>, %arg7: memref<1x32xf32, #tpu.memory_space<vmem>>, %arg8: memref<1x32xf32, #tpu.memory_space<vmem>>, %arg9: memref<1x32xf32, #tpu.memory_space<vmem>>, %arg10: memref<32x64xf32, #tpu.memory_space<vmem>>, %arg11: memref<1x64xf32, #tpu.memory_space<vmem>>, %arg12: memref<64x32xf32, #tpu.memory_space<vmem>>, %arg13: memref<1x32xf32, #tpu.memory_space<vmem>>, %arg14: memref<1x8x32xf32, #tpu.memory_space<vmem>>) attributes {dimension_semantics = [#tpu.dimension_semantics<parallel>], iteration_bounds = array<i64: 2>, scalar_prefetch = 0 : i64, scratch_operands = 0 : i64, tpu.core_type = #tpu.core_type<tc>, window_params = [{transform_indices = @transform_0, window_bounds = array<i64: 1, 8, 32>}, {pipeline_mode = #tpu.pipeline_mode<synchronous>, transform_indices = @transform_1, window_bounds = array<i64: 1, 32>}, {pipeline_mode = #tpu.pipeline_mode<synchronous>, transform_indices = @transform_2, window_bounds = array<i64: 1, 32>}, {pipeline_mode = #tpu.pipeline_mode<synchronous>, transform_indices = @transform_3, window_bounds = array<i64: 32, 96>}, {pipeline_mode = #tpu.pipeline_mode<synchronous>, transform_indices = @transform_4, window_bounds = array<i64: 1, 96>}, {pipeline_mode = #tpu.pipeline_mode<synchronous>, transform_indices = @transform_5, window_bounds = array<i64: 32, 32>}, {pipeline_mode = #tpu.pipeline_mode<synchronous>, transform_indices = @transform_6, window_bounds = array<i64: 1, 32>}, {pipeline_mode = #tpu.pipeline_mode<synchronous>, transform_indices = @transform_7, window_bounds = array<i64: 1, 32>}, {pipeline_mode = #tpu.pipeline_mode<synchronous>, transform_indices = @transform_8, window_bounds = array<i64: 1, 32>}, {pipeline_mode = #tpu.pipeline_mode<synchronous>, transform_indices = @transform_9, window_bounds = array<i64: 32, 64>}, {pipeline_mode = #tpu.pipeline_mode<synchronous>, transform_indices = @transform_10, window_bounds = array<i64: 1, 64>}, {pipeline_mode = #tpu.pipeline_mode<synchronous>, transform_indices = @transform_11, window_bounds = array<i64: 64, 32>}, {pipeline_mode = #tpu.pipeline_mode<synchronous>, transform_indices = @transform_12, window_bounds = array<i64: 1, 32>}, {transform_indices = @transform_13, window_bounds = array<i64: 1, 8, 32>}]} {
    %c0 = arith.constant 0 : index
    %c0_0 = arith.constant 0 : index
    %c0_1 = arith.constant 0 : index
    %0 = vector.load %arg1[%c0, %c0_0, %c0_1] : memref<1x8x32xf32, #tpu.memory_space<vmem>>, vector<1x8x32xf32>
    %1 = vector.shape_cast %0 : vector<1x8x32xf32> to vector<8x32xf32>
    %c0_2 = arith.constant 0 : index
    %c0_3 = arith.constant 0 : index
    %2 = vector.load %arg2[%c0_2, %c0_3] : memref<1x32xf32, #tpu.memory_space<vmem>>, vector<1x32xf32>
    %c0_4 = arith.constant 0 : index
    %c0_5 = arith.constant 0 : index
    %3 = vector.load %arg3[%c0_4, %c0_5] : memref<1x32xf32, #tpu.memory_space<vmem>>, vector<1x32xf32>
    %cst = arith.constant dense<0.000000e+00> : vector<8xf32>
    %4 = vector.multi_reduction <add>, %1, %cst [1] : vector<8x32xf32> to vector<8xf32>
    %5 = vector.shape_cast %4 : vector<8xf32> to vector<8x1xf32>
    %cst_6 = arith.constant 3.200000e+01 : f32
    %6 = vector.broadcast %cst_6 : f32 to vector<8x1xf32>
    %7 = arith.divf %5, %6 : vector<8x1xf32>
    %8 = vector.broadcast %7 : vector<8x1xf32> to vector<8x32xf32>
    %9 = arith.subf %1, %8 : vector<8x32xf32>
    %10 = arith.mulf %9, %9 : vector<8x32xf32>
    %cst_7 = arith.constant dense<0.000000e+00> : vector<8xf32>
    %11 = vector.multi_reduction <add>, %10, %cst_7 [1] : vector<8x32xf32> to vector<8xf32>
    %12 = vector.shape_cast %11 : vector<8xf32> to vector<8x1xf32>
    %cst_8 = arith.constant 3.200000e+01 : f32
    %13 = vector.broadcast %cst_8 : f32 to vector<8x1xf32>
    %14 = arith.divf %12, %13 : vector<8x1xf32>
    %15 = vector.broadcast %7 : vector<8x1xf32> to vector<8x32xf32>
    %16 = arith.subf %1, %15 : vector<8x32xf32>
    %cst_9 = arith.constant 9.99999974E-6 : f32
    %17 = vector.broadcast %cst_9 : f32 to vector<8x1xf32>
    %18 = arith.addf %14, %17 : vector<8x1xf32>
    %19 = math.rsqrt %18 : vector<8x1xf32>
    %20 = vector.broadcast %19 : vector<8x1xf32> to vector<8x32xf32>
    %21 = arith.mulf %16, %20 : vector<8x32xf32>
    %22 = vector.broadcast %2 : vector<1x32xf32> to vector<8x32xf32>
    %23 = arith.mulf %21, %22 : vector<8x32xf32>
    %24 = vector.broadcast %3 : vector<1x32xf32> to vector<8x32xf32>
    %25 = arith.addf %23, %24 : vector<8x32xf32>
    %c0_10 = arith.constant 0 : index
    %c0_11 = arith.constant 0 : index
    %26 = vector.load %arg4[%c0_10, %c0_11] : memref<32x96xf32, #tpu.memory_space<vmem>>, vector<32x96xf32>
    %cst_12 = arith.constant dense<0.000000e+00> : vector<8x96xf32>
    %27 = tpu.matmul %25, %26, %cst_12 {dimension_numbers = #tpu.dot_dimension_numbers<[1], [0], [0], [1], [0, 0, 1, 1], [], []>} : vector<8x32xf32>, vector<32x96xf32>, vector<8x96xf32> -> vector<8x96xf32>
    %c0_13 = arith.constant 0 : index
    %c0_14 = arith.constant 0 : index
    %28 = vector.load %arg5[%c0_13, %c0_14] : memref<1x96xf32, #tpu.memory_space<vmem>>, vector<1x96xf32>
    %29 = vector.broadcast %28 : vector<1x96xf32> to vector<8x96xf32>
    %30 = arith.addf %27, %29 : vector<8x96xf32>
    %31 = vector.extract_strided_slice %30 {offsets = [0, 0], sizes = [8, 32], strides = [1, 1]} : vector<8x96xf32> to vector<8x32xf32>
    %32 = vector.shape_cast %31 : vector<8x32xf32> to vector<1x8x4x8xf32>
    %33 = tpu.transpose %32, [0, 2, 1, 3] : vector<1x8x4x8xf32> -> vector<1x4x8x8xf32>
    %34 = vector.shape_cast %33 : vector<1x4x8x8xf32> to vector<4x8x8xf32>
    %35 = vector.extract_strided_slice %30 {offsets = [0, 32], sizes = [8, 32], strides = [1, 1]} : vector<8x96xf32> to vector<8x32xf32>
    %36 = vector.shape_cast %35 : vector<8x32xf32> to vector<1x8x4x8xf32>
    %37 = tpu.transpose %36, [0, 2, 1, 3] : vector<1x8x4x8xf32> -> vector<1x4x8x8xf32>
    %38 = vector.shape_cast %37 : vector<1x4x8x8xf32> to vector<4x8x8xf32>
    %39 = vector.extract_strided_slice %30 {offsets = [0, 64], sizes = [8, 32], strides = [1, 1]} : vector<8x96xf32> to vector<8x32xf32>
    %40 = vector.shape_cast %39 : vector<8x32xf32> to vector<1x8x4x8xf32>
    %41 = tpu.transpose %40, [0, 2, 1, 3] : vector<1x8x4x8xf32> -> vector<1x4x8x8xf32>
    %42 = vector.shape_cast %41 : vector<1x4x8x8xf32> to vector<4x8x8xf32>
    "tpu.trace_start"() <{level = 10 : i32, message = "bqd,bkd->bqk"}> : () -> ()
    %cst_15 = arith.constant dense<0.000000e+00> : vector<4x8x8xf32>
    %43 = tpu.matmul %34, %38, %cst_15 {dimension_numbers = #tpu.dot_dimension_numbers<[2], [2], [1], [1], [0, 0, 0, 1, 1, 1], [0], [0]>} : vector<4x8x8xf32>, vector<4x8x8xf32>, vector<4x8x8xf32> -> vector<4x8x8xf32>
    "tpu.trace_stop"() : () -> ()
    %cst_16 = arith.constant dense<0xFF800000> : vector<4x8xf32>
    %44 = vector.multi_reduction <maximumf>, %43, %cst_16 [2] : vector<4x8x8xf32> to vector<4x8xf32>
    %45 = vector.shape_cast %44 : vector<4x8xf32> to vector<4x8x1xf32>
    %46 = vector.broadcast %45 : vector<4x8x1xf32> to vector<4x8x8xf32>
    %47 = arith.subf %43, %46 : vector<4x8x8xf32>
    %48 = math.exp %47 : vector<4x8x8xf32>
    %cst_17 = arith.constant dense<0.000000e+00> : vector<4x8xf32>
    %49 = vector.multi_reduction <add>, %48, %cst_17 [2] : vector<4x8x8xf32> to vector<4x8xf32>
    %50 = vector.shape_cast %49 : vector<4x8xf32> to vector<4x8x1xf32>
    %51 = tpu.reciprocal %50 : vector<4x8x1xf32> -> vector<4x8x1xf32>
    %52 = vector.broadcast %51 : vector<4x8x1xf32> to vector<4x8x8xf32>
    %53 = arith.mulf %48, %52 : vector<4x8x8xf32>
    "tpu.trace_start"() <{level = 10 : i32, message = "bqk,bkd->bqd"}> : () -> ()
    %cst_18 = arith.constant dense<0.000000e+00> : vector<4x8x8xf32>
    %54 = tpu.matmul %53, %42, %cst_18 {dimension_numbers = #tpu.dot_dimension_numbers<[2], [1], [1], [2], [0, 0, 0, 1, 1, 2], [0], [0]>} : vector<4x8x8xf32>, vector<4x8x8xf32>, vector<4x8x8xf32> -> vector<4x8x8xf32>
    "tpu.trace_stop"() : () -> ()
    %55 = vector.shape_cast %54 : vector<4x8x8xf32> to vector<1x4x8x8xf32>
    %56 = tpu.transpose %55, [0, 2, 1, 3] : vector<1x4x8x8xf32> -> vector<1x8x4x8xf32>
    %57 = vector.shape_cast %56 : vector<1x8x4x8xf32> to vector<8x32xf32>
    %c0_19 = arith.constant 0 : index
    %c0_20 = arith.constant 0 : index
    %58 = vector.load %arg6[%c0_19, %c0_20] : memref<32x32xf32, #tpu.memory_space<vmem>>, vector<32x32xf32>
    %cst_21 = arith.constant dense<0.000000e+00> : vector<8x32xf32>
    %59 = tpu.matmul %57, %58, %cst_21 {dimension_numbers = #tpu.dot_dimension_numbers<[1], [0], [0], [1], [0, 0, 1, 1], [], []>} : vector<8x32xf32>, vector<32x32xf32>, vector<8x32xf32> -> vector<8x32xf32>
    %c0_22 = arith.constant 0 : index
    %c0_23 = arith.constant 0 : index
    %60 = vector.load %arg7[%c0_22, %c0_23] : memref<1x32xf32, #tpu.memory_space<vmem>>, vector<1x32xf32>
    %61 = vector.broadcast %60 : vector<1x32xf32> to vector<8x32xf32>
    %62 = arith.addf %59, %61 : vector<8x32xf32>
    %63 = arith.addf %62, %1 : vector<8x32xf32>
    %c0_24 = arith.constant 0 : index
    %c0_25 = arith.constant 0 : index
    %64 = vector.load %arg8[%c0_24, %c0_25] : memref<1x32xf32, #tpu.memory_space<vmem>>, vector<1x32xf32>
    %c0_26 = arith.constant 0 : index
    %c0_27 = arith.constant 0 : index
    %65 = vector.load %arg9[%c0_26, %c0_27] : memref<1x32xf32, #tpu.memory_space<vmem>>, vector<1x32xf32>
    %cst_28 = arith.constant dense<0.000000e+00> : vector<8xf32>
    %66 = vector.multi_reduction <add>, %63, %cst_28 [1] : vector<8x32xf32> to vector<8xf32>
    %67 = vector.shape_cast %66 : vector<8xf32> to vector<8x1xf32>
    %cst_29 = arith.constant 3.200000e+01 : f32
    %68 = vector.broadcast %cst_29 : f32 to vector<8x1xf32>
    %69 = arith.divf %67, %68 : vector<8x1xf32>
    %70 = vector.broadcast %69 : vector<8x1xf32> to vector<8x32xf32>
    %71 = arith.subf %63, %70 : vector<8x32xf32>
    %72 = arith.mulf %71, %71 : vector<8x32xf32>
    %cst_30 = arith.constant dense<0.000000e+00> : vector<8xf32>
    %73 = vector.multi_reduction <add>, %72, %cst_30 [1] : vector<8x32xf32> to vector<8xf32>
    %74 = vector.shape_cast %73 : vector<8xf32> to vector<8x1xf32>
    %cst_31 = arith.constant 3.200000e+01 : f32
    %75 = vector.broadcast %cst_31 : f32 to vector<8x1xf32>
    %76 = arith.divf %74, %75 : vector<8x1xf32>
    %77 = vector.broadcast %69 : vector<8x1xf32> to vector<8x32xf32>
    %78 = arith.subf %63, %77 : vector<8x32xf32>
    %cst_32 = arith.constant 9.99999974E-6 : f32
    %79 = vector.broadcast %cst_32 : f32 to vector<8x1xf32>
    %80 = arith.addf %76, %79 : vector<8x1xf32>
    %81 = math.rsqrt %80 : vector<8x1xf32>
    %82 = vector.broadcast %81 : vector<8x1xf32> to vector<8x32xf32>
    %83 = arith.mulf %78, %82 : vector<8x32xf32>
    %84 = vector.broadcast %64 : vector<1x32xf32> to vector<8x32xf32>
    %85 = arith.mulf %83, %84 : vector<8x32xf32>
    %86 = vector.broadcast %65 : vector<1x32xf32> to vector<8x32xf32>
    %87 = arith.addf %85, %86 : vector<8x32xf32>
    %c0_33 = arith.constant 0 : index
    %c0_34 = arith.constant 0 : index
    %88 = vector.load %arg10[%c0_33, %c0_34] : memref<32x64xf32, #tpu.memory_space<vmem>>, vector<32x64xf32>
    %cst_35 = arith.constant dense<0.000000e+00> : vector<8x64xf32>
    %89 = tpu.matmul %87, %88, %cst_35 {dimension_numbers = #tpu.dot_dimension_numbers<[1], [0], [0], [1], [0, 0, 1, 1], [], []>} : vector<8x32xf32>, vector<32x64xf32>, vector<8x64xf32> -> vector<8x64xf32>
    %c0_36 = arith.constant 0 : index
    %c0_37 = arith.constant 0 : index
    %90 = vector.load %arg11[%c0_36, %c0_37] : memref<1x64xf32, #tpu.memory_space<vmem>>, vector<1x64xf32>
    %91 = vector.broadcast %90 : vector<1x64xf32> to vector<8x64xf32>
    %92 = arith.addf %89, %91 : vector<8x64xf32>
    %cst_38 = arith.constant 0.000000e+00 : f32
    %93 = vector.broadcast %cst_38 : f32 to vector<8x64xf32>
    %94 = arith.maximumf %92, %93 : vector<8x64xf32>
    %c0_39 = arith.constant 0 : index
    %c0_40 = arith.constant 0 : index
    %95 = vector.load %arg12[%c0_39, %c0_40] : memref<64x32xf32, #tpu.memory_space<vmem>>, vector<64x32xf32>
    %cst_41 = arith.constant dense<0.000000e+00> : vector<8x32xf32>
    %96 = tpu.matmul %94, %95, %cst_41 {dimension_numbers = #tpu.dot_dimension_numbers<[1], [0], [0], [1], [0, 0, 1, 1], [], []>} : vector<8x64xf32>, vector<64x32xf32>, vector<8x32xf32> -> vector<8x32xf32>
    %c0_42 = arith.constant 0 : index
    %c0_43 = arith.constant 0 : index
    %97 = vector.load %arg13[%c0_42, %c0_43] : memref<1x32xf32, #tpu.memory_space<vmem>>, vector<1x32xf32>
    %98 = vector.broadcast %97 : vector<1x32xf32> to vector<8x32xf32>
    %99 = arith.addf %96, %98 : vector<8x32xf32>
    %100 = arith.addf %63, %99 : vector<8x32xf32>
    %101 = vector.shape_cast %100 : vector<8x32xf32> to vector<1x8x32xf32>
    %c0_44 = arith.constant 0 : index
    %c0_45 = arith.constant 0 : index
    %c0_46 = arith.constant 0 : index
    %102 = vector.load %arg14[%c0_44, %c0_45, %c0_46] : memref<1x8x32xf32, #tpu.memory_space<vmem>>, vector<1x8x32xf32>
    tpu.vector_store %arg14[%c0_44, %c0_45, %c0_46], %101 {strides = array<i32>} : memref<1x8x32xf32, #tpu.memory_space<vmem>>, vector<1x8x32xf32>,
    return
  }
  func.func @transform_0(%arg0: i32) -> (i32, i32, i32) {
    %c0_i32 = arith.constant 0 : i32
    %c0_i32_0 = arith.constant 0 : i32
    %c0_i32_1 = arith.constant 0 : i32
    return %arg0, %c0_i32, %c0_i32_0 : i32, i32, i32
  }
  func.func @transform_1(%arg0: i32) -> (i32, i32) {
    %c0_i32 = arith.constant 0 : i32
    %c0_i32_0 = arith.constant 0 : i32
    %c0_i32_1 = arith.constant 0 : i32
    return %c0_i32, %c0_i32_0 : i32, i32
  }
  func.func @transform_2(%arg0: i32) -> (i32, i32) {
    %c0_i32 = arith.constant 0 : i32
    %c0_i32_0 = arith.constant 0 : i32
    %c0_i32_1 = arith.constant 0 : i32
    return %c0_i32, %c0_i32_0 : i32, i32
  }
  func.func @transform_3(%arg0: i32) -> (i32, i32) {
    %c0_i32 = arith.constant 0 : i32
    %c0_i32_0 = arith.constant 0 : i32
    %c0_i32_1 = arith.constant 0 : i32
    return %c0_i32, %c0_i32_0 : i32, i32
  }
  func.func @transform_4(%arg0: i32) -> (i32, i32) {
    %c0_i32 = arith.constant 0 : i32
    %c0_i32_0 = arith.constant 0 : i32
    %c0_i32_1 = arith.constant 0 : i32
    return %c0_i32, %c0_i32_0 : i32, i32
  }
  func.func @transform_5(%arg0: i32) -> (i32, i32) {
    %c0_i32 = arith.constant 0 : i32
    %c0_i32_0 = arith.constant 0 : i32
    %c0_i32_1 = arith.constant 0 : i32
    return %c0_i32, %c0_i32_0 : i32, i32
  }
  func.func @transform_6(%arg0: i32) -> (i32, i32) {
    %c0_i32 = arith.constant 0 : i32
    %c0_i32_0 = arith.constant 0 : i32
    %c0_i32_1 = arith.constant 0 : i32
    return %c0_i32, %c0_i32_0 : i32, i32
  }
  func.func @transform_7(%arg0: i32) -> (i32, i32) {
    %c0_i32 = arith.constant 0 : i32
    %c0_i32_0 = arith.constant 0 : i32
    %c0_i32_1 = arith.constant 0 : i32
    return %c0_i32, %c0_i32_0 : i32, i32
  }
  func.func @transform_8(%arg0: i32) -> (i32, i32) {
    %c0_i32 = arith.constant 0 : i32
    %c0_i32_0 = arith.constant 0 : i32
    %c0_i32_1 = arith.constant 0 : i32
    return %c0_i32, %c0_i32_0 : i32, i32
  }
  func.func @transform_9(%arg0: i32) -> (i32, i32) {
    %c0_i32 = arith.constant 0 : i32
    %c0_i32_0 = arith.constant 0 : i32
    %c0_i32_1 = arith.constant 0 : i32
    return %c0_i32, %c0_i32_0 : i32, i32
  }
  func.func @transform_10(%arg0: i32) -> (i32, i32) {
    %c0_i32 = arith.constant 0 : i32
    %c0_i32_0 = arith.constant 0 : i32
    %c0_i32_1 = arith.constant 0 : i32
    return %c0_i32, %c0_i32_0 : i32, i32
  }
  func.func @transform_11(%arg0: i32) -> (i32, i32) {
    %c0_i32 = arith.constant 0 : i32
    %c0_i32_0 = arith.constant 0 : i32
    %c0_i32_1 = arith.constant 0 : i32
    return %c0_i32, %c0_i32_0 : i32, i32
  }
  func.func @transform_12(%arg0: i32) -> (i32, i32) {
    %c0_i32 = arith.constant 0 : i32
    %c0_i32_0 = arith.constant 0 : i32
    %c0_i32_1 = arith.constant 0 : i32
    return %c0_i32, %c0_i32_0 : i32, i32
  }
  func.func @transform_13(%arg0: i32) -> (i32, i32, i32) {
    %c0_i32 = arith.constant 0 : i32
    %c0_i32_0 = arith.constant 0 : i32
    %c0_i32_1 = arith.constant 0 : i32
    return %arg0, %c0_i32, %c0_i32_0 : i32, i32, i32
  }
}

module attributes {stable_mosaic.version = 11 : i64} {
  func.func @encoder_block_kernel(%arg0: i32, %arg1: memref<1x8x32xf32, #tpu.memory_space<vmem>>, %arg2: memref<1x32xf32, #tpu.memory_space<vmem>>, %arg3: memref<1x32xf32, #tpu.memory_space<vmem>>, %arg4: memref<32x96xf32, #tpu.memory_space<vmem>>, %arg5: memref<1x96xf32, #tpu.memory_space<vmem>>, %arg6: memref<32x32xf32, #tpu.memory_space<vmem>>, %arg7: memref<1x32xf32, #tpu.memory_space<vmem>>, %arg8: memref<1x32xf32, #tpu.memory_space<vmem>>, %arg9: memref<1x32xf32, #tpu.memory_space<vmem>>, %arg10: memref<32x64xf32, #tpu.memory_space<vmem>>, %arg11: memref<1x64xf32, #tpu.memory_space<vmem>>, %arg12: memref<64x32xf32, #tpu.memory_space<vmem>>, %arg13: memref<1x32xf32, #tpu.memory_space<vmem>>, %arg14: memref<1x8x32xf32, #tpu.memory_space<vmem>>) attributes {dimension_semantics = [#tpu.dimension_semantics<parallel>], iteration_bounds = array<i64: 2>, scalar_prefetch = 0 : i64, scratch_operands = 0 : i64, tpu.core_type = #tpu.core_type<tc>, window_params = [{transform_indices = @transform_0, window_bounds = array<i64: 1, 8, 32>}, {pipeline_mode = #tpu.pipeline_mode<synchronous>, transform_indices = @transform_1, window_bounds = array<i64: 1, 32>}, {pipeline_mode = #tpu.pipeline_mode<synchronous>, transform_indices = @transform_2, window_bounds = array<i64: 1, 32>}, {pipeline_mode = #tpu.pipeline_mode<synchronous>, transform_indices = @transform_3, window_bounds = array<i64: 32, 96>}, {pipeline_mode = #tpu.pipeline_mode<synchronous>, transform_indices = @transform_4, window_bounds = array<i64: 1, 96>}, {pipeline_mode = #tpu.pipeline_mode<synchronous>, transform_indices = @transform_5, window_bounds = array<i64: 32, 32>}, {pipeline_mode = #tpu.pipeline_mode<synchronous>, transform_indices = @transform_6, window_bounds = array<i64: 1, 32>}, {pipeline_mode = #tpu.pipeline_mode<synchronous>, transform_indices = @transform_7, window_bounds = array<i64: 1, 32>}, {pipeline_mode = #tpu.pipeline_mode<synchronous>, transform_indices = @transform_8, window_bounds = array<i64: 1, 32>}, {pipeline_mode = #tpu.pipeline_mode<synchronous>, transform_indices = @transform_9, window_bounds = array<i64: 32, 64>}, {pipeline_mode = #tpu.pipeline_mode<synchronous>, transform_indices = @transform_10, window_bounds = array<i64: 1, 64>}, {pipeline_mode = #tpu.pipeline_mode<synchronous>, transform_indices = @transform_11, window_bounds = array<i64: 64, 32>}, {pipeline_mode = #tpu.pipeline_mode<synchronous>, transform_indices = @transform_12, window_bounds = array<i64: 1, 32>}, {transform_indices = @transform_13, window_bounds = array<i64: 1, 8, 32>}]} {
    %c0 = arith.constant 0 : index
    %c0_0 = arith.constant 0 : index
    %c0_1 = arith.constant 0 : index
    %0 = vector.load %arg1[%c0, %c0_0, %c0_1] : memref<1x8x32xf32, #tpu.memory_space<vmem>>, vector<1x8x32xf32>
    %1 = vector.shape_cast %0 : vector<1x8x32xf32> to vector<8x32xf32>
    %c0_2 = arith.constant 0 : index
    %c0_3 = arith.constant 0 : index
    %2 = vector.load %arg2[%c0_2, %c0_3] : memref<1x32xf32, #tpu.memory_space<vmem>>, vector<1x32xf32>
    %c0_4 = arith.constant 0 : index
    %c0_5 = arith.constant 0 : index
    %3 = vector.load %arg3[%c0_4, %c0_5] : memref<1x32xf32, #tpu.memory_space<vmem>>, vector<1x32xf32>
    %cst = arith.constant dense<0.000000e+00> : vector<8xf32>
    %4 = vector.multi_reduction <add>, %1, %cst [1] : vector<8x32xf32> to vector<8xf32>
    %5 = vector.shape_cast %4 : vector<8xf32> to vector<8x1xf32>
    %cst_6 = arith.constant 3.200000e+01 : f32
    %6 = vector.broadcast %cst_6 : f32 to vector<8x1xf32>
    %7 = arith.divf %5, %6 : vector<8x1xf32>
    %8 = vector.broadcast %7 : vector<8x1xf32> to vector<8x32xf32>
    %9 = arith.subf %1, %8 : vector<8x32xf32>
    %10 = arith.mulf %9, %9 : vector<8x32xf32>
    %cst_7 = arith.constant dense<0.000000e+00> : vector<8xf32>
    %11 = vector.multi_reduction <add>, %10, %cst_7 [1] : vector<8x32xf32> to vector<8xf32>
    %12 = vector.shape_cast %11 : vector<8xf32> to vector<8x1xf32>
    %cst_8 = arith.constant 3.200000e+01 : f32
    %13 = vector.broadcast %cst_8 : f32 to vector<8x1xf32>
    %14 = arith.divf %12, %13 : vector<8x1xf32>
    %15 = vector.broadcast %7 : vector<8x1xf32> to vector<8x32xf32>
    %16 = arith.subf %1, %15 : vector<8x32xf32>
    %cst_9 = arith.constant 9.99999974E-6 : f32
    %17 = vector.broadcast %cst_9 : f32 to vector<8x1xf32>
    %18 = arith.addf %14, %17 : vector<8x1xf32>
    %19 = math.rsqrt %18 : vector<8x1xf32>
    %20 = vector.broadcast %19 : vector<8x1xf32> to vector<8x32xf32>
    %21 = arith.mulf %16, %20 : vector<8x32xf32>
    %22 = vector.broadcast %2 : vector<1x32xf32> to vector<8x32xf32>
    %23 = arith.mulf %21, %22 : vector<8x32xf32>
    %24 = vector.broadcast %3 : vector<1x32xf32> to vector<8x32xf32>
    %25 = arith.addf %23, %24 : vector<8x32xf32>
    %c0_10 = arith.constant 0 : index
    %c0_11 = arith.constant 0 : index
    %26 = vector.load %arg4[%c0_10, %c0_11] : memref<32x96xf32, #tpu.memory_space<vmem>>, vector<32x96xf32>
    %cst_12 = arith.constant dense<0.000000e+00> : vector<8x96xf32>
    %27 = tpu.matmul %25, %26, %cst_12 {dimension_numbers = #tpu.dot_dimension_numbers<[1], [0], [0], [1], [0, 0, 1, 1], [], []>} : vector<8x32xf32>, vector<32x96xf32>, vector<8x96xf32> -> vector<8x96xf32>
    %c0_13 = arith.constant 0 : index
    %c0_14 = arith.constant 0 : index
    %28 = vector.load %arg5[%c0_13, %c0_14] : memref<1x96xf32, #tpu.memory_space<vmem>>, vector<1x96xf32>
    %29 = vector.broadcast %28 : vector<1x96xf32> to vector<8x96xf32>
    %30 = arith.addf %27, %29 : vector<8x96xf32>
    %31 = vector.extract_strided_slice %30 {offsets = [0, 0], sizes = [8, 32], strides = [1, 1]} : vector<8x96xf32> to vector<8x32xf32>
    %32 = vector.shape_cast %31 : vector<8x32xf32> to vector<1x8x32xf32>
    %33 = vector.extract_strided_slice %30 {offsets = [0, 32], sizes = [8, 32], strides = [1, 1]} : vector<8x96xf32> to vector<8x32xf32>
    %34 = vector.shape_cast %33 : vector<8x32xf32> to vector<1x8x32xf32>
    %35 = vector.extract_strided_slice %30 {offsets = [0, 64], sizes = [8, 32], strides = [1, 1]} : vector<8x96xf32> to vector<8x32xf32>
    %36 = vector.shape_cast %35 : vector<8x32xf32> to vector<1x8x32xf32>
    %c0_15 = arith.constant 0 : index
    %c0_16 = arith.constant 0 : index
    %37 = vector.load %arg6[%c0_15, %c0_16] : memref<32x32xf32, #tpu.memory_space<vmem>>, vector<32x32xf32>
    %cst_17 = arith.constant 0.000000e+00 : f32
    %38 = vector.broadcast %cst_17 : f32 to vector<8x32xf32>
    %39 = vector.extract_strided_slice %32 {offsets = [0, 0, 0], sizes = [1, 8, 8], strides = [1, 1, 1]} : vector<1x8x32xf32> to vector<1x8x8xf32>
    %40 = vector.extract_strided_slice %34 {offsets = [0, 0, 0], sizes = [1, 8, 8], strides = [1, 1, 1]} : vector<1x8x32xf32> to vector<1x8x8xf32>
    %41 = vector.extract_strided_slice %36 {offsets = [0, 0, 0], sizes = [1, 8, 8], strides = [1, 1, 1]} : vector<1x8x32xf32> to vector<1x8x8xf32>
    "tpu.trace_start"() <{level = 10 : i32, message = "bqd,bkd->bqk"}> : () -> ()
    %cst_18 = arith.constant dense<0.000000e+00> : vector<1x8x8xf32>
    %42 = tpu.matmul %39, %40, %cst_18 {dimension_numbers = #tpu.dot_dimension_numbers<[2], [2], [1], [1], [0, 0, 0, 1, 1, 1], [0], [0]>} : vector<1x8x8xf32>, vector<1x8x8xf32>, vector<1x8x8xf32> -> vector<1x8x8xf32>
    "tpu.trace_stop"() : () -> ()
    %cst_19 = arith.constant dense<0xFF800000> : vector<1x8xf32>
    %43 = vector.multi_reduction <maximumf>, %42, %cst_19 [2] : vector<1x8x8xf32> to vector<1x8xf32>
    %44 = vector.shape_cast %43 : vector<1x8xf32> to vector<1x8x1xf32>
    %45 = vector.broadcast %44 : vector<1x8x1xf32> to vector<1x8x8xf32>
    %46 = arith.subf %42, %45 : vector<1x8x8xf32>
    %47 = math.exp %46 : vector<1x8x8xf32>
    %cst_20 = arith.constant dense<0.000000e+00> : vector<1x8xf32>
    %48 = vector.multi_reduction <add>, %47, %cst_20 [2] : vector<1x8x8xf32> to vector<1x8xf32>
    %49 = vector.shape_cast %48 : vector<1x8xf32> to vector<1x8x1xf32>
    %50 = tpu.reciprocal %49 : vector<1x8x1xf32> -> vector<1x8x1xf32>
    %51 = vector.broadcast %50 : vector<1x8x1xf32> to vector<1x8x8xf32>
    %52 = arith.mulf %47, %51 : vector<1x8x8xf32>
    "tpu.trace_start"() <{level = 10 : i32, message = "bqk,bkd->bqd"}> : () -> ()
    %cst_21 = arith.constant dense<0.000000e+00> : vector<1x8x8xf32>
    %53 = tpu.matmul %52, %41, %cst_21 {dimension_numbers = #tpu.dot_dimension_numbers<[2], [1], [1], [2], [0, 0, 0, 1, 1, 2], [0], [0]>} : vector<1x8x8xf32>, vector<1x8x8xf32>, vector<1x8x8xf32> -> vector<1x8x8xf32>
    "tpu.trace_stop"() : () -> ()
    %54 = vector.shape_cast %53 : vector<1x8x8xf32> to vector<8x8xf32>
    %55 = vector.extract_strided_slice %37 {offsets = [0, 0], sizes = [8, 32], strides = [1, 1]} : vector<32x32xf32> to vector<8x32xf32>
    %cst_22 = arith.constant dense<0.000000e+00> : vector<8x32xf32>
    %56 = tpu.matmul %54, %55, %cst_22 {dimension_numbers = #tpu.dot_dimension_numbers<[1], [0], [0], [1], [0, 0, 1, 1], [], []>} : vector<8x8xf32>, vector<8x32xf32>, vector<8x32xf32> -> vector<8x32xf32>
    %57 = arith.addf %38, %56 : vector<8x32xf32>
    %58 = vector.extract_strided_slice %32 {offsets = [0, 0, 8], sizes = [1, 8, 8], strides = [1, 1, 1]} : vector<1x8x32xf32> to vector<1x8x8xf32>
    %59 = vector.extract_strided_slice %34 {offsets = [0, 0, 8], sizes = [1, 8, 8], strides = [1, 1, 1]} : vector<1x8x32xf32> to vector<1x8x8xf32>
    %60 = vector.extract_strided_slice %36 {offsets = [0, 0, 8], sizes = [1, 8, 8], strides = [1, 1, 1]} : vector<1x8x32xf32> to vector<1x8x8xf32>
    "tpu.trace_start"() <{level = 10 : i32, message = "bqd,bkd->bqk"}> : () -> ()
    %cst_23 = arith.constant dense<0.000000e+00> : vector<1x8x8xf32>
    %61 = tpu.matmul %58, %59, %cst_23 {dimension_numbers = #tpu.dot_dimension_numbers<[2], [2], [1], [1], [0, 0, 0, 1, 1, 1], [0], [0]>} : vector<1x8x8xf32>, vector<1x8x8xf32>, vector<1x8x8xf32> -> vector<1x8x8xf32>
    "tpu.trace_stop"() : () -> ()
    %cst_24 = arith.constant dense<0xFF800000> : vector<1x8xf32>
    %62 = vector.multi_reduction <maximumf>, %61, %cst_24 [2] : vector<1x8x8xf32> to vector<1x8xf32>
    %63 = vector.shape_cast %62 : vector<1x8xf32> to vector<1x8x1xf32>
    %64 = vector.broadcast %63 : vector<1x8x1xf32> to vector<1x8x8xf32>
    %65 = arith.subf %61, %64 : vector<1x8x8xf32>
    %66 = math.exp %65 : vector<1x8x8xf32>
    %cst_25 = arith.constant dense<0.000000e+00> : vector<1x8xf32>
    %67 = vector.multi_reduction <add>, %66, %cst_25 [2] : vector<1x8x8xf32> to vector<1x8xf32>
    %68 = vector.shape_cast %67 : vector<1x8xf32> to vector<1x8x1xf32>
    %69 = tpu.reciprocal %68 : vector<1x8x1xf32> -> vector<1x8x1xf32>
    %70 = vector.broadcast %69 : vector<1x8x1xf32> to vector<1x8x8xf32>
    %71 = arith.mulf %66, %70 : vector<1x8x8xf32>
    "tpu.trace_start"() <{level = 10 : i32, message = "bqk,bkd->bqd"}> : () -> ()
    %cst_26 = arith.constant dense<0.000000e+00> : vector<1x8x8xf32>
    %72 = tpu.matmul %71, %60, %cst_26 {dimension_numbers = #tpu.dot_dimension_numbers<[2], [1], [1], [2], [0, 0, 0, 1, 1, 2], [0], [0]>} : vector<1x8x8xf32>, vector<1x8x8xf32>, vector<1x8x8xf32> -> vector<1x8x8xf32>
    "tpu.trace_stop"() : () -> ()
    %73 = vector.shape_cast %72 : vector<1x8x8xf32> to vector<8x8xf32>
    %74 = vector.extract_strided_slice %37 {offsets = [8, 0], sizes = [8, 32], strides = [1, 1]} : vector<32x32xf32> to vector<8x32xf32>
    %cst_27 = arith.constant dense<0.000000e+00> : vector<8x32xf32>
    %75 = tpu.matmul %73, %74, %cst_27 {dimension_numbers = #tpu.dot_dimension_numbers<[1], [0], [0], [1], [0, 0, 1, 1], [], []>} : vector<8x8xf32>, vector<8x32xf32>, vector<8x32xf32> -> vector<8x32xf32>
    %76 = arith.addf %57, %75 : vector<8x32xf32>
    %77 = vector.extract_strided_slice %32 {offsets = [0, 0, 16], sizes = [1, 8, 8], strides = [1, 1, 1]} : vector<1x8x32xf32> to vector<1x8x8xf32>
    %78 = vector.extract_strided_slice %34 {offsets = [0, 0, 16], sizes = [1, 8, 8], strides = [1, 1, 1]} : vector<1x8x32xf32> to vector<1x8x8xf32>
    %79 = vector.extract_strided_slice %36 {offsets = [0, 0, 16], sizes = [1, 8, 8], strides = [1, 1, 1]} : vector<1x8x32xf32> to vector<1x8x8xf32>
    "tpu.trace_start"() <{level = 10 : i32, message = "bqd,bkd->bqk"}> : () -> ()
    %cst_28 = arith.constant dense<0.000000e+00> : vector<1x8x8xf32>
    %80 = tpu.matmul %77, %78, %cst_28 {dimension_numbers = #tpu.dot_dimension_numbers<[2], [2], [1], [1], [0, 0, 0, 1, 1, 1], [0], [0]>} : vector<1x8x8xf32>, vector<1x8x8xf32>, vector<1x8x8xf32> -> vector<1x8x8xf32>
    "tpu.trace_stop"() : () -> ()
    %cst_29 = arith.constant dense<0xFF800000> : vector<1x8xf32>
    %81 = vector.multi_reduction <maximumf>, %80, %cst_29 [2] : vector<1x8x8xf32> to vector<1x8xf32>
    %82 = vector.shape_cast %81 : vector<1x8xf32> to vector<1x8x1xf32>
    %83 = vector.broadcast %82 : vector<1x8x1xf32> to vector<1x8x8xf32>
    %84 = arith.subf %80, %83 : vector<1x8x8xf32>
    %85 = math.exp %84 : vector<1x8x8xf32>
    %cst_30 = arith.constant dense<0.000000e+00> : vector<1x8xf32>
    %86 = vector.multi_reduction <add>, %85, %cst_30 [2] : vector<1x8x8xf32> to vector<1x8xf32>
    %87 = vector.shape_cast %86 : vector<1x8xf32> to vector<1x8x1xf32>
    %88 = tpu.reciprocal %87 : vector<1x8x1xf32> -> vector<1x8x1xf32>
    %89 = vector.broadcast %88 : vector<1x8x1xf32> to vector<1x8x8xf32>
    %90 = arith.mulf %85, %89 : vector<1x8x8xf32>
    "tpu.trace_start"() <{level = 10 : i32, message = "bqk,bkd->bqd"}> : () -> ()
    %cst_31 = arith.constant dense<0.000000e+00> : vector<1x8x8xf32>
    %91 = tpu.matmul %90, %79, %cst_31 {dimension_numbers = #tpu.dot_dimension_numbers<[2], [1], [1], [2], [0, 0, 0, 1, 1, 2], [0], [0]>} : vector<1x8x8xf32>, vector<1x8x8xf32>, vector<1x8x8xf32> -> vector<1x8x8xf32>
    "tpu.trace_stop"() : () -> ()
    %92 = vector.shape_cast %91 : vector<1x8x8xf32> to vector<8x8xf32>
    %93 = vector.extract_strided_slice %37 {offsets = [16, 0], sizes = [8, 32], strides = [1, 1]} : vector<32x32xf32> to vector<8x32xf32>
    %cst_32 = arith.constant dense<0.000000e+00> : vector<8x32xf32>
    %94 = tpu.matmul %92, %93, %cst_32 {dimension_numbers = #tpu.dot_dimension_numbers<[1], [0], [0], [1], [0, 0, 1, 1], [], []>} : vector<8x8xf32>, vector<8x32xf32>, vector<8x32xf32> -> vector<8x32xf32>
    %95 = arith.addf %76, %94 : vector<8x32xf32>
    %96 = vector.extract_strided_slice %32 {offsets = [0, 0, 24], sizes = [1, 8, 8], strides = [1, 1, 1]} : vector<1x8x32xf32> to vector<1x8x8xf32>
    %97 = vector.extract_strided_slice %34 {offsets = [0, 0, 24], sizes = [1, 8, 8], strides = [1, 1, 1]} : vector<1x8x32xf32> to vector<1x8x8xf32>
    %98 = vector.extract_strided_slice %36 {offsets = [0, 0, 24], sizes = [1, 8, 8], strides = [1, 1, 1]} : vector<1x8x32xf32> to vector<1x8x8xf32>
    "tpu.trace_start"() <{level = 10 : i32, message = "bqd,bkd->bqk"}> : () -> ()
    %cst_33 = arith.constant dense<0.000000e+00> : vector<1x8x8xf32>
    %99 = tpu.matmul %96, %97, %cst_33 {dimension_numbers = #tpu.dot_dimension_numbers<[2], [2], [1], [1], [0, 0, 0, 1, 1, 1], [0], [0]>} : vector<1x8x8xf32>, vector<1x8x8xf32>, vector<1x8x8xf32> -> vector<1x8x8xf32>
    "tpu.trace_stop"() : () -> ()
    %cst_34 = arith.constant dense<0xFF800000> : vector<1x8xf32>
    %100 = vector.multi_reduction <maximumf>, %99, %cst_34 [2] : vector<1x8x8xf32> to vector<1x8xf32>
    %101 = vector.shape_cast %100 : vector<1x8xf32> to vector<1x8x1xf32>
    %102 = vector.broadcast %101 : vector<1x8x1xf32> to vector<1x8x8xf32>
    %103 = arith.subf %99, %102 : vector<1x8x8xf32>
    %104 = math.exp %103 : vector<1x8x8xf32>
    %cst_35 = arith.constant dense<0.000000e+00> : vector<1x8xf32>
    %105 = vector.multi_reduction <add>, %104, %cst_35 [2] : vector<1x8x8xf32> to vector<1x8xf32>
    %106 = vector.shape_cast %105 : vector<1x8xf32> to vector<1x8x1xf32>
    %107 = tpu.reciprocal %106 : vector<1x8x1xf32> -> vector<1x8x1xf32>
    %108 = vector.broadcast %107 : vector<1x8x1xf32> to vector<1x8x8xf32>
    %109 = arith.mulf %104, %108 : vector<1x8x8xf32>
    "tpu.trace_start"() <{level = 10 : i32, message = "bqk,bkd->bqd"}> : () -> ()
    %cst_36 = arith.constant dense<0.000000e+00> : vector<1x8x8xf32>
    %110 = tpu.matmul %109, %98, %cst_36 {dimension_numbers = #tpu.dot_dimension_numbers<[2], [1], [1], [2], [0, 0, 0, 1, 1, 2], [0], [0]>} : vector<1x8x8xf32>, vector<1x8x8xf32>, vector<1x8x8xf32> -> vector<1x8x8xf32>
    "tpu.trace_stop"() : () -> ()
    %111 = vector.shape_cast %110 : vector<1x8x8xf32> to vector<8x8xf32>
    %112 = vector.extract_strided_slice %37 {offsets = [24, 0], sizes = [8, 32], strides = [1, 1]} : vector<32x32xf32> to vector<8x32xf32>
    %cst_37 = arith.constant dense<0.000000e+00> : vector<8x32xf32>
    %113 = tpu.matmul %111, %112, %cst_37 {dimension_numbers = #tpu.dot_dimension_numbers<[1], [0], [0], [1], [0, 0, 1, 1], [], []>} : vector<8x8xf32>, vector<8x32xf32>, vector<8x32xf32> -> vector<8x32xf32>
    %114 = arith.addf %95, %113 : vector<8x32xf32>
    %c0_38 = arith.constant 0 : index
    %c0_39 = arith.constant 0 : index
    %115 = vector.load %arg7[%c0_38, %c0_39] : memref<1x32xf32, #tpu.memory_space<vmem>>, vector<1x32xf32>
    %116 = vector.broadcast %115 : vector<1x32xf32> to vector<8x32xf32>
    %117 = arith.addf %114, %116 : vector<8x32xf32>
    %118 = arith.addf %117, %1 : vector<8x32xf32>
    %c0_40 = arith.constant 0 : index
    %c0_41 = arith.constant 0 : index
    %119 = vector.load %arg8[%c0_40, %c0_41] : memref<1x32xf32, #tpu.memory_space<vmem>>, vector<1x32xf32>
    %c0_42 = arith.constant 0 : index
    %c0_43 = arith.constant 0 : index
    %120 = vector.load %arg9[%c0_42, %c0_43] : memref<1x32xf32, #tpu.memory_space<vmem>>, vector<1x32xf32>
    %cst_44 = arith.constant dense<0.000000e+00> : vector<8xf32>
    %121 = vector.multi_reduction <add>, %118, %cst_44 [1] : vector<8x32xf32> to vector<8xf32>
    %122 = vector.shape_cast %121 : vector<8xf32> to vector<8x1xf32>
    %cst_45 = arith.constant 3.200000e+01 : f32
    %123 = vector.broadcast %cst_45 : f32 to vector<8x1xf32>
    %124 = arith.divf %122, %123 : vector<8x1xf32>
    %125 = vector.broadcast %124 : vector<8x1xf32> to vector<8x32xf32>
    %126 = arith.subf %118, %125 : vector<8x32xf32>
    %127 = arith.mulf %126, %126 : vector<8x32xf32>
    %cst_46 = arith.constant dense<0.000000e+00> : vector<8xf32>
    %128 = vector.multi_reduction <add>, %127, %cst_46 [1] : vector<8x32xf32> to vector<8xf32>
    %129 = vector.shape_cast %128 : vector<8xf32> to vector<8x1xf32>
    %cst_47 = arith.constant 3.200000e+01 : f32
    %130 = vector.broadcast %cst_47 : f32 to vector<8x1xf32>
    %131 = arith.divf %129, %130 : vector<8x1xf32>
    %132 = vector.broadcast %124 : vector<8x1xf32> to vector<8x32xf32>
    %133 = arith.subf %118, %132 : vector<8x32xf32>
    %cst_48 = arith.constant 9.99999974E-6 : f32
    %134 = vector.broadcast %cst_48 : f32 to vector<8x1xf32>
    %135 = arith.addf %131, %134 : vector<8x1xf32>
    %136 = math.rsqrt %135 : vector<8x1xf32>
    %137 = vector.broadcast %136 : vector<8x1xf32> to vector<8x32xf32>
    %138 = arith.mulf %133, %137 : vector<8x32xf32>
    %139 = vector.broadcast %119 : vector<1x32xf32> to vector<8x32xf32>
    %140 = arith.mulf %138, %139 : vector<8x32xf32>
    %141 = vector.broadcast %120 : vector<1x32xf32> to vector<8x32xf32>
    %142 = arith.addf %140, %141 : vector<8x32xf32>
    %c0_49 = arith.constant 0 : index
    %c0_50 = arith.constant 0 : index
    %143 = vector.load %arg10[%c0_49, %c0_50] : memref<32x64xf32, #tpu.memory_space<vmem>>, vector<32x64xf32>
    %cst_51 = arith.constant dense<0.000000e+00> : vector<8x64xf32>
    %144 = tpu.matmul %142, %143, %cst_51 {dimension_numbers = #tpu.dot_dimension_numbers<[1], [0], [0], [1], [0, 0, 1, 1], [], []>} : vector<8x32xf32>, vector<32x64xf32>, vector<8x64xf32> -> vector<8x64xf32>
    %c0_52 = arith.constant 0 : index
    %c0_53 = arith.constant 0 : index
    %145 = vector.load %arg11[%c0_52, %c0_53] : memref<1x64xf32, #tpu.memory_space<vmem>>, vector<1x64xf32>
    %146 = vector.broadcast %145 : vector<1x64xf32> to vector<8x64xf32>
    %147 = arith.addf %144, %146 : vector<8x64xf32>
    %cst_54 = arith.constant 0.000000e+00 : f32
    %148 = vector.broadcast %cst_54 : f32 to vector<8x64xf32>
    %149 = arith.maximumf %147, %148 : vector<8x64xf32>
    %c0_55 = arith.constant 0 : index
    %c0_56 = arith.constant 0 : index
    %150 = vector.load %arg12[%c0_55, %c0_56] : memref<64x32xf32, #tpu.memory_space<vmem>>, vector<64x32xf32>
    %cst_57 = arith.constant dense<0.000000e+00> : vector<8x32xf32>
    %151 = tpu.matmul %149, %150, %cst_57 {dimension_numbers = #tpu.dot_dimension_numbers<[1], [0], [0], [1], [0, 0, 1, 1], [], []>} : vector<8x64xf32>, vector<64x32xf32>, vector<8x32xf32> -> vector<8x32xf32>
    %c0_58 = arith.constant 0 : index
    %c0_59 = arith.constant 0 : index
    %152 = vector.load %arg13[%c0_58, %c0_59] : memref<1x32xf32, #tpu.memory_space<vmem>>, vector<1x32xf32>
    %153 = vector.broadcast %152 : vector<1x32xf32> to vector<8x32xf32>
    %154 = arith.addf %151, %153 : vector<8x32xf32>
    %155 = arith.addf %118, %154 : vector<8x32xf32>
    %156 = vector.shape_cast %155 : vector<8x32xf32> to vector<1x8x32xf32>
    %c0_60 = arith.constant 0 : index
    %c0_61 = arith.constant 0 : index
    %c0_62 = arith.constant 0 : index
    %157 = vector.load %arg14[%c0_60, %c0_61, %c0_62] : memref<1x8x32xf32, #tpu.memory_space<vmem>>, vector<1x8x32xf32>
    tpu.vector_store %arg14[%c0_60, %c0_61, %c0_62], %156 {strides = array<i32>} : memref<1x8x32xf32, #tpu.memory_space<vmem>>, vector<1x8x32xf32>,
    return
  }
  func.func @transform_0(%arg0: i32) -> (i32, i32, i32) {
    %c0_i32 = arith.constant 0 : i32
    %c0_i32_0 = arith.constant 0 : i32
    %c0_i32_1 = arith.constant 0 : i32
    return %arg0, %c0_i32, %c0_i32_0 : i32, i32, i32
  }
  func.func @transform_1(%arg0: i32) -> (i32, i32) {
    %c0_i32 = arith.constant 0 : i32
    %c0_i32_0 = arith.constant 0 : i32
    %c0_i32_1 = arith.constant 0 : i32
    return %c0_i32, %c0_i32_0 : i32, i32
  }
  func.func @transform_2(%arg0: i32) -> (i32, i32) {
    %c0_i32 = arith.constant 0 : i32
    %c0_i32_0 = arith.constant 0 : i32
    %c0_i32_1 = arith.constant 0 : i32
    return %c0_i32, %c0_i32_0 : i32, i32
  }
  func.func @transform_3(%arg0: i32) -> (i32, i32) {
    %c0_i32 = arith.constant 0 : i32
    %c0_i32_0 = arith.constant 0 : i32
    %c0_i32_1 = arith.constant 0 : i32
    return %c0_i32, %c0_i32_0 : i32, i32
  }
  func.func @transform_4(%arg0: i32) -> (i32, i32) {
    %c0_i32 = arith.constant 0 : i32
    %c0_i32_0 = arith.constant 0 : i32
    %c0_i32_1 = arith.constant 0 : i32
    return %c0_i32, %c0_i32_0 : i32, i32
  }
  func.func @transform_5(%arg0: i32) -> (i32, i32) {
    %c0_i32 = arith.constant 0 : i32
    %c0_i32_0 = arith.constant 0 : i32
    %c0_i32_1 = arith.constant 0 : i32
    return %c0_i32, %c0_i32_0 : i32, i32
  }
  func.func @transform_6(%arg0: i32) -> (i32, i32) {
    %c0_i32 = arith.constant 0 : i32
    %c0_i32_0 = arith.constant 0 : i32
    %c0_i32_1 = arith.constant 0 : i32
    return %c0_i32, %c0_i32_0 : i32, i32
  }
  func.func @transform_7(%arg0: i32) -> (i32, i32) {
    %c0_i32 = arith.constant 0 : i32
    %c0_i32_0 = arith.constant 0 : i32
    %c0_i32_1 = arith.constant 0 : i32
    return %c0_i32, %c0_i32_0 : i32, i32
  }
  func.func @transform_8(%arg0: i32) -> (i32, i32) {
    %c0_i32 = arith.constant 0 : i32
    %c0_i32_0 = arith.constant 0 : i32
    %c0_i32_1 = arith.constant 0 : i32
    return %c0_i32, %c0_i32_0 : i32, i32
  }
  func.func @transform_9(%arg0: i32) -> (i32, i32) {
    %c0_i32 = arith.constant 0 : i32
    %c0_i32_0 = arith.constant 0 : i32
    %c0_i32_1 = arith.constant 0 : i32
    return %c0_i32, %c0_i32_0 : i32, i32
  }
  func.func @transform_10(%arg0: i32) -> (i32, i32) {
    %c0_i32 = arith.constant 0 : i32
    %c0_i32_0 = arith.constant 0 : i32
    %c0_i32_1 = arith.constant 0 : i32
    return %c0_i32, %c0_i32_0 : i32, i32
  }
  func.func @transform_11(%arg0: i32) -> (i32, i32) {
    %c0_i32 = arith.constant 0 : i32
    %c0_i32_0 = arith.constant 0 : i32
    %c0_i32_1 = arith.constant 0 : i32
    return %c0_i32, %c0_i32_0 : i32, i32
  }
  func.func @transform_12(%arg0: i32) -> (i32, i32) {
    %c0_i32 = arith.constant 0 : i32
    %c0_i32_0 = arith.constant 0 : i32
    %c0_i32_1 = arith.constant 0 : i32
    return %c0_i32, %c0_i32_0 : i32, i32
  }
  func.func @transform_13(%arg0: i32) -> (i32, i32, i32) {
    %c0_i32 = arith.constant 0 : i32
    %c0_i32_0 = arith.constant 0 : i32
    %c0_i32_1 = arith.constant 0 : i32
    return %arg0, %c0_i32, %c0_i32_0 : i32, i32, i32
  }
}

module attributes {stable_mosaic.version = 11 : i64} {
  func.func @encoder_block_kernel(%arg0: i32, %arg1: memref<1x8x32xf32, #tpu.memory_space<vmem>>, %arg2: memref<1x32xf32, #tpu.memory_space<vmem>>, %arg3: memref<1x32xf32, #tpu.memory_space<vmem>>, %arg4: memref<32x96xf32, #tpu.memory_space<vmem>>, %arg5: memref<1x96xf32, #tpu.memory_space<vmem>>, %arg6: memref<32x32xf32, #tpu.memory_space<vmem>>, %arg7: memref<1x32xf32, #tpu.memory_space<vmem>>, %arg8: memref<1x32xf32, #tpu.memory_space<vmem>>, %arg9: memref<1x32xf32, #tpu.memory_space<vmem>>, %arg10: memref<32x64xf32, #tpu.memory_space<vmem>>, %arg11: memref<1x64xf32, #tpu.memory_space<vmem>>, %arg12: memref<64x32xf32, #tpu.memory_space<vmem>>, %arg13: memref<1x32xf32, #tpu.memory_space<vmem>>, %arg14: memref<1x8x32xf32, #tpu.memory_space<vmem>>) attributes {dimension_semantics = [#tpu.dimension_semantics<parallel>], iteration_bounds = array<i64: 2>, scalar_prefetch = 0 : i64, scratch_operands = 0 : i64, tpu.core_type = #tpu.core_type<tc>, window_params = [{transform_indices = @transform_0, window_bounds = array<i64: 1, 8, 32>}, {pipeline_mode = #tpu.pipeline_mode<synchronous>, transform_indices = @transform_1, window_bounds = array<i64: 1, 32>}, {pipeline_mode = #tpu.pipeline_mode<synchronous>, transform_indices = @transform_2, window_bounds = array<i64: 1, 32>}, {pipeline_mode = #tpu.pipeline_mode<synchronous>, transform_indices = @transform_3, window_bounds = array<i64: 32, 96>}, {pipeline_mode = #tpu.pipeline_mode<synchronous>, transform_indices = @transform_4, window_bounds = array<i64: 1, 96>}, {pipeline_mode = #tpu.pipeline_mode<synchronous>, transform_indices = @transform_5, window_bounds = array<i64: 32, 32>}, {pipeline_mode = #tpu.pipeline_mode<synchronous>, transform_indices = @transform_6, window_bounds = array<i64: 1, 32>}, {pipeline_mode = #tpu.pipeline_mode<synchronous>, transform_indices = @transform_7, window_bounds = array<i64: 1, 32>}, {pipeline_mode = #tpu.pipeline_mode<synchronous>, transform_indices = @transform_8, window_bounds = array<i64: 1, 32>}, {pipeline_mode = #tpu.pipeline_mode<synchronous>, transform_indices = @transform_9, window_bounds = array<i64: 32, 64>}, {pipeline_mode = #tpu.pipeline_mode<synchronous>, transform_indices = @transform_10, window_bounds = array<i64: 1, 64>}, {pipeline_mode = #tpu.pipeline_mode<synchronous>, transform_indices = @transform_11, window_bounds = array<i64: 64, 32>}, {pipeline_mode = #tpu.pipeline_mode<synchronous>, transform_indices = @transform_12, window_bounds = array<i64: 1, 32>}, {transform_indices = @transform_13, window_bounds = array<i64: 1, 8, 32>}]} {
    %c0 = arith.constant 0 : index
    %c0_0 = arith.constant 0 : index
    %c0_1 = arith.constant 0 : index
    %0 = vector.load %arg1[%c0, %c0_0, %c0_1] : memref<1x8x32xf32, #tpu.memory_space<vmem>>, vector<1x8x32xf32>
    %1 = vector.shape_cast %0 : vector<1x8x32xf32> to vector<8x32xf32>
    %c0_2 = arith.constant 0 : index
    %c0_3 = arith.constant 0 : index
    %2 = vector.load %arg2[%c0_2, %c0_3] : memref<1x32xf32, #tpu.memory_space<vmem>>, vector<1x32xf32>
    %c0_4 = arith.constant 0 : index
    %c0_5 = arith.constant 0 : index
    %3 = vector.load %arg3[%c0_4, %c0_5] : memref<1x32xf32, #tpu.memory_space<vmem>>, vector<1x32xf32>
    %cst = arith.constant dense<0.000000e+00> : vector<8xf32>
    %4 = vector.multi_reduction <add>, %1, %cst [1] : vector<8x32xf32> to vector<8xf32>
    %5 = vector.shape_cast %4 : vector<8xf32> to vector<8x1xf32>
    %cst_6 = arith.constant 3.200000e+01 : f32
    %6 = vector.broadcast %cst_6 : f32 to vector<8x1xf32>
    %7 = arith.divf %5, %6 : vector<8x1xf32>
    %8 = vector.broadcast %7 : vector<8x1xf32> to vector<8x32xf32>
    %9 = arith.subf %1, %8 : vector<8x32xf32>
    %10 = arith.mulf %9, %9 : vector<8x32xf32>
    %cst_7 = arith.constant dense<0.000000e+00> : vector<8xf32>
    %11 = vector.multi_reduction <add>, %10, %cst_7 [1] : vector<8x32xf32> to vector<8xf32>
    %12 = vector.shape_cast %11 : vector<8xf32> to vector<8x1xf32>
    %cst_8 = arith.constant 3.200000e+01 : f32
    %13 = vector.broadcast %cst_8 : f32 to vector<8x1xf32>
    %14 = arith.divf %12, %13 : vector<8x1xf32>
    %15 = vector.broadcast %7 : vector<8x1xf32> to vector<8x32xf32>
    %16 = arith.subf %1, %15 : vector<8x32xf32>
    %cst_9 = arith.constant 9.99999974E-6 : f32
    %17 = vector.broadcast %cst_9 : f32 to vector<8x1xf32>
    %18 = arith.addf %14, %17 : vector<8x1xf32>
    %19 = math.rsqrt %18 : vector<8x1xf32>
    %20 = vector.broadcast %19 : vector<8x1xf32> to vector<8x32xf32>
    %21 = arith.mulf %16, %20 : vector<8x32xf32>
    %22 = vector.broadcast %2 : vector<1x32xf32> to vector<8x32xf32>
    %23 = arith.mulf %21, %22 : vector<8x32xf32>
    %24 = vector.broadcast %3 : vector<1x32xf32> to vector<8x32xf32>
    %25 = arith.addf %23, %24 : vector<8x32xf32>
    %c0_10 = arith.constant 0 : index
    %c0_11 = arith.constant 0 : index
    %26 = vector.load %arg4[%c0_10, %c0_11] : memref<32x96xf32, #tpu.memory_space<vmem>>, vector<32x96xf32>
    %cst_12 = arith.constant dense<0.000000e+00> : vector<8x96xf32>
    %27 = tpu.matmul %25, %26, %cst_12 {dimension_numbers = #tpu.dot_dimension_numbers<[1], [0], [0], [1], [0, 0, 1, 1], [], []>} : vector<8x32xf32>, vector<32x96xf32>, vector<8x96xf32> -> vector<8x96xf32>
    %c0_13 = arith.constant 0 : index
    %c0_14 = arith.constant 0 : index
    %28 = vector.load %arg5[%c0_13, %c0_14] : memref<1x96xf32, #tpu.memory_space<vmem>>, vector<1x96xf32>
    %29 = vector.broadcast %28 : vector<1x96xf32> to vector<8x96xf32>
    %30 = arith.addf %27, %29 : vector<8x96xf32>
    %31 = vector.extract_strided_slice %30 {offsets = [0, 0], sizes = [8, 32], strides = [1, 1]} : vector<8x96xf32> to vector<8x32xf32>
    %32 = vector.shape_cast %31 : vector<8x32xf32> to vector<1x8x32xf32>
    %33 = vector.extract_strided_slice %30 {offsets = [0, 32], sizes = [8, 32], strides = [1, 1]} : vector<8x96xf32> to vector<8x32xf32>
    %34 = vector.shape_cast %33 : vector<8x32xf32> to vector<1x8x32xf32>
    %35 = vector.extract_strided_slice %30 {offsets = [0, 64], sizes = [8, 32], strides = [1, 1]} : vector<8x96xf32> to vector<8x32xf32>
    %36 = vector.shape_cast %35 : vector<8x32xf32> to vector<1x8x32xf32>
    %c0_15 = arith.constant 0 : index
    %c0_16 = arith.constant 0 : index
    %37 = vector.load %arg6[%c0_15, %c0_16] : memref<32x32xf32, #tpu.memory_space<vmem>>, vector<32x32xf32>
    %cst_17 = arith.constant 0.000000e+00 : f32
    %38 = vector.broadcast %cst_17 : f32 to vector<8x32xf32>
    %39 = vector.extract_strided_slice %32 {offsets = [0, 0, 0], sizes = [1, 8, 8], strides = [1, 1, 1]} : vector<1x8x32xf32> to vector<1x8x8xf32>
    %40 = vector.extract_strided_slice %34 {offsets = [0, 0, 0], sizes = [1, 8, 8], strides = [1, 1, 1]} : vector<1x8x32xf32> to vector<1x8x8xf32>
    %41 = vector.extract_strided_slice %36 {offsets = [0, 0, 0], sizes = [1, 8, 8], strides = [1, 1, 1]} : vector<1x8x32xf32> to vector<1x8x8xf32>
    "tpu.trace_start"() <{level = 10 : i32, message = "bqd,bkd->bqk"}> : () -> ()
    %cst_18 = arith.constant dense<0.000000e+00> : vector<1x8x8xf32>
    %42 = tpu.matmul %39, %40, %cst_18 {dimension_numbers = #tpu.dot_dimension_numbers<[2], [2], [1], [1], [0, 0, 0, 1, 1, 1], [0], [0]>} : vector<1x8x8xf32>, vector<1x8x8xf32>, vector<1x8x8xf32> -> vector<1x8x8xf32>
    "tpu.trace_stop"() : () -> ()
    %cst_19 = arith.constant dense<0xFF800000> : vector<1x8xf32>
    %43 = vector.multi_reduction <maximumf>, %42, %cst_19 [2] : vector<1x8x8xf32> to vector<1x8xf32>
    %44 = vector.shape_cast %43 : vector<1x8xf32> to vector<1x8x1xf32>
    %45 = vector.broadcast %44 : vector<1x8x1xf32> to vector<1x8x8xf32>
    %46 = arith.subf %42, %45 : vector<1x8x8xf32>
    %47 = math.exp %46 : vector<1x8x8xf32>
    %cst_20 = arith.constant dense<0.000000e+00> : vector<1x8xf32>
    %48 = vector.multi_reduction <add>, %47, %cst_20 [2] : vector<1x8x8xf32> to vector<1x8xf32>
    %49 = vector.shape_cast %48 : vector<1x8xf32> to vector<1x8x1xf32>
    %50 = tpu.reciprocal %49 : vector<1x8x1xf32> -> vector<1x8x1xf32>
    %51 = vector.broadcast %50 : vector<1x8x1xf32> to vector<1x8x8xf32>
    %52 = arith.mulf %47, %51 : vector<1x8x8xf32>
    "tpu.trace_start"() <{level = 10 : i32, message = "bqk,bkd->bqd"}> : () -> ()
    %cst_21 = arith.constant dense<0.000000e+00> : vector<1x8x8xf32>
    %53 = tpu.matmul %52, %41, %cst_21 {dimension_numbers = #tpu.dot_dimension_numbers<[2], [1], [1], [2], [0, 0, 0, 1, 1, 2], [0], [0]>} : vector<1x8x8xf32>, vector<1x8x8xf32>, vector<1x8x8xf32> -> vector<1x8x8xf32>
    "tpu.trace_stop"() : () -> ()
    %54 = vector.shape_cast %53 : vector<1x8x8xf32> to vector<8x8xf32>
    %55 = vector.extract_strided_slice %37 {offsets = [0, 0], sizes = [8, 32], strides = [1, 1]} : vector<32x32xf32> to vector<8x32xf32>
    %cst_22 = arith.constant dense<0.000000e+00> : vector<8x32xf32>
    %56 = tpu.matmul %54, %55, %cst_22 {dimension_numbers = #tpu.dot_dimension_numbers<[1], [0], [0], [1], [0, 0, 1, 1], [], []>} : vector<8x8xf32>, vector<8x32xf32>, vector<8x32xf32> -> vector<8x32xf32>
    %57 = arith.addf %38, %56 : vector<8x32xf32>
    %58 = vector.extract_strided_slice %32 {offsets = [0, 0, 8], sizes = [1, 8, 8], strides = [1, 1, 1]} : vector<1x8x32xf32> to vector<1x8x8xf32>
    %59 = vector.extract_strided_slice %34 {offsets = [0, 0, 8], sizes = [1, 8, 8], strides = [1, 1, 1]} : vector<1x8x32xf32> to vector<1x8x8xf32>
    %60 = vector.extract_strided_slice %36 {offsets = [0, 0, 8], sizes = [1, 8, 8], strides = [1, 1, 1]} : vector<1x8x32xf32> to vector<1x8x8xf32>
    "tpu.trace_start"() <{level = 10 : i32, message = "bqd,bkd->bqk"}> : () -> ()
    %cst_23 = arith.constant dense<0.000000e+00> : vector<1x8x8xf32>
    %61 = tpu.matmul %58, %59, %cst_23 {dimension_numbers = #tpu.dot_dimension_numbers<[2], [2], [1], [1], [0, 0, 0, 1, 1, 1], [0], [0]>} : vector<1x8x8xf32>, vector<1x8x8xf32>, vector<1x8x8xf32> -> vector<1x8x8xf32>
    "tpu.trace_stop"() : () -> ()
    %cst_24 = arith.constant dense<0xFF800000> : vector<1x8xf32>
    %62 = vector.multi_reduction <maximumf>, %61, %cst_24 [2] : vector<1x8x8xf32> to vector<1x8xf32>
    %63 = vector.shape_cast %62 : vector<1x8xf32> to vector<1x8x1xf32>
    %64 = vector.broadcast %63 : vector<1x8x1xf32> to vector<1x8x8xf32>
    %65 = arith.subf %61, %64 : vector<1x8x8xf32>
    %66 = math.exp %65 : vector<1x8x8xf32>
    %cst_25 = arith.constant dense<0.000000e+00> : vector<1x8xf32>
    %67 = vector.multi_reduction <add>, %66, %cst_25 [2] : vector<1x8x8xf32> to vector<1x8xf32>
    %68 = vector.shape_cast %67 : vector<1x8xf32> to vector<1x8x1xf32>
    %69 = tpu.reciprocal %68 : vector<1x8x1xf32> -> vector<1x8x1xf32>
    %70 = vector.broadcast %69 : vector<1x8x1xf32> to vector<1x8x8xf32>
    %71 = arith.mulf %66, %70 : vector<1x8x8xf32>
    "tpu.trace_start"() <{level = 10 : i32, message = "bqk,bkd->bqd"}> : () -> ()
    %cst_26 = arith.constant dense<0.000000e+00> : vector<1x8x8xf32>
    %72 = tpu.matmul %71, %60, %cst_26 {dimension_numbers = #tpu.dot_dimension_numbers<[2], [1], [1], [2], [0, 0, 0, 1, 1, 2], [0], [0]>} : vector<1x8x8xf32>, vector<1x8x8xf32>, vector<1x8x8xf32> -> vector<1x8x8xf32>
    "tpu.trace_stop"() : () -> ()
    %73 = vector.shape_cast %72 : vector<1x8x8xf32> to vector<8x8xf32>
    %74 = vector.extract_strided_slice %37 {offsets = [8, 0], sizes = [8, 32], strides = [1, 1]} : vector<32x32xf32> to vector<8x32xf32>
    %cst_27 = arith.constant dense<0.000000e+00> : vector<8x32xf32>
    %75 = tpu.matmul %73, %74, %cst_27 {dimension_numbers = #tpu.dot_dimension_numbers<[1], [0], [0], [1], [0, 0, 1, 1], [], []>} : vector<8x8xf32>, vector<8x32xf32>, vector<8x32xf32> -> vector<8x32xf32>
    %76 = arith.addf %57, %75 : vector<8x32xf32>
    %77 = vector.extract_strided_slice %32 {offsets = [0, 0, 16], sizes = [1, 8, 8], strides = [1, 1, 1]} : vector<1x8x32xf32> to vector<1x8x8xf32>
    %78 = vector.extract_strided_slice %34 {offsets = [0, 0, 16], sizes = [1, 8, 8], strides = [1, 1, 1]} : vector<1x8x32xf32> to vector<1x8x8xf32>
    %79 = vector.extract_strided_slice %36 {offsets = [0, 0, 16], sizes = [1, 8, 8], strides = [1, 1, 1]} : vector<1x8x32xf32> to vector<1x8x8xf32>
    "tpu.trace_start"() <{level = 10 : i32, message = "bqd,bkd->bqk"}> : () -> ()
    %cst_28 = arith.constant dense<0.000000e+00> : vector<1x8x8xf32>
    %80 = tpu.matmul %77, %78, %cst_28 {dimension_numbers = #tpu.dot_dimension_numbers<[2], [2], [1], [1], [0, 0, 0, 1, 1, 1], [0], [0]>} : vector<1x8x8xf32>, vector<1x8x8xf32>, vector<1x8x8xf32> -> vector<1x8x8xf32>
    "tpu.trace_stop"() : () -> ()
    %cst_29 = arith.constant dense<0xFF800000> : vector<1x8xf32>
    %81 = vector.multi_reduction <maximumf>, %80, %cst_29 [2] : vector<1x8x8xf32> to vector<1x8xf32>
    %82 = vector.shape_cast %81 : vector<1x8xf32> to vector<1x8x1xf32>
    %83 = vector.broadcast %82 : vector<1x8x1xf32> to vector<1x8x8xf32>
    %84 = arith.subf %80, %83 : vector<1x8x8xf32>
    %85 = math.exp %84 : vector<1x8x8xf32>
    %cst_30 = arith.constant dense<0.000000e+00> : vector<1x8xf32>
    %86 = vector.multi_reduction <add>, %85, %cst_30 [2] : vector<1x8x8xf32> to vector<1x8xf32>
    %87 = vector.shape_cast %86 : vector<1x8xf32> to vector<1x8x1xf32>
    %88 = tpu.reciprocal %87 : vector<1x8x1xf32> -> vector<1x8x1xf32>
    %89 = vector.broadcast %88 : vector<1x8x1xf32> to vector<1x8x8xf32>
    %90 = arith.mulf %85, %89 : vector<1x8x8xf32>
    "tpu.trace_start"() <{level = 10 : i32, message = "bqk,bkd->bqd"}> : () -> ()
    %cst_31 = arith.constant dense<0.000000e+00> : vector<1x8x8xf32>
    %91 = tpu.matmul %90, %79, %cst_31 {dimension_numbers = #tpu.dot_dimension_numbers<[2], [1], [1], [2], [0, 0, 0, 1, 1, 2], [0], [0]>} : vector<1x8x8xf32>, vector<1x8x8xf32>, vector<1x8x8xf32> -> vector<1x8x8xf32>
    "tpu.trace_stop"() : () -> ()
    %92 = vector.shape_cast %91 : vector<1x8x8xf32> to vector<8x8xf32>
    %93 = vector.extract_strided_slice %37 {offsets = [16, 0], sizes = [8, 32], strides = [1, 1]} : vector<32x32xf32> to vector<8x32xf32>
    %cst_32 = arith.constant dense<0.000000e+00> : vector<8x32xf32>
    %94 = tpu.matmul %92, %93, %cst_32 {dimension_numbers = #tpu.dot_dimension_numbers<[1], [0], [0], [1], [0, 0, 1, 1], [], []>} : vector<8x8xf32>, vector<8x32xf32>, vector<8x32xf32> -> vector<8x32xf32>
    %95 = arith.addf %76, %94 : vector<8x32xf32>
    %96 = vector.extract_strided_slice %32 {offsets = [0, 0, 24], sizes = [1, 8, 8], strides = [1, 1, 1]} : vector<1x8x32xf32> to vector<1x8x8xf32>
    %97 = vector.extract_strided_slice %34 {offsets = [0, 0, 24], sizes = [1, 8, 8], strides = [1, 1, 1]} : vector<1x8x32xf32> to vector<1x8x8xf32>
    %98 = vector.extract_strided_slice %36 {offsets = [0, 0, 24], sizes = [1, 8, 8], strides = [1, 1, 1]} : vector<1x8x32xf32> to vector<1x8x8xf32>
    "tpu.trace_start"() <{level = 10 : i32, message = "bqd,bkd->bqk"}> : () -> ()
    %cst_33 = arith.constant dense<0.000000e+00> : vector<1x8x8xf32>
    %99 = tpu.matmul %96, %97, %cst_33 {dimension_numbers = #tpu.dot_dimension_numbers<[2], [2], [1], [1], [0, 0, 0, 1, 1, 1], [0], [0]>} : vector<1x8x8xf32>, vector<1x8x8xf32>, vector<1x8x8xf32> -> vector<1x8x8xf32>
    "tpu.trace_stop"() : () -> ()
    %cst_34 = arith.constant dense<0xFF800000> : vector<1x8xf32>
    %100 = vector.multi_reduction <maximumf>, %99, %cst_34 [2] : vector<1x8x8xf32> to vector<1x8xf32>
    %101 = vector.shape_cast %100 : vector<1x8xf32> to vector<1x8x1xf32>
    %102 = vector.broadcast %101 : vector<1x8x1xf32> to vector<1x8x8xf32>
    %103 = arith.subf %99, %102 : vector<1x8x8xf32>
    %104 = math.exp %103 : vector<1x8x8xf32>
    %cst_35 = arith.constant dense<0.000000e+00> : vector<1x8xf32>
    %105 = vector.multi_reduction <add>, %104, %cst_35 [2] : vector<1x8x8xf32> to vector<1x8xf32>
    %106 = vector.shape_cast %105 : vector<1x8xf32> to vector<1x8x1xf32>
    %107 = tpu.reciprocal %106 : vector<1x8x1xf32> -> vector<1x8x1xf32>
    %108 = vector.broadcast %107 : vector<1x8x1xf32> to vector<1x8x8xf32>
    %109 = arith.mulf %104, %108 : vector<1x8x8xf32>
    "tpu.trace_start"() <{level = 10 : i32, message = "bqk,bkd->bqd"}> : () -> ()
    %cst_36 = arith.constant dense<0.000000e+00> : vector<1x8x8xf32>
    %110 = tpu.matmul %109, %98, %cst_36 {dimension_numbers = #tpu.dot_dimension_numbers<[2], [1], [1], [2], [0, 0, 0, 1, 1, 2], [0], [0]>} : vector<1x8x8xf32>, vector<1x8x8xf32>, vector<1x8x8xf32> -> vector<1x8x8xf32>
    "tpu.trace_stop"() : () -> ()
    %111 = vector.shape_cast %110 : vector<1x8x8xf32> to vector<8x8xf32>
    %112 = vector.extract_strided_slice %37 {offsets = [24, 0], sizes = [8, 32], strides = [1, 1]} : vector<32x32xf32> to vector<8x32xf32>
    %cst_37 = arith.constant dense<0.000000e+00> : vector<8x32xf32>
    %113 = tpu.matmul %111, %112, %cst_37 {dimension_numbers = #tpu.dot_dimension_numbers<[1], [0], [0], [1], [0, 0, 1, 1], [], []>} : vector<8x8xf32>, vector<8x32xf32>, vector<8x32xf32> -> vector<8x32xf32>
    %114 = arith.addf %95, %113 : vector<8x32xf32>
    %c0_38 = arith.constant 0 : index
    %c0_39 = arith.constant 0 : index
    %115 = vector.load %arg7[%c0_38, %c0_39] : memref<1x32xf32, #tpu.memory_space<vmem>>, vector<1x32xf32>
    %116 = vector.broadcast %115 : vector<1x32xf32> to vector<8x32xf32>
    %117 = arith.addf %114, %116 : vector<8x32xf32>
    %118 = arith.addf %117, %1 : vector<8x32xf32>
    %c0_40 = arith.constant 0 : index
    %c0_41 = arith.constant 0 : index
    %119 = vector.load %arg8[%c0_40, %c0_41] : memref<1x32xf32, #tpu.memory_space<vmem>>, vector<1x32xf32>
    %c0_42 = arith.constant 0 : index
    %c0_43 = arith.constant 0 : index
    %120 = vector.load %arg9[%c0_42, %c0_43] : memref<1x32xf32, #tpu.memory_space<vmem>>, vector<1x32xf32>
    %cst_44 = arith.constant dense<0.000000e+00> : vector<8xf32>
    %121 = vector.multi_reduction <add>, %118, %cst_44 [1] : vector<8x32xf32> to vector<8xf32>
    %122 = vector.shape_cast %121 : vector<8xf32> to vector<8x1xf32>
    %cst_45 = arith.constant 3.200000e+01 : f32
    %123 = vector.broadcast %cst_45 : f32 to vector<8x1xf32>
    %124 = arith.divf %122, %123 : vector<8x1xf32>
    %125 = vector.broadcast %124 : vector<8x1xf32> to vector<8x32xf32>
    %126 = arith.subf %118, %125 : vector<8x32xf32>
    %127 = arith.mulf %126, %126 : vector<8x32xf32>
    %cst_46 = arith.constant dense<0.000000e+00> : vector<8xf32>
    %128 = vector.multi_reduction <add>, %127, %cst_46 [1] : vector<8x32xf32> to vector<8xf32>
    %129 = vector.shape_cast %128 : vector<8xf32> to vector<8x1xf32>
    %cst_47 = arith.constant 3.200000e+01 : f32
    %130 = vector.broadcast %cst_47 : f32 to vector<8x1xf32>
    %131 = arith.divf %129, %130 : vector<8x1xf32>
    %132 = vector.broadcast %124 : vector<8x1xf32> to vector<8x32xf32>
    %133 = arith.subf %118, %132 : vector<8x32xf32>
    %cst_48 = arith.constant 9.99999974E-6 : f32
    %134 = vector.broadcast %cst_48 : f32 to vector<8x1xf32>
    %135 = arith.addf %131, %134 : vector<8x1xf32>
    %136 = math.rsqrt %135 : vector<8x1xf32>
    %137 = vector.broadcast %136 : vector<8x1xf32> to vector<8x32xf32>
    %138 = arith.mulf %133, %137 : vector<8x32xf32>
    %139 = vector.broadcast %119 : vector<1x32xf32> to vector<8x32xf32>
    %140 = arith.mulf %138, %139 : vector<8x32xf32>
    %141 = vector.broadcast %120 : vector<1x32xf32> to vector<8x32xf32>
    %142 = arith.addf %140, %141 : vector<8x32xf32>
    %c0_49 = arith.constant 0 : index
    %c0_50 = arith.constant 0 : index
    %143 = vector.load %arg10[%c0_49, %c0_50] : memref<32x64xf32, #tpu.memory_space<vmem>>, vector<32x64xf32>
    %cst_51 = arith.constant dense<0.000000e+00> : vector<8x64xf32>
    %144 = tpu.matmul %142, %143, %cst_51 {dimension_numbers = #tpu.dot_dimension_numbers<[1], [0], [0], [1], [0, 0, 1, 1], [], []>} : vector<8x32xf32>, vector<32x64xf32>, vector<8x64xf32> -> vector<8x64xf32>
    %c0_52 = arith.constant 0 : index
    %c0_53 = arith.constant 0 : index
    %145 = vector.load %arg11[%c0_52, %c0_53] : memref<1x64xf32, #tpu.memory_space<vmem>>, vector<1x64xf32>
    %146 = vector.broadcast %145 : vector<1x64xf32> to vector<8x64xf32>
    %147 = arith.addf %144, %146 : vector<8x64xf32>
    %cst_54 = arith.constant 0.000000e+00 : f32
    %148 = vector.broadcast %cst_54 : f32 to vector<8x64xf32>
    %149 = arith.maximumf %147, %148 : vector<8x64xf32>
    %c0_55 = arith.constant 0 : index
    %c0_56 = arith.constant 0 : index
    %150 = vector.load %arg12[%c0_55, %c0_56] : memref<64x32xf32, #tpu.memory_space<vmem>>, vector<64x32xf32>
    %cst_57 = arith.constant dense<0.000000e+00> : vector<8x32xf32>
    %151 = tpu.matmul %149, %150, %cst_57 {dimension_numbers = #tpu.dot_dimension_numbers<[1], [0], [0], [1], [0, 0, 1, 1], [], []>} : vector<8x64xf32>, vector<64x32xf32>, vector<8x32xf32> -> vector<8x32xf32>
    %c0_58 = arith.constant 0 : index
    %c0_59 = arith.constant 0 : index
    %152 = vector.load %arg13[%c0_58, %c0_59] : memref<1x32xf32, #tpu.memory_space<vmem>>, vector<1x32xf32>
    %153 = vector.broadcast %152 : vector<1x32xf32> to vector<8x32xf32>
    %154 = arith.addf %151, %153 : vector<8x32xf32>
    %155 = arith.addf %118, %154 : vector<8x32xf32>
    %156 = vector.shape_cast %155 : vector<8x32xf32> to vector<1x8x32xf32>
    %c0_60 = arith.constant 0 : index
    %c0_61 = arith.constant 0 : index
    %c0_62 = arith.constant 0 : index
    %157 = vector.load %arg14[%c0_60, %c0_61, %c0_62] : memref<1x8x32xf32, #tpu.memory_space<vmem>>, vector<1x8x32xf32>
    tpu.vector_store %arg14[%c0_60, %c0_61, %c0_62], %156 {strides = array<i32>} : memref<1x8x32xf32, #tpu.memory_space<vmem>>, vector<1x8x32xf32>,
    return
  }
  func.func @transform_0(%arg0: i32) -> (i32, i32, i32) {
    %c0_i32 = arith.constant 0 : i32
    %c0_i32_0 = arith.constant 0 : i32
    %c0_i32_1 = arith.constant 0 : i32
    return %arg0, %c0_i32, %c0_i32_0 : i32, i32, i32
  }
  func.func @transform_1(%arg0: i32) -> (i32, i32) {
    %c0_i32 = arith.constant 0 : i32
    %c0_i32_0 = arith.constant 0 : i32
    %c0_i32_1 = arith.constant 0 : i32
    return %c0_i32, %c0_i32_0 : i32, i32
  }
  func.func @transform_2(%arg0: i32) -> (i32, i32) {
    %c0_i32 = arith.constant 0 : i32
    %c0_i32_0 = arith.constant 0 : i32
    %c0_i32_1 = arith.constant 0 : i32
    return %c0_i32, %c0_i32_0 : i32, i32
  }
  func.func @transform_3(%arg0: i32) -> (i32, i32) {
    %c0_i32 = arith.constant 0 : i32
    %c0_i32_0 = arith.constant 0 : i32
    %c0_i32_1 = arith.constant 0 : i32
    return %c0_i32, %c0_i32_0 : i32, i32
  }
  func.func @transform_4(%arg0: i32) -> (i32, i32) {
    %c0_i32 = arith.constant 0 : i32
    %c0_i32_0 = arith.constant 0 : i32
    %c0_i32_1 = arith.constant 0 : i32
    return %c0_i32, %c0_i32_0 : i32, i32
  }
  func.func @transform_5(%arg0: i32) -> (i32, i32) {
    %c0_i32 = arith.constant 0 : i32
    %c0_i32_0 = arith.constant 0 : i32
    %c0_i32_1 = arith.constant 0 : i32
    return %c0_i32, %c0_i32_0 : i32, i32
  }
  func.func @transform_6(%arg0: i32) -> (i32, i32) {
    %c0_i32 = arith.constant 0 : i32
    %c0_i32_0 = arith.constant 0 : i32
    %c0_i32_1 = arith.constant 0 : i32
    return %c0_i32, %c0_i32_0 : i32, i32
  }
  func.func @transform_7(%arg0: i32) -> (i32, i32) {
    %c0_i32 = arith.constant 0 : i32
    %c0_i32_0 = arith.constant 0 : i32
    %c0_i32_1 = arith.constant 0 : i32
    return %c0_i32, %c0_i32_0 : i32, i32
  }
  func.func @transform_8(%arg0: i32) -> (i32, i32) {
    %c0_i32 = arith.constant 0 : i32
    %c0_i32_0 = arith.constant 0 : i32
    %c0_i32_1 = arith.constant 0 : i32
    return %c0_i32, %c0_i32_0 : i32, i32
  }
  func.func @transform_9(%arg0: i32) -> (i32, i32) {
    %c0_i32 = arith.constant 0 : i32
    %c0_i32_0 = arith.constant 0 : i32
    %c0_i32_1 = arith.constant 0 : i32
    return %c0_i32, %c0_i32_0 : i32, i32
  }
  func.func @transform_10(%arg0: i32) -> (i32, i32) {
    %c0_i32 = arith.constant 0 : i32
    %c0_i32_0 = arith.constant 0 : i32
    %c0_i32_1 = arith.constant 0 : i32
    return %c0_i32, %c0_i32_0 : i32, i32
  }
  func.func @transform_11(%arg0: i32) -> (i32, i32) {
    %c0_i32 = arith.constant 0 : i32
    %c0_i32_0 = arith.constant 0 : i32
    %c0_i32_1 = arith.constant 0 : i32
    return %c0_i32, %c0_i32_0 : i32, i32
  }
  func.func @transform_12(%arg0: i32) -> (i32, i32) {
    %c0_i32 = arith.constant 0 : i32
    %c0_i32_0 = arith.constant 0 : i32
    %c0_i32_1 = arith.constant 0 : i32
    return %c0_i32, %c0_i32_0 : i32, i32
  }
  func.func @transform_13(%arg0: i32) -> (i32, i32, i32) {
    %c0_i32 = arith.constant 0 : i32
    %c0_i32_0 = arith.constant 0 : i32
    %c0_i32_1 = arith.constant 0 : i32
    return %arg0, %c0_i32, %c0_i32_0 : i32, i32, i32
  }
}

</mosaic_0001>

<llo_original>
// kernel: tpu_custom_call.1
$region0: #{tpu_custom_call.1}
  #allocation0 [shape = 'u32[]', space=smem, size = 0x4, offset = 0x4, fixed_abs, tag = 'smem constant byte address 0x4 - core index']
  #allocation1 [shape = 'u32[72,128]{1,0:T(1,128)}', space=vmem, size = 0x9000, scoped, tag = 'internal scratch']
  %s0 = inlined_call_operand.hbm [shape: f32[2,8,32], index: 0, kind: input, shape index: {}]
  %s1 = inlined_call_operand.hbm [shape: f32[1,32], index: 1, kind: input, shape index: {}]
  %s2 = inlined_call_operand.vmem [shape: f32[1,32], index: 2, kind: input, shape index: {}]
  %s3 = inlined_call_operand.vmem [shape: f32[32,96], index: 3, kind: input, shape index: {}]
  %s4 = inlined_call_operand.vmem [shape: f32[1,96], index: 4, kind: input, shape index: {}]
  %s5 = inlined_call_operand.vmem [shape: f32[32,32], index: 5, kind: input, shape index: {}]
  %s6 = inlined_call_operand.vmem [shape: f32[1,32], index: 6, kind: input, shape index: {}]
  %s7 = inlined_call_operand.vmem [shape: f32[1,32], index: 7, kind: input, shape index: {}]
  %s8 = inlined_call_operand.vmem [shape: f32[1,32], index: 8, kind: input, shape index: {}]
  %s9 = inlined_call_operand.vmem [shape: f32[32,64], index: 9, kind: input, shape index: {}]
  %s10 = inlined_call_operand.vmem [shape: f32[1,64], index: 10, kind: input, shape index: {}]
  %s11 = inlined_call_operand.vmem [shape: f32[64,32], index: 11, kind: input, shape index: {}]
  %s12 = inlined_call_operand.vmem [shape: f32[1,32], index: 12, kind: input, shape index: {}]
  %s13 = inlined_call_operand.hbm [shape: f32[2,8,32], index: 13, kind: output, shape index: {}]
  %s14 = sld [smem:[#allocation0]]
  $region93: #{tpu_custom_call.1} parent=0
    _
  %s16 = ssub.s32 1, %s14
  %s17 = scalar_select 0, %s16, %s14
  $region1: #{tpu_custom_call.1} parent=0
    #allocation2 [shape = 'u8[8192]{0}', space=vmem, size = 0x2000, scoped, tag = 'input window, operand 0']
    #allocation3 [shape = 's32[2]{0}', space=sflag, size = 0x8, scoped, tag = 'scoped memory for tpu_custom_call.1']
    #allocation4 [shape = 's32[2]{0}', space=sflag, size = 0x8, scoped, tag = 'scoped memory for tpu_custom_call.1']
    #allocation5 [shape = 'u8[512]{0}', space=vmem, size = 0x400, scoped, tag = 'input window, operand 1, single buffered']
    #allocation6 [shape = 's32[1]{0}', space=sflag, size = 0x4, scoped, tag = 'scoped memory for tpu_custom_call.1']
    #allocation7 [shape = 'u8[8192]{0}', space=vmem, size = 0x2000, scoped, tag = 'output window, operand 0']
    %18 = vsyncpa [#allocation3], 0
    %s19 = scalar_lea.sflag [#allocation3], 1
    %20 = vsyncpa %s19, 0
    %21 = vsyncpa [#allocation6], 0
    %22 = vsyncpa [#allocation4], 0
    %s23 = scalar_lea.sflag [#allocation4], 1
    %24 = vsyncpa %s23, 0
    loop: start=0, step=1, limit=4
    $region2: #{tpu_custom_call.1} parent=1 // loop_pre_header
      _
    $region3: #{tpu_custom_call.1} parent=1 // loop_header
      %s26 = sphi 0, %s30
      %p27 = scmp.ge.s32.totalorder %s26, 4
      %s36 = sphi 0, %s38
      %s39 = sphi 0, %s36
      %s40 = sphi 0, %s39
      %s56 = sphi 0, %s40
      %s60 = sphi 0, %s60
      %s62 = sphi 0, %s60
      %s63 = sphi 0, %s62
      %s77 = sphi 0, %s63
      %s81 = sphi 0, %s81
      %s83 = sphi 0, %s81
      %s84 = sphi 0, %s83
      %s98 = sphi 0, %s84
      %s102 = sphi 0, %s102
      %s104 = sphi 0, %s102
      %s105 = sphi 0, %s104
      %s119 = sphi 0, %s105
      %s123 = sphi 0, %s123
      %s125 = sphi 0, %s123
      %s126 = sphi 0, %s125
      %s140 = sphi 0, %s126
      %s144 = sphi 0, %s144
      %s146 = sphi 0, %s144
      %s147 = sphi 0, %s146
      %s161 = sphi 0, %s147
      %s165 = sphi 0, %s165
      %s167 = sphi 0, %s165
      %s168 = sphi 0, %s167
      %s182 = sphi 0, %s168
      %s186 = sphi 0, %s186
      %s188 = sphi 0, %s186
      %s189 = sphi 0, %s188
      %s203 = sphi 0, %s189
      %s207 = sphi 0, %s207
      %s209 = sphi 0, %s207
      %s210 = sphi 0, %s209
      %s224 = sphi 0, %s210
      %s228 = sphi 0, %s228
      %s230 = sphi 0, %s228
      %s231 = sphi 0, %s230
      %s245 = sphi 0, %s231
      %s249 = sphi 0, %s249
      %s251 = sphi 0, %s249
      %s252 = sphi 0, %s251
      %s266 = sphi 0, %s252
      %s270 = sphi 0, %s270
      %s272 = sphi 0, %s270
      %s273 = sphi 0, %s272
      %s287 = sphi 0, %s273
      %s291 = sphi 0, %s291
      %s293 = sphi 0, %s291
      %s294 = sphi 0, %s293
      %s308 = sphi 0, %s294
      %s314 = sphi 0, %s316
      %s317 = sphi 0, %s314
      %s318 = sphi 0, %s317
      %s334 = sphi 0, %s318
    $region4: #{tpu_custom_call.1} parent=1 // loop_header_branch
      %29 = sbr.rel (%p27) target = $region8
    $region5: #{tpu_custom_call.1} parent=1 // loop_body
      %s31 = ssub.s32 %s26, 1
      %s32 = ssub.s32 %s26, 2
      %s33 = sadd.s32 %s26, 1
      %s34 = ssub.s32 %s26, %s33
      %p35 = scmp.eq.s32.totalorder %s34, 0
      %s37 = sadd.s32 %s36, 1
      %s38 = scalar_select %p35, %s36, %s37
      %p41 = pneg %p35
      %p42 = scmp.eq.s32.totalorder %s26, 1
      %p43 = por %p41, %p42
      %p44 = scmp.ne.s32.totalorder %s36, %s39
      %p45 = scmp.eq.s32.totalorder %s26, 0
      %p46 = por %p44, %p45
      %p47 = scmp.ne.s32.totalorder %s36, %s39
      %p48 = scmp.eq.s32.totalorder %s31, 1
      %p49 = por %p47, %p48
      %p50 = scmp.ne.s32.totalorder %s39, %s40
      %p51 = scmp.eq.s32.totalorder %s31, 0
      %p52 = por %p50, %p51
      %p53 = scmp.ne.s32.totalorder %s39, %s40
      %p54 = scmp.eq.s32.totalorder %s32, 1
      %p55 = por %p53, %p54
      %p57 = scmp.ne.s32.totalorder %s40, %s56
      %p58 = scmp.eq.s32.totalorder %s32, 0
      %p59 = por %p57, %p58
      %s61 = sadd.s32 %s60, 1
      %p64 = scmp.eq.s32.totalorder %s26, 1
      %p65 = scmp.ne.s32.totalorder %s60, %s62
      %p66 = scmp.eq.s32.totalorder %s26, 0
      %p67 = por %p65, %p66
      %p68 = scmp.ne.s32.totalorder %s60, %s62
      %p69 = scmp.eq.s32.totalorder %s31, 1
      %p70 = por %p68, %p69
      %p71 = scmp.ne.s32.totalorder %s62, %s63
      %p72 = scmp.eq.s32.totalorder %s31, 0
      %p73 = por %p71, %p72
      %p74 = scmp.ne.s32.totalorder %s62, %s63
      %p75 = scmp.eq.s32.totalorder %s32, 1
      %p76 = por %p74, %p75
      %p78 = scmp.ne.s32.totalorder %s63, %s77
      %p79 = scmp.eq.s32.totalorder %s32, 0
      %p80 = por %p78, %p79
      %s82 = sadd.s32 %s81, 1
      %p85 = scmp.eq.s32.totalorder %s26, 1
      %p86 = scmp.ne.s32.totalorder %s81, %s83
      %p87 = scmp.eq.s32.totalorder %s26, 0
      %p88 = por %p86, %p87
      %p89 = scmp.ne.s32.totalorder %s81, %s83
      %p90 = scmp.eq.s32.totalorder %s31, 1
      %p91 = por %p89, %p90
      %p92 = scmp.ne.s32.totalorder %s83, %s84
      %p93 = scmp.eq.s32.totalorder %s31, 0
      %p94 = por %p92, %p93
      %p95 = scmp.ne.s32.totalorder %s83, %s84
      %p96 = scmp.eq.s32.totalorder %s32, 1
      %p97 = por %p95, %p96
      %p99 = scmp.ne.s32.totalorder %s84, %s98
      %p100 = scmp.eq.s32.totalorder %s32, 0
      %p101 = por %p99, %p100
      %s103 = sadd.s32 %s102, 1
      %p106 = scmp.eq.s32.totalorder %s26, 1
      %p107 = scmp.ne.s32.totalorder %s102, %s104
      %p108 = scmp.eq.s32.totalorder %s26, 0
      %p109 = por %p107, %p108
      %p110 = scmp.ne.s32.totalorder %s102, %s104
      %p111 = scmp.eq.s32.totalorder %s31, 1
      %p112 = por %p110, %p111
      %p113 = scmp.ne.s32.totalorder %s104, %s105
      %p114 = scmp.eq.s32.totalorder %s31, 0
      %p115 = por %p113, %p114
      %p116 = scmp.ne.s32.totalorder %s104, %s105
      %p117 = scmp.eq.s32.totalorder %s32, 1
      %p118 = por %p116, %p117
      %p120 = scmp.ne.s32.totalorder %s105, %s119
      %p121 = scmp.eq.s32.totalorder %s32, 0
      %p122 = por %p120, %p121
      %s124 = sadd.s32 %s123, 1
      %p127 = scmp.eq.s32.totalorder %s26, 1
      %p128 = scmp.ne.s32.totalorder %s123, %s125
      %p129 = scmp.eq.s32.totalorder %s26, 0
      %p130 = por %p128, %p129
      %p131 = scmp.ne.s32.totalorder %s123, %s125
      %p132 = scmp.eq.s32.totalorder %s31, 1
      %p133 = por %p131, %p132
      %p134 = scmp.ne.s32.totalorder %s125, %s126
      %p135 = scmp.eq.s32.totalorder %s31, 0
      %p136 = por %p134, %p135
      %p137 = scmp.ne.s32.totalorder %s125, %s126
      %p138 = scmp.eq.s32.totalorder %s32, 1
      %p139 = por %p137, %p138
      %p141 = scmp.ne.s32.totalorder %s126, %s140
      %p142 = scmp.eq.s32.totalorder %s32, 0
      %p143 = por %p141, %p142
      %s145 = sadd.s32 %s144, 1
      %p148 = scmp.eq.s32.totalorder %s26, 1
      %p149 = scmp.ne.s32.totalorder %s144, %s146
      %p150 = scmp.eq.s32.totalorder %s26, 0
      %p151 = por %p149, %p150
      %p152 = scmp.ne.s32.totalorder %s144, %s146
      %p153 = scmp.eq.s32.totalorder %s31, 1
      %p154 = por %p152, %p153
      %p155 = scmp.ne.s32.totalorder %s146, %s147
      %p156 = scmp.eq.s32.totalorder %s31, 0
      %p157 = por %p155, %p156
      %p158 = scmp.ne.s32.totalorder %s146, %s147
      %p159 = scmp.eq.s32.totalorder %s32, 1
      %p160 = por %p158, %p159
      %p162 = scmp.ne.s32.totalorder %s147, %s161
      %p163 = scmp.eq.s32.totalorder %s32, 0
      %p164 = por %p162, %p163
      %s166 = sadd.s32 %s165, 1
      %p169 = scmp.eq.s32.totalorder %s26, 1
      %p170 = scmp.ne.s32.totalorder %s165, %s167
      %p171 = scmp.eq.s32.totalorder %s26, 0
      %p172 = por %p170, %p171
      %p173 = scmp.ne.s32.totalorder %s165, %s167
      %p174 = scmp.eq.s32.totalorder %s31, 1
      %p175 = por %p173, %p174
      %p176 = scmp.ne.s32.totalorder %s167, %s168
      %p177 = scmp.eq.s32.totalorder %s31, 0
      %p178 = por %p176, %p177
      %p179 = scmp.ne.s32.totalorder %s167, %s168
      %p180 = scmp.eq.s32.totalorder %s32, 1
      %p181 = por %p179, %p180
      %p183 = scmp.ne.s32.totalorder %s168, %s182
      %p184 = scmp.eq.s32.totalorder %s32, 0
      %p185 = por %p183, %p184
      %s187 = sadd.s32 %s186, 1
      %p190 = scmp.eq.s32.totalorder %s26, 1
      %p191 = scmp.ne.s32.totalorder %s186, %s188
      %p192 = scmp.eq.s32.totalorder %s26, 0
      %p193 = por %p191, %p192
      %p194 = scmp.ne.s32.totalorder %s186, %s188
      %p195 = scmp.eq.s32.totalorder %s31, 1
      %p196 = por %p194, %p195
      %p197 = scmp.ne.s32.totalorder %s188, %s189
      %p198 = scmp.eq.s32.totalorder %s31, 0
      %p199 = por %p197, %p198
      %p200 = scmp.ne.s32.totalorder %s188, %s189
      %p201 = scmp.eq.s32.totalorder %s32, 1
      %p202 = por %p200, %p201
      %p204 = scmp.ne.s32.totalorder %s189, %s203
      %p205 = scmp.eq.s32.totalorder %s32, 0
      %p206 = por %p204, %p205
      %s208 = sadd.s32 %s207, 1
      %p211 = scmp.eq.s32.totalorder %s26, 1
      %p212 = scmp.ne.s32.totalorder %s207, %s209
      %p213 = scmp.eq.s32.totalorder %s26, 0
      %p214 = por %p212, %p213
      %p215 = scmp.ne.s32.totalorder %s207, %s209
      %p216 = scmp.eq.s32.totalorder %s31, 1
      %p217 = por %p215, %p216
      %p218 = scmp.ne.s32.totalorder %s209, %s210
      %p219 = scmp.eq.s32.totalorder %s31, 0
      %p220 = por %p218, %p219
      %p221 = scmp.ne.s32.totalorder %s209, %s210
      %p222 = scmp.eq.s32.totalorder %s32, 1
      %p223 = por %p221, %p222
      %p225 = scmp.ne.s32.totalorder %s210, %s224
      %p226 = scmp.eq.s32.totalorder %s32, 0
      %p227 = por %p225, %p226
      %s229 = sadd.s32 %s228, 1
      %p232 = scmp.eq.s32.totalorder %s26, 1
      %p233 = scmp.ne.s32.totalorder %s228, %s230
      %p234 = scmp.eq.s32.totalorder %s26, 0
      %p235 = por %p233, %p234
      %p236 = scmp.ne.s32.totalorder %s228, %s230
      %p237 = scmp.eq.s32.totalorder %s31, 1
      %p238 = por %p236, %p237
      %p239 = scmp.ne.s32.totalorder %s230, %s231
      %p240 = scmp.eq.s32.totalorder %s31, 0
      %p241 = por %p239, %p240
      %p242 = scmp.ne.s32.totalorder %s230, %s231
      %p243 = scmp.eq.s32.totalorder %s32, 1
      %p244 = por %p242, %p243
      %p246 = scmp.ne.s32.totalorder %s231, %s245
      %p247 = scmp.eq.s32.totalorder %s32, 0
      %p248 = por %p246, %p247
      %s250 = sadd.s32 %s249, 1
      %p253 = scmp.eq.s32.totalorder %s26, 1
      %p254 = scmp.ne.s32.totalorder %s249, %s251
      %p255 = scmp.eq.s32.totalorder %s26, 0
      %p256 = por %p254, %p255
      %p257 = scmp.ne.s32.totalorder %s249, %s251
      %p258 = scmp.eq.s32.totalorder %s31, 1
      %p259 = por %p257, %p258
      %p260 = scmp.ne.s32.totalorder %s251, %s252
      %p261 = scmp.eq.s32.totalorder %s31, 0
      %p262 = por %p260, %p261
      %p263 = scmp.ne.s32.totalorder %s251, %s252
      %p264 = scmp.eq.s32.totalorder %s32, 1
      %p265 = por %p263, %p264
      %p267 = scmp.ne.s32.totalorder %s252, %s266
      %p268 = scmp.eq.s32.totalorder %s32, 0
      %p269 = por %p267, %p268
      %s271 = sadd.s32 %s270, 1
      %p274 = scmp.eq.s32.totalorder %s26, 1
      %p275 = scmp.ne.s32.totalorder %s270, %s272
      %p276 = scmp.eq.s32.totalorder %s26, 0
      %p277 = por %p275, %p276
      %p278 = scmp.ne.s32.totalorder %s270, %s272
      %p279 = scmp.eq.s32.totalorder %s31, 1
      %p280 = por %p278, %p279
      %p281 = scmp.ne.s32.totalorder %s272, %s273
      %p282 = scmp.eq.s32.totalorder %s31, 0
      %p283 = por %p281, %p282
      %p284 = scmp.ne.s32.totalorder %s272, %s273
      %p285 = scmp.eq.s32.totalorder %s32, 1
      %p286 = por %p284, %p285
      %p288 = scmp.ne.s32.totalorder %s273, %s287
      %p289 = scmp.eq.s32.totalorder %s32, 0
      %p290 = por %p288, %p289
      %s292 = sadd.s32 %s291, 1
      %p295 = scmp.eq.s32.totalorder %s26, 1
      %p296 = scmp.ne.s32.totalorder %s291, %s293
      %p297 = scmp.eq.s32.totalorder %s26, 0
      %p298 = por %p296, %p297
      %p299 = scmp.ne.s32.totalorder %s291, %s293
      %p300 = scmp.eq.s32.totalorder %s31, 1
      %p301 = por %p299, %p300
      %p302 = scmp.ne.s32.totalorder %s293, %s294
      %p303 = scmp.eq.s32.totalorder %s31, 0
      %p304 = por %p302, %p303
      %p305 = scmp.ne.s32.totalorder %s293, %s294
      %p306 = scmp.eq.s32.totalorder %s32, 1
      %p307 = por %p305, %p306
      %p309 = scmp.ne.s32.totalorder %s294, %s308
      %p310 = scmp.eq.s32.totalorder %s32, 0
      %p311 = por %p309, %p310
      %s312 = ssub.s32 %s26, %s33
      %p313 = scmp.eq.s32.totalorder %s312, 0
      %s315 = sadd.s32 %s314, 1
      %s316 = scalar_select %p313, %s314, %s315
      %p319 = pneg %p313
      %p320 = scmp.eq.s32.totalorder %s26, 1
      %p321 = por %p319, %p320
      %p322 = scmp.ne.s32.totalorder %s314, %s317
      %p323 = scmp.eq.s32.totalorder %s26, 0
      %p324 = por %p322, %p323
      %p325 = scmp.ne.s32.totalorder %s314, %s317
      %p326 = scmp.eq.s32.totalorder %s31, 1
      %p327 = por %p325, %p326
      %p328 = scmp.ne.s32.totalorder %s317, %s318
      %p329 = scmp.eq.s32.totalorder %s31, 0
      %p330 = por %p328, %p329
      %p331 = scmp.ne.s32.totalorder %s317, %s318
      %p332 = scmp.eq.s32.totalorder %s32, 1
      %p333 = por %p331, %p332
      %p335 = scmp.ne.s32.totalorder %s318, %s334
      %p336 = scmp.eq.s32.totalorder %s32, 0
      %p337 = por %p335, %p336
      %p338 = scmp.le.s32.totalorder 1, %s26
      %p339 = scmp.lt.s32.totalorder %s26, 3
      %p340 = pnand %p338, %p339
      %p341 = pneg %p340
      // Predicated region
      $region9: #{tpu_custom_call.1} parent=5 // pred_check
        _
      $region10: #{tpu_custom_call.1} parent=5 // pred_check_branch
        %343 = sbr.rel (%p340) target = $region12
      $region11: #{tpu_custom_call.1} parent=5 // pred_region
        %s344 = ssub.s32 %s26, 1
        // Predicated region
        $region13: #{tpu_custom_call.1} parent=11 // pred_check
          %p345 = pneg %p73
        $region14: #{tpu_custom_call.1} parent=11 // pred_check_branch
          %347 = sbr.rel (%p345) target = $region16
        $region15: #{tpu_custom_call.1} parent=11 // pred_region
          %349 = vsyncadd [#allocation6], 0
          %s351 = sshll.u32 %s1, 4
          %s352 = int_to_ptr.hbm [resolvable:$true] %s351
          %s353 = sshll.u32 [#allocation5], 4
          %s354 = int_to_ptr.vmem [resolvable:$true] %s353
          %356 = dma.hbm_to_vmem [thread:$0]  %s352, 16, %s354, [#allocation6]
        $region16: #{tpu_custom_call.1} parent=11 // pred_fallthru
          _
        // Predicated region
        $region17: #{tpu_custom_call.1} parent=11 // pred_check
          %p357 = pneg %p94
        $region18: #{tpu_custom_call.1} parent=11 // pred_check_branch
          %359 = sbr.rel (%p357) target = $region20
        $region19: #{tpu_custom_call.1} parent=11 // pred_region
          _
        $region20: #{tpu_custom_call.1} parent=11 // pred_fallthru
          _
        // Predicated region
        $region21: #{tpu_custom_call.1} parent=11 // pred_check
          %p360 = pneg %p115
        $region22: #{tpu_custom_call.1} parent=11 // pred_check_branch
          %362 = sbr.rel (%p360) target = $region24
        $region23: #{tpu_custom_call.1} parent=11 // pred_region
          _
        $region24: #{tpu_custom_call.1} parent=11 // pred_fallthru
          _
        // Predicated region
        $region25: #{tpu_custom_call.1} parent=11 // pred_check
          %p363 = pneg %p136
        $region26: #{tpu_custom_call.1} parent=11 // pred_check_branch
          %365 = sbr.rel (%p363) target = $region28
        $region27: #{tpu_custom_call.1} parent=11 // pred_region
          _
        $region28: #{tpu_custom_call.1} parent=11 // pred_fallthru
          _
        // Predicated region
        $region29: #{tpu_custom_call.1} parent=11 // pred_check
          %p366 = pneg %p157
        $region30: #{tpu_custom_call.1} parent=11 // pred_check_branch
          %368 = sbr.rel (%p366) target = $region32
        $region31: #{tpu_custom_call.1} parent=11 // pred_region
          _
        $region32: #{tpu_custom_call.1} parent=11 // pred_fallthru
          _
        // Predicated region
        $region33: #{tpu_custom_call.1} parent=11 // pred_check
          %p369 = pneg %p178
        $region34: #{tpu_custom_call.1} parent=11 // pred_check_branch
          %371 = sbr.rel (%p369) target = $region36
        $region35: #{tpu_custom_call.1} parent=11 // pred_region
          _
        $region36: #{tpu_custom_call.1} parent=11 // pred_fallthru
          _
        // Predicated region
        $region37: #{tpu_custom_call.1} parent=11 // pred_check
          %p372 = pneg %p199
        $region38: #{tpu_custom_call.1} parent=11 // pred_check_branch
          %374 = sbr.rel (%p372) target = $region40
        $region39: #{tpu_custom_call.1} parent=11 // pred_region
          _
        $region40: #{tpu_custom_call.1} parent=11 // pred_fallthru
          _
        // Predicated region
        $region41: #{tpu_custom_call.1} parent=11 // pred_check
          %p375 = pneg %p220
        $region42: #{tpu_custom_call.1} parent=11 // pred_check_branch
          %377 = sbr.rel (%p375) target = $region44
        $region43: #{tpu_custom_call.1} parent=11 // pred_region
          _
        $region44: #{tpu_custom_call.1} parent=11 // pred_fallthru
          _
        // Predicated region
        $region45: #{tpu_custom_call.1} parent=11 // pred_check
          %p378 = pneg %p241
        $region46: #{tpu_custom_call.1} parent=11 // pred_check_branch
          %380 = sbr.rel (%p378) target = $region48
        $region47: #{tpu_custom_call.1} parent=11 // pred_region
          _
        $region48: #{tpu_custom_call.1} parent=11 // pred_fallthru
          _
        // Predicated region
        $region49: #{tpu_custom_call.1} parent=11 // pred_check
          %p381 = pneg %p262
        $region50: #{tpu_custom_call.1} parent=11 // pred_check_branch
          %383 = sbr.rel (%p381) target = $region52
        $region51: #{tpu_custom_call.1} parent=11 // pred_region
          _
        $region52: #{tpu_custom_call.1} parent=11 // pred_fallthru
          _
        // Predicated region
        $region53: #{tpu_custom_call.1} parent=11 // pred_check
          %p384 = pneg %p283
        $region54: #{tpu_custom_call.1} parent=11 // pred_check_branch
          %386 = sbr.rel (%p384) target = $region56
        $region55: #{tpu_custom_call.1} parent=11 // pred_region
          _
        $region56: #{tpu_custom_call.1} parent=11 // pred_fallthru
          _
        // Predicated region
        $region57: #{tpu_custom_call.1} parent=11 // pred_check
          %p387 = pneg %p304
        $region58: #{tpu_custom_call.1} parent=11 // pred_check_branch
          %389 = sbr.rel (%p387) target = $region60
        $region59: #{tpu_custom_call.1} parent=11 // pred_region
          _
        $region60: #{tpu_custom_call.1} parent=11 // pred_fallthru
          _
      $region12: #{tpu_custom_call.1} parent=5 // pred_fallthru
        _
      %p390 = scmp.lt.s32.totalorder %s26, 2
      // Predicated region
      $region61: #{tpu_custom_call.1} parent=5 // pred_check
        %p391 = pneg %p390
      $region62: #{tpu_custom_call.1} parent=5 // pred_check_branch
        %393 = sbr.rel (%p391) target = $region64
      $region63: #{tpu_custom_call.1} parent=5 // pred_region
        // Predicated region
        $region65: #{tpu_custom_call.1} parent=63 // pred_check
          %p394 = pneg %p46
        $region66: #{tpu_custom_call.1} parent=63 // pred_check_branch
          %396 = sbr.rel (%p394) target = $region68
        $region67: #{tpu_custom_call.1} parent=63 // pred_region
          %s397 = sand.u32 %s36, 1
          %s398 = scalar_lea.sflag [#allocation3], %s397
          %s399 = sand.u32 %s36, 1
          %s400 = smul.addr %s399, 8
          %s401 = scalar_lea.vmem [#allocation2], %s400
          %403 = vsyncadd %s398, 0
          %s404 = smul.addr %s26, 8
          %s405 = scalar_lea.hbm %s0, %s404
          %s407 = sshll.u32 %s405, 4
          %s408 = int_to_ptr.hbm [resolvable:$true] %s407
          %s409 = sshll.u32 %s401, 4
          %s410 = int_to_ptr.vmem [resolvable:$true] %s409
          %412 = dma.hbm_to_vmem [thread:$0]  %s408, 128, %s410, %s398
        $region68: #{tpu_custom_call.1} parent=63 // pred_fallthru
          _
      $region64: #{tpu_custom_call.1} parent=5 // pred_fallthru
        _
      %p413 = scmp.le.s32.totalorder 1, %s26
      %p414 = scmp.lt.s32.totalorder %s26, 3
      %p415 = pnand %p413, %p414
      %p416 = pneg %p415
      // Predicated region
      $region69: #{tpu_custom_call.1} parent=5 // pred_check
        _
      $region70: #{tpu_custom_call.1} parent=5 // pred_check_branch
        %418 = sbr.rel (%p415) target = $region72
      $region71: #{tpu_custom_call.1} parent=5 // pred_region
        %s419 = ssub.s32 %s26, 1
        %s420 = sand.u32 %s39, 1
        %s421 = scalar_lea.sflag [#allocation3], %s420
        %s422 = sand.u32 %s39, 1
        %s423 = smul.addr %s422, 8
        %s424 = scalar_lea.vmem [#allocation2], %s423
        // Predicated region
        $region73: #{tpu_custom_call.1} parent=71 // pred_check
          %p425 = pneg %p52
        $region74: #{tpu_custom_call.1} parent=71 // pred_check_branch
          %427 = sbr.rel (%p425) target = $region76
        $region75: #{tpu_custom_call.1} parent=71 // pred_region
          %429 = dma.done %s421, 128
        $region76: #{tpu_custom_call.1} parent=71 // pred_fallthru
          _
        // Predicated region
        $region77: #{tpu_custom_call.1} parent=71 // pred_check
          %p430 = pneg %p73
        $region78: #{tpu_custom_call.1} parent=71 // pred_check_branch
          %432 = sbr.rel (%p430) target = $region80
        $region79: #{tpu_custom_call.1} parent=71 // pred_region
          %434 = dma.done [#allocation6], 16
        $region80: #{tpu_custom_call.1} parent=71 // pred_fallthru
          _
        %s435 = sand.u32 %s39, 1
        %s436 = scalar_lea.sflag [#allocation3], %s435
        %s437 = sand.u32 %s39, 1
        %s438 = smul.addr %s437, 8
        %s439 = scalar_lea.vmem [#allocation2], %s438
        %p440 = pneg %p52
        %p441 = pneg %p49
        %p442 = pneg %p73
        %p443 = pneg %p70
        %p444 = pneg %p94
        %p445 = pneg %p91
        %p446 = pneg %p115
        %p447 = pneg %p112
        %p448 = pneg %p136
        %p449 = pneg %p133
        %p450 = pneg %p157
        %p451 = pneg %p154
        %p452 = pneg %p178
        %p453 = pneg %p175
        %p454 = pneg %p199
        %p455 = pneg %p196
        %p456 = pneg %p220
        %p457 = pneg %p217
        %p458 = pneg %p241
        %p459 = pneg %p238
        %p460 = pneg %p262
        %p461 = pneg %p259
        %p462 = pneg %p283
        %p463 = pneg %p280
        %p464 = pneg %p304
        %p465 = pneg %p301
        %p466 = pneg %p330
        %p467 = pneg %p327
        %s468 = sand.u32 %s317, 1
        %s469 = scalar_lea.sflag [#allocation4], %s468
        %s470 = sand.u32 %s317, 1
        %s471 = smul.addr %s470, 8
        %s472 = scalar_lea.vmem [#allocation7], %s471
        %v473 = vld [vmem:[%s424] sm:$0xff]
        %v474 = vld [vmem:[#allocation5] sm:$0x1]
        %v475 = vld [vmem:[%s2] sm:$0x1]
        %vm476 = vcmask 261120
        %v477 = vsel %vm476, %v473, 0.0
        %478 = vadd.xlane.f32.xlu0 %v477
        %v479 = vpop.xlane.xlu0 %478
        %v480 = vrcp.pop 32.0
        %v481 = vmul.f32 32.0, %v480
        %v482 = vsub.f32 1.0, %v481
        %v483 = vmul.f32 %v480, %v482
        %v484 = vadd.f32 %v480, %v483
        %vm485 = vweird.f32 %v480
        %v486 = vsel %vm485, %v480, %v484
        %v487 = vmul.f32 %v479, %v486
        %v488 = vsub.f32 %v473, %v487
        %v489 = vmul.f32 %v488, %v488
        %v490 = vsel %vm476, %v489, 0.0
        %491 = vadd.xlane.f32.xlu0 %v490
        %v492 = vpop.xlane.xlu0 %491
        %v493 = vmul.f32 %v492, %v486
        %v494 = vadd.f32 %v493, 1e-05
        %v495 = vrsqrt.pop %v494
        %v496 = vmul.f32 %v495, %v494
        %v497 = vmul.f32 %v496, %v495
        %v498 = vmul.f32 0.5, %v497
        %v499 = vsub.f32 1.5, %v498
        %v500 = vmul.f32 %v495, %v499
        %vm501 = vweird.f32 %v494
        %vm502 = vweird.f32 %v495
        %vm503 = vmor %vm501, %vm502
        %v504 = vsel %vm503, %v495, %v500
        %v505 = vmul.f32 %v488, %v504
        %v507 = vperm.slane %v474, 0
        %v509 = vmul.f32 %v505, %v507
        %v511 = vperm.slane %v475, 0
        %v513 = vadd.f32 %v509, %v511
        %v514 = vld [vmem:[%s3] sm:$0xff]
        %v515 = vld [vmem:[%s3 + $0x8] sm:$0xff]
        %v516 = vld [vmem:[%s3 + $0x10] sm:$0xff]
        %v517 = vld [vmem:[%s3 + $0x18] sm:$0xff]
        %v518 = vld [vmem:[%s4] sm:$0x1]
        %v520 = vperm.slane %v518, 0
        %v523 = vsel %vm476, %v513, 0
        %525 = vmatpush.msra.mxu0 0.0
        %526 = vmatpush.msra.mxu0 0.0
        %527 = vmatpush.msra.mxu0 0.0
        %528 = vmatpush.msra.mxu0 0.0
        %529 = vmatpush.msra.mxu0 0.0
        %530 = vmatpush.msra.mxu0 0.0
        %531 = vmatpush.msra.mxu0 0.0
        %532 = vmatpush.msra.mxu0 0.0
        %533 = vmatpush.msra.mxu0 0.0
        %534 = vmatpush.msra.mxu0 0.0
        %535 = vmatpush.msra.mxu0 0.0
        %536 = vmatpush.msra.mxu0 0.0
        %537 = vmatpush.msra.mxu0 %v517
        %538 = vmatpush.msra.mxu0 %v516
        %539 = vmatpush.msra.mxu0 %v515
        %540 = vmatpush.msra.mxu0 %v514
        %541 = vmatmul.f32.gmra.mxu0 %v523
        %v542 = vpop.f32.mrf.mxu0
        %v543 = vadd.f32 %v520, %v542
        %544 = vdwg.mxu0
        %546 = vrot.lane.b32.xlu0 %v543, 120
        %v547 = vpop.permute.xlu0 %546
        %549 = vrot.lane.b32.xlu0 %v543, 112
        %v550 = vpop.permute.xlu0 %549
        %552 = vrot.lane.b32.xlu0 %v543, 104
        %v553 = vpop.permute.xlu0 %552
        %v555 = vrot.slane %v550, 4
        %vm556 = vcmask 1047556
        %v557 = vsel %vm556, %v555, %v543
        %v558 = vrot.slane %v543, 4
        %v559 = vsel %vm556, %v550, %v558
        %v561 = vunpack.c.l.s4 1983009808
        %v562 = vunpack.c.0.s8 %v561
        %v563 = vperm.slane %v557, %v562
        %v565 = vunpack.c.l.s4 1983009808
        %v566 = vunpack.c.0.s8 %v565
        %v567 = vperm.slane %v559, %v566
        %v568 = vrot.slane %v553, 4
        %v569 = vsel %vm556, %v568, %v547
        %v570 = vrot.slane %v547, 4
        %v571 = vsel %vm556, %v553, %v570
        %v573 = vunpack.c.l.s4 1983009808
        %v574 = vunpack.c.0.s8 %v573
        %v575 = vperm.slane %v569, %v574
        %v577 = vunpack.c.l.s4 1983009808
        %v578 = vunpack.c.0.s8 %v577
        %v579 = vperm.slane %v571, %v578
        %v580 = vrot.slane %v575, 4
        %v581 = vsel %vm556, %v580, %v563
        %v582 = vrot.slane %v563, 4
        %v583 = vsel %vm556, %v575, %v582
        %v585 = vunpack.c.l.s4 1934713408
        %v586 = vunpack.c.0.s8 %v585
        %v587 = vperm.slane %v581, %v586
        %v589 = vunpack.c.l.s4 1934713408
        %v590 = vunpack.c.0.s8 %v589
        %v591 = vperm.slane %v583, %v590
        %v592 = vrot.slane %v579, 4
        %v593 = vsel %vm556, %v592, %v567
        %v594 = vrot.slane %v567, 4
        %v595 = vsel %vm556, %v579, %v594
        %v597 = vunpack.c.l.s4 1934713408
        %v598 = vunpack.c.0.s8 %v597
        %v599 = vperm.slane %v593, %v598
        %v601 = vunpack.c.l.s4 1934713408
        %v602 = vunpack.c.0.s8 %v601
        %v603 = vperm.slane %v595, %v602
        %v604 = vrot.slane %v587, 4
        %v605 = vsel %vm556, 0.0, %v604
        %v606 = vrot.slane %v591, 4
        %v607 = vsel %vm556, 0.0, %v606
        %v608 = vrot.slane %v599, 4
        %v609 = vsel %vm556, 0.0, %v608
        %v610 = vrot.slane %v603, 4
        %v611 = vsel %vm556, 0.0, %v610
        %v612 = vsel %vm556, %v606, %v587
        %v614 = vunpack.c.l.s4 1983009808
        %v615 = vunpack.c.0.s8 %v614
        %v616 = vperm.slane %v612, %v615
        %v617 = vrot.slane %v607, 4
        %v618 = vsel %vm556, %v617, %v605
        %v620 = vunpack.c.l.s4 1983009808
        %v621 = vunpack.c.0.s8 %v620
        %v622 = vperm.slane %v618, %v621
        %v623 = vsel %vm556, %v610, %v599
        %v625 = vunpack.c.l.s4 1983009808
        %v626 = vunpack.c.0.s8 %v625
        %v627 = vperm.slane %v623, %v626
        %v628 = vrot.slane %v611, 4
        %v629 = vsel %vm556, %v628, %v609
        %v631 = vunpack.c.l.s4 1983009808
        %v632 = vunpack.c.0.s8 %v631
        %v633 = vperm.slane %v629, %v632
        %v634 = vrot.slane %v622, 4
        %v635 = vsel %vm556, %v634, %v616
        %v636 = vrot.slane %v616, 4
        %v637 = vsel %vm556, %v622, %v636
        %v639 = vunpack.c.l.s4 1934713408
        %v640 = vunpack.c.0.s8 %v639
        %v641 = vperm.slane %v635, %v640
        %v643 = vunpack.c.l.s4 1934713408
        %v644 = vunpack.c.0.s8 %v643
        %v645 = vperm.slane %v637, %v644
        %v646 = vrot.slane %v633, 4
        %v647 = vsel %vm556, %v646, %v627
        %v648 = vrot.slane %v627, 4
        %v649 = vsel %vm556, %v633, %v648
        %v651 = vunpack.c.l.s4 1934713408
        %v652 = vunpack.c.0.s8 %v651
        %v653 = vperm.slane %v647, %v652
        %v655 = vunpack.c.l.s4 1934713408
        %v656 = vunpack.c.0.s8 %v655
        %v657 = vperm.slane %v649, %v656
        %v658 = vrot.slane %v653, 4
        %v659 = vsel %vm556, %v658, %v641
        %v660 = vrot.slane %v641, 4
        %v661 = vsel %vm556, %v653, %v660
        %v662 = vrot.slane %v657, 4
        %v663 = vsel %vm556, %v662, %v645
        %v664 = vrot.slane %v645, 4
        %v665 = vsel %vm556, %v657, %v664
        %666 = vrot.lane.b32.xlu0 %v543, 96
        %v667 = vpop.permute.xlu0 %666
        %668 = vrot.lane.b32.xlu0 %v547, 96
        %v669 = vpop.permute.xlu0 %668
        %670 = vrot.lane.b32.xlu0 %v550, 96
        %v671 = vpop.permute.xlu0 %670
        %672 = vrot.lane.b32.xlu0 %v553, 96
        %v673 = vpop.permute.xlu0 %672
        %v678 = vrot.slane %v671, 4
        %v679 = vsel %vm556, %v678, %v667
        %v680 = vrot.slane %v667, 4
        %v681 = vsel %vm556, %v671, %v680
        %v683 = vunpack.c.l.s4 1983009808
        %v684 = vunpack.c.0.s8 %v683
        %v685 = vperm.slane %v679, %v684
        %v687 = vunpack.c.l.s4 1983009808
        %v688 = vunpack.c.0.s8 %v687
        %v689 = vperm.slane %v681, %v688
        %v690 = vrot.slane %v673, 4
        %v691 = vsel %vm556, %v690, %v669
        %v692 = vrot.slane %v669, 4
        %v693 = vsel %vm556, %v673, %v692
        %v695 = vunpack.c.l.s4 1983009808
        %v696 = vunpack.c.0.s8 %v695
        %v697 = vperm.slane %v691, %v696
        %v699 = vunpack.c.l.s4 1983009808
        %v700 = vunpack.c.0.s8 %v699
        %v701 = vperm.slane %v693, %v700
        %v702 = vrot.slane %v697, 4
        %v703 = vsel %vm556, %v702, %v685
        %v704 = vrot.slane %v685, 4
        %v705 = vsel %vm556, %v697, %v704
        %v707 = vunpack.c.l.s4 1934713408
        %v708 = vunpack.c.0.s8 %v707
        %v709 = vperm.slane %v703, %v708
        %v711 = vunpack.c.l.s4 1934713408
        %v712 = vunpack.c.0.s8 %v711
        %v713 = vperm.slane %v705, %v712
        %v714 = vrot.slane %v701, 4
        %v715 = vsel %vm556, %v714, %v689
        %v716 = vrot.slane %v689, 4
        %v717 = vsel %vm556, %v701, %v716
        %v719 = vunpack.c.l.s4 1934713408
        %v720 = vunpack.c.0.s8 %v719
        %v721 = vperm.slane %v715, %v720
        %v723 = vunpack.c.l.s4 1934713408
        %v724 = vunpack.c.0.s8 %v723
        %v725 = vperm.slane %v717, %v724
        %v726 = vrot.slane %v709, 4
        %v727 = vsel %vm556, 0.0, %v726
        %v728 = vrot.slane %v713, 4
        %v729 = vsel %vm556, 0.0, %v728
        %v730 = vrot.slane %v721, 4
        %v731 = vsel %vm556, 0.0, %v730
        %v732 = vrot.slane %v725, 4
        %v733 = vsel %vm556, 0.0, %v732
        %v734 = vsel %vm556, %v728, %v709
        %v736 = vunpack.c.l.s4 1983009808
        %v737 = vunpack.c.0.s8 %v736
        %v738 = vperm.slane %v734, %v737
        %v739 = vrot.slane %v729, 4
        %v740 = vsel %vm556, %v739, %v727
        %v742 = vunpack.c.l.s4 1983009808
        %v743 = vunpack.c.0.s8 %v742
        %v744 = vperm.slane %v740, %v743
        %v745 = vsel %vm556, %v732, %v721
        %v747 = vunpack.c.l.s4 1983009808
        %v748 = vunpack.c.0.s8 %v747
        %v749 = vperm.slane %v745, %v748
        %v750 = vrot.slane %v733, 4
        %v751 = vsel %vm556, %v750, %v731
        %v753 = vunpack.c.l.s4 1983009808
        %v754 = vunpack.c.0.s8 %v753
        %v755 = vperm.slane %v751, %v754
        %v756 = vrot.slane %v744, 4
        %v757 = vsel %vm556, %v756, %v738
        %v758 = vrot.slane %v738, 4
        %v759 = vsel %vm556, %v744, %v758
        %v761 = vunpack.c.l.s4 1934713408
        %v762 = vunpack.c.0.s8 %v761
        %v763 = vperm.slane %v757, %v762
        %v765 = vunpack.c.l.s4 1934713408
        %v766 = vunpack.c.0.s8 %v765
        %v767 = vperm.slane %v759, %v766
        %v768 = vrot.slane %v755, 4
        %v769 = vsel %vm556, %v768, %v749
        %v770 = vrot.slane %v749, 4
        %v771 = vsel %vm556, %v755, %v770
        %v773 = vunpack.c.l.s4 1934713408
        %v774 = vunpack.c.0.s8 %v773
        %v775 = vperm.slane %v769, %v774
        %v777 = vunpack.c.l.s4 1934713408
        %v778 = vunpack.c.0.s8 %v777
        %v779 = vperm.slane %v771, %v778
        %v780 = vrot.slane %v775, 4
        %v781 = vsel %vm556, %v780, %v763
        %v782 = vrot.slane %v763, 4
        %v783 = vsel %vm556, %v775, %v782
        %v784 = vrot.slane %v779, 4
        %v785 = vsel %vm556, %v784, %v767
        %v786 = vrot.slane %v767, 4
        %v787 = vsel %vm556, %v779, %v786
        %788 = vrot.lane.b32.xlu0 %v543, 64
        %v789 = vpop.permute.xlu0 %788
        %790 = vrot.lane.b32.xlu0 %v547, 64
        %v791 = vpop.permute.xlu0 %790
        %792 = vrot.lane.b32.xlu0 %v550, 64
        %v793 = vpop.permute.xlu0 %792
        %794 = vrot.lane.b32.xlu0 %v553, 64
        %v795 = vpop.permute.xlu0 %794
        %v800 = vrot.slane %v793, 4
        %v801 = vsel %vm556, %v800, %v789
        %v802 = vrot.slane %v789, 4
        %v803 = vsel %vm556, %v793, %v802
        %v805 = vunpack.c.l.s4 1983009808
        %v806 = vunpack.c.0.s8 %v805
        %v807 = vperm.slane %v801, %v806
        %v809 = vunpack.c.l.s4 1983009808
        %v810 = vunpack.c.0.s8 %v809
        %v811 = vperm.slane %v803, %v810
        %v812 = vrot.slane %v795, 4
        %v813 = vsel %vm556, %v812, %v791
        %v814 = vrot.slane %v791, 4
        %v815 = vsel %vm556, %v795, %v814
        %v817 = vunpack.c.l.s4 1983009808
        %v818 = vunpack.c.0.s8 %v817
        %v819 = vperm.slane %v813, %v818
        %v821 = vunpack.c.l.s4 1983009808
        %v822 = vunpack.c.0.s8 %v821
        %v823 = vperm.slane %v815, %v822
        %v824 = vrot.slane %v819, 4
        %v825 = vsel %vm556, %v824, %v807
        %v826 = vrot.slane %v807, 4
        %v827 = vsel %vm556, %v819, %v826
        %v829 = vunpack.c.l.s4 1934713408
        %v830 = vunpack.c.0.s8 %v829
        %v831 = vperm.slane %v825, %v830
        %v833 = vunpack.c.l.s4 1934713408
        %v834 = vunpack.c.0.s8 %v833
        %v835 = vperm.slane %v827, %v834
        %v836 = vrot.slane %v823, 4
        %v837 = vsel %vm556, %v836, %v811
        %v838 = vrot.slane %v811, 4
        %v839 = vsel %vm556, %v823, %v838
        %v841 = vunpack.c.l.s4 1934713408
        %v842 = vunpack.c.0.s8 %v841
        %v843 = vperm.slane %v837, %v842
        %v845 = vunpack.c.l.s4 1934713408
        %v846 = vunpack.c.0.s8 %v845
        %v847 = vperm.slane %v839, %v846
        %v848 = vrot.slane %v831, 4
        %v849 = vsel %vm556, 0.0, %v848
        %v850 = vrot.slane %v835, 4
        %v851 = vsel %vm556, 0.0, %v850
        %v852 = vrot.slane %v843, 4
        %v853 = vsel %vm556, 0.0, %v852
        %v854 = vrot.slane %v847, 4
        %v855 = vsel %vm556, 0.0, %v854
        %v856 = vsel %vm556, %v850, %v831
        %v858 = vunpack.c.l.s4 1983009808
        %v859 = vunpack.c.0.s8 %v858
        %v860 = vperm.slane %v856, %v859
        %v861 = vrot.slane %v851, 4
        %v862 = vsel %vm556, %v861, %v849
        %v864 = vunpack.c.l.s4 1983009808
        %v865 = vunpack.c.0.s8 %v864
        %v866 = vperm.slane %v862, %v865
        %v867 = vsel %vm556, %v854, %v843
        %v869 = vunpack.c.l.s4 1983009808
        %v870 = vunpack.c.0.s8 %v869
        %v871 = vperm.slane %v867, %v870
        %v872 = vrot.slane %v855, 4
        %v873 = vsel %vm556, %v872, %v853
        %v875 = vunpack.c.l.s4 1983009808
        %v876 = vunpack.c.0.s8 %v875
        %v877 = vperm.slane %v873, %v876
        %v878 = vrot.slane %v866, 4
        %v879 = vsel %vm556, %v878, %v860
        %v880 = vrot.slane %v860, 4
        %v881 = vsel %vm556, %v866, %v880
        %v883 = vunpack.c.l.s4 1934713408
        %v884 = vunpack.c.0.s8 %v883
        %v885 = vperm.slane %v879, %v884
        %v887 = vunpack.c.l.s4 1934713408
        %v888 = vunpack.c.0.s8 %v887
        %v889 = vperm.slane %v881, %v888
        %v890 = vrot.slane %v877, 4
        %v891 = vsel %vm556, %v890, %v871
        %v892 = vrot.slane %v871, 4
        %v893 = vsel %vm556, %v877, %v892
        %v895 = vunpack.c.l.s4 1934713408
        %v896 = vunpack.c.0.s8 %v895
        %v897 = vperm.slane %v891, %v896
        %v899 = vunpack.c.l.s4 1934713408
        %v900 = vunpack.c.0.s8 %v899
        %v901 = vperm.slane %v893, %v900
        %v902 = vrot.slane %v897, 4
        %v903 = vsel %vm556, %v902, %v885
        %v904 = vrot.slane %v885, 4
        %v905 = vsel %vm556, %v897, %v904
        %v906 = vrot.slane %v901, 4
        %v907 = vsel %vm556, %v906, %v889
        %v908 = vrot.slane %v889, 4
        %v909 = vsel %vm556, %v901, %v908
        %vm910 = vcmask 64512
        %v912 = vsel %vm910, %v659, 0
        %v915 = vsel %vm910, %v781, 0
        %917 = vmatpush.xpose.msra.mxu0 0.0
        %918 = vmatpush.xpose.msra.mxu0 0.0
        %919 = vmatpush.xpose.msra.mxu0 0.0
        %920 = vmatpush.xpose.msra.mxu0 0.0
        %921 = vmatpush.xpose.msra.mxu0 0.0
        %922 = vmatpush.xpose.msra.mxu0 0.0
        %923 = vmatpush.xpose.msra.mxu0 0.0
        %924 = vmatpush.xpose.msra.mxu0 0.0
        %925 = vmatpush.xpose.msra.mxu0 0.0
        %926 = vmatpush.xpose.msra.mxu0 0.0
        %927 = vmatpush.xpose.msra.mxu0 0.0
        %928 = vmatpush.xpose.msra.mxu0 0.0
        %929 = vmatpush.xpose.msra.mxu0 0.0
        %930 = vmatpush.xpose.msra.mxu0 0.0
        %931 = vmatpush.xpose.msra.mxu0 0.0
        %932 = vmatpush.xpose.msra.mxu0 %v915
        %933 = vmatmul.f32.gmra.mxu0 %v912
        %v934 = vpop.f32.mrf.mxu0
        %v935 = vadd.f32 0.0, %v934
        %936 = vdwg.mxu0
        %v938 = vsel %vm910, %v661, 0
        %v941 = vsel %vm910, %v783, 0
        %943 = vmatpush.xpose.msra.mxu0 0.0
        %944 = vmatpush.xpose.msra.mxu0 0.0
        %945 = vmatpush.xpose.msra.mxu0 0.0
        %946 = vmatpush.xpose.msra.mxu0 0.0
        %947 = vmatpush.xpose.msra.mxu0 0.0
        %948 = vmatpush.xpose.msra.mxu0 0.0
        %949 = vmatpush.xpose.msra.mxu0 0.0
        %950 = vmatpush.xpose.msra.mxu0 0.0
        %951 = vmatpush.xpose.msra.mxu0 0.0
        %952 = vmatpush.xpose.msra.mxu0 0.0
        %953 = vmatpush.xpose.msra.mxu0 0.0
        %954 = vmatpush.xpose.msra.mxu0 0.0
        %955 = vmatpush.xpose.msra.mxu0 0.0
        %956 = vmatpush.xpose.msra.mxu0 0.0
        %957 = vmatpush.xpose.msra.mxu0 0.0
        %958 = vmatpush.xpose.msra.mxu0 %v941
        %959 = vmatmul.f32.gmra.mxu0 %v938
        %v960 = vpop.f32.mrf.mxu0
        %v961 = vadd.f32 0.0, %v960
        %962 = vdwg.mxu0
        %v964 = vsel %vm910, %v663, 0
        %v967 = vsel %vm910, %v785, 0
        %969 = vmatpush.xpose.msra.mxu0 0.0
        %970 = vmatpush.xpose.msra.mxu0 0.0
        %971 = vmatpush.xpose.msra.mxu0 0.0
        %972 = vmatpush.xpose.msra.mxu0 0.0
        %973 = vmatpush.xpose.msra.mxu0 0.0
        %974 = vmatpush.xpose.msra.mxu0 0.0
        %975 = vmatpush.xpose.msra.mxu0 0.0
        %976 = vmatpush.xpose.msra.mxu0 0.0
        %977 = vmatpush.xpose.msra.mxu0 0.0
        %978 = vmatpush.xpose.msra.mxu0 0.0
        %979 = vmatpush.xpose.msra.mxu0 0.0
        %980 = vmatpush.xpose.msra.mxu0 0.0
        %981 = vmatpush.xpose.msra.mxu0 0.0
        %982 = vmatpush.xpose.msra.mxu0 0.0
        %983 = vmatpush.xpose.msra.mxu0 0.0
        %984 = vmatpush.xpose.msra.mxu0 %v967
        %985 = vmatmul.f32.gmra.mxu0 %v964
        %v986 = vpop.f32.mrf.mxu0
        %v987 = vadd.f32 0.0, %v986
        %988 = vdwg.mxu0
        %v990 = vsel %vm910, %v665, 0
        %v993 = vsel %vm910, %v787, 0
        %995 = vmatpush.xpose.msra.mxu0 0.0
        %996 = vmatpush.xpose.msra.mxu0 0.0
        %997 = vmatpush.xpose.msra.mxu0 0.0
        %998 = vmatpush.xpose.msra.mxu0 0.0
        %999 = vmatpush.xpose.msra.mxu0 0.0
        %1000 = vmatpush.xpose.msra.mxu0 0.0
        %1001 = vmatpush.xpose.msra.mxu0 0.0
        %1002 = vmatpush.xpose.msra.mxu0 0.0
        %1003 = vmatpush.xpose.msra.mxu0 0.0
        %1004 = vmatpush.xpose.msra.mxu0 0.0
        %1005 = vmatpush.xpose.msra.mxu0 0.0
        %1006 = vmatpush.xpose.msra.mxu0 0.0
        %1007 = vmatpush.xpose.msra.mxu0 0.0
        %1008 = vmatpush.xpose.msra.mxu0 0.0
        %1009 = vmatpush.xpose.msra.mxu0 0.0
        %1010 = vmatpush.xpose.msra.mxu0 %v993
        %1011 = vmatmul.f32.gmra.mxu0 %v990
        %v1012 = vpop.f32.mrf.mxu0
        %v1013 = vadd.f32 0.0, %v1012
        %1014 = vdwg.mxu0
        %v1015 = vsel %vm910, %v935, -inf
        %1016 = vmax.xlane.f32.xlu0 %v1015
        %v1017 = vpop.xlane.xlu0 %1016
        %v1018 = vsel %vm910, %v961, -inf
        %1019 = vmax.xlane.f32.xlu0 %v1018
        %v1020 = vpop.xlane.xlu0 %1019
        %v1021 = vsel %vm910, %v987, -inf
        %1022 = vmax.xlane.f32.xlu0 %v1021
        %v1023 = vpop.xlane.xlu0 %1022
        %v1024 = vsel %vm910, %v1013, -inf
        %1025 = vmax.xlane.f32.xlu0 %v1024
        %v1026 = vpop.xlane.xlu0 %1025
        %v1027 = vsub.f32 %v935, %v1017
        %v1028 = vsub.f32 %v961, %v1020
        %v1029 = vsub.f32 %v987, %v1023
        %v1030 = vsub.f32 %v1013, %v1026
        %v1031 = vmul.f32 %v1027, 1.442695
        %v1032 = vpow.pop %v1031
        %v1033 = vmul.f32 %v1028, 1.442695
        %v1034 = vpow.pop %v1033
        %v1035 = vmul.f32 %v1029, 1.442695
        %v1036 = vpow.pop %v1035
        %v1037 = vmul.f32 %v1030, 1.442695
        %v1038 = vpow.pop %v1037
        %v1039 = vsel %vm910, %v1032, 0.0
        %1040 = vadd.xlane.f32.xlu0 %v1039
        %v1041 = vpop.xlane.xlu0 %1040
        %v1042 = vsel %vm910, %v1034, 0.0
        %1043 = vadd.xlane.f32.xlu0 %v1042
        %v1044 = vpop.xlane.xlu0 %1043
        %v1045 = vsel %vm910, %v1036, 0.0
        %1046 = vadd.xlane.f32.xlu0 %v1045
        %v1047 = vpop.xlane.xlu0 %1046
        %v1048 = vsel %vm910, %v1038, 0.0
        %1049 = vadd.xlane.f32.xlu0 %v1048
        %v1050 = vpop.xlane.xlu0 %1049
        %v1051 = vrcp.pop %v1041
        %v1052 = vmul.f32 %v1041, %v1051
        %v1053 = vsub.f32 1.0, %v1052
        %v1054 = vmul.f32 %v1051, %v1053
        %v1055 = vadd.f32 %v1051, %v1054
        %vm1056 = vweird.f32 %v1041
        %vm1057 = vweird.f32 %v1051
        %vm1058 = vmor %vm1056, %vm1057
        %v1059 = vsel %vm1058, %v1051, %v1055
        %v1060 = vand.u32 2147483647, %v1041
        %vm1061 = vcmp.eq.f32.partialorder %v1060, 8.507059e+37
        %v1062 = vand.u32 %v1041, 2147483648
        %v1063 = vor.u32 1.1754944e-38, %v1062
        %v1064 = vsel %vm1061, %v1063, %v1059
        %v1065 = vrcp.pop %v1044
        %v1066 = vmul.f32 %v1044, %v1065
        %v1067 = vsub.f32 1.0, %v1066
        %v1068 = vmul.f32 %v1065, %v1067
        %v1069 = vadd.f32 %v1065, %v1068
        %vm1070 = vweird.f32 %v1044
        %vm1071 = vweird.f32 %v1065
        %vm1072 = vmor %vm1070, %vm1071
        %v1073 = vsel %vm1072, %v1065, %v1069
        %v1074 = vand.u32 2147483647, %v1044
        %vm1075 = vcmp.eq.f32.partialorder %v1074, 8.507059e+37
        %v1076 = vand.u32 %v1044, 2147483648
        %v1077 = vor.u32 1.1754944e-38, %v1076
        %v1078 = vsel %vm1075, %v1077, %v1073
        %v1079 = vrcp.pop %v1047
        %v1080 = vmul.f32 %v1047, %v1079
        %v1081 = vsub.f32 1.0, %v1080
        %v1082 = vmul.f32 %v1079, %v1081
        %v1083 = vadd.f32 %v1079, %v1082
        %vm1084 = vweird.f32 %v1047
        %vm1085 = vweird.f32 %v1079
        %vm1086 = vmor %vm1084, %vm1085
        %v1087 = vsel %vm1086, %v1079, %v1083
        %v1088 = vand.u32 2147483647, %v1047
        %vm1089 = vcmp.eq.f32.partialorder %v1088, 8.507059e+37
        %v1090 = vand.u32 %v1047, 2147483648
        %v1091 = vor.u32 1.1754944e-38, %v1090
        %v1092 = vsel %vm1089, %v1091, %v1087
        %v1093 = vrcp.pop %v1050
        %v1094 = vmul.f32 %v1050, %v1093
        %v1095 = vsub.f32 1.0, %v1094
        %v1096 = vmul.f32 %v1093, %v1095
        %v1097 = vadd.f32 %v1093, %v1096
        %vm1098 = vweird.f32 %v1050
        %vm1099 = vweird.f32 %v1093
        %vm1100 = vmor %vm1098, %vm1099
        %v1101 = vsel %vm1100, %v1093, %v1097
        %v1102 = vand.u32 2147483647, %v1050
        %vm1103 = vcmp.eq.f32.partialorder %v1102, 8.507059e+37
        %v1104 = vand.u32 %v1050, 2147483648
        %v1105 = vor.u32 1.1754944e-38, %v1104
        %v1106 = vsel %vm1103, %v1105, %v1101
        %v1107 = vmul.f32 %v1032, %v1064
        %v1108 = vmul.f32 %v1034, %v1078
        %v1109 = vmul.f32 %v1036, %v1092
        %v1110 = vmul.f32 %v1038, %v1106
        %v1112 = vsel %vm910, %v1107, 0
        %1114 = vmatpush.msra.mxu0 0.0
        %1115 = vmatpush.msra.mxu0 0.0
        %1116 = vmatpush.msra.mxu0 0.0
        %1117 = vmatpush.msra.mxu0 0.0
        %1118 = vmatpush.msra.mxu0 0.0
        %1119 = vmatpush.msra.mxu0 0.0
        %1120 = vmatpush.msra.mxu0 0.0
        %1121 = vmatpush.msra.mxu0 0.0
        %1122 = vmatpush.msra.mxu0 0.0
        %1123 = vmatpush.msra.mxu0 0.0
        %1124 = vmatpush.msra.mxu0 0.0
        %1125 = vmatpush.msra.mxu0 0.0
        %1126 = vmatpush.msra.mxu0 0.0
        %1127 = vmatpush.msra.mxu0 0.0
        %1128 = vmatpush.msra.mxu0 0.0
        %1129 = vmatpush.msra.mxu0 %v903
        %1130 = vmatmul.f32.gmra.mxu0 %v1112
        %v1131 = vpop.f32.mrf.mxu0
        %v1132 = vadd.f32 0.0, %v1131
        %1133 = vdwg.mxu0
        %v1135 = vsel %vm910, %v1108, 0
        %1137 = vmatpush.msra.mxu0 0.0
        %1138 = vmatpush.msra.mxu0 0.0
        %1139 = vmatpush.msra.mxu0 0.0
        %1140 = vmatpush.msra.mxu0 0.0
        %1141 = vmatpush.msra.mxu0 0.0
        %1142 = vmatpush.msra.mxu0 0.0
        %1143 = vmatpush.msra.mxu0 0.0
        %1144 = vmatpush.msra.mxu0 0.0
        %1145 = vmatpush.msra.mxu0 0.0
        %1146 = vmatpush.msra.mxu0 0.0
        %1147 = vmatpush.msra.mxu0 0.0
        %1148 = vmatpush.msra.mxu0 0.0
        %1149 = vmatpush.msra.mxu0 0.0
        %1150 = vmatpush.msra.mxu0 0.0
        %1151 = vmatpush.msra.mxu0 0.0
        %1152 = vmatpush.msra.mxu0 %v905
        %1153 = vmatmul.f32.gmra.mxu0 %v1135
        %v1154 = vpop.f32.mrf.mxu0
        %v1155 = vadd.f32 0.0, %v1154
        %1156 = vdwg.mxu0
        %v1158 = vsel %vm910, %v1109, 0
        %1160 = vmatpush.msra.mxu0 0.0
        %1161 = vmatpush.msra.mxu0 0.0
        %1162 = vmatpush.msra.mxu0 0.0
        %1163 = vmatpush.msra.mxu0 0.0
        %1164 = vmatpush.msra.mxu0 0.0
        %1165 = vmatpush.msra.mxu0 0.0
        %1166 = vmatpush.msra.mxu0 0.0
        %1167 = vmatpush.msra.mxu0 0.0
        %1168 = vmatpush.msra.mxu0 0.0
        %1169 = vmatpush.msra.mxu0 0.0
        %1170 = vmatpush.msra.mxu0 0.0
        %1171 = vmatpush.msra.mxu0 0.0
        %1172 = vmatpush.msra.mxu0 0.0
        %1173 = vmatpush.msra.mxu0 0.0
        %1174 = vmatpush.msra.mxu0 0.0
        %1175 = vmatpush.msra.mxu0 %v907
        %1176 = vmatmul.f32.gmra.mxu0 %v1158
        %v1177 = vpop.f32.mrf.mxu0
        %v1178 = vadd.f32 0.0, %v1177
        %1179 = vdwg.mxu0
        %v1181 = vsel %vm910, %v1110, 0
        %1183 = vmatpush.msra.mxu0 0.0
        %1184 = vmatpush.msra.mxu0 0.0
        %1185 = vmatpush.msra.mxu0 0.0
        %1186 = vmatpush.msra.mxu0 0.0
        %1187 = vmatpush.msra.mxu0 0.0
        %1188 = vmatpush.msra.mxu0 0.0
        %1189 = vmatpush.msra.mxu0 0.0
        %1190 = vmatpush.msra.mxu0 0.0
        %1191 = vmatpush.msra.mxu0 0.0
        %1192 = vmatpush.msra.mxu0 0.0
        %1193 = vmatpush.msra.mxu0 0.0
        %1194 = vmatpush.msra.mxu0 0.0
        %1195 = vmatpush.msra.mxu0 0.0
        %1196 = vmatpush.msra.mxu0 0.0
        %1197 = vmatpush.msra.mxu0 0.0
        %1198 = vmatpush.msra.mxu0 %v909
        %1199 = vmatmul.f32.gmra.mxu0 %v1181
        %v1200 = vpop.f32.mrf.mxu0
        %v1201 = vadd.f32 0.0, %v1200
        %1202 = vdwg.mxu0
        %v1203 = vrot.slane %v1178, 4
        %v1204 = vsel %vm556, %v1203, %v1132
        %v1205 = vrot.slane %v1132, 4
        %v1206 = vsel %vm556, %v1178, %v1205
        %v1208 = vunpack.c.l.s4 1983009808
        %v1209 = vunpack.c.0.s8 %v1208
        %v1210 = vperm.slane %v1204, %v1209
        %v1212 = vunpack.c.l.s4 1983009808
        %v1213 = vunpack.c.0.s8 %v1212
        %v1214 = vperm.slane %v1206, %v1213
        %v1215 = vrot.slane %v1201, 4
        %v1216 = vsel %vm556, %v1215, %v1155
        %v1217 = vrot.slane %v1155, 4
        %v1218 = vsel %vm556, %v1201, %v1217
        %v1220 = vunpack.c.l.s4 1983009808
        %v1221 = vunpack.c.0.s8 %v1220
        %v1222 = vperm.slane %v1216, %v1221
        %v1224 = vunpack.c.l.s4 1983009808
        %v1225 = vunpack.c.0.s8 %v1224
        %v1226 = vperm.slane %v1218, %v1225
        %v1227 = vrot.slane %v1222, 4
        %v1228 = vsel %vm556, %v1227, %v1210
        %v1229 = vrot.slane %v1210, 4
        %v1230 = vsel %vm556, %v1222, %v1229
        %v1232 = vunpack.c.l.s4 1934713408
        %v1233 = vunpack.c.0.s8 %v1232
        %v1234 = vperm.slane %v1228, %v1233
        %v1236 = vunpack.c.l.s4 1934713408
        %v1237 = vunpack.c.0.s8 %v1236
        %v1238 = vperm.slane %v1230, %v1237
        %v1239 = vrot.slane %v1226, 4
        %v1240 = vsel %vm556, %v1239, %v1214
        %v1241 = vrot.slane %v1214, 4
        %v1242 = vsel %vm556, %v1226, %v1241
        %v1244 = vunpack.c.l.s4 1934713408
        %v1245 = vunpack.c.0.s8 %v1244
        %v1246 = vperm.slane %v1240, %v1245
        %v1248 = vunpack.c.l.s4 1934713408
        %v1249 = vunpack.c.0.s8 %v1248
        %v1250 = vperm.slane %v1242, %v1249
        %v1251 = vrot.slane %v1234, 4
        %v1252 = vsel %vm556, 0.0, %v1251
        %v1253 = vrot.slane %v1238, 4
        %v1254 = vsel %vm556, 0.0, %v1253
        %v1255 = vrot.slane %v1246, 4
        %v1256 = vsel %vm556, 0.0, %v1255
        %v1257 = vrot.slane %v1250, 4
        %v1258 = vsel %vm556, 0.0, %v1257
        %v1259 = vsel %vm556, %v1253, %v1234
        %v1261 = vunpack.c.l.s4 1983009808
        %v1262 = vunpack.c.0.s8 %v1261
        %v1263 = vperm.slane %v1259, %v1262
        %v1264 = vrot.slane %v1254, 4
        %v1265 = vsel %vm556, %v1264, %v1252
        %v1267 = vunpack.c.l.s4 1983009808
        %v1268 = vunpack.c.0.s8 %v1267
        %v1269 = vperm.slane %v1265, %v1268
        %v1270 = vsel %vm556, %v1257, %v1246
        %v1272 = vunpack.c.l.s4 1983009808
        %v1273 = vunpack.c.0.s8 %v1272
        %v1274 = vperm.slane %v1270, %v1273
        %v1275 = vrot.slane %v1258, 4
        %v1276 = vsel %vm556, %v1275, %v1256
        %v1278 = vunpack.c.l.s4 1983009808
        %v1279 = vunpack.c.0.s8 %v1278
        %v1280 = vperm.slane %v1276, %v1279
        %v1281 = vrot.slane %v1269, 4
        %v1282 = vsel %vm556, %v1281, %v1263
        %v1283 = vrot.slane %v1263, 4
        %v1284 = vsel %vm556, %v1269, %v1283
        %v1286 = vunpack.c.l.s4 1934713408
        %v1287 = vunpack.c.0.s8 %v1286
        %v1288 = vperm.slane %v1282, %v1287
        %v1290 = vunpack.c.l.s4 1934713408
        %v1291 = vunpack.c.0.s8 %v1290
        %v1292 = vperm.slane %v1284, %v1291
        %v1293 = vrot.slane %v1280, 4
        %v1294 = vsel %vm556, %v1293, %v1274
        %v1295 = vrot.slane %v1274, 4
        %v1296 = vsel %vm556, %v1280, %v1295
        %v1298 = vunpack.c.l.s4 1934713408
        %v1299 = vunpack.c.0.s8 %v1298
        %v1300 = vperm.slane %v1294, %v1299
        %v1302 = vunpack.c.l.s4 1934713408
        %v1303 = vunpack.c.0.s8 %v1302
        %v1304 = vperm.slane %v1296, %v1303
        %v1305 = vrot.slane %v1300, 4
        %v1306 = vsel %vm556, %v1305, %v1288
        %v1307 = vrot.slane %v1288, 4
        %v1308 = vsel %vm556, %v1300, %v1307
        %v1309 = vrot.slane %v1304, 4
        %v1310 = vsel %vm556, %v1309, %v1292
        %v1311 = vrot.slane %v1292, 4
        %v1312 = vsel %vm556, %v1304, %v1311
        %1314 = vrot.lane.b32.xlu0 %v1308, 8
        %v1315 = vpop.permute.xlu0 %1314
        %1318 = vrot.lane.b32.xlu0 %v1310, 16
        %v1319 = vpop.permute.xlu0 %1318
        %1322 = vrot.lane.b32.xlu0 %v1312, 24
        %v1323 = vpop.permute.xlu0 %1322
        %v1325 = vsel %vm910, %v1306, %v1315
        %vm1326 = vcmask 130048
        %v1327 = vsel %vm1326, %v1325, %v1319
        %vm1328 = vcmask 195584
        %v1329 = vsel %vm1328, %v1327, %v1323
        %v1330 = vld [vmem:[%s5] sm:$0xff]
        %v1331 = vld [vmem:[%s5 + $0x8] sm:$0xff]
        %v1332 = vld [vmem:[%s5 + $0x10] sm:$0xff]
        %v1333 = vld [vmem:[%s5 + $0x18] sm:$0xff]
        %v1334 = vld [vmem:[%s6] sm:$0x1]
        %v1336 = vperm.slane %v1334, 0
        %v1339 = vsel %vm476, %v1329, 0
        %1341 = vmatpush.msra.mxu0 0.0
        %1342 = vmatpush.msra.mxu0 0.0
        %1343 = vmatpush.msra.mxu0 0.0
        %1344 = vmatpush.msra.mxu0 0.0
        %1345 = vmatpush.msra.mxu0 0.0
        %1346 = vmatpush.msra.mxu0 0.0
        %1347 = vmatpush.msra.mxu0 0.0
        %1348 = vmatpush.msra.mxu0 0.0
        %1349 = vmatpush.msra.mxu0 0.0
        %1350 = vmatpush.msra.mxu0 0.0
        %1351 = vmatpush.msra.mxu0 0.0
        %1352 = vmatpush.msra.mxu0 0.0
        %1353 = vmatpush.msra.mxu0 %v1333
        %1354 = vmatpush.msra.mxu0 %v1332
        %1355 = vmatpush.msra.mxu0 %v1331
        %1356 = vmatpush.msra.mxu0 %v1330
        %1357 = vmatmul.f32.gmra.mxu0 %v1339
        %v1358 = vpop.f32.mrf.mxu0
        %v1359 = vadd.f32 %v1336, %v1358
        %1360 = vdwg.mxu0
        %v1361 = vadd.f32 %v1359, %v473
        %v1362 = vld [vmem:[%s7] sm:$0x1]
        %v1363 = vld [vmem:[%s8] sm:$0x1]
        %v1364 = vsel %vm476, %v1361, 0.0
        %1365 = vadd.xlane.f32.xlu0 %v1364
        %v1366 = vpop.xlane.xlu0 %1365
        %v1367 = vmul.f32 %v1366, %v486
        %v1368 = vsub.f32 %v1361, %v1367
        %v1369 = vmul.f32 %v1368, %v1368
        %v1370 = vsel %vm476, %v1369, 0.0
        %1371 = vadd.xlane.f32.xlu0 %v1370
        %v1372 = vpop.xlane.xlu0 %1371
        %v1373 = vmul.f32 %v1372, %v486
        %v1374 = vadd.f32 %v1373, 1e-05
        %v1375 = vrsqrt.pop %v1374
        %v1376 = vmul.f32 %v1375, %v1374
        %v1377 = vmul.f32 %v1376, %v1375
        %v1378 = vmul.f32 0.5, %v1377
        %v1379 = vsub.f32 1.5, %v1378
        %v1380 = vmul.f32 %v1375, %v1379
        %vm1381 = vweird.f32 %v1374
        %vm1382 = vweird.f32 %v1375
        %vm1383 = vmor %vm1381, %vm1382
        %v1384 = vsel %vm1383, %v1375, %v1380
        %v1385 = vmul.f32 %v1368, %v1384
        %v1387 = vperm.slane %v1362, 0
        %v1389 = vmul.f32 %v1385, %v1387
        %v1391 = vperm.slane %v1363, 0
        %v1393 = vadd.f32 %v1389, %v1391
        %v1394 = vld [vmem:[%s9] sm:$0xff]
        %v1395 = vld [vmem:[%s9 + $0x8] sm:$0xff]
        %v1396 = vld [vmem:[%s9 + $0x10] sm:$0xff]
        %v1397 = vld [vmem:[%s9 + $0x18] sm:$0xff]
        %v1398 = vld [vmem:[%s10] sm:$0x1]
        %v1400 = vperm.slane %v1398, 0
        %v1403 = vsel %vm476, %v1393, 0
        %1405 = vmatpush.msra.mxu0 0.0
        %1406 = vmatpush.msra.mxu0 0.0
        %1407 = vmatpush.msra.mxu0 0.0
        %1408 = vmatpush.msra.mxu0 0.0
        %1409 = vmatpush.msra.mxu0 0.0
        %1410 = vmatpush.msra.mxu0 0.0
        %1411 = vmatpush.msra.mxu0 0.0
        %1412 = vmatpush.msra.mxu0 0.0
        %1413 = vmatpush.msra.mxu0 0.0
        %1414 = vmatpush.msra.mxu0 0.0
        %1415 = vmatpush.msra.mxu0 0.0
        %1416 = vmatpush.msra.mxu0 0.0
        %1417 = vmatpush.msra.mxu0 %v1397
        %1418 = vmatpush.msra.mxu0 %v1396
        %1419 = vmatpush.msra.mxu0 %v1395
        %1420 = vmatpush.msra.mxu0 %v1394
        %1421 = vmatmul.f32.gmra.mxu0 %v1403
        %v1422 = vpop.f32.mrf.mxu0
        %v1423 = vadd.f32 %v1400, %v1422
        %1424 = vdwg.mxu0
        %v1425 = vmax.f32 %v1423, 0.0
        %v1426 = vld [vmem:[%s11] sm:$0xff]
        %v1427 = vld [vmem:[%s11 + $0x8] sm:$0xff]
        %v1428 = vld [vmem:[%s11 + $0x10] sm:$0xff]
        %v1429 = vld [vmem:[%s11 + $0x18] sm:$0xff]
        %v1430 = vld [vmem:[%s11 + $0x20] sm:$0xff]
        %v1431 = vld [vmem:[%s11 + $0x28] sm:$0xff]
        %v1432 = vld [vmem:[%s11 + $0x30] sm:$0xff]
        %v1433 = vld [vmem:[%s11 + $0x38] sm:$0xff]
        %v1434 = vld [vmem:[%s12] sm:$0x1]
        %v1436 = vperm.slane %v1434, 0
        %vm1438 = vcmask 523264
        %v1440 = vsel %vm1438, %v1425, 0
        %1442 = vmatpush.msra.mxu0 0.0
        %1443 = vmatpush.msra.mxu0 0.0
        %1444 = vmatpush.msra.mxu0 0.0
        %1445 = vmatpush.msra.mxu0 0.0
        %1446 = vmatpush.msra.mxu0 0.0
        %1447 = vmatpush.msra.mxu0 0.0
        %1448 = vmatpush.msra.mxu0 0.0
        %1449 = vmatpush.msra.mxu0 0.0
        %1450 = vmatpush.msra.mxu0 %v1433
        %1451 = vmatpush.msra.mxu0 %v1432
        %1452 = vmatpush.msra.mxu0 %v1431
        %1453 = vmatpush.msra.mxu0 %v1430
        %1454 = vmatpush.msra.mxu0 %v1429
        %1455 = vmatpush.msra.mxu0 %v1428
        %1456 = vmatpush.msra.mxu0 %v1427
        %1457 = vmatpush.msra.mxu0 %v1426
        %1458 = vmatmul.f32.gmra.mxu0 %v1440
        %v1459 = vpop.f32.mrf.mxu0
        %v1460 = vadd.f32 %v1436, %v1459
        %1461 = vdwg.mxu0
        %v1462 = vadd.f32 %v1361, %v1460
        %1463 = vst.msk [vmem:[%s472] sm:$0xff] %vm476, %v1462
        %s1464 = sand.u32 %s317, 1
        %s1465 = scalar_lea.sflag [#allocation4], %s1464
        %s1466 = sand.u32 %s317, 1
        %s1467 = smul.addr %s1466, 8
        %s1468 = scalar_lea.vmem [#allocation7], %s1467
        // Predicated region
        $region81: #{tpu_custom_call.1} parent=71 // pred_check
          %p1469 = pneg %p327
        $region82: #{tpu_custom_call.1} parent=71 // pred_check_branch
          %1471 = sbr.rel (%p1469) target = $region84
        $region83: #{tpu_custom_call.1} parent=71 // pred_region
          %1473 = vsyncadd %s1465, 0
          %s1474 = smul.addr %s31, 8
          %s1475 = scalar_lea.hbm %s13, %s1474
          %s1477 = sshll.u32 %s1468, 4
          %s1478 = int_to_ptr.vmem [resolvable:$true] %s1477
          %s1479 = sshll.u32 %s1475, 4
          %s1480 = int_to_ptr.hbm [resolvable:$true] %s1479
          %1482 = dma.vmem_to_hbm [thread:$0]  %s1478, 128, %s1480, %s1465
        $region84: #{tpu_custom_call.1} parent=71 // pred_fallthru
          _
      $region72: #{tpu_custom_call.1} parent=5 // pred_fallthru
        _
      %p1483 = scmp.le.s32.totalorder 2, %s26
      // Predicated region
      $region85: #{tpu_custom_call.1} parent=5 // pred_check
        %p1484 = pneg %p1483
      $region86: #{tpu_custom_call.1} parent=5 // pred_check_branch
        %1486 = sbr.rel (%p1484) target = $region88
      $region87: #{tpu_custom_call.1} parent=5 // pred_region
        %s1487 = ssub.s32 %s26, 2
        // Predicated region
        $region89: #{tpu_custom_call.1} parent=87 // pred_check
          %p1488 = pneg %p333
        $region90: #{tpu_custom_call.1} parent=87 // pred_check_branch
          %1490 = sbr.rel (%p1488) target = $region92
        $region91: #{tpu_custom_call.1} parent=87 // pred_region
          %s1491 = sand.u32 %s318, 1
          %s1492 = scalar_lea.sflag [#allocation4], %s1491
          %s1493 = sand.u32 %s318, 1
          %s1494 = smul.addr %s1493, 8
          %s1495 = scalar_lea.vmem [#allocation7], %s1494
          %1497 = dma.done %s1492, 128
        $region92: #{tpu_custom_call.1} parent=87 // pred_fallthru
          _
      $region88: #{tpu_custom_call.1} parent=5 // pred_fallthru
        _
    $region6: #{tpu_custom_call.1} parent=1 // loop_footer
      %s30 = sadd.s32 1, %s26
    $region7: #{tpu_custom_call.1} parent=1 // loop_footer_branch
      %25 = sbr.rel target = $region3
    $region8: #{tpu_custom_call.1} parent=1 // loop_exit
      _
    %1498 = vsyncpa [#allocation3], 1
    %s1499 = scalar_lea.sflag [#allocation3], 1
    %1500 = vsyncpa %s1499, 1
    %1501 = vsyncpa [#allocation6], 1
    %1502 = vsyncpa [#allocation4], 1
    %s1503 = scalar_lea.sflag [#allocation4], 1
    %1504 = vsyncpa %s1503, 1

// kernel: tpu_custom_call.1
$region0: #{tpu_custom_call.1}
  #allocation0 [shape = 'u32[]', space=smem, size = 0x4, offset = 0x4, fixed_abs, tag = 'smem constant byte address 0x4 - core index']
  #allocation1 [shape = 'u32[72,128]{1,0:T(1,128)}', space=vmem, size = 0x9000, scoped, tag = 'internal scratch']
  %s0 = inlined_call_operand.hbm [shape: f32[2,8,32], index: 0, kind: input, shape index: {}]
  %s1 = inlined_call_operand.hbm [shape: f32[1,32], index: 1, kind: input, shape index: {}]
  %s2 = inlined_call_operand.vmem [shape: f32[1,32], index: 2, kind: input, shape index: {}]
  %s3 = inlined_call_operand.vmem [shape: f32[32,96], index: 3, kind: input, shape index: {}]
  %s4 = inlined_call_operand.vmem [shape: f32[1,96], index: 4, kind: input, shape index: {}]
  %s5 = inlined_call_operand.vmem [shape: f32[32,32], index: 5, kind: input, shape index: {}]
  %s6 = inlined_call_operand.vmem [shape: f32[1,32], index: 6, kind: input, shape index: {}]
  %s7 = inlined_call_operand.vmem [shape: f32[1,32], index: 7, kind: input, shape index: {}]
  %s8 = inlined_call_operand.vmem [shape: f32[1,32], index: 8, kind: input, shape index: {}]
  %s9 = inlined_call_operand.vmem [shape: f32[32,64], index: 9, kind: input, shape index: {}]
  %s10 = inlined_call_operand.vmem [shape: f32[1,64], index: 10, kind: input, shape index: {}]
  %s11 = inlined_call_operand.vmem [shape: f32[64,32], index: 11, kind: input, shape index: {}]
  %s12 = inlined_call_operand.vmem [shape: f32[1,32], index: 12, kind: input, shape index: {}]
  %s13 = inlined_call_operand.hbm [shape: f32[2,8,32], index: 13, kind: output, shape index: {}]
  %s14 = sld [smem:[#allocation0]]
  $region93: #{tpu_custom_call.1} parent=0
    _
  %s16 = ssub.s32 1, %s14
  %s17 = scalar_select 0, %s16, %s14
  $region1: #{tpu_custom_call.1} parent=0
    #allocation2 [shape = 'u8[8192]{0}', space=vmem, size = 0x2000, scoped, tag = 'input window, operand 0']
    #allocation3 [shape = 's32[2]{0}', space=sflag, size = 0x8, scoped, tag = 'scoped memory for tpu_custom_call.1']
    #allocation4 [shape = 's32[2]{0}', space=sflag, size = 0x8, scoped, tag = 'scoped memory for tpu_custom_call.1']
    #allocation5 [shape = 'u8[512]{0}', space=vmem, size = 0x400, scoped, tag = 'input window, operand 1, single buffered']
    #allocation6 [shape = 's32[1]{0}', space=sflag, size = 0x4, scoped, tag = 'scoped memory for tpu_custom_call.1']
    #allocation7 [shape = 'u8[8192]{0}', space=vmem, size = 0x2000, scoped, tag = 'output window, operand 0']
    %18 = vsyncpa [#allocation3], 0
    %s19 = scalar_lea.sflag [#allocation3], 1
    %20 = vsyncpa %s19, 0
    %21 = vsyncpa [#allocation6], 0
    %22 = vsyncpa [#allocation4], 0
    %s23 = scalar_lea.sflag [#allocation4], 1
    %24 = vsyncpa %s23, 0
    loop: start=0, step=1, limit=4
    $region2: #{tpu_custom_call.1} parent=1 // loop_pre_header
      _
    $region3: #{tpu_custom_call.1} parent=1 // loop_header
      %s26 = sphi 0, %s30
      %p27 = scmp.ge.s32.totalorder %s26, 4
      %s36 = sphi 0, %s38
      %s39 = sphi 0, %s36
      %s40 = sphi 0, %s39
      %s56 = sphi 0, %s40
      %s60 = sphi 0, %s60
      %s62 = sphi 0, %s60
      %s63 = sphi 0, %s62
      %s77 = sphi 0, %s63
      %s81 = sphi 0, %s81
      %s83 = sphi 0, %s81
      %s84 = sphi 0, %s83
      %s98 = sphi 0, %s84
      %s102 = sphi 0, %s102
      %s104 = sphi 0, %s102
      %s105 = sphi 0, %s104
      %s119 = sphi 0, %s105
      %s123 = sphi 0, %s123
      %s125 = sphi 0, %s123
      %s126 = sphi 0, %s125
      %s140 = sphi 0, %s126
      %s144 = sphi 0, %s144
      %s146 = sphi 0, %s144
      %s147 = sphi 0, %s146
      %s161 = sphi 0, %s147
      %s165 = sphi 0, %s165
      %s167 = sphi 0, %s165
      %s168 = sphi 0, %s167
      %s182 = sphi 0, %s168
      %s186 = sphi 0, %s186
      %s188 = sphi 0, %s186
      %s189 = sphi 0, %s188
      %s203 = sphi 0, %s189
      %s207 = sphi 0, %s207
      %s209 = sphi 0, %s207
      %s210 = sphi 0, %s209
      %s224 = sphi 0, %s210
      %s228 = sphi 0, %s228
      %s230 = sphi 0, %s228
      %s231 = sphi 0, %s230
      %s245 = sphi 0, %s231
      %s249 = sphi 0, %s249
      %s251 = sphi 0, %s249
      %s252 = sphi 0, %s251
      %s266 = sphi 0, %s252
      %s270 = sphi 0, %s270
      %s272 = sphi 0, %s270
      %s273 = sphi 0, %s272
      %s287 = sphi 0, %s273
      %s291 = sphi 0, %s291
      %s293 = sphi 0, %s291
      %s294 = sphi 0, %s293
      %s308 = sphi 0, %s294
      %s314 = sphi 0, %s316
      %s317 = sphi 0, %s314
      %s318 = sphi 0, %s317
      %s334 = sphi 0, %s318
    $region4: #{tpu_custom_call.1} parent=1 // loop_header_branch
      %29 = sbr.rel (%p27) target = $region8
    $region5: #{tpu_custom_call.1} parent=1 // loop_body
      %s31 = ssub.s32 %s26, 1
      %s32 = ssub.s32 %s26, 2
      %s33 = sadd.s32 %s26, 1
      %s34 = ssub.s32 %s26, %s33
      %p35 = scmp.eq.s32.totalorder %s34, 0
      %s37 = sadd.s32 %s36, 1
      %s38 = scalar_select %p35, %s36, %s37
      %p41 = pneg %p35
      %p42 = scmp.eq.s32.totalorder %s26, 1
      %p43 = por %p41, %p42
      %p44 = scmp.ne.s32.totalorder %s36, %s39
      %p45 = scmp.eq.s32.totalorder %s26, 0
      %p46 = por %p44, %p45
      %p47 = scmp.ne.s32.totalorder %s36, %s39
      %p48 = scmp.eq.s32.totalorder %s31, 1
      %p49 = por %p47, %p48
      %p50 = scmp.ne.s32.totalorder %s39, %s40
      %p51 = scmp.eq.s32.totalorder %s31, 0
      %p52 = por %p50, %p51
      %p53 = scmp.ne.s32.totalorder %s39, %s40
      %p54 = scmp.eq.s32.totalorder %s32, 1
      %p55 = por %p53, %p54
      %p57 = scmp.ne.s32.totalorder %s40, %s56
      %p58 = scmp.eq.s32.totalorder %s32, 0
      %p59 = por %p57, %p58
      %s61 = sadd.s32 %s60, 1
      %p64 = scmp.eq.s32.totalorder %s26, 1
      %p65 = scmp.ne.s32.totalorder %s60, %s62
      %p66 = scmp.eq.s32.totalorder %s26, 0
      %p67 = por %p65, %p66
      %p68 = scmp.ne.s32.totalorder %s60, %s62
      %p69 = scmp.eq.s32.totalorder %s31, 1
      %p70 = por %p68, %p69
      %p71 = scmp.ne.s32.totalorder %s62, %s63
      %p72 = scmp.eq.s32.totalorder %s31, 0
      %p73 = por %p71, %p72
      %p74 = scmp.ne.s32.totalorder %s62, %s63
      %p75 = scmp.eq.s32.totalorder %s32, 1
      %p76 = por %p74, %p75
      %p78 = scmp.ne.s32.totalorder %s63, %s77
      %p79 = scmp.eq.s32.totalorder %s32, 0
      %p80 = por %p78, %p79
      %s82 = sadd.s32 %s81, 1
      %p85 = scmp.eq.s32.totalorder %s26, 1
      %p86 = scmp.ne.s32.totalorder %s81, %s83
      %p87 = scmp.eq.s32.totalorder %s26, 0
      %p88 = por %p86, %p87
      %p89 = scmp.ne.s32.totalorder %s81, %s83
      %p90 = scmp.eq.s32.totalorder %s31, 1
      %p91 = por %p89, %p90
      %p92 = scmp.ne.s32.totalorder %s83, %s84
      %p93 = scmp.eq.s32.totalorder %s31, 0
      %p94 = por %p92, %p93
      %p95 = scmp.ne.s32.totalorder %s83, %s84
      %p96 = scmp.eq.s32.totalorder %s32, 1
      %p97 = por %p95, %p96
      %p99 = scmp.ne.s32.totalorder %s84, %s98
      %p100 = scmp.eq.s32.totalorder %s32, 0
      %p101 = por %p99, %p100
      %s103 = sadd.s32 %s102, 1
      %p106 = scmp.eq.s32.totalorder %s26, 1
      %p107 = scmp.ne.s32.totalorder %s102, %s104
      %p108 = scmp.eq.s32.totalorder %s26, 0
      %p109 = por %p107, %p108
      %p110 = scmp.ne.s32.totalorder %s102, %s104
      %p111 = scmp.eq.s32.totalorder %s31, 1
      %p112 = por %p110, %p111
      %p113 = scmp.ne.s32.totalorder %s104, %s105
      %p114 = scmp.eq.s32.totalorder %s31, 0
      %p115 = por %p113, %p114
      %p116 = scmp.ne.s32.totalorder %s104, %s105
      %p117 = scmp.eq.s32.totalorder %s32, 1
      %p118 = por %p116, %p117
      %p120 = scmp.ne.s32.totalorder %s105, %s119
      %p121 = scmp.eq.s32.totalorder %s32, 0
      %p122 = por %p120, %p121
      %s124 = sadd.s32 %s123, 1
      %p127 = scmp.eq.s32.totalorder %s26, 1
      %p128 = scmp.ne.s32.totalorder %s123, %s125
      %p129 = scmp.eq.s32.totalorder %s26, 0
      %p130 = por %p128, %p129
      %p131 = scmp.ne.s32.totalorder %s123, %s125
      %p132 = scmp.eq.s32.totalorder %s31, 1
      %p133 = por %p131, %p132
      %p134 = scmp.ne.s32.totalorder %s125, %s126
      %p135 = scmp.eq.s32.totalorder %s31, 0
      %p136 = por %p134, %p135
      %p137 = scmp.ne.s32.totalorder %s125, %s126
      %p138 = scmp.eq.s32.totalorder %s32, 1
      %p139 = por %p137, %p138
      %p141 = scmp.ne.s32.totalorder %s126, %s140
      %p142 = scmp.eq.s32.totalorder %s32, 0
      %p143 = por %p141, %p142
      %s145 = sadd.s32 %s144, 1
      %p148 = scmp.eq.s32.totalorder %s26, 1
      %p149 = scmp.ne.s32.totalorder %s144, %s146
      %p150 = scmp.eq.s32.totalorder %s26, 0
      %p151 = por %p149, %p150
      %p152 = scmp.ne.s32.totalorder %s144, %s146
      %p153 = scmp.eq.s32.totalorder %s31, 1
      %p154 = por %p152, %p153
      %p155 = scmp.ne.s32.totalorder %s146, %s147
      %p156 = scmp.eq.s32.totalorder %s31, 0
      %p157 = por %p155, %p156
      %p158 = scmp.ne.s32.totalorder %s146, %s147
      %p159 = scmp.eq.s32.totalorder %s32, 1
      %p160 = por %p158, %p159
      %p162 = scmp.ne.s32.totalorder %s147, %s161
      %p163 = scmp.eq.s32.totalorder %s32, 0
      %p164 = por %p162, %p163
      %s166 = sadd.s32 %s165, 1
      %p169 = scmp.eq.s32.totalorder %s26, 1
      %p170 = scmp.ne.s32.totalorder %s165, %s167
      %p171 = scmp.eq.s32.totalorder %s26, 0
      %p172 = por %p170, %p171
      %p173 = scmp.ne.s32.totalorder %s165, %s167
      %p174 = scmp.eq.s32.totalorder %s31, 1
      %p175 = por %p173, %p174
      %p176 = scmp.ne.s32.totalorder %s167, %s168
      %p177 = scmp.eq.s32.totalorder %s31, 0
      %p178 = por %p176, %p177
      %p179 = scmp.ne.s32.totalorder %s167, %s168
      %p180 = scmp.eq.s32.totalorder %s32, 1
      %p181 = por %p179, %p180
      %p183 = scmp.ne.s32.totalorder %s168, %s182
      %p184 = scmp.eq.s32.totalorder %s32, 0
      %p185 = por %p183, %p184
      %s187 = sadd.s32 %s186, 1
      %p190 = scmp.eq.s32.totalorder %s26, 1
      %p191 = scmp.ne.s32.totalorder %s186, %s188
      %p192 = scmp.eq.s32.totalorder %s26, 0
      %p193 = por %p191, %p192
      %p194 = scmp.ne.s32.totalorder %s186, %s188
      %p195 = scmp.eq.s32.totalorder %s31, 1
      %p196 = por %p194, %p195
      %p197 = scmp.ne.s32.totalorder %s188, %s189
      %p198 = scmp.eq.s32.totalorder %s31, 0
      %p199 = por %p197, %p198
      %p200 = scmp.ne.s32.totalorder %s188, %s189
      %p201 = scmp.eq.s32.totalorder %s32, 1
      %p202 = por %p200, %p201
      %p204 = scmp.ne.s32.totalorder %s189, %s203
      %p205 = scmp.eq.s32.totalorder %s32, 0
      %p206 = por %p204, %p205
      %s208 = sadd.s32 %s207, 1
      %p211 = scmp.eq.s32.totalorder %s26, 1
      %p212 = scmp.ne.s32.totalorder %s207, %s209
      %p213 = scmp.eq.s32.totalorder %s26, 0
      %p214 = por %p212, %p213
      %p215 = scmp.ne.s32.totalorder %s207, %s209
      %p216 = scmp.eq.s32.totalorder %s31, 1
      %p217 = por %p215, %p216
      %p218 = scmp.ne.s32.totalorder %s209, %s210
      %p219 = scmp.eq.s32.totalorder %s31, 0
      %p220 = por %p218, %p219
      %p221 = scmp.ne.s32.totalorder %s209, %s210
      %p222 = scmp.eq.s32.totalorder %s32, 1
      %p223 = por %p221, %p222
      %p225 = scmp.ne.s32.totalorder %s210, %s224
      %p226 = scmp.eq.s32.totalorder %s32, 0
      %p227 = por %p225, %p226
      %s229 = sadd.s32 %s228, 1
      %p232 = scmp.eq.s32.totalorder %s26, 1
      %p233 = scmp.ne.s32.totalorder %s228, %s230
      %p234 = scmp.eq.s32.totalorder %s26, 0
      %p235 = por %p233, %p234
      %p236 = scmp.ne.s32.totalorder %s228, %s230
      %p237 = scmp.eq.s32.totalorder %s31, 1
      %p238 = por %p236, %p237
      %p239 = scmp.ne.s32.totalorder %s230, %s231
      %p240 = scmp.eq.s32.totalorder %s31, 0
      %p241 = por %p239, %p240
      %p242 = scmp.ne.s32.totalorder %s230, %s231
      %p243 = scmp.eq.s32.totalorder %s32, 1
      %p244 = por %p242, %p243
      %p246 = scmp.ne.s32.totalorder %s231, %s245
      %p247 = scmp.eq.s32.totalorder %s32, 0
      %p248 = por %p246, %p247
      %s250 = sadd.s32 %s249, 1
      %p253 = scmp.eq.s32.totalorder %s26, 1
      %p254 = scmp.ne.s32.totalorder %s249, %s251
      %p255 = scmp.eq.s32.totalorder %s26, 0
      %p256 = por %p254, %p255
      %p257 = scmp.ne.s32.totalorder %s249, %s251
      %p258 = scmp.eq.s32.totalorder %s31, 1
      %p259 = por %p257, %p258
      %p260 = scmp.ne.s32.totalorder %s251, %s252
      %p261 = scmp.eq.s32.totalorder %s31, 0
      %p262 = por %p260, %p261
      %p263 = scmp.ne.s32.totalorder %s251, %s252
      %p264 = scmp.eq.s32.totalorder %s32, 1
      %p265 = por %p263, %p264
      %p267 = scmp.ne.s32.totalorder %s252, %s266
      %p268 = scmp.eq.s32.totalorder %s32, 0
      %p269 = por %p267, %p268
      %s271 = sadd.s32 %s270, 1
      %p274 = scmp.eq.s32.totalorder %s26, 1
      %p275 = scmp.ne.s32.totalorder %s270, %s272
      %p276 = scmp.eq.s32.totalorder %s26, 0
      %p277 = por %p275, %p276
      %p278 = scmp.ne.s32.totalorder %s270, %s272
      %p279 = scmp.eq.s32.totalorder %s31, 1
      %p280 = por %p278, %p279
      %p281 = scmp.ne.s32.totalorder %s272, %s273
      %p282 = scmp.eq.s32.totalorder %s31, 0
      %p283 = por %p281, %p282
      %p284 = scmp.ne.s32.totalorder %s272, %s273
      %p285 = scmp.eq.s32.totalorder %s32, 1
      %p286 = por %p284, %p285
      %p288 = scmp.ne.s32.totalorder %s273, %s287
      %p289 = scmp.eq.s32.totalorder %s32, 0
      %p290 = por %p288, %p289
      %s292 = sadd.s32 %s291, 1
      %p295 = scmp.eq.s32.totalorder %s26, 1
      %p296 = scmp.ne.s32.totalorder %s291, %s293
      %p297 = scmp.eq.s32.totalorder %s26, 0
      %p298 = por %p296, %p297
      %p299 = scmp.ne.s32.totalorder %s291, %s293
      %p300 = scmp.eq.s32.totalorder %s31, 1
      %p301 = por %p299, %p300
      %p302 = scmp.ne.s32.totalorder %s293, %s294
      %p303 = scmp.eq.s32.totalorder %s31, 0
      %p304 = por %p302, %p303
      %p305 = scmp.ne.s32.totalorder %s293, %s294
      %p306 = scmp.eq.s32.totalorder %s32, 1
      %p307 = por %p305, %p306
      %p309 = scmp.ne.s32.totalorder %s294, %s308
      %p310 = scmp.eq.s32.totalorder %s32, 0
      %p311 = por %p309, %p310
      %s312 = ssub.s32 %s26, %s33
      %p313 = scmp.eq.s32.totalorder %s312, 0
      %s315 = sadd.s32 %s314, 1
      %s316 = scalar_select %p313, %s314, %s315
      %p319 = pneg %p313
      %p320 = scmp.eq.s32.totalorder %s26, 1
      %p321 = por %p319, %p320
      %p322 = scmp.ne.s32.totalorder %s314, %s317
      %p323 = scmp.eq.s32.totalorder %s26, 0
      %p324 = por %p322, %p323
      %p325 = scmp.ne.s32.totalorder %s314, %s317
      %p326 = scmp.eq.s32.totalorder %s31, 1
      %p327 = por %p325, %p326
      %p328 = scmp.ne.s32.totalorder %s317, %s318
      %p329 = scmp.eq.s32.totalorder %s31, 0
      %p330 = por %p328, %p329
      %p331 = scmp.ne.s32.totalorder %s317, %s318
      %p332 = scmp.eq.s32.totalorder %s32, 1
      %p333 = por %p331, %p332
      %p335 = scmp.ne.s32.totalorder %s318, %s334
      %p336 = scmp.eq.s32.totalorder %s32, 0
      %p337 = por %p335, %p336
      %p338 = scmp.le.s32.totalorder 1, %s26
      %p339 = scmp.lt.s32.totalorder %s26, 3
      %p340 = pnand %p338, %p339
      %p341 = pneg %p340
      // Predicated region
      $region9: #{tpu_custom_call.1} parent=5 // pred_check
        _
      $region10: #{tpu_custom_call.1} parent=5 // pred_check_branch
        %343 = sbr.rel (%p340) target = $region12
      $region11: #{tpu_custom_call.1} parent=5 // pred_region
        %s344 = ssub.s32 %s26, 1
        // Predicated region
        $region13: #{tpu_custom_call.1} parent=11 // pred_check
          %p345 = pneg %p73
        $region14: #{tpu_custom_call.1} parent=11 // pred_check_branch
          %347 = sbr.rel (%p345) target = $region16
        $region15: #{tpu_custom_call.1} parent=11 // pred_region
          %349 = vsyncadd [#allocation6], 0
          %s351 = sshll.u32 %s1, 4
          %s352 = int_to_ptr.hbm [resolvable:$true] %s351
          %s353 = sshll.u32 [#allocation5], 4
          %s354 = int_to_ptr.vmem [resolvable:$true] %s353
          %356 = dma.hbm_to_vmem [thread:$0]  %s352, 16, %s354, [#allocation6]
        $region16: #{tpu_custom_call.1} parent=11 // pred_fallthru
          _
        // Predicated region
        $region17: #{tpu_custom_call.1} parent=11 // pred_check
          %p357 = pneg %p94
        $region18: #{tpu_custom_call.1} parent=11 // pred_check_branch
          %359 = sbr.rel (%p357) target = $region20
        $region19: #{tpu_custom_call.1} parent=11 // pred_region
          _
        $region20: #{tpu_custom_call.1} parent=11 // pred_fallthru
          _
        // Predicated region
        $region21: #{tpu_custom_call.1} parent=11 // pred_check
          %p360 = pneg %p115
        $region22: #{tpu_custom_call.1} parent=11 // pred_check_branch
          %362 = sbr.rel (%p360) target = $region24
        $region23: #{tpu_custom_call.1} parent=11 // pred_region
          _
        $region24: #{tpu_custom_call.1} parent=11 // pred_fallthru
          _
        // Predicated region
        $region25: #{tpu_custom_call.1} parent=11 // pred_check
          %p363 = pneg %p136
        $region26: #{tpu_custom_call.1} parent=11 // pred_check_branch
          %365 = sbr.rel (%p363) target = $region28
        $region27: #{tpu_custom_call.1} parent=11 // pred_region
          _
        $region28: #{tpu_custom_call.1} parent=11 // pred_fallthru
          _
        // Predicated region
        $region29: #{tpu_custom_call.1} parent=11 // pred_check
          %p366 = pneg %p157
        $region30: #{tpu_custom_call.1} parent=11 // pred_check_branch
          %368 = sbr.rel (%p366) target = $region32
        $region31: #{tpu_custom_call.1} parent=11 // pred_region
          _
        $region32: #{tpu_custom_call.1} parent=11 // pred_fallthru
          _
        // Predicated region
        $region33: #{tpu_custom_call.1} parent=11 // pred_check
          %p369 = pneg %p178
        $region34: #{tpu_custom_call.1} parent=11 // pred_check_branch
          %371 = sbr.rel (%p369) target = $region36
        $region35: #{tpu_custom_call.1} parent=11 // pred_region
          _
        $region36: #{tpu_custom_call.1} parent=11 // pred_fallthru
          _
        // Predicated region
        $region37: #{tpu_custom_call.1} parent=11 // pred_check
          %p372 = pneg %p199
        $region38: #{tpu_custom_call.1} parent=11 // pred_check_branch
          %374 = sbr.rel (%p372) target = $region40
        $region39: #{tpu_custom_call.1} parent=11 // pred_region
          _
        $region40: #{tpu_custom_call.1} parent=11 // pred_fallthru
          _
        // Predicated region
        $region41: #{tpu_custom_call.1} parent=11 // pred_check
          %p375 = pneg %p220
        $region42: #{tpu_custom_call.1} parent=11 // pred_check_branch
          %377 = sbr.rel (%p375) target = $region44
        $region43: #{tpu_custom_call.1} parent=11 // pred_region
          _
        $region44: #{tpu_custom_call.1} parent=11 // pred_fallthru
          _
        // Predicated region
        $region45: #{tpu_custom_call.1} parent=11 // pred_check
          %p378 = pneg %p241
        $region46: #{tpu_custom_call.1} parent=11 // pred_check_branch
          %380 = sbr.rel (%p378) target = $region48
        $region47: #{tpu_custom_call.1} parent=11 // pred_region
          _
        $region48: #{tpu_custom_call.1} parent=11 // pred_fallthru
          _
        // Predicated region
        $region49: #{tpu_custom_call.1} parent=11 // pred_check
          %p381 = pneg %p262
        $region50: #{tpu_custom_call.1} parent=11 // pred_check_branch
          %383 = sbr.rel (%p381) target = $region52
        $region51: #{tpu_custom_call.1} parent=11 // pred_region
          _
        $region52: #{tpu_custom_call.1} parent=11 // pred_fallthru
          _
        // Predicated region
        $region53: #{tpu_custom_call.1} parent=11 // pred_check
          %p384 = pneg %p283
        $region54: #{tpu_custom_call.1} parent=11 // pred_check_branch
          %386 = sbr.rel (%p384) target = $region56
        $region55: #{tpu_custom_call.1} parent=11 // pred_region
          _
        $region56: #{tpu_custom_call.1} parent=11 // pred_fallthru
          _
        // Predicated region
        $region57: #{tpu_custom_call.1} parent=11 // pred_check
          %p387 = pneg %p304
        $region58: #{tpu_custom_call.1} parent=11 // pred_check_branch
          %389 = sbr.rel (%p387) target = $region60
        $region59: #{tpu_custom_call.1} parent=11 // pred_region
          _
        $region60: #{tpu_custom_call.1} parent=11 // pred_fallthru
          _
      $region12: #{tpu_custom_call.1} parent=5 // pred_fallthru
        _
      %p390 = scmp.lt.s32.totalorder %s26, 2
      // Predicated region
      $region61: #{tpu_custom_call.1} parent=5 // pred_check
        %p391 = pneg %p390
      $region62: #{tpu_custom_call.1} parent=5 // pred_check_branch
        %393 = sbr.rel (%p391) target = $region64
      $region63: #{tpu_custom_call.1} parent=5 // pred_region
        // Predicated region
        $region65: #{tpu_custom_call.1} parent=63 // pred_check
          %p394 = pneg %p46
        $region66: #{tpu_custom_call.1} parent=63 // pred_check_branch
          %396 = sbr.rel (%p394) target = $region68
        $region67: #{tpu_custom_call.1} parent=63 // pred_region
          %s397 = sand.u32 %s36, 1
          %s398 = scalar_lea.sflag [#allocation3], %s397
          %s399 = sand.u32 %s36, 1
          %s400 = smul.addr %s399, 8
          %s401 = scalar_lea.vmem [#allocation2], %s400
          %403 = vsyncadd %s398, 0
          %s404 = smul.addr %s26, 8
          %s405 = scalar_lea.hbm %s0, %s404
          %s407 = sshll.u32 %s405, 4
          %s408 = int_to_ptr.hbm [resolvable:$true] %s407
          %s409 = sshll.u32 %s401, 4
          %s410 = int_to_ptr.vmem [resolvable:$true] %s409
          %412 = dma.hbm_to_vmem [thread:$0]  %s408, 128, %s410, %s398
        $region68: #{tpu_custom_call.1} parent=63 // pred_fallthru
          _
      $region64: #{tpu_custom_call.1} parent=5 // pred_fallthru
        _
      %p413 = scmp.le.s32.totalorder 1, %s26
      %p414 = scmp.lt.s32.totalorder %s26, 3
      %p415 = pnand %p413, %p414
      %p416 = pneg %p415
      // Predicated region
      $region69: #{tpu_custom_call.1} parent=5 // pred_check
        _
      $region70: #{tpu_custom_call.1} parent=5 // pred_check_branch
        %418 = sbr.rel (%p415) target = $region72
      $region71: #{tpu_custom_call.1} parent=5 // pred_region
        %s419 = ssub.s32 %s26, 1
        %s420 = sand.u32 %s39, 1
        %s421 = scalar_lea.sflag [#allocation3], %s420
        %s422 = sand.u32 %s39, 1
        %s423 = smul.addr %s422, 8
        %s424 = scalar_lea.vmem [#allocation2], %s423
        // Predicated region
        $region73: #{tpu_custom_call.1} parent=71 // pred_check
          %p425 = pneg %p52
        $region74: #{tpu_custom_call.1} parent=71 // pred_check_branch
          %427 = sbr.rel (%p425) target = $region76
        $region75: #{tpu_custom_call.1} parent=71 // pred_region
          %429 = dma.done %s421, 128
        $region76: #{tpu_custom_call.1} parent=71 // pred_fallthru
          _
        // Predicated region
        $region77: #{tpu_custom_call.1} parent=71 // pred_check
          %p430 = pneg %p73
        $region78: #{tpu_custom_call.1} parent=71 // pred_check_branch
          %432 = sbr.rel (%p430) target = $region80
        $region79: #{tpu_custom_call.1} parent=71 // pred_region
          %434 = dma.done [#allocation6], 16
        $region80: #{tpu_custom_call.1} parent=71 // pred_fallthru
          _
        %s435 = sand.u32 %s39, 1
        %s436 = scalar_lea.sflag [#allocation3], %s435
        %s437 = sand.u32 %s39, 1
        %s438 = smul.addr %s437, 8
        %s439 = scalar_lea.vmem [#allocation2], %s438
        %p440 = pneg %p52
        %p441 = pneg %p49
        %p442 = pneg %p73
        %p443 = pneg %p70
        %p444 = pneg %p94
        %p445 = pneg %p91
        %p446 = pneg %p115
        %p447 = pneg %p112
        %p448 = pneg %p136
        %p449 = pneg %p133
        %p450 = pneg %p157
        %p451 = pneg %p154
        %p452 = pneg %p178
        %p453 = pneg %p175
        %p454 = pneg %p199
        %p455 = pneg %p196
        %p456 = pneg %p220
        %p457 = pneg %p217
        %p458 = pneg %p241
        %p459 = pneg %p238
        %p460 = pneg %p262
        %p461 = pneg %p259
        %p462 = pneg %p283
        %p463 = pneg %p280
        %p464 = pneg %p304
        %p465 = pneg %p301
        %p466 = pneg %p330
        %p467 = pneg %p327
        %s468 = sand.u32 %s317, 1
        %s469 = scalar_lea.sflag [#allocation4], %s468
        %s470 = sand.u32 %s317, 1
        %s471 = smul.addr %s470, 8
        %s472 = scalar_lea.vmem [#allocation7], %s471
        %v473 = vld [vmem:[%s424] sm:$0xff]
        %v474 = vld [vmem:[#allocation5] sm:$0x1]
        %v475 = vld [vmem:[%s2] sm:$0x1]
        %vm476 = vcmask 261120
        %v477 = vsel %vm476, %v473, 0.0
        %478 = vadd.xlane.f32.xlu0 %v477
        %v479 = vpop.xlane.xlu0 %478
        %v480 = vrcp.pop 32.0
        %v481 = vmul.f32 32.0, %v480
        %v482 = vsub.f32 1.0, %v481
        %v483 = vmul.f32 %v480, %v482
        %v484 = vadd.f32 %v480, %v483
        %vm485 = vweird.f32 %v480
        %v486 = vsel %vm485, %v480, %v484
        %v487 = vmul.f32 %v479, %v486
        %v488 = vsub.f32 %v473, %v487
        %v489 = vmul.f32 %v488, %v488
        %v490 = vsel %vm476, %v489, 0.0
        %491 = vadd.xlane.f32.xlu0 %v490
        %v492 = vpop.xlane.xlu0 %491
        %v493 = vmul.f32 %v492, %v486
        %v494 = vadd.f32 %v493, 1e-05
        %v495 = vrsqrt.pop %v494
        %v496 = vmul.f32 %v495, %v494
        %v497 = vmul.f32 %v496, %v495
        %v498 = vmul.f32 0.5, %v497
        %v499 = vsub.f32 1.5, %v498
        %v500 = vmul.f32 %v495, %v499
        %vm501 = vweird.f32 %v494
        %vm502 = vweird.f32 %v495
        %vm503 = vmor %vm501, %vm502
        %v504 = vsel %vm503, %v495, %v500
        %v505 = vmul.f32 %v488, %v504
        %v507 = vperm.slane %v474, 0
        %v509 = vmul.f32 %v505, %v507
        %v511 = vperm.slane %v475, 0
        %v513 = vadd.f32 %v509, %v511
        %v514 = vld [vmem:[%s3] sm:$0xff]
        %v515 = vld [vmem:[%s3 + $0x8] sm:$0xff]
        %v516 = vld [vmem:[%s3 + $0x10] sm:$0xff]
        %v517 = vld [vmem:[%s3 + $0x18] sm:$0xff]
        %v518 = vld [vmem:[%s4] sm:$0x1]
        %v520 = vperm.slane %v518, 0
        %v523 = vsel %vm476, %v513, 0
        %525 = vmatpush.msra.mxu0 0.0
        %526 = vmatpush.msra.mxu0 0.0
        %527 = vmatpush.msra.mxu0 0.0
        %528 = vmatpush.msra.mxu0 0.0
        %529 = vmatpush.msra.mxu0 0.0
        %530 = vmatpush.msra.mxu0 0.0
        %531 = vmatpush.msra.mxu0 0.0
        %532 = vmatpush.msra.mxu0 0.0
        %533 = vmatpush.msra.mxu0 0.0
        %534 = vmatpush.msra.mxu0 0.0
        %535 = vmatpush.msra.mxu0 0.0
        %536 = vmatpush.msra.mxu0 0.0
        %537 = vmatpush.msra.mxu0 %v517
        %538 = vmatpush.msra.mxu0 %v516
        %539 = vmatpush.msra.mxu0 %v515
        %540 = vmatpush.msra.mxu0 %v514
        %541 = vmatmul.f32.gmra.mxu0 %v523
        %v542 = vpop.f32.mrf.mxu0
        %v543 = vadd.f32 %v520, %v542
        %544 = vdwg.mxu0
        %546 = vrot.lane.b32.xlu0 %v543, 120
        %v547 = vpop.permute.xlu0 %546
        %549 = vrot.lane.b32.xlu0 %v543, 112
        %v550 = vpop.permute.xlu0 %549
        %552 = vrot.lane.b32.xlu0 %v543, 104
        %v553 = vpop.permute.xlu0 %552
        %v555 = vrot.slane %v550, 4
        %vm556 = vcmask 1047556
        %v557 = vsel %vm556, %v555, %v543
        %v558 = vrot.slane %v543, 4
        %v559 = vsel %vm556, %v550, %v558
        %v561 = vunpack.c.l.s4 1983009808
        %v562 = vunpack.c.0.s8 %v561
        %v563 = vperm.slane %v557, %v562
        %v565 = vunpack.c.l.s4 1983009808
        %v566 = vunpack.c.0.s8 %v565
        %v567 = vperm.slane %v559, %v566
        %v568 = vrot.slane %v553, 4
        %v569 = vsel %vm556, %v568, %v547
        %v570 = vrot.slane %v547, 4
        %v571 = vsel %vm556, %v553, %v570
        %v573 = vunpack.c.l.s4 1983009808
        %v574 = vunpack.c.0.s8 %v573
        %v575 = vperm.slane %v569, %v574
        %v577 = vunpack.c.l.s4 1983009808
        %v578 = vunpack.c.0.s8 %v577
        %v579 = vperm.slane %v571, %v578
        %v580 = vrot.slane %v575, 4
        %v581 = vsel %vm556, %v580, %v563
        %v582 = vrot.slane %v563, 4
        %v583 = vsel %vm556, %v575, %v582
        %v585 = vunpack.c.l.s4 1934713408
        %v586 = vunpack.c.0.s8 %v585
        %v587 = vperm.slane %v581, %v586
        %v589 = vunpack.c.l.s4 1934713408
        %v590 = vunpack.c.0.s8 %v589
        %v591 = vperm.slane %v583, %v590
        %v592 = vrot.slane %v579, 4
        %v593 = vsel %vm556, %v592, %v567
        %v594 = vrot.slane %v567, 4
        %v595 = vsel %vm556, %v579, %v594
        %v597 = vunpack.c.l.s4 1934713408
        %v598 = vunpack.c.0.s8 %v597
        %v599 = vperm.slane %v593, %v598
        %v601 = vunpack.c.l.s4 1934713408
        %v602 = vunpack.c.0.s8 %v601
        %v603 = vperm.slane %v595, %v602
        %v604 = vrot.slane %v587, 4
        %v605 = vsel %vm556, 0.0, %v604
        %v606 = vrot.slane %v591, 4
        %v607 = vsel %vm556, 0.0, %v606
        %v608 = vrot.slane %v599, 4
        %v609 = vsel %vm556, 0.0, %v608
        %v610 = vrot.slane %v603, 4
        %v611 = vsel %vm556, 0.0, %v610
        %v612 = vsel %vm556, %v606, %v587
        %v614 = vunpack.c.l.s4 1983009808
        %v615 = vunpack.c.0.s8 %v614
        %v616 = vperm.slane %v612, %v615
        %v617 = vrot.slane %v607, 4
        %v618 = vsel %vm556, %v617, %v605
        %v620 = vunpack.c.l.s4 1983009808
        %v621 = vunpack.c.0.s8 %v620
        %v622 = vperm.slane %v618, %v621
        %v623 = vsel %vm556, %v610, %v599
        %v625 = vunpack.c.l.s4 1983009808
        %v626 = vunpack.c.0.s8 %v625
        %v627 = vperm.slane %v623, %v626
        %v628 = vrot.slane %v611, 4
        %v629 = vsel %vm556, %v628, %v609
        %v631 = vunpack.c.l.s4 1983009808
        %v632 = vunpack.c.0.s8 %v631
        %v633 = vperm.slane %v629, %v632
        %v634 = vrot.slane %v622, 4
        %v635 = vsel %vm556, %v634, %v616
        %v636 = vrot.slane %v616, 4
        %v637 = vsel %vm556, %v622, %v636
        %v639 = vunpack.c.l.s4 1934713408
        %v640 = vunpack.c.0.s8 %v639
        %v641 = vperm.slane %v635, %v640
        %v643 = vunpack.c.l.s4 1934713408
        %v644 = vunpack.c.0.s8 %v643
        %v645 = vperm.slane %v637, %v644
        %v646 = vrot.slane %v633, 4
        %v647 = vsel %vm556, %v646, %v627
        %v648 = vrot.slane %v627, 4
        %v649 = vsel %vm556, %v633, %v648
        %v651 = vunpack.c.l.s4 1934713408
        %v652 = vunpack.c.0.s8 %v651
        %v653 = vperm.slane %v647, %v652
        %v655 = vunpack.c.l.s4 1934713408
        %v656 = vunpack.c.0.s8 %v655
        %v657 = vperm.slane %v649, %v656
        %v658 = vrot.slane %v653, 4
        %v659 = vsel %vm556, %v658, %v641
        %v660 = vrot.slane %v641, 4
        %v661 = vsel %vm556, %v653, %v660
        %v662 = vrot.slane %v657, 4
        %v663 = vsel %vm556, %v662, %v645
        %v664 = vrot.slane %v645, 4
        %v665 = vsel %vm556, %v657, %v664
        %666 = vrot.lane.b32.xlu0 %v543, 96
        %v667 = vpop.permute.xlu0 %666
        %668 = vrot.lane.b32.xlu0 %v547, 96
        %v669 = vpop.permute.xlu0 %668
        %670 = vrot.lane.b32.xlu0 %v550, 96
        %v671 = vpop.permute.xlu0 %670
        %672 = vrot.lane.b32.xlu0 %v553, 96
        %v673 = vpop.permute.xlu0 %672
        %v678 = vrot.slane %v671, 4
        %v679 = vsel %vm556, %v678, %v667
        %v680 = vrot.slane %v667, 4
        %v681 = vsel %vm556, %v671, %v680
        %v683 = vunpack.c.l.s4 1983009808
        %v684 = vunpack.c.0.s8 %v683
        %v685 = vperm.slane %v679, %v684
        %v687 = vunpack.c.l.s4 1983009808
        %v688 = vunpack.c.0.s8 %v687
        %v689 = vperm.slane %v681, %v688
        %v690 = vrot.slane %v673, 4
        %v691 = vsel %vm556, %v690, %v669
        %v692 = vrot.slane %v669, 4
        %v693 = vsel %vm556, %v673, %v692
        %v695 = vunpack.c.l.s4 1983009808
        %v696 = vunpack.c.0.s8 %v695
        %v697 = vperm.slane %v691, %v696
        %v699 = vunpack.c.l.s4 1983009808
        %v700 = vunpack.c.0.s8 %v699
        %v701 = vperm.slane %v693, %v700
        %v702 = vrot.slane %v697, 4
        %v703 = vsel %vm556, %v702, %v685
        %v704 = vrot.slane %v685, 4
        %v705 = vsel %vm556, %v697, %v704
        %v707 = vunpack.c.l.s4 1934713408
        %v708 = vunpack.c.0.s8 %v707
        %v709 = vperm.slane %v703, %v708
        %v711 = vunpack.c.l.s4 1934713408
        %v712 = vunpack.c.0.s8 %v711
        %v713 = vperm.slane %v705, %v712
        %v714 = vrot.slane %v701, 4
        %v715 = vsel %vm556, %v714, %v689
        %v716 = vrot.slane %v689, 4
        %v717 = vsel %vm556, %v701, %v716
        %v719 = vunpack.c.l.s4 1934713408
        %v720 = vunpack.c.0.s8 %v719
        %v721 = vperm.slane %v715, %v720
        %v723 = vunpack.c.l.s4 1934713408
        %v724 = vunpack.c.0.s8 %v723
        %v725 = vperm.slane %v717, %v724
        %v726 = vrot.slane %v709, 4
        %v727 = vsel %vm556, 0.0, %v726
        %v728 = vrot.slane %v713, 4
        %v729 = vsel %vm556, 0.0, %v728
        %v730 = vrot.slane %v721, 4
        %v731 = vsel %vm556, 0.0, %v730
        %v732 = vrot.slane %v725, 4
        %v733 = vsel %vm556, 0.0, %v732
        %v734 = vsel %vm556, %v728, %v709
        %v736 = vunpack.c.l.s4 1983009808
        %v737 = vunpack.c.0.s8 %v736
        %v738 = vperm.slane %v734, %v737
        %v739 = vrot.slane %v729, 4
        %v740 = vsel %vm556, %v739, %v727
        %v742 = vunpack.c.l.s4 1983009808
        %v743 = vunpack.c.0.s8 %v742
        %v744 = vperm.slane %v740, %v743
        %v745 = vsel %vm556, %v732, %v721
        %v747 = vunpack.c.l.s4 1983009808
        %v748 = vunpack.c.0.s8 %v747
        %v749 = vperm.slane %v745, %v748
        %v750 = vrot.slane %v733, 4
        %v751 = vsel %vm556, %v750, %v731
        %v753 = vunpack.c.l.s4 1983009808
        %v754 = vunpack.c.0.s8 %v753
        %v755 = vperm.slane %v751, %v754
        %v756 = vrot.slane %v744, 4
        %v757 = vsel %vm556, %v756, %v738
        %v758 = vrot.slane %v738, 4
        %v759 = vsel %vm556, %v744, %v758
        %v761 = vunpack.c.l.s4 1934713408
        %v762 = vunpack.c.0.s8 %v761
        %v763 = vperm.slane %v757, %v762
        %v765 = vunpack.c.l.s4 1934713408
        %v766 = vunpack.c.0.s8 %v765
        %v767 = vperm.slane %v759, %v766
        %v768 = vrot.slane %v755, 4
        %v769 = vsel %vm556, %v768, %v749
        %v770 = vrot.slane %v749, 4
        %v771 = vsel %vm556, %v755, %v770
        %v773 = vunpack.c.l.s4 1934713408
        %v774 = vunpack.c.0.s8 %v773
        %v775 = vperm.slane %v769, %v774
        %v777 = vunpack.c.l.s4 1934713408
        %v778 = vunpack.c.0.s8 %v777
        %v779 = vperm.slane %v771, %v778
        %v780 = vrot.slane %v775, 4
        %v781 = vsel %vm556, %v780, %v763
        %v782 = vrot.slane %v763, 4
        %v783 = vsel %vm556, %v775, %v782
        %v784 = vrot.slane %v779, 4
        %v785 = vsel %vm556, %v784, %v767
        %v786 = vrot.slane %v767, 4
        %v787 = vsel %vm556, %v779, %v786
        %788 = vrot.lane.b32.xlu0 %v543, 64
        %v789 = vpop.permute.xlu0 %788
        %790 = vrot.lane.b32.xlu0 %v547, 64
        %v791 = vpop.permute.xlu0 %790
        %792 = vrot.lane.b32.xlu0 %v550, 64
        %v793 = vpop.permute.xlu0 %792
        %794 = vrot.lane.b32.xlu0 %v553, 64
        %v795 = vpop.permute.xlu0 %794
        %v800 = vrot.slane %v793, 4
        %v801 = vsel %vm556, %v800, %v789
        %v802 = vrot.slane %v789, 4
        %v803 = vsel %vm556, %v793, %v802
        %v805 = vunpack.c.l.s4 1983009808
        %v806 = vunpack.c.0.s8 %v805
        %v807 = vperm.slane %v801, %v806
        %v809 = vunpack.c.l.s4 1983009808
        %v810 = vunpack.c.0.s8 %v809
        %v811 = vperm.slane %v803, %v810
        %v812 = vrot.slane %v795, 4
        %v813 = vsel %vm556, %v812, %v791
        %v814 = vrot.slane %v791, 4
        %v815 = vsel %vm556, %v795, %v814
        %v817 = vunpack.c.l.s4 1983009808
        %v818 = vunpack.c.0.s8 %v817
        %v819 = vperm.slane %v813, %v818
        %v821 = vunpack.c.l.s4 1983009808
        %v822 = vunpack.c.0.s8 %v821
        %v823 = vperm.slane %v815, %v822
        %v824 = vrot.slane %v819, 4
        %v825 = vsel %vm556, %v824, %v807
        %v826 = vrot.slane %v807, 4
        %v827 = vsel %vm556, %v819, %v826
        %v829 = vunpack.c.l.s4 1934713408
        %v830 = vunpack.c.0.s8 %v829
        %v831 = vperm.slane %v825, %v830
        %v833 = vunpack.c.l.s4 1934713408
        %v834 = vunpack.c.0.s8 %v833
        %v835 = vperm.slane %v827, %v834
        %v836 = vrot.slane %v823, 4
        %v837 = vsel %vm556, %v836, %v811
        %v838 = vrot.slane %v811, 4
        %v839 = vsel %vm556, %v823, %v838
        %v841 = vunpack.c.l.s4 1934713408
        %v842 = vunpack.c.0.s8 %v841
        %v843 = vperm.slane %v837, %v842
        %v845 = vunpack.c.l.s4 1934713408
        %v846 = vunpack.c.0.s8 %v845
        %v847 = vperm.slane %v839, %v846
        %v848 = vrot.slane %v831, 4
        %v849 = vsel %vm556, 0.0, %v848
        %v850 = vrot.slane %v835, 4
        %v851 = vsel %vm556, 0.0, %v850
        %v852 = vrot.slane %v843, 4
        %v853 = vsel %vm556, 0.0, %v852
        %v854 = vrot.slane %v847, 4
        %v855 = vsel %vm556, 0.0, %v854
        %v856 = vsel %vm556, %v850, %v831
        %v858 = vunpack.c.l.s4 1983009808
        %v859 = vunpack.c.0.s8 %v858
        %v860 = vperm.slane %v856, %v859
        %v861 = vrot.slane %v851, 4
        %v862 = vsel %vm556, %v861, %v849
        %v864 = vunpack.c.l.s4 1983009808
        %v865 = vunpack.c.0.s8 %v864
        %v866 = vperm.slane %v862, %v865
        %v867 = vsel %vm556, %v854, %v843
        %v869 = vunpack.c.l.s4 1983009808
        %v870 = vunpack.c.0.s8 %v869
        %v871 = vperm.slane %v867, %v870
        %v872 = vrot.slane %v855, 4
        %v873 = vsel %vm556, %v872, %v853
        %v875 = vunpack.c.l.s4 1983009808
        %v876 = vunpack.c.0.s8 %v875
        %v877 = vperm.slane %v873, %v876
        %v878 = vrot.slane %v866, 4
        %v879 = vsel %vm556, %v878, %v860
        %v880 = vrot.slane %v860, 4
        %v881 = vsel %vm556, %v866, %v880
        %v883 = vunpack.c.l.s4 1934713408
        %v884 = vunpack.c.0.s8 %v883
        %v885 = vperm.slane %v879, %v884
        %v887 = vunpack.c.l.s4 1934713408
        %v888 = vunpack.c.0.s8 %v887
        %v889 = vperm.slane %v881, %v888
        %v890 = vrot.slane %v877, 4
        %v891 = vsel %vm556, %v890, %v871
        %v892 = vrot.slane %v871, 4
        %v893 = vsel %vm556, %v877, %v892
        %v895 = vunpack.c.l.s4 1934713408
        %v896 = vunpack.c.0.s8 %v895
        %v897 = vperm.slane %v891, %v896
        %v899 = vunpack.c.l.s4 1934713408
        %v900 = vunpack.c.0.s8 %v899
        %v901 = vperm.slane %v893, %v900
        %v902 = vrot.slane %v897, 4
        %v903 = vsel %vm556, %v902, %v885
        %v904 = vrot.slane %v885, 4
        %v905 = vsel %vm556, %v897, %v904
        %v906 = vrot.slane %v901, 4
        %v907 = vsel %vm556, %v906, %v889
        %v908 = vrot.slane %v889, 4
        %v909 = vsel %vm556, %v901, %v908
        %vm910 = vcmask 64512
        %v912 = vsel %vm910, %v659, 0
        %v915 = vsel %vm910, %v781, 0
        %917 = vmatpush.xpose.msra.mxu0 0.0
        %918 = vmatpush.xpose.msra.mxu0 0.0
        %919 = vmatpush.xpose.msra.mxu0 0.0
        %920 = vmatpush.xpose.msra.mxu0 0.0
        %921 = vmatpush.xpose.msra.mxu0 0.0
        %922 = vmatpush.xpose.msra.mxu0 0.0
        %923 = vmatpush.xpose.msra.mxu0 0.0
        %924 = vmatpush.xpose.msra.mxu0 0.0
        %925 = vmatpush.xpose.msra.mxu0 0.0
        %926 = vmatpush.xpose.msra.mxu0 0.0
        %927 = vmatpush.xpose.msra.mxu0 0.0
        %928 = vmatpush.xpose.msra.mxu0 0.0
        %929 = vmatpush.xpose.msra.mxu0 0.0
        %930 = vmatpush.xpose.msra.mxu0 0.0
        %931 = vmatpush.xpose.msra.mxu0 0.0
        %932 = vmatpush.xpose.msra.mxu0 %v915
        %933 = vmatmul.f32.gmra.mxu0 %v912
        %v934 = vpop.f32.mrf.mxu0
        %v935 = vadd.f32 0.0, %v934
        %936 = vdwg.mxu0
        %v938 = vsel %vm910, %v661, 0
        %v941 = vsel %vm910, %v783, 0
        %943 = vmatpush.xpose.msra.mxu0 0.0
        %944 = vmatpush.xpose.msra.mxu0 0.0
        %945 = vmatpush.xpose.msra.mxu0 0.0
        %946 = vmatpush.xpose.msra.mxu0 0.0
        %947 = vmatpush.xpose.msra.mxu0 0.0
        %948 = vmatpush.xpose.msra.mxu0 0.0
        %949 = vmatpush.xpose.msra.mxu0 0.0
        %950 = vmatpush.xpose.msra.mxu0 0.0
        %951 = vmatpush.xpose.msra.mxu0 0.0
        %952 = vmatpush.xpose.msra.mxu0 0.0
        %953 = vmatpush.xpose.msra.mxu0 0.0
        %954 = vmatpush.xpose.msra.mxu0 0.0
        %955 = vmatpush.xpose.msra.mxu0 0.0
        %956 = vmatpush.xpose.msra.mxu0 0.0
        %957 = vmatpush.xpose.msra.mxu0 0.0
        %958 = vmatpush.xpose.msra.mxu0 %v941
        %959 = vmatmul.f32.gmra.mxu0 %v938
        %v960 = vpop.f32.mrf.mxu0
        %v961 = vadd.f32 0.0, %v960
        %962 = vdwg.mxu0
        %v964 = vsel %vm910, %v663, 0
        %v967 = vsel %vm910, %v785, 0
        %969 = vmatpush.xpose.msra.mxu0 0.0
        %970 = vmatpush.xpose.msra.mxu0 0.0
        %971 = vmatpush.xpose.msra.mxu0 0.0
        %972 = vmatpush.xpose.msra.mxu0 0.0
        %973 = vmatpush.xpose.msra.mxu0 0.0
        %974 = vmatpush.xpose.msra.mxu0 0.0
        %975 = vmatpush.xpose.msra.mxu0 0.0
        %976 = vmatpush.xpose.msra.mxu0 0.0
        %977 = vmatpush.xpose.msra.mxu0 0.0
        %978 = vmatpush.xpose.msra.mxu0 0.0
        %979 = vmatpush.xpose.msra.mxu0 0.0
        %980 = vmatpush.xpose.msra.mxu0 0.0
        %981 = vmatpush.xpose.msra.mxu0 0.0
        %982 = vmatpush.xpose.msra.mxu0 0.0
        %983 = vmatpush.xpose.msra.mxu0 0.0
        %984 = vmatpush.xpose.msra.mxu0 %v967
        %985 = vmatmul.f32.gmra.mxu0 %v964
        %v986 = vpop.f32.mrf.mxu0
        %v987 = vadd.f32 0.0, %v986
        %988 = vdwg.mxu0
        %v990 = vsel %vm910, %v665, 0
        %v993 = vsel %vm910, %v787, 0
        %995 = vmatpush.xpose.msra.mxu0 0.0
        %996 = vmatpush.xpose.msra.mxu0 0.0
        %997 = vmatpush.xpose.msra.mxu0 0.0
        %998 = vmatpush.xpose.msra.mxu0 0.0
        %999 = vmatpush.xpose.msra.mxu0 0.0
        %1000 = vmatpush.xpose.msra.mxu0 0.0
        %1001 = vmatpush.xpose.msra.mxu0 0.0
        %1002 = vmatpush.xpose.msra.mxu0 0.0
        %1003 = vmatpush.xpose.msra.mxu0 0.0
        %1004 = vmatpush.xpose.msra.mxu0 0.0
        %1005 = vmatpush.xpose.msra.mxu0 0.0
        %1006 = vmatpush.xpose.msra.mxu0 0.0
        %1007 = vmatpush.xpose.msra.mxu0 0.0
        %1008 = vmatpush.xpose.msra.mxu0 0.0
        %1009 = vmatpush.xpose.msra.mxu0 0.0
        %1010 = vmatpush.xpose.msra.mxu0 %v993
        %1011 = vmatmul.f32.gmra.mxu0 %v990
        %v1012 = vpop.f32.mrf.mxu0
        %v1013 = vadd.f32 0.0, %v1012
        %1014 = vdwg.mxu0
        %v1015 = vsel %vm910, %v935, -inf
        %1016 = vmax.xlane.f32.xlu0 %v1015
        %v1017 = vpop.xlane.xlu0 %1016
        %v1018 = vsel %vm910, %v961, -inf
        %1019 = vmax.xlane.f32.xlu0 %v1018
        %v1020 = vpop.xlane.xlu0 %1019
        %v1021 = vsel %vm910, %v987, -inf
        %1022 = vmax.xlane.f32.xlu0 %v1021
        %v1023 = vpop.xlane.xlu0 %1022
        %v1024 = vsel %vm910, %v1013, -inf
        %1025 = vmax.xlane.f32.xlu0 %v1024
        %v1026 = vpop.xlane.xlu0 %1025
        %v1027 = vsub.f32 %v935, %v1017
        %v1028 = vsub.f32 %v961, %v1020
        %v1029 = vsub.f32 %v987, %v1023
        %v1030 = vsub.f32 %v1013, %v1026
        %v1031 = vmul.f32 %v1027, 1.442695
        %v1032 = vpow.pop %v1031
        %v1033 = vmul.f32 %v1028, 1.442695
        %v1034 = vpow.pop %v1033
        %v1035 = vmul.f32 %v1029, 1.442695
        %v1036 = vpow.pop %v1035
        %v1037 = vmul.f32 %v1030, 1.442695
        %v1038 = vpow.pop %v1037
        %v1039 = vsel %vm910, %v1032, 0.0
        %1040 = vadd.xlane.f32.xlu0 %v1039
        %v1041 = vpop.xlane.xlu0 %1040
        %v1042 = vsel %vm910, %v1034, 0.0
        %1043 = vadd.xlane.f32.xlu0 %v1042
        %v1044 = vpop.xlane.xlu0 %1043
        %v1045 = vsel %vm910, %v1036, 0.0
        %1046 = vadd.xlane.f32.xlu0 %v1045
        %v1047 = vpop.xlane.xlu0 %1046
        %v1048 = vsel %vm910, %v1038, 0.0
        %1049 = vadd.xlane.f32.xlu0 %v1048
        %v1050 = vpop.xlane.xlu0 %1049
        %v1051 = vrcp.pop %v1041
        %v1052 = vmul.f32 %v1041, %v1051
        %v1053 = vsub.f32 1.0, %v1052
        %v1054 = vmul.f32 %v1051, %v1053
        %v1055 = vadd.f32 %v1051, %v1054
        %vm1056 = vweird.f32 %v1041
        %vm1057 = vweird.f32 %v1051
        %vm1058 = vmor %vm1056, %vm1057
        %v1059 = vsel %vm1058, %v1051, %v1055
        %v1060 = vand.u32 2147483647, %v1041
        %vm1061 = vcmp.eq.f32.partialorder %v1060, 8.507059e+37
        %v1062 = vand.u32 %v1041, 2147483648
        %v1063 = vor.u32 1.1754944e-38, %v1062
        %v1064 = vsel %vm1061, %v1063, %v1059
        %v1065 = vrcp.pop %v1044
        %v1066 = vmul.f32 %v1044, %v1065
        %v1067 = vsub.f32 1.0, %v1066
        %v1068 = vmul.f32 %v1065, %v1067
        %v1069 = vadd.f32 %v1065, %v1068
        %vm1070 = vweird.f32 %v1044
        %vm1071 = vweird.f32 %v1065
        %vm1072 = vmor %vm1070, %vm1071
        %v1073 = vsel %vm1072, %v1065, %v1069
        %v1074 = vand.u32 2147483647, %v1044
        %vm1075 = vcmp.eq.f32.partialorder %v1074, 8.507059e+37
        %v1076 = vand.u32 %v1044, 2147483648
        %v1077 = vor.u32 1.1754944e-38, %v1076
        %v1078 = vsel %vm1075, %v1077, %v1073
        %v1079 = vrcp.pop %v1047
        %v1080 = vmul.f32 %v1047, %v1079
        %v1081 = vsub.f32 1.0, %v1080
        %v1082 = vmul.f32 %v1079, %v1081
        %v1083 = vadd.f32 %v1079, %v1082
        %vm1084 = vweird.f32 %v1047
        %vm1085 = vweird.f32 %v1079
        %vm1086 = vmor %vm1084, %vm1085
        %v1087 = vsel %vm1086, %v1079, %v1083
        %v1088 = vand.u32 2147483647, %v1047
        %vm1089 = vcmp.eq.f32.partialorder %v1088, 8.507059e+37
        %v1090 = vand.u32 %v1047, 2147483648
        %v1091 = vor.u32 1.1754944e-38, %v1090
        %v1092 = vsel %vm1089, %v1091, %v1087
        %v1093 = vrcp.pop %v1050
        %v1094 = vmul.f32 %v1050, %v1093
        %v1095 = vsub.f32 1.0, %v1094
        %v1096 = vmul.f32 %v1093, %v1095
        %v1097 = vadd.f32 %v1093, %v1096
        %vm1098 = vweird.f32 %v1050
        %vm1099 = vweird.f32 %v1093
        %vm1100 = vmor %vm1098, %vm1099
        %v1101 = vsel %vm1100, %v1093, %v1097
        %v1102 = vand.u32 2147483647, %v1050
        %vm1103 = vcmp.eq.f32.partialorder %v1102, 8.507059e+37
        %v1104 = vand.u32 %v1050, 2147483648
        %v1105 = vor.u32 1.1754944e-38, %v1104
        %v1106 = vsel %vm1103, %v1105, %v1101
        %v1107 = vmul.f32 %v1032, %v1064
        %v1108 = vmul.f32 %v1034, %v1078
        %v1109 = vmul.f32 %v1036, %v1092
        %v1110 = vmul.f32 %v1038, %v1106
        %v1112 = vsel %vm910, %v1107, 0
        %1114 = vmatpush.msra.mxu0 0.0
        %1115 = vmatpush.msra.mxu0 0.0
        %1116 = vmatpush.msra.mxu0 0.0
        %1117 = vmatpush.msra.mxu0 0.0
        %1118 = vmatpush.msra.mxu0 0.0
        %1119 = vmatpush.msra.mxu0 0.0
        %1120 = vmatpush.msra.mxu0 0.0
        %1121 = vmatpush.msra.mxu0 0.0
        %1122 = vmatpush.msra.mxu0 0.0
        %1123 = vmatpush.msra.mxu0 0.0
        %1124 = vmatpush.msra.mxu0 0.0
        %1125 = vmatpush.msra.mxu0 0.0
        %1126 = vmatpush.msra.mxu0 0.0
        %1127 = vmatpush.msra.mxu0 0.0
        %1128 = vmatpush.msra.mxu0 0.0
        %1129 = vmatpush.msra.mxu0 %v903
        %1130 = vmatmul.f32.gmra.mxu0 %v1112
        %v1131 = vpop.f32.mrf.mxu0
        %v1132 = vadd.f32 0.0, %v1131
        %1133 = vdwg.mxu0
        %v1135 = vsel %vm910, %v1108, 0
        %1137 = vmatpush.msra.mxu0 0.0
        %1138 = vmatpush.msra.mxu0 0.0
        %1139 = vmatpush.msra.mxu0 0.0
        %1140 = vmatpush.msra.mxu0 0.0
        %1141 = vmatpush.msra.mxu0 0.0
        %1142 = vmatpush.msra.mxu0 0.0
        %1143 = vmatpush.msra.mxu0 0.0
        %1144 = vmatpush.msra.mxu0 0.0
        %1145 = vmatpush.msra.mxu0 0.0
        %1146 = vmatpush.msra.mxu0 0.0
        %1147 = vmatpush.msra.mxu0 0.0
        %1148 = vmatpush.msra.mxu0 0.0
        %1149 = vmatpush.msra.mxu0 0.0
        %1150 = vmatpush.msra.mxu0 0.0
        %1151 = vmatpush.msra.mxu0 0.0
        %1152 = vmatpush.msra.mxu0 %v905
        %1153 = vmatmul.f32.gmra.mxu0 %v1135
        %v1154 = vpop.f32.mrf.mxu0
        %v1155 = vadd.f32 0.0, %v1154
        %1156 = vdwg.mxu0
        %v1158 = vsel %vm910, %v1109, 0
        %1160 = vmatpush.msra.mxu0 0.0
        %1161 = vmatpush.msra.mxu0 0.0
        %1162 = vmatpush.msra.mxu0 0.0
        %1163 = vmatpush.msra.mxu0 0.0
        %1164 = vmatpush.msra.mxu0 0.0
        %1165 = vmatpush.msra.mxu0 0.0
        %1166 = vmatpush.msra.mxu0 0.0
        %1167 = vmatpush.msra.mxu0 0.0
        %1168 = vmatpush.msra.mxu0 0.0
        %1169 = vmatpush.msra.mxu0 0.0
        %1170 = vmatpush.msra.mxu0 0.0
        %1171 = vmatpush.msra.mxu0 0.0
        %1172 = vmatpush.msra.mxu0 0.0
        %1173 = vmatpush.msra.mxu0 0.0
        %1174 = vmatpush.msra.mxu0 0.0
        %1175 = vmatpush.msra.mxu0 %v907
        %1176 = vmatmul.f32.gmra.mxu0 %v1158
        %v1177 = vpop.f32.mrf.mxu0
        %v1178 = vadd.f32 0.0, %v1177
        %1179 = vdwg.mxu0
        %v1181 = vsel %vm910, %v1110, 0
        %1183 = vmatpush.msra.mxu0 0.0
        %1184 = vmatpush.msra.mxu0 0.0
        %1185 = vmatpush.msra.mxu0 0.0
        %1186 = vmatpush.msra.mxu0 0.0
        %1187 = vmatpush.msra.mxu0 0.0
        %1188 = vmatpush.msra.mxu0 0.0
        %1189 = vmatpush.msra.mxu0 0.0
        %1190 = vmatpush.msra.mxu0 0.0
        %1191 = vmatpush.msra.mxu0 0.0
        %1192 = vmatpush.msra.mxu0 0.0
        %1193 = vmatpush.msra.mxu0 0.0
        %1194 = vmatpush.msra.mxu0 0.0
        %1195 = vmatpush.msra.mxu0 0.0
        %1196 = vmatpush.msra.mxu0 0.0
        %1197 = vmatpush.msra.mxu0 0.0
        %1198 = vmatpush.msra.mxu0 %v909
        %1199 = vmatmul.f32.gmra.mxu0 %v1181
        %v1200 = vpop.f32.mrf.mxu0
        %v1201 = vadd.f32 0.0, %v1200
        %1202 = vdwg.mxu0
        %v1203 = vrot.slane %v1178, 4
        %v1204 = vsel %vm556, %v1203, %v1132
        %v1205 = vrot.slane %v1132, 4
        %v1206 = vsel %vm556, %v1178, %v1205
        %v1208 = vunpack.c.l.s4 1983009808
        %v1209 = vunpack.c.0.s8 %v1208
        %v1210 = vperm.slane %v1204, %v1209
        %v1212 = vunpack.c.l.s4 1983009808
        %v1213 = vunpack.c.0.s8 %v1212
        %v1214 = vperm.slane %v1206, %v1213
        %v1215 = vrot.slane %v1201, 4
        %v1216 = vsel %vm556, %v1215, %v1155
        %v1217 = vrot.slane %v1155, 4
        %v1218 = vsel %vm556, %v1201, %v1217
        %v1220 = vunpack.c.l.s4 1983009808
        %v1221 = vunpack.c.0.s8 %v1220
        %v1222 = vperm.slane %v1216, %v1221
        %v1224 = vunpack.c.l.s4 1983009808
        %v1225 = vunpack.c.0.s8 %v1224
        %v1226 = vperm.slane %v1218, %v1225
        %v1227 = vrot.slane %v1222, 4
        %v1228 = vsel %vm556, %v1227, %v1210
        %v1229 = vrot.slane %v1210, 4
        %v1230 = vsel %vm556, %v1222, %v1229
        %v1232 = vunpack.c.l.s4 1934713408
        %v1233 = vunpack.c.0.s8 %v1232
        %v1234 = vperm.slane %v1228, %v1233
        %v1236 = vunpack.c.l.s4 1934713408
        %v1237 = vunpack.c.0.s8 %v1236
        %v1238 = vperm.slane %v1230, %v1237
        %v1239 = vrot.slane %v1226, 4
        %v1240 = vsel %vm556, %v1239, %v1214
        %v1241 = vrot.slane %v1214, 4
        %v1242 = vsel %vm556, %v1226, %v1241
        %v1244 = vunpack.c.l.s4 1934713408
        %v1245 = vunpack.c.0.s8 %v1244
        %v1246 = vperm.slane %v1240, %v1245
        %v1248 = vunpack.c.l.s4 1934713408
        %v1249 = vunpack.c.0.s8 %v1248
        %v1250 = vperm.slane %v1242, %v1249
        %v1251 = vrot.slane %v1234, 4
        %v1252 = vsel %vm556, 0.0, %v1251
        %v1253 = vrot.slane %v1238, 4
        %v1254 = vsel %vm556, 0.0, %v1253
        %v1255 = vrot.slane %v1246, 4
        %v1256 = vsel %vm556, 0.0, %v1255
        %v1257 = vrot.slane %v1250, 4
        %v1258 = vsel %vm556, 0.0, %v1257
        %v1259 = vsel %vm556, %v1253, %v1234
        %v1261 = vunpack.c.l.s4 1983009808
        %v1262 = vunpack.c.0.s8 %v1261
        %v1263 = vperm.slane %v1259, %v1262
        %v1264 = vrot.slane %v1254, 4
        %v1265 = vsel %vm556, %v1264, %v1252
        %v1267 = vunpack.c.l.s4 1983009808
        %v1268 = vunpack.c.0.s8 %v1267
        %v1269 = vperm.slane %v1265, %v1268
        %v1270 = vsel %vm556, %v1257, %v1246
        %v1272 = vunpack.c.l.s4 1983009808
        %v1273 = vunpack.c.0.s8 %v1272
        %v1274 = vperm.slane %v1270, %v1273
        %v1275 = vrot.slane %v1258, 4
        %v1276 = vsel %vm556, %v1275, %v1256
        %v1278 = vunpack.c.l.s4 1983009808
        %v1279 = vunpack.c.0.s8 %v1278
        %v1280 = vperm.slane %v1276, %v1279
        %v1281 = vrot.slane %v1269, 4
        %v1282 = vsel %vm556, %v1281, %v1263
        %v1283 = vrot.slane %v1263, 4
        %v1284 = vsel %vm556, %v1269, %v1283
        %v1286 = vunpack.c.l.s4 1934713408
        %v1287 = vunpack.c.0.s8 %v1286
        %v1288 = vperm.slane %v1282, %v1287
        %v1290 = vunpack.c.l.s4 1934713408
        %v1291 = vunpack.c.0.s8 %v1290
        %v1292 = vperm.slane %v1284, %v1291
        %v1293 = vrot.slane %v1280, 4
        %v1294 = vsel %vm556, %v1293, %v1274
        %v1295 = vrot.slane %v1274, 4
        %v1296 = vsel %vm556, %v1280, %v1295
        %v1298 = vunpack.c.l.s4 1934713408
        %v1299 = vunpack.c.0.s8 %v1298
        %v1300 = vperm.slane %v1294, %v1299
        %v1302 = vunpack.c.l.s4 1934713408
        %v1303 = vunpack.c.0.s8 %v1302
        %v1304 = vperm.slane %v1296, %v1303
        %v1305 = vrot.slane %v1300, 4
        %v1306 = vsel %vm556, %v1305, %v1288
        %v1307 = vrot.slane %v1288, 4
        %v1308 = vsel %vm556, %v1300, %v1307
        %v1309 = vrot.slane %v1304, 4
        %v1310 = vsel %vm556, %v1309, %v1292
        %v1311 = vrot.slane %v1292, 4
        %v1312 = vsel %vm556, %v1304, %v1311
        %1314 = vrot.lane.b32.xlu0 %v1308, 8
        %v1315 = vpop.permute.xlu0 %1314
        %1318 = vrot.lane.b32.xlu0 %v1310, 16
        %v1319 = vpop.permute.xlu0 %1318
        %1322 = vrot.lane.b32.xlu0 %v1312, 24
        %v1323 = vpop.permute.xlu0 %1322
        %v1325 = vsel %vm910, %v1306, %v1315
        %vm1326 = vcmask 130048
        %v1327 = vsel %vm1326, %v1325, %v1319
        %vm1328 = vcmask 195584
        %v1329 = vsel %vm1328, %v1327, %v1323
        %v1330 = vld [vmem:[%s5] sm:$0xff]
        %v1331 = vld [vmem:[%s5 + $0x8] sm:$0xff]
        %v1332 = vld [vmem:[%s5 + $0x10] sm:$0xff]
        %v1333 = vld [vmem:[%s5 + $0x18] sm:$0xff]
        %v1334 = vld [vmem:[%s6] sm:$0x1]
        %v1336 = vperm.slane %v1334, 0
        %v1339 = vsel %vm476, %v1329, 0
        %1341 = vmatpush.msra.mxu0 0.0
        %1342 = vmatpush.msra.mxu0 0.0
        %1343 = vmatpush.msra.mxu0 0.0
        %1344 = vmatpush.msra.mxu0 0.0
        %1345 = vmatpush.msra.mxu0 0.0
        %1346 = vmatpush.msra.mxu0 0.0
        %1347 = vmatpush.msra.mxu0 0.0
        %1348 = vmatpush.msra.mxu0 0.0
        %1349 = vmatpush.msra.mxu0 0.0
        %1350 = vmatpush.msra.mxu0 0.0
        %1351 = vmatpush.msra.mxu0 0.0
        %1352 = vmatpush.msra.mxu0 0.0
        %1353 = vmatpush.msra.mxu0 %v1333
        %1354 = vmatpush.msra.mxu0 %v1332
        %1355 = vmatpush.msra.mxu0 %v1331
        %1356 = vmatpush.msra.mxu0 %v1330
        %1357 = vmatmul.f32.gmra.mxu0 %v1339
        %v1358 = vpop.f32.mrf.mxu0
        %v1359 = vadd.f32 %v1336, %v1358
        %1360 = vdwg.mxu0
        %v1361 = vadd.f32 %v1359, %v473
        %v1362 = vld [vmem:[%s7] sm:$0x1]
        %v1363 = vld [vmem:[%s8] sm:$0x1]
        %v1364 = vsel %vm476, %v1361, 0.0
        %1365 = vadd.xlane.f32.xlu0 %v1364
        %v1366 = vpop.xlane.xlu0 %1365
        %v1367 = vmul.f32 %v1366, %v486
        %v1368 = vsub.f32 %v1361, %v1367
        %v1369 = vmul.f32 %v1368, %v1368
        %v1370 = vsel %vm476, %v1369, 0.0
        %1371 = vadd.xlane.f32.xlu0 %v1370
        %v1372 = vpop.xlane.xlu0 %1371
        %v1373 = vmul.f32 %v1372, %v486
        %v1374 = vadd.f32 %v1373, 1e-05
        %v1375 = vrsqrt.pop %v1374
        %v1376 = vmul.f32 %v1375, %v1374
        %v1377 = vmul.f32 %v1376, %v1375
        %v1378 = vmul.f32 0.5, %v1377
        %v1379 = vsub.f32 1.5, %v1378
        %v1380 = vmul.f32 %v1375, %v1379
        %vm1381 = vweird.f32 %v1374
        %vm1382 = vweird.f32 %v1375
        %vm1383 = vmor %vm1381, %vm1382
        %v1384 = vsel %vm1383, %v1375, %v1380
        %v1385 = vmul.f32 %v1368, %v1384
        %v1387 = vperm.slane %v1362, 0
        %v1389 = vmul.f32 %v1385, %v1387
        %v1391 = vperm.slane %v1363, 0
        %v1393 = vadd.f32 %v1389, %v1391
        %v1394 = vld [vmem:[%s9] sm:$0xff]
        %v1395 = vld [vmem:[%s9 + $0x8] sm:$0xff]
        %v1396 = vld [vmem:[%s9 + $0x10] sm:$0xff]
        %v1397 = vld [vmem:[%s9 + $0x18] sm:$0xff]
        %v1398 = vld [vmem:[%s10] sm:$0x1]
        %v1400 = vperm.slane %v1398, 0
        %v1403 = vsel %vm476, %v1393, 0
        %1405 = vmatpush.msra.mxu0 0.0
        %1406 = vmatpush.msra.mxu0 0.0
        %1407 = vmatpush.msra.mxu0 0.0
        %1408 = vmatpush.msra.mxu0 0.0
        %1409 = vmatpush.msra.mxu0 0.0
        %1410 = vmatpush.msra.mxu0 0.0
        %1411 = vmatpush.msra.mxu0 0.0
        %1412 = vmatpush.msra.mxu0 0.0
        %1413 = vmatpush.msra.mxu0 0.0
        %1414 = vmatpush.msra.mxu0 0.0
        %1415 = vmatpush.msra.mxu0 0.0
        %1416 = vmatpush.msra.mxu0 0.0
        %1417 = vmatpush.msra.mxu0 %v1397
        %1418 = vmatpush.msra.mxu0 %v1396
        %1419 = vmatpush.msra.mxu0 %v1395
        %1420 = vmatpush.msra.mxu0 %v1394
        %1421 = vmatmul.f32.gmra.mxu0 %v1403
        %v1422 = vpop.f32.mrf.mxu0
        %v1423 = vadd.f32 %v1400, %v1422
        %1424 = vdwg.mxu0
        %v1425 = vmax.f32 %v1423, 0.0
        %v1426 = vld [vmem:[%s11] sm:$0xff]
        %v1427 = vld [vmem:[%s11 + $0x8] sm:$0xff]
        %v1428 = vld [vmem:[%s11 + $0x10] sm:$0xff]
        %v1429 = vld [vmem:[%s11 + $0x18] sm:$0xff]
        %v1430 = vld [vmem:[%s11 + $0x20] sm:$0xff]
        %v1431 = vld [vmem:[%s11 + $0x28] sm:$0xff]
        %v1432 = vld [vmem:[%s11 + $0x30] sm:$0xff]
        %v1433 = vld [vmem:[%s11 + $0x38] sm:$0xff]
        %v1434 = vld [vmem:[%s12] sm:$0x1]
        %v1436 = vperm.slane %v1434, 0
        %vm1438 = vcmask 523264
        %v1440 = vsel %vm1438, %v1425, 0
        %1442 = vmatpush.msra.mxu0 0.0
        %1443 = vmatpush.msra.mxu0 0.0
        %1444 = vmatpush.msra.mxu0 0.0
        %1445 = vmatpush.msra.mxu0 0.0
        %1446 = vmatpush.msra.mxu0 0.0
        %1447 = vmatpush.msra.mxu0 0.0
        %1448 = vmatpush.msra.mxu0 0.0
        %1449 = vmatpush.msra.mxu0 0.0
        %1450 = vmatpush.msra.mxu0 %v1433
        %1451 = vmatpush.msra.mxu0 %v1432
        %1452 = vmatpush.msra.mxu0 %v1431
        %1453 = vmatpush.msra.mxu0 %v1430
        %1454 = vmatpush.msra.mxu0 %v1429
        %1455 = vmatpush.msra.mxu0 %v1428
        %1456 = vmatpush.msra.mxu0 %v1427
        %1457 = vmatpush.msra.mxu0 %v1426
        %1458 = vmatmul.f32.gmra.mxu0 %v1440
        %v1459 = vpop.f32.mrf.mxu0
        %v1460 = vadd.f32 %v1436, %v1459
        %1461 = vdwg.mxu0
        %v1462 = vadd.f32 %v1361, %v1460
        %1463 = vst.msk [vmem:[%s472] sm:$0xff] %vm476, %v1462
        %s1464 = sand.u32 %s317, 1
        %s1465 = scalar_lea.sflag [#allocation4], %s1464
        %s1466 = sand.u32 %s317, 1
        %s1467 = smul.addr %s1466, 8
        %s1468 = scalar_lea.vmem [#allocation7], %s1467
        // Predicated region
        $region81: #{tpu_custom_call.1} parent=71 // pred_check
          %p1469 = pneg %p327
        $region82: #{tpu_custom_call.1} parent=71 // pred_check_branch
          %1471 = sbr.rel (%p1469) target = $region84
        $region83: #{tpu_custom_call.1} parent=71 // pred_region
          %1473 = vsyncadd %s1465, 0
          %s1474 = smul.addr %s31, 8
          %s1475 = scalar_lea.hbm %s13, %s1474
          %s1477 = sshll.u32 %s1468, 4
          %s1478 = int_to_ptr.vmem [resolvable:$true] %s1477
          %s1479 = sshll.u32 %s1475, 4
          %s1480 = int_to_ptr.hbm [resolvable:$true] %s1479
          %1482 = dma.vmem_to_hbm [thread:$0]  %s1478, 128, %s1480, %s1465
        $region84: #{tpu_custom_call.1} parent=71 // pred_fallthru
          _
      $region72: #{tpu_custom_call.1} parent=5 // pred_fallthru
        _
      %p1483 = scmp.le.s32.totalorder 2, %s26
      // Predicated region
      $region85: #{tpu_custom_call.1} parent=5 // pred_check
        %p1484 = pneg %p1483
      $region86: #{tpu_custom_call.1} parent=5 // pred_check_branch
        %1486 = sbr.rel (%p1484) target = $region88
      $region87: #{tpu_custom_call.1} parent=5 // pred_region
        %s1487 = ssub.s32 %s26, 2
        // Predicated region
        $region89: #{tpu_custom_call.1} parent=87 // pred_check
          %p1488 = pneg %p333
        $region90: #{tpu_custom_call.1} parent=87 // pred_check_branch
          %1490 = sbr.rel (%p1488) target = $region92
        $region91: #{tpu_custom_call.1} parent=87 // pred_region
          %s1491 = sand.u32 %s318, 1
          %s1492 = scalar_lea.sflag [#allocation4], %s1491
          %s1493 = sand.u32 %s318, 1
          %s1494 = smul.addr %s1493, 8
          %s1495 = scalar_lea.vmem [#allocation7], %s1494
          %1497 = dma.done %s1492, 128
        $region92: #{tpu_custom_call.1} parent=87 // pred_fallthru
          _
      $region88: #{tpu_custom_call.1} parent=5 // pred_fallthru
        _
    $region6: #{tpu_custom_call.1} parent=1 // loop_footer
      %s30 = sadd.s32 1, %s26
    $region7: #{tpu_custom_call.1} parent=1 // loop_footer_branch
      %25 = sbr.rel target = $region3
    $region8: #{tpu_custom_call.1} parent=1 // loop_exit
      _
    %1498 = vsyncpa [#allocation3], 1
    %s1499 = scalar_lea.sflag [#allocation3], 1
    %1500 = vsyncpa %s1499, 1
    %1501 = vsyncpa [#allocation6], 1
    %1502 = vsyncpa [#allocation4], 1
    %s1503 = scalar_lea.sflag [#allocation4], 1
    %1504 = vsyncpa %s1503, 1

// kernel: tpu_custom_call.1
$region0: #{tpu_custom_call.1}
  #allocation0 [shape = 'u32[]', space=smem, size = 0x4, offset = 0x4, fixed_abs, tag = 'smem constant byte address 0x4 - core index']
  #allocation1 [shape = 'u32[72,128]{1,0:T(1,128)}', space=vmem, size = 0x9000, scoped, tag = 'internal scratch']
  %s0 = inlined_call_operand.hbm [shape: f32[2,8,32], index: 0, kind: input, shape index: {}]
  %s1 = inlined_call_operand.hbm [shape: f32[1,32], index: 1, kind: input, shape index: {}]
  %s2 = inlined_call_operand.vmem [shape: f32[1,32], index: 2, kind: input, shape index: {}]
  %s3 = inlined_call_operand.vmem [shape: f32[32,96], index: 3, kind: input, shape index: {}]
  %s4 = inlined_call_operand.vmem [shape: f32[1,96], index: 4, kind: input, shape index: {}]
  %s5 = inlined_call_operand.vmem [shape: f32[32,32], index: 5, kind: input, shape index: {}]
  %s6 = inlined_call_operand.vmem [shape: f32[1,32], index: 6, kind: input, shape index: {}]
  %s7 = inlined_call_operand.vmem [shape: f32[1,32], index: 7, kind: input, shape index: {}]
  %s8 = inlined_call_operand.vmem [shape: f32[1,32], index: 8, kind: input, shape index: {}]
  %s9 = inlined_call_operand.vmem [shape: f32[32,64], index: 9, kind: input, shape index: {}]
  %s10 = inlined_call_operand.vmem [shape: f32[1,64], index: 10, kind: input, shape index: {}]
  %s11 = inlined_call_operand.vmem [shape: f32[64,32], index: 11, kind: input, shape index: {}]
  %s12 = inlined_call_operand.vmem [shape: f32[1,32], index: 12, kind: input, shape index: {}]
  %s13 = inlined_call_operand.hbm [shape: f32[2,8,32], index: 13, kind: output, shape index: {}]
  %s14 = sld [smem:[#allocation0]]
  $region93: #{tpu_custom_call.1} parent=0
    _
  %s16 = ssub.s32 1, %s14
  %s17 = scalar_select 0, %s16, %s14
  $region1: #{tpu_custom_call.1} parent=0
    #allocation2 [shape = 'u8[8192]{0}', space=vmem, size = 0x2000, scoped, tag = 'input window, operand 0']
    #allocation3 [shape = 's32[2]{0}', space=sflag, size = 0x8, scoped, tag = 'scoped memory for tpu_custom_call.1']
    #allocation4 [shape = 's32[2]{0}', space=sflag, size = 0x8, scoped, tag = 'scoped memory for tpu_custom_call.1']
    #allocation5 [shape = 'u8[512]{0}', space=vmem, size = 0x400, scoped, tag = 'input window, operand 1, single buffered']
    #allocation6 [shape = 's32[1]{0}', space=sflag, size = 0x4, scoped, tag = 'scoped memory for tpu_custom_call.1']
    #allocation7 [shape = 'u8[8192]{0}', space=vmem, size = 0x2000, scoped, tag = 'output window, operand 0']
    %18 = vsyncpa [#allocation3], 0
    %s19 = scalar_lea.sflag [#allocation3], 1
    %20 = vsyncpa %s19, 0
    %21 = vsyncpa [#allocation6], 0
    %22 = vsyncpa [#allocation4], 0
    %s23 = scalar_lea.sflag [#allocation4], 1
    %24 = vsyncpa %s23, 0
    loop: start=0, step=1, limit=4
    $region2: #{tpu_custom_call.1} parent=1 // loop_pre_header
      _
    $region3: #{tpu_custom_call.1} parent=1 // loop_header
      %s26 = sphi 0, %s30
      %p27 = scmp.ge.s32.totalorder %s26, 4
      %s36 = sphi 0, %s38
      %s39 = sphi 0, %s36
      %s40 = sphi 0, %s39
      %s56 = sphi 0, %s40
      %s60 = sphi 0, %s60
      %s62 = sphi 0, %s60
      %s63 = sphi 0, %s62
      %s77 = sphi 0, %s63
      %s81 = sphi 0, %s81
      %s83 = sphi 0, %s81
      %s84 = sphi 0, %s83
      %s98 = sphi 0, %s84
      %s102 = sphi 0, %s102
      %s104 = sphi 0, %s102
      %s105 = sphi 0, %s104
      %s119 = sphi 0, %s105
      %s123 = sphi 0, %s123
      %s125 = sphi 0, %s123
      %s126 = sphi 0, %s125
      %s140 = sphi 0, %s126
      %s144 = sphi 0, %s144
      %s146 = sphi 0, %s144
      %s147 = sphi 0, %s146
      %s161 = sphi 0, %s147
      %s165 = sphi 0, %s165
      %s167 = sphi 0, %s165
      %s168 = sphi 0, %s167
      %s182 = sphi 0, %s168
      %s186 = sphi 0, %s186
      %s188 = sphi 0, %s186
      %s189 = sphi 0, %s188
      %s203 = sphi 0, %s189
      %s207 = sphi 0, %s207
      %s209 = sphi 0, %s207
      %s210 = sphi 0, %s209
      %s224 = sphi 0, %s210
      %s228 = sphi 0, %s228
      %s230 = sphi 0, %s228
      %s231 = sphi 0, %s230
      %s245 = sphi 0, %s231
      %s249 = sphi 0, %s249
      %s251 = sphi 0, %s249
      %s252 = sphi 0, %s251
      %s266 = sphi 0, %s252
      %s270 = sphi 0, %s270
      %s272 = sphi 0, %s270
      %s273 = sphi 0, %s272
      %s287 = sphi 0, %s273
      %s291 = sphi 0, %s291
      %s293 = sphi 0, %s291
      %s294 = sphi 0, %s293
      %s308 = sphi 0, %s294
      %s314 = sphi 0, %s316
      %s317 = sphi 0, %s314
      %s318 = sphi 0, %s317
      %s334 = sphi 0, %s318
    $region4: #{tpu_custom_call.1} parent=1 // loop_header_branch
      %29 = sbr.rel (%p27) target = $region8
    $region5: #{tpu_custom_call.1} parent=1 // loop_body
      %s31 = ssub.s32 %s26, 1
      %s32 = ssub.s32 %s26, 2
      %s33 = sadd.s32 %s26, 1
      %s34 = ssub.s32 %s26, %s33
      %p35 = scmp.eq.s32.totalorder %s34, 0
      %s37 = sadd.s32 %s36, 1
      %s38 = scalar_select %p35, %s36, %s37
      %p41 = pneg %p35
      %p42 = scmp.eq.s32.totalorder %s26, 1
      %p43 = por %p41, %p42
      %p44 = scmp.ne.s32.totalorder %s36, %s39
      %p45 = scmp.eq.s32.totalorder %s26, 0
      %p46 = por %p44, %p45
      %p47 = scmp.ne.s32.totalorder %s36, %s39
      %p48 = scmp.eq.s32.totalorder %s31, 1
      %p49 = por %p47, %p48
      %p50 = scmp.ne.s32.totalorder %s39, %s40
      %p51 = scmp.eq.s32.totalorder %s31, 0
      %p52 = por %p50, %p51
      %p53 = scmp.ne.s32.totalorder %s39, %s40
      %p54 = scmp.eq.s32.totalorder %s32, 1
      %p55 = por %p53, %p54
      %p57 = scmp.ne.s32.totalorder %s40, %s56
      %p58 = scmp.eq.s32.totalorder %s32, 0
      %p59 = por %p57, %p58
      %s61 = sadd.s32 %s60, 1
      %p64 = scmp.eq.s32.totalorder %s26, 1
      %p65 = scmp.ne.s32.totalorder %s60, %s62
      %p66 = scmp.eq.s32.totalorder %s26, 0
      %p67 = por %p65, %p66
      %p68 = scmp.ne.s32.totalorder %s60, %s62
      %p69 = scmp.eq.s32.totalorder %s31, 1
      %p70 = por %p68, %p69
      %p71 = scmp.ne.s32.totalorder %s62, %s63
      %p72 = scmp.eq.s32.totalorder %s31, 0
      %p73 = por %p71, %p72
      %p74 = scmp.ne.s32.totalorder %s62, %s63
      %p75 = scmp.eq.s32.totalorder %s32, 1
      %p76 = por %p74, %p75
      %p78 = scmp.ne.s32.totalorder %s63, %s77
      %p79 = scmp.eq.s32.totalorder %s32, 0
      %p80 = por %p78, %p79
      %s82 = sadd.s32 %s81, 1
      %p85 = scmp.eq.s32.totalorder %s26, 1
      %p86 = scmp.ne.s32.totalorder %s81, %s83
      %p87 = scmp.eq.s32.totalorder %s26, 0
      %p88 = por %p86, %p87
      %p89 = scmp.ne.s32.totalorder %s81, %s83
      %p90 = scmp.eq.s32.totalorder %s31, 1
      %p91 = por %p89, %p90
      %p92 = scmp.ne.s32.totalorder %s83, %s84
      %p93 = scmp.eq.s32.totalorder %s31, 0
      %p94 = por %p92, %p93
      %p95 = scmp.ne.s32.totalorder %s83, %s84
      %p96 = scmp.eq.s32.totalorder %s32, 1
      %p97 = por %p95, %p96
      %p99 = scmp.ne.s32.totalorder %s84, %s98
      %p100 = scmp.eq.s32.totalorder %s32, 0
      %p101 = por %p99, %p100
      %s103 = sadd.s32 %s102, 1
      %p106 = scmp.eq.s32.totalorder %s26, 1
      %p107 = scmp.ne.s32.totalorder %s102, %s104
      %p108 = scmp.eq.s32.totalorder %s26, 0
      %p109 = por %p107, %p108
      %p110 = scmp.ne.s32.totalorder %s102, %s104
      %p111 = scmp.eq.s32.totalorder %s31, 1
      %p112 = por %p110, %p111
      %p113 = scmp.ne.s32.totalorder %s104, %s105
      %p114 = scmp.eq.s32.totalorder %s31, 0
      %p115 = por %p113, %p114
      %p116 = scmp.ne.s32.totalorder %s104, %s105
      %p117 = scmp.eq.s32.totalorder %s32, 1
      %p118 = por %p116, %p117
      %p120 = scmp.ne.s32.totalorder %s105, %s119
      %p121 = scmp.eq.s32.totalorder %s32, 0
      %p122 = por %p120, %p121
      %s124 = sadd.s32 %s123, 1
      %p127 = scmp.eq.s32.totalorder %s26, 1
      %p128 = scmp.ne.s32.totalorder %s123, %s125
      %p129 = scmp.eq.s32.totalorder %s26, 0
      %p130 = por %p128, %p129
      %p131 = scmp.ne.s32.totalorder %s123, %s125
      %p132 = scmp.eq.s32.totalorder %s31, 1
      %p133 = por %p131, %p132
      %p134 = scmp.ne.s32.totalorder %s125, %s126
      %p135 = scmp.eq.s32.totalorder %s31, 0
      %p136 = por %p134, %p135
      %p137 = scmp.ne.s32.totalorder %s125, %s126
      %p138 = scmp.eq.s32.totalorder %s32, 1
      %p139 = por %p137, %p138
      %p141 = scmp.ne.s32.totalorder %s126, %s140
      %p142 = scmp.eq.s32.totalorder %s32, 0
      %p143 = por %p141, %p142
      %s145 = sadd.s32 %s144, 1
      %p148 = scmp.eq.s32.totalorder %s26, 1
      %p149 = scmp.ne.s32.totalorder %s144, %s146
      %p150 = scmp.eq.s32.totalorder %s26, 0
      %p151 = por %p149, %p150
      %p152 = scmp.ne.s32.totalorder %s144, %s146
      %p153 = scmp.eq.s32.totalorder %s31, 1
      %p154 = por %p152, %p153
      %p155 = scmp.ne.s32.totalorder %s146, %s147
      %p156 = scmp.eq.s32.totalorder %s31, 0
      %p157 = por %p155, %p156
      %p158 = scmp.ne.s32.totalorder %s146, %s147
      %p159 = scmp.eq.s32.totalorder %s32, 1
      %p160 = por %p158, %p159
      %p162 = scmp.ne.s32.totalorder %s147, %s161
      %p163 = scmp.eq.s32.totalorder %s32, 0
      %p164 = por %p162, %p163
      %s166 = sadd.s32 %s165, 1
      %p169 = scmp.eq.s32.totalorder %s26, 1
      %p170 = scmp.ne.s32.totalorder %s165, %s167
      %p171 = scmp.eq.s32.totalorder %s26, 0
      %p172 = por %p170, %p171
      %p173 = scmp.ne.s32.totalorder %s165, %s167
      %p174 = scmp.eq.s32.totalorder %s31, 1
      %p175 = por %p173, %p174
      %p176 = scmp.ne.s32.totalorder %s167, %s168
      %p177 = scmp.eq.s32.totalorder %s31, 0
      %p178 = por %p176, %p177
      %p179 = scmp.ne.s32.totalorder %s167, %s168
      %p180 = scmp.eq.s32.totalorder %s32, 1
      %p181 = por %p179, %p180
      %p183 = scmp.ne.s32.totalorder %s168, %s182
      %p184 = scmp.eq.s32.totalorder %s32, 0
      %p185 = por %p183, %p184
      %s187 = sadd.s32 %s186, 1
      %p190 = scmp.eq.s32.totalorder %s26, 1
      %p191 = scmp.ne.s32.totalorder %s186, %s188
      %p192 = scmp.eq.s32.totalorder %s26, 0
      %p193 = por %p191, %p192
      %p194 = scmp.ne.s32.totalorder %s186, %s188
      %p195 = scmp.eq.s32.totalorder %s31, 1
      %p196 = por %p194, %p195
      %p197 = scmp.ne.s32.totalorder %s188, %s189
      %p198 = scmp.eq.s32.totalorder %s31, 0
      %p199 = por %p197, %p198
      %p200 = scmp.ne.s32.totalorder %s188, %s189
      %p201 = scmp.eq.s32.totalorder %s32, 1
      %p202 = por %p200, %p201
      %p204 = scmp.ne.s32.totalorder %s189, %s203
      %p205 = scmp.eq.s32.totalorder %s32, 0
      %p206 = por %p204, %p205
      %s208 = sadd.s32 %s207, 1
      %p211 = scmp.eq.s32.totalorder %s26, 1
      %p212 = scmp.ne.s32.totalorder %s207, %s209
      %p213 = scmp.eq.s32.totalorder %s26, 0
      %p214 = por %p212, %p213
      %p215 = scmp.ne.s32.totalorder %s207, %s209
      %p216 = scmp.eq.s32.totalorder %s31, 1
      %p217 = por %p215, %p216
      %p218 = scmp.ne.s32.totalorder %s209, %s210
      %p219 = scmp.eq.s32.totalorder %s31, 0
      %p220 = por %p218, %p219
      %p221 = scmp.ne.s32.totalorder %s209, %s210
      %p222 = scmp.eq.s32.totalorder %s32, 1
      %p223 = por %p221, %p222
      %p225 = scmp.ne.s32.totalorder %s210, %s224
      %p226 = scmp.eq.s32.totalorder %s32, 0
      %p227 = por %p225, %p226
      %s229 = sadd.s32 %s228, 1
      %p232 = scmp.eq.s32.totalorder %s26, 1
      %p233 = scmp.ne.s32.totalorder %s228, %s230
      %p234 = scmp.eq.s32.totalorder %s26, 0
      %p235 = por %p233, %p234
      %p236 = scmp.ne.s32.totalorder %s228, %s230
      %p237 = scmp.eq.s32.totalorder %s31, 1
      %p238 = por %p236, %p237
      %p239 = scmp.ne.s32.totalorder %s230, %s231
      %p240 = scmp.eq.s32.totalorder %s31, 0
      %p241 = por %p239, %p240
      %p242 = scmp.ne.s32.totalorder %s230, %s231
      %p243 = scmp.eq.s32.totalorder %s32, 1
      %p244 = por %p242, %p243
      %p246 = scmp.ne.s32.totalorder %s231, %s245
      %p247 = scmp.eq.s32.totalorder %s32, 0
      %p248 = por %p246, %p247
      %s250 = sadd.s32 %s249, 1
      %p253 = scmp.eq.s32.totalorder %s26, 1
      %p254 = scmp.ne.s32.totalorder %s249, %s251
      %p255 = scmp.eq.s32.totalorder %s26, 0
      %p256 = por %p254, %p255
      %p257 = scmp.ne.s32.totalorder %s249, %s251
      %p258 = scmp.eq.s32.totalorder %s31, 1
      %p259 = por %p257, %p258
      %p260 = scmp.ne.s32.totalorder %s251, %s252
      %p261 = scmp.eq.s32.totalorder %s31, 0
      %p262 = por %p260, %p261
      %p263 = scmp.ne.s32.totalorder %s251, %s252
      %p264 = scmp.eq.s32.totalorder %s32, 1
      %p265 = por %p263, %p264
      %p267 = scmp.ne.s32.totalorder %s252, %s266
      %p268 = scmp.eq.s32.totalorder %s32, 0
      %p269 = por %p267, %p268
      %s271 = sadd.s32 %s270, 1
      %p274 = scmp.eq.s32.totalorder %s26, 1
      %p275 = scmp.ne.s32.totalorder %s270, %s272
      %p276 = scmp.eq.s32.totalorder %s26, 0
      %p277 = por %p275, %p276
      %p278 = scmp.ne.s32.totalorder %s270, %s272
      %p279 = scmp.eq.s32.totalorder %s31, 1
      %p280 = por %p278, %p279
      %p281 = scmp.ne.s32.totalorder %s272, %s273
      %p282 = scmp.eq.s32.totalorder %s31, 0
      %p283 = por %p281, %p282
      %p284 = scmp.ne.s32.totalorder %s272, %s273
      %p285 = scmp.eq.s32.totalorder %s32, 1
      %p286 = por %p284, %p285
      %p288 = scmp.ne.s32.totalorder %s273, %s287
      %p289 = scmp.eq.s32.totalorder %s32, 0
      %p290 = por %p288, %p289
      %s292 = sadd.s32 %s291, 1
      %p295 = scmp.eq.s32.totalorder %s26, 1
      %p296 = scmp.ne.s32.totalorder %s291, %s293
      %p297 = scmp.eq.s32.totalorder %s26, 0
      %p298 = por %p296, %p297
      %p299 = scmp.ne.s32.totalorder %s291, %s293
      %p300 = scmp.eq.s32.totalorder %s31, 1
      %p301 = por %p299, %p300
      %p302 = scmp.ne.s32.totalorder %s293, %s294
      %p303 = scmp.eq.s32.totalorder %s31, 0
      %p304 = por %p302, %p303
      %p305 = scmp.ne.s32.totalorder %s293, %s294
      %p306 = scmp.eq.s32.totalorder %s32, 1
      %p307 = por %p305, %p306
      %p309 = scmp.ne.s32.totalorder %s294, %s308
      %p310 = scmp.eq.s32.totalorder %s32, 0
      %p311 = por %p309, %p310
      %s312 = ssub.s32 %s26, %s33
      %p313 = scmp.eq.s32.totalorder %s312, 0
      %s315 = sadd.s32 %s314, 1
      %s316 = scalar_select %p313, %s314, %s315
      %p319 = pneg %p313
      %p320 = scmp.eq.s32.totalorder %s26, 1
      %p321 = por %p319, %p320
      %p322 = scmp.ne.s32.totalorder %s314, %s317
      %p323 = scmp.eq.s32.totalorder %s26, 0
      %p324 = por %p322, %p323
      %p325 = scmp.ne.s32.totalorder %s314, %s317
      %p326 = scmp.eq.s32.totalorder %s31, 1
      %p327 = por %p325, %p326
      %p328 = scmp.ne.s32.totalorder %s317, %s318
      %p329 = scmp.eq.s32.totalorder %s31, 0
      %p330 = por %p328, %p329
      %p331 = scmp.ne.s32.totalorder %s317, %s318
      %p332 = scmp.eq.s32.totalorder %s32, 1
      %p333 = por %p331, %p332
      %p335 = scmp.ne.s32.totalorder %s318, %s334
      %p336 = scmp.eq.s32.totalorder %s32, 0
      %p337 = por %p335, %p336
      %p338 = scmp.le.s32.totalorder 1, %s26
      %p339 = scmp.lt.s32.totalorder %s26, 3
      %p340 = pnand %p338, %p339
      %p341 = pneg %p340
      // Predicated region
      $region9: #{tpu_custom_call.1} parent=5 // pred_check
        _
      $region10: #{tpu_custom_call.1} parent=5 // pred_check_branch
        %343 = sbr.rel (%p340) target = $region12
      $region11: #{tpu_custom_call.1} parent=5 // pred_region
        %s344 = ssub.s32 %s26, 1
        // Predicated region
        $region13: #{tpu_custom_call.1} parent=11 // pred_check
          %p345 = pneg %p73
        $region14: #{tpu_custom_call.1} parent=11 // pred_check_branch
          %347 = sbr.rel (%p345) target = $region16
        $region15: #{tpu_custom_call.1} parent=11 // pred_region
          %349 = vsyncadd [#allocation6], 0
          %s351 = sshll.u32 %s1, 4
          %s352 = int_to_ptr.hbm [resolvable:$true] %s351
          %s353 = sshll.u32 [#allocation5], 4
          %s354 = int_to_ptr.vmem [resolvable:$true] %s353
          %356 = dma.hbm_to_vmem [thread:$0]  %s352, 16, %s354, [#allocation6]
        $region16: #{tpu_custom_call.1} parent=11 // pred_fallthru
          _
        // Predicated region
        $region17: #{tpu_custom_call.1} parent=11 // pred_check
          %p357 = pneg %p94
        $region18: #{tpu_custom_call.1} parent=11 // pred_check_branch
          %359 = sbr.rel (%p357) target = $region20
        $region19: #{tpu_custom_call.1} parent=11 // pred_region
          _
        $region20: #{tpu_custom_call.1} parent=11 // pred_fallthru
          _
        // Predicated region
        $region21: #{tpu_custom_call.1} parent=11 // pred_check
          %p360 = pneg %p115
        $region22: #{tpu_custom_call.1} parent=11 // pred_check_branch
          %362 = sbr.rel (%p360) target = $region24
        $region23: #{tpu_custom_call.1} parent=11 // pred_region
          _
        $region24: #{tpu_custom_call.1} parent=11 // pred_fallthru
          _
        // Predicated region
        $region25: #{tpu_custom_call.1} parent=11 // pred_check
          %p363 = pneg %p136
        $region26: #{tpu_custom_call.1} parent=11 // pred_check_branch
          %365 = sbr.rel (%p363) target = $region28
        $region27: #{tpu_custom_call.1} parent=11 // pred_region
          _
        $region28: #{tpu_custom_call.1} parent=11 // pred_fallthru
          _
        // Predicated region
        $region29: #{tpu_custom_call.1} parent=11 // pred_check
          %p366 = pneg %p157
        $region30: #{tpu_custom_call.1} parent=11 // pred_check_branch
          %368 = sbr.rel (%p366) target = $region32
        $region31: #{tpu_custom_call.1} parent=11 // pred_region
          _
        $region32: #{tpu_custom_call.1} parent=11 // pred_fallthru
          _
        // Predicated region
        $region33: #{tpu_custom_call.1} parent=11 // pred_check
          %p369 = pneg %p178
        $region34: #{tpu_custom_call.1} parent=11 // pred_check_branch
          %371 = sbr.rel (%p369) target = $region36
        $region35: #{tpu_custom_call.1} parent=11 // pred_region
          _
        $region36: #{tpu_custom_call.1} parent=11 // pred_fallthru
          _
        // Predicated region
        $region37: #{tpu_custom_call.1} parent=11 // pred_check
          %p372 = pneg %p199
        $region38: #{tpu_custom_call.1} parent=11 // pred_check_branch
          %374 = sbr.rel (%p372) target = $region40
        $region39: #{tpu_custom_call.1} parent=11 // pred_region
          _
        $region40: #{tpu_custom_call.1} parent=11 // pred_fallthru
          _
        // Predicated region
        $region41: #{tpu_custom_call.1} parent=11 // pred_check
          %p375 = pneg %p220
        $region42: #{tpu_custom_call.1} parent=11 // pred_check_branch
          %377 = sbr.rel (%p375) target = $region44
        $region43: #{tpu_custom_call.1} parent=11 // pred_region
          _
        $region44: #{tpu_custom_call.1} parent=11 // pred_fallthru
          _
        // Predicated region
        $region45: #{tpu_custom_call.1} parent=11 // pred_check
          %p378 = pneg %p241
        $region46: #{tpu_custom_call.1} parent=11 // pred_check_branch
          %380 = sbr.rel (%p378) target = $region48
        $region47: #{tpu_custom_call.1} parent=11 // pred_region
          _
        $region48: #{tpu_custom_call.1} parent=11 // pred_fallthru
          _
        // Predicated region
        $region49: #{tpu_custom_call.1} parent=11 // pred_check
          %p381 = pneg %p262
        $region50: #{tpu_custom_call.1} parent=11 // pred_check_branch
          %383 = sbr.rel (%p381) target = $region52
        $region51: #{tpu_custom_call.1} parent=11 // pred_region
          _
        $region52: #{tpu_custom_call.1} parent=11 // pred_fallthru
          _
        // Predicated region
        $region53: #{tpu_custom_call.1} parent=11 // pred_check
          %p384 = pneg %p283
        $region54: #{tpu_custom_call.1} parent=11 // pred_check_branch
          %386 = sbr.rel (%p384) target = $region56
        $region55: #{tpu_custom_call.1} parent=11 // pred_region
          _
        $region56: #{tpu_custom_call.1} parent=11 // pred_fallthru
          _
        // Predicated region
        $region57: #{tpu_custom_call.1} parent=11 // pred_check
          %p387 = pneg %p304
        $region58: #{tpu_custom_call.1} parent=11 // pred_check_branch
          %389 = sbr.rel (%p387) target = $region60
        $region59: #{tpu_custom_call.1} parent=11 // pred_region
          _
        $region60: #{tpu_custom_call.1} parent=11 // pred_fallthru
          _
      $region12: #{tpu_custom_call.1} parent=5 // pred_fallthru
        _
      %p390 = scmp.lt.s32.totalorder %s26, 2
      // Predicated region
      $region61: #{tpu_custom_call.1} parent=5 // pred_check
        %p391 = pneg %p390
      $region62: #{tpu_custom_call.1} parent=5 // pred_check_branch
        %393 = sbr.rel (%p391) target = $region64
      $region63: #{tpu_custom_call.1} parent=5 // pred_region
        // Predicated region
        $region65: #{tpu_custom_call.1} parent=63 // pred_check
          %p394 = pneg %p46
        $region66: #{tpu_custom_call.1} parent=63 // pred_check_branch
          %396 = sbr.rel (%p394) target = $region68
        $region67: #{tpu_custom_call.1} parent=63 // pred_region
          %s397 = sand.u32 %s36, 1
          %s398 = scalar_lea.sflag [#allocation3], %s397
          %s399 = sand.u32 %s36, 1
          %s400 = smul.addr %s399, 8
          %s401 = scalar_lea.vmem [#allocation2], %s400
          %403 = vsyncadd %s398, 0
          %s404 = smul.addr %s26, 8
          %s405 = scalar_lea.hbm %s0, %s404
          %s407 = sshll.u32 %s405, 4
          %s408 = int_to_ptr.hbm [resolvable:$true] %s407
          %s409 = sshll.u32 %s401, 4
          %s410 = int_to_ptr.vmem [resolvable:$true] %s409
          %412 = dma.hbm_to_vmem [thread:$0]  %s408, 128, %s410, %s398
        $region68: #{tpu_custom_call.1} parent=63 // pred_fallthru
          _
      $region64: #{tpu_custom_call.1} parent=5 // pred_fallthru
        _
      %p413 = scmp.le.s32.totalorder 1, %s26
      %p414 = scmp.lt.s32.totalorder %s26, 3
      %p415 = pnand %p413, %p414
      %p416 = pneg %p415
      // Predicated region
      $region69: #{tpu_custom_call.1} parent=5 // pred_check
        _
      $region70: #{tpu_custom_call.1} parent=5 // pred_check_branch
        %418 = sbr.rel (%p415) target = $region72
      $region71: #{tpu_custom_call.1} parent=5 // pred_region
        %s419 = ssub.s32 %s26, 1
        %s420 = sand.u32 %s39, 1
        %s421 = scalar_lea.sflag [#allocation3], %s420
        %s422 = sand.u32 %s39, 1
        %s423 = smul.addr %s422, 8
        %s424 = scalar_lea.vmem [#allocation2], %s423
        // Predicated region
        $region73: #{tpu_custom_call.1} parent=71 // pred_check
          %p425 = pneg %p52
        $region74: #{tpu_custom_call.1} parent=71 // pred_check_branch
          %427 = sbr.rel (%p425) target = $region76
        $region75: #{tpu_custom_call.1} parent=71 // pred_region
          %429 = dma.done %s421, 128
        $region76: #{tpu_custom_call.1} parent=71 // pred_fallthru
          _
        // Predicated region
        $region77: #{tpu_custom_call.1} parent=71 // pred_check
          %p430 = pneg %p73
        $region78: #{tpu_custom_call.1} parent=71 // pred_check_branch
          %432 = sbr.rel (%p430) target = $region80
        $region79: #{tpu_custom_call.1} parent=71 // pred_region
          %434 = dma.done [#allocation6], 16
        $region80: #{tpu_custom_call.1} parent=71 // pred_fallthru
          _
        %s435 = sand.u32 %s39, 1
        %s436 = scalar_lea.sflag [#allocation3], %s435
        %s437 = sand.u32 %s39, 1
        %s438 = smul.addr %s437, 8
        %s439 = scalar_lea.vmem [#allocation2], %s438
        %p440 = pneg %p52
        %p441 = pneg %p49
        %p442 = pneg %p73
        %p443 = pneg %p70
        %p444 = pneg %p94
        %p445 = pneg %p91
        %p446 = pneg %p115
        %p447 = pneg %p112
        %p448 = pneg %p136
        %p449 = pneg %p133
        %p450 = pneg %p157
        %p451 = pneg %p154
        %p452 = pneg %p178
        %p453 = pneg %p175
        %p454 = pneg %p199
        %p455 = pneg %p196
        %p456 = pneg %p220
        %p457 = pneg %p217
        %p458 = pneg %p241
        %p459 = pneg %p238
        %p460 = pneg %p262
        %p461 = pneg %p259
        %p462 = pneg %p283
        %p463 = pneg %p280
        %p464 = pneg %p304
        %p465 = pneg %p301
        %p466 = pneg %p330
        %p467 = pneg %p327
        %s468 = sand.u32 %s317, 1
        %s469 = scalar_lea.sflag [#allocation4], %s468
        %s470 = sand.u32 %s317, 1
        %s471 = smul.addr %s470, 8
        %s472 = scalar_lea.vmem [#allocation7], %s471
        %v473 = vld [vmem:[%s424] sm:$0xff]
        %v474 = vld [vmem:[#allocation5] sm:$0x1]
        %v475 = vld [vmem:[%s2] sm:$0x1]
        %vm476 = vcmask 261120
        %v477 = vsel %vm476, %v473, 0.0
        %478 = vadd.xlane.f32.xlu0 %v477
        %v479 = vpop.xlane.xlu0 %478
        %v480 = vrcp.pop 32.0
        %v481 = vmul.f32 32.0, %v480
        %v482 = vsub.f32 1.0, %v481
        %v483 = vmul.f32 %v480, %v482
        %v484 = vadd.f32 %v480, %v483
        %vm485 = vweird.f32 %v480
        %v486 = vsel %vm485, %v480, %v484
        %v487 = vmul.f32 %v479, %v486
        %v488 = vsub.f32 %v473, %v487
        %v489 = vmul.f32 %v488, %v488
        %v490 = vsel %vm476, %v489, 0.0
        %491 = vadd.xlane.f32.xlu0 %v490
        %v492 = vpop.xlane.xlu0 %491
        %v493 = vmul.f32 %v492, %v486
        %v494 = vadd.f32 %v493, 1e-05
        %v495 = vrsqrt.pop %v494
        %v496 = vmul.f32 %v495, %v494
        %v497 = vmul.f32 %v496, %v495
        %v498 = vmul.f32 0.5, %v497
        %v499 = vsub.f32 1.5, %v498
        %v500 = vmul.f32 %v495, %v499
        %vm501 = vweird.f32 %v494
        %vm502 = vweird.f32 %v495
        %vm503 = vmor %vm501, %vm502
        %v504 = vsel %vm503, %v495, %v500
        %v505 = vmul.f32 %v488, %v504
        %v507 = vperm.slane %v474, 0
        %v509 = vmul.f32 %v505, %v507
        %v511 = vperm.slane %v475, 0
        %v513 = vadd.f32 %v509, %v511
        %v514 = vld [vmem:[%s3] sm:$0xff]
        %v515 = vld [vmem:[%s3 + $0x8] sm:$0xff]
        %v516 = vld [vmem:[%s3 + $0x10] sm:$0xff]
        %v517 = vld [vmem:[%s3 + $0x18] sm:$0xff]
        %v518 = vld [vmem:[%s4] sm:$0x1]
        %v520 = vperm.slane %v518, 0
        %v523 = vsel %vm476, %v513, 0
        %525 = vmatpush.msra.mxu0 0.0
        %526 = vmatpush.msra.mxu0 0.0
        %527 = vmatpush.msra.mxu0 0.0
        %528 = vmatpush.msra.mxu0 0.0
        %529 = vmatpush.msra.mxu0 0.0
        %530 = vmatpush.msra.mxu0 0.0
        %531 = vmatpush.msra.mxu0 0.0
        %532 = vmatpush.msra.mxu0 0.0
        %533 = vmatpush.msra.mxu0 0.0
        %534 = vmatpush.msra.mxu0 0.0
        %535 = vmatpush.msra.mxu0 0.0
        %536 = vmatpush.msra.mxu0 0.0
        %537 = vmatpush.msra.mxu0 %v517
        %538 = vmatpush.msra.mxu0 %v516
        %539 = vmatpush.msra.mxu0 %v515
        %540 = vmatpush.msra.mxu0 %v514
        %541 = vmatmul.f32.gmra.mxu0 %v523
        %v542 = vpop.f32.mrf.mxu0
        %v543 = vadd.f32 %v520, %v542
        %544 = vdwg.mxu0
        %v545 = vld [vmem:[%s5] sm:$0xff]
        %v546 = vld [vmem:[%s5 + $0x8] sm:$0xff]
        %v547 = vld [vmem:[%s5 + $0x10] sm:$0xff]
        %v548 = vld [vmem:[%s5 + $0x18] sm:$0xff]
        %550 = vrot.lane.b32.xlu0 %v543, 96
        %v551 = vpop.permute.xlu0 %550
        %vm552 = vcmask 64512
        %v553 = vsel %vm552, %v543, 0
        %v555 = vsel %vm552, %v551, 0
        %557 = vmatpush.xpose.msra.mxu0 0.0
        %558 = vmatpush.xpose.msra.mxu0 0.0
        %559 = vmatpush.xpose.msra.mxu0 0.0
        %560 = vmatpush.xpose.msra.mxu0 0.0
        %561 = vmatpush.xpose.msra.mxu0 0.0
        %562 = vmatpush.xpose.msra.mxu0 0.0
        %563 = vmatpush.xpose.msra.mxu0 0.0
        %564 = vmatpush.xpose.msra.mxu0 0.0
        %565 = vmatpush.xpose.msra.mxu0 0.0
        %566 = vmatpush.xpose.msra.mxu0 0.0
        %567 = vmatpush.xpose.msra.mxu0 0.0
        %568 = vmatpush.xpose.msra.mxu0 0.0
        %569 = vmatpush.xpose.msra.mxu0 0.0
        %570 = vmatpush.xpose.msra.mxu0 0.0
        %571 = vmatpush.xpose.msra.mxu0 0.0
        %572 = vmatpush.xpose.msra.mxu0 %v555
        %573 = vmatmul.f32.gmra.mxu0 %v553
        %v574 = vpop.f32.mrf.mxu0
        %v575 = vadd.f32 0.0, %v574
        %576 = vdwg.mxu0
        %v577 = vsel %vm552, %v575, -inf
        %578 = vmax.xlane.f32.xlu0 %v577
        %v579 = vpop.xlane.xlu0 %578
        %v580 = vsub.f32 %v575, %v579
        %v581 = vmul.f32 %v580, 1.442695
        %v582 = vpow.pop %v581
        %v583 = vsel %vm552, %v582, 0.0
        %584 = vadd.xlane.f32.xlu0 %v583
        %v585 = vpop.xlane.xlu0 %584
        %v586 = vrcp.pop %v585
        %v587 = vmul.f32 %v585, %v586
        %v588 = vsub.f32 1.0, %v587
        %v589 = vmul.f32 %v586, %v588
        %v590 = vadd.f32 %v586, %v589
        %vm591 = vweird.f32 %v585
        %vm592 = vweird.f32 %v586
        %vm593 = vmor %vm591, %vm592
        %v594 = vsel %vm593, %v586, %v590
        %v595 = vand.u32 2147483647, %v585
        %vm596 = vcmp.eq.f32.partialorder %v595, 8.507059e+37
        %v597 = vand.u32 %v585, 2147483648
        %v598 = vor.u32 1.1754944e-38, %v597
        %v599 = vsel %vm596, %v598, %v594
        %v600 = vmul.f32 %v582, %v599
        %601 = vrot.lane.b32.xlu0 %v543, 64
        %v602 = vpop.permute.xlu0 %601
        %v605 = vsel %vm552, %v600, 0
        %607 = vmatpush.msra.mxu0 0.0
        %608 = vmatpush.msra.mxu0 0.0
        %609 = vmatpush.msra.mxu0 0.0
        %610 = vmatpush.msra.mxu0 0.0
        %611 = vmatpush.msra.mxu0 0.0
        %612 = vmatpush.msra.mxu0 0.0
        %613 = vmatpush.msra.mxu0 0.0
        %614 = vmatpush.msra.mxu0 0.0
        %615 = vmatpush.msra.mxu0 0.0
        %616 = vmatpush.msra.mxu0 0.0
        %617 = vmatpush.msra.mxu0 0.0
        %618 = vmatpush.msra.mxu0 0.0
        %619 = vmatpush.msra.mxu0 0.0
        %620 = vmatpush.msra.mxu0 0.0
        %621 = vmatpush.msra.mxu0 0.0
        %622 = vmatpush.msra.mxu0 %v602
        %623 = vmatmul.f32.gmra.mxu0 %v605
        %v624 = vpop.f32.mrf.mxu0
        %v625 = vadd.f32 0.0, %v624
        %626 = vdwg.mxu0
        %627 = vrot.lane.b32.xlu0 %v543, 120
        %v628 = vpop.permute.xlu0 %627
        %629 = vrot.lane.b32.xlu0 %v543, 88
        %v630 = vpop.permute.xlu0 %629
        %v631 = vsel %vm552, %v628, 0
        %v633 = vsel %vm552, %v630, 0
        %635 = vmatpush.xpose.msra.mxu0 0.0
        %636 = vmatpush.xpose.msra.mxu0 0.0
        %637 = vmatpush.xpose.msra.mxu0 0.0
        %638 = vmatpush.xpose.msra.mxu0 0.0
        %639 = vmatpush.xpose.msra.mxu0 0.0
        %640 = vmatpush.xpose.msra.mxu0 0.0
        %641 = vmatpush.xpose.msra.mxu0 0.0
        %642 = vmatpush.xpose.msra.mxu0 0.0
        %643 = vmatpush.xpose.msra.mxu0 0.0
        %644 = vmatpush.xpose.msra.mxu0 0.0
        %645 = vmatpush.xpose.msra.mxu0 0.0
        %646 = vmatpush.xpose.msra.mxu0 0.0
        %647 = vmatpush.xpose.msra.mxu0 0.0
        %648 = vmatpush.xpose.msra.mxu0 0.0
        %649 = vmatpush.xpose.msra.mxu0 0.0
        %650 = vmatpush.xpose.msra.mxu0 %v633
        %651 = vmatmul.f32.gmra.mxu0 %v631
        %v652 = vpop.f32.mrf.mxu0
        %v653 = vadd.f32 0.0, %v652
        %654 = vdwg.mxu0
        %v655 = vsel %vm552, %v653, -inf
        %656 = vmax.xlane.f32.xlu0 %v655
        %v657 = vpop.xlane.xlu0 %656
        %v658 = vsub.f32 %v653, %v657
        %v659 = vmul.f32 %v658, 1.442695
        %v660 = vpow.pop %v659
        %v661 = vsel %vm552, %v660, 0.0
        %662 = vadd.xlane.f32.xlu0 %v661
        %v663 = vpop.xlane.xlu0 %662
        %v664 = vrcp.pop %v663
        %v665 = vmul.f32 %v663, %v664
        %v666 = vsub.f32 1.0, %v665
        %v667 = vmul.f32 %v664, %v666
        %v668 = vadd.f32 %v664, %v667
        %vm669 = vweird.f32 %v663
        %vm670 = vweird.f32 %v664
        %vm671 = vmor %vm669, %vm670
        %v672 = vsel %vm671, %v664, %v668
        %v673 = vand.u32 2147483647, %v663
        %vm674 = vcmp.eq.f32.partialorder %v673, 8.507059e+37
        %v675 = vand.u32 %v663, 2147483648
        %v676 = vor.u32 1.1754944e-38, %v675
        %v677 = vsel %vm674, %v676, %v672
        %v678 = vmul.f32 %v660, %v677
        %679 = vrot.lane.b32.xlu0 %v543, 56
        %v680 = vpop.permute.xlu0 %679
        %v683 = vsel %vm552, %v678, 0
        %685 = vmatpush.msra.mxu0 0.0
        %686 = vmatpush.msra.mxu0 0.0
        %687 = vmatpush.msra.mxu0 0.0
        %688 = vmatpush.msra.mxu0 0.0
        %689 = vmatpush.msra.mxu0 0.0
        %690 = vmatpush.msra.mxu0 0.0
        %691 = vmatpush.msra.mxu0 0.0
        %692 = vmatpush.msra.mxu0 0.0
        %693 = vmatpush.msra.mxu0 0.0
        %694 = vmatpush.msra.mxu0 0.0
        %695 = vmatpush.msra.mxu0 0.0
        %696 = vmatpush.msra.mxu0 0.0
        %697 = vmatpush.msra.mxu0 0.0
        %698 = vmatpush.msra.mxu0 0.0
        %699 = vmatpush.msra.mxu0 0.0
        %700 = vmatpush.msra.mxu0 %v680
        %701 = vmatmul.f32.gmra.mxu0 %v683
        %v702 = vpop.f32.mrf.mxu0
        %v703 = vadd.f32 0.0, %v702
        %704 = vdwg.mxu0
        %v706 = vsel %vm552, %v703, 0
        %708 = vmatpush.msra.mxu0 0.0
        %709 = vmatpush.msra.mxu0 0.0
        %710 = vmatpush.msra.mxu0 0.0
        %711 = vmatpush.msra.mxu0 0.0
        %712 = vmatpush.msra.mxu0 0.0
        %713 = vmatpush.msra.mxu0 0.0
        %714 = vmatpush.msra.mxu0 0.0
        %715 = vmatpush.msra.mxu0 0.0
        %716 = vmatpush.msra.mxu0 0.0
        %717 = vmatpush.msra.mxu0 0.0
        %718 = vmatpush.msra.mxu0 0.0
        %719 = vmatpush.msra.mxu0 0.0
        %720 = vmatpush.msra.mxu0 0.0
        %721 = vmatpush.msra.mxu0 0.0
        %722 = vmatpush.msra.mxu0 0.0
        %723 = vmatpush.msra.mxu0 %v546
        %724 = vmatmul.f32.gmra.mxu0 %v706
        %v725 = vpop.f32.mrf.mxu0
        %v726 = vadd.f32 0.0, %v725
        %727 = vdwg.mxu0
        %v729 = vsel %vm552, %v625, 0
        %731 = vmatpush.msra.mxu0 0.0
        %732 = vmatpush.msra.mxu0 0.0
        %733 = vmatpush.msra.mxu0 0.0
        %734 = vmatpush.msra.mxu0 0.0
        %735 = vmatpush.msra.mxu0 0.0
        %736 = vmatpush.msra.mxu0 0.0
        %737 = vmatpush.msra.mxu0 0.0
        %738 = vmatpush.msra.mxu0 0.0
        %739 = vmatpush.msra.mxu0 0.0
        %740 = vmatpush.msra.mxu0 0.0
        %741 = vmatpush.msra.mxu0 0.0
        %742 = vmatpush.msra.mxu0 0.0
        %743 = vmatpush.msra.mxu0 0.0
        %744 = vmatpush.msra.mxu0 0.0
        %745 = vmatpush.msra.mxu0 0.0
        %746 = vmatpush.msra.mxu0 %v545
        %747 = vmatmul.f32.gmra.mxu0 %v729
        %v748 = vpop.f32.mrf.mxu0
        %v749 = vadd.f32 %v726, %v748
        %750 = vdwg.mxu0
        %751 = vrot.lane.b32.xlu0 %v543, 112
        %v752 = vpop.permute.xlu0 %751
        %753 = vrot.lane.b32.xlu0 %v543, 80
        %v754 = vpop.permute.xlu0 %753
        %v755 = vsel %vm552, %v752, 0
        %v757 = vsel %vm552, %v754, 0
        %759 = vmatpush.xpose.msra.mxu0 0.0
        %760 = vmatpush.xpose.msra.mxu0 0.0
        %761 = vmatpush.xpose.msra.mxu0 0.0
        %762 = vmatpush.xpose.msra.mxu0 0.0
        %763 = vmatpush.xpose.msra.mxu0 0.0
        %764 = vmatpush.xpose.msra.mxu0 0.0
        %765 = vmatpush.xpose.msra.mxu0 0.0
        %766 = vmatpush.xpose.msra.mxu0 0.0
        %767 = vmatpush.xpose.msra.mxu0 0.0
        %768 = vmatpush.xpose.msra.mxu0 0.0
        %769 = vmatpush.xpose.msra.mxu0 0.0
        %770 = vmatpush.xpose.msra.mxu0 0.0
        %771 = vmatpush.xpose.msra.mxu0 0.0
        %772 = vmatpush.xpose.msra.mxu0 0.0
        %773 = vmatpush.xpose.msra.mxu0 0.0
        %774 = vmatpush.xpose.msra.mxu0 %v757
        %775 = vmatmul.f32.gmra.mxu0 %v755
        %v776 = vpop.f32.mrf.mxu0
        %v777 = vadd.f32 0.0, %v776
        %778 = vdwg.mxu0
        %v779 = vsel %vm552, %v777, -inf
        %780 = vmax.xlane.f32.xlu0 %v779
        %v781 = vpop.xlane.xlu0 %780
        %v782 = vsub.f32 %v777, %v781
        %v783 = vmul.f32 %v782, 1.442695
        %v784 = vpow.pop %v783
        %v785 = vsel %vm552, %v784, 0.0
        %786 = vadd.xlane.f32.xlu0 %v785
        %v787 = vpop.xlane.xlu0 %786
        %v788 = vrcp.pop %v787
        %v789 = vmul.f32 %v787, %v788
        %v790 = vsub.f32 1.0, %v789
        %v791 = vmul.f32 %v788, %v790
        %v792 = vadd.f32 %v788, %v791
        %vm793 = vweird.f32 %v787
        %vm794 = vweird.f32 %v788
        %vm795 = vmor %vm793, %vm794
        %v796 = vsel %vm795, %v788, %v792
        %v797 = vand.u32 2147483647, %v787
        %vm798 = vcmp.eq.f32.partialorder %v797, 8.507059e+37
        %v799 = vand.u32 %v787, 2147483648
        %v800 = vor.u32 1.1754944e-38, %v799
        %v801 = vsel %vm798, %v800, %v796
        %v802 = vmul.f32 %v784, %v801
        %803 = vrot.lane.b32.xlu0 %v543, 48
        %v804 = vpop.permute.xlu0 %803
        %v807 = vsel %vm552, %v802, 0
        %809 = vmatpush.msra.mxu0 0.0
        %810 = vmatpush.msra.mxu0 0.0
        %811 = vmatpush.msra.mxu0 0.0
        %812 = vmatpush.msra.mxu0 0.0
        %813 = vmatpush.msra.mxu0 0.0
        %814 = vmatpush.msra.mxu0 0.0
        %815 = vmatpush.msra.mxu0 0.0
        %816 = vmatpush.msra.mxu0 0.0
        %817 = vmatpush.msra.mxu0 0.0
        %818 = vmatpush.msra.mxu0 0.0
        %819 = vmatpush.msra.mxu0 0.0
        %820 = vmatpush.msra.mxu0 0.0
        %821 = vmatpush.msra.mxu0 0.0
        %822 = vmatpush.msra.mxu0 0.0
        %823 = vmatpush.msra.mxu0 0.0
        %824 = vmatpush.msra.mxu0 %v804
        %825 = vmatmul.f32.gmra.mxu0 %v807
        %v826 = vpop.f32.mrf.mxu0
        %v827 = vadd.f32 0.0, %v826
        %828 = vdwg.mxu0
        %v830 = vsel %vm552, %v827, 0
        %832 = vmatpush.msra.mxu0 0.0
        %833 = vmatpush.msra.mxu0 0.0
        %834 = vmatpush.msra.mxu0 0.0
        %835 = vmatpush.msra.mxu0 0.0
        %836 = vmatpush.msra.mxu0 0.0
        %837 = vmatpush.msra.mxu0 0.0
        %838 = vmatpush.msra.mxu0 0.0
        %839 = vmatpush.msra.mxu0 0.0
        %840 = vmatpush.msra.mxu0 0.0
        %841 = vmatpush.msra.mxu0 0.0
        %842 = vmatpush.msra.mxu0 0.0
        %843 = vmatpush.msra.mxu0 0.0
        %844 = vmatpush.msra.mxu0 0.0
        %845 = vmatpush.msra.mxu0 0.0
        %846 = vmatpush.msra.mxu0 0.0
        %847 = vmatpush.msra.mxu0 %v547
        %848 = vmatmul.f32.gmra.mxu0 %v830
        %v849 = vpop.f32.mrf.mxu0
        %v850 = vadd.f32 0.0, %v849
        %851 = vdwg.mxu0
        %v852 = vadd.f32 %v749, %v850
        %853 = vrot.lane.b32.xlu0 %v543, 104
        %v854 = vpop.permute.xlu0 %853
        %855 = vrot.lane.b32.xlu0 %v543, 72
        %v856 = vpop.permute.xlu0 %855
        %v857 = vsel %vm552, %v854, 0
        %v859 = vsel %vm552, %v856, 0
        %861 = vmatpush.xpose.msra.mxu0 0.0
        %862 = vmatpush.xpose.msra.mxu0 0.0
        %863 = vmatpush.xpose.msra.mxu0 0.0
        %864 = vmatpush.xpose.msra.mxu0 0.0
        %865 = vmatpush.xpose.msra.mxu0 0.0
        %866 = vmatpush.xpose.msra.mxu0 0.0
        %867 = vmatpush.xpose.msra.mxu0 0.0
        %868 = vmatpush.xpose.msra.mxu0 0.0
        %869 = vmatpush.xpose.msra.mxu0 0.0
        %870 = vmatpush.xpose.msra.mxu0 0.0
        %871 = vmatpush.xpose.msra.mxu0 0.0
        %872 = vmatpush.xpose.msra.mxu0 0.0
        %873 = vmatpush.xpose.msra.mxu0 0.0
        %874 = vmatpush.xpose.msra.mxu0 0.0
        %875 = vmatpush.xpose.msra.mxu0 0.0
        %876 = vmatpush.xpose.msra.mxu0 %v859
        %877 = vmatmul.f32.gmra.mxu0 %v857
        %v878 = vpop.f32.mrf.mxu0
        %v879 = vadd.f32 0.0, %v878
        %880 = vdwg.mxu0
        %v881 = vsel %vm552, %v879, -inf
        %882 = vmax.xlane.f32.xlu0 %v881
        %v883 = vpop.xlane.xlu0 %882
        %v884 = vsub.f32 %v879, %v883
        %v885 = vmul.f32 %v884, 1.442695
        %v886 = vpow.pop %v885
        %v887 = vsel %vm552, %v886, 0.0
        %888 = vadd.xlane.f32.xlu0 %v887
        %v889 = vpop.xlane.xlu0 %888
        %v890 = vrcp.pop %v889
        %v891 = vmul.f32 %v889, %v890
        %v892 = vsub.f32 1.0, %v891
        %v893 = vmul.f32 %v890, %v892
        %v894 = vadd.f32 %v890, %v893
        %vm895 = vweird.f32 %v889
        %vm896 = vweird.f32 %v890
        %vm897 = vmor %vm895, %vm896
        %v898 = vsel %vm897, %v890, %v894
        %v899 = vand.u32 2147483647, %v889
        %vm900 = vcmp.eq.f32.partialorder %v899, 8.507059e+37
        %v901 = vand.u32 %v889, 2147483648
        %v902 = vor.u32 1.1754944e-38, %v901
        %v903 = vsel %vm900, %v902, %v898
        %v904 = vmul.f32 %v886, %v903
        %905 = vrot.lane.b32.xlu0 %v543, 40
        %v906 = vpop.permute.xlu0 %905
        %v909 = vsel %vm552, %v904, 0
        %911 = vmatpush.msra.mxu0 0.0
        %912 = vmatpush.msra.mxu0 0.0
        %913 = vmatpush.msra.mxu0 0.0
        %914 = vmatpush.msra.mxu0 0.0
        %915 = vmatpush.msra.mxu0 0.0
        %916 = vmatpush.msra.mxu0 0.0
        %917 = vmatpush.msra.mxu0 0.0
        %918 = vmatpush.msra.mxu0 0.0
        %919 = vmatpush.msra.mxu0 0.0
        %920 = vmatpush.msra.mxu0 0.0
        %921 = vmatpush.msra.mxu0 0.0
        %922 = vmatpush.msra.mxu0 0.0
        %923 = vmatpush.msra.mxu0 0.0
        %924 = vmatpush.msra.mxu0 0.0
        %925 = vmatpush.msra.mxu0 0.0
        %926 = vmatpush.msra.mxu0 %v906
        %927 = vmatmul.f32.gmra.mxu0 %v909
        %v928 = vpop.f32.mrf.mxu0
        %v929 = vadd.f32 0.0, %v928
        %930 = vdwg.mxu0
        %v932 = vsel %vm552, %v929, 0
        %934 = vmatpush.msra.mxu0 0.0
        %935 = vmatpush.msra.mxu0 0.0
        %936 = vmatpush.msra.mxu0 0.0
        %937 = vmatpush.msra.mxu0 0.0
        %938 = vmatpush.msra.mxu0 0.0
        %939 = vmatpush.msra.mxu0 0.0
        %940 = vmatpush.msra.mxu0 0.0
        %941 = vmatpush.msra.mxu0 0.0
        %942 = vmatpush.msra.mxu0 0.0
        %943 = vmatpush.msra.mxu0 0.0
        %944 = vmatpush.msra.mxu0 0.0
        %945 = vmatpush.msra.mxu0 0.0
        %946 = vmatpush.msra.mxu0 0.0
        %947 = vmatpush.msra.mxu0 0.0
        %948 = vmatpush.msra.mxu0 0.0
        %949 = vmatpush.msra.mxu0 %v548
        %950 = vmatmul.f32.gmra.mxu0 %v932
        %v951 = vpop.f32.mrf.mxu0
        %v952 = vadd.f32 0.0, %v951
        %953 = vdwg.mxu0
        %v954 = vadd.f32 %v852, %v952
        %v955 = vld [vmem:[%s6] sm:$0x1]
        %v957 = vperm.slane %v955, 0
        %v959 = vadd.f32 %v954, %v957
        %v960 = vadd.f32 %v959, %v473
        %v961 = vld [vmem:[%s7] sm:$0x1]
        %v962 = vld [vmem:[%s8] sm:$0x1]
        %v963 = vsel %vm476, %v960, 0.0
        %964 = vadd.xlane.f32.xlu0 %v963
        %v965 = vpop.xlane.xlu0 %964
        %v966 = vmul.f32 %v965, %v486
        %v967 = vsub.f32 %v960, %v966
        %v968 = vmul.f32 %v967, %v967
        %v969 = vsel %vm476, %v968, 0.0
        %970 = vadd.xlane.f32.xlu0 %v969
        %v971 = vpop.xlane.xlu0 %970
        %v972 = vmul.f32 %v971, %v486
        %v973 = vadd.f32 %v972, 1e-05
        %v974 = vrsqrt.pop %v973
        %v975 = vmul.f32 %v974, %v973
        %v976 = vmul.f32 %v975, %v974
        %v977 = vmul.f32 0.5, %v976
        %v978 = vsub.f32 1.5, %v977
        %v979 = vmul.f32 %v974, %v978
        %vm980 = vweird.f32 %v973
        %vm981 = vweird.f32 %v974
        %vm982 = vmor %vm980, %vm981
        %v983 = vsel %vm982, %v974, %v979
        %v984 = vmul.f32 %v967, %v983
        %v986 = vperm.slane %v961, 0
        %v988 = vmul.f32 %v984, %v986
        %v990 = vperm.slane %v962, 0
        %v992 = vadd.f32 %v988, %v990
        %v993 = vld [vmem:[%s9] sm:$0xff]
        %v994 = vld [vmem:[%s9 + $0x8] sm:$0xff]
        %v995 = vld [vmem:[%s9 + $0x10] sm:$0xff]
        %v996 = vld [vmem:[%s9 + $0x18] sm:$0xff]
        %v997 = vld [vmem:[%s10] sm:$0x1]
        %v999 = vperm.slane %v997, 0
        %v1002 = vsel %vm476, %v992, 0
        %1004 = vmatpush.msra.mxu0 0.0
        %1005 = vmatpush.msra.mxu0 0.0
        %1006 = vmatpush.msra.mxu0 0.0
        %1007 = vmatpush.msra.mxu0 0.0
        %1008 = vmatpush.msra.mxu0 0.0
        %1009 = vmatpush.msra.mxu0 0.0
        %1010 = vmatpush.msra.mxu0 0.0
        %1011 = vmatpush.msra.mxu0 0.0
        %1012 = vmatpush.msra.mxu0 0.0
        %1013 = vmatpush.msra.mxu0 0.0
        %1014 = vmatpush.msra.mxu0 0.0
        %1015 = vmatpush.msra.mxu0 0.0
        %1016 = vmatpush.msra.mxu0 %v996
        %1017 = vmatpush.msra.mxu0 %v995
        %1018 = vmatpush.msra.mxu0 %v994
        %1019 = vmatpush.msra.mxu0 %v993
        %1020 = vmatmul.f32.gmra.mxu0 %v1002
        %v1021 = vpop.f32.mrf.mxu0
        %v1022 = vadd.f32 %v999, %v1021
        %1023 = vdwg.mxu0
        %v1024 = vmax.f32 %v1022, 0.0
        %v1025 = vld [vmem:[%s11] sm:$0xff]
        %v1026 = vld [vmem:[%s11 + $0x8] sm:$0xff]
        %v1027 = vld [vmem:[%s11 + $0x10] sm:$0xff]
        %v1028 = vld [vmem:[%s11 + $0x18] sm:$0xff]
        %v1029 = vld [vmem:[%s11 + $0x20] sm:$0xff]
        %v1030 = vld [vmem:[%s11 + $0x28] sm:$0xff]
        %v1031 = vld [vmem:[%s11 + $0x30] sm:$0xff]
        %v1032 = vld [vmem:[%s11 + $0x38] sm:$0xff]
        %v1033 = vld [vmem:[%s12] sm:$0x1]
        %v1035 = vperm.slane %v1033, 0
        %vm1037 = vcmask 523264
        %v1039 = vsel %vm1037, %v1024, 0
        %1041 = vmatpush.msra.mxu0 0.0
        %1042 = vmatpush.msra.mxu0 0.0
        %1043 = vmatpush.msra.mxu0 0.0
        %1044 = vmatpush.msra.mxu0 0.0
        %1045 = vmatpush.msra.mxu0 0.0
        %1046 = vmatpush.msra.mxu0 0.0
        %1047 = vmatpush.msra.mxu0 0.0
        %1048 = vmatpush.msra.mxu0 0.0
        %1049 = vmatpush.msra.mxu0 %v1032
        %1050 = vmatpush.msra.mxu0 %v1031
        %1051 = vmatpush.msra.mxu0 %v1030
        %1052 = vmatpush.msra.mxu0 %v1029
        %1053 = vmatpush.msra.mxu0 %v1028
        %1054 = vmatpush.msra.mxu0 %v1027
        %1055 = vmatpush.msra.mxu0 %v1026
        %1056 = vmatpush.msra.mxu0 %v1025
        %1057 = vmatmul.f32.gmra.mxu0 %v1039
        %v1058 = vpop.f32.mrf.mxu0
        %v1059 = vadd.f32 %v1035, %v1058
        %1060 = vdwg.mxu0
        %v1061 = vadd.f32 %v960, %v1059
        %1062 = vst.msk [vmem:[%s472] sm:$0xff] %vm476, %v1061
        %s1063 = sand.u32 %s317, 1
        %s1064 = scalar_lea.sflag [#allocation4], %s1063
        %s1065 = sand.u32 %s317, 1
        %s1066 = smul.addr %s1065, 8
        %s1067 = scalar_lea.vmem [#allocation7], %s1066
        // Predicated region
        $region81: #{tpu_custom_call.1} parent=71 // pred_check
          %p1068 = pneg %p327
        $region82: #{tpu_custom_call.1} parent=71 // pred_check_branch
          %1070 = sbr.rel (%p1068) target = $region84
        $region83: #{tpu_custom_call.1} parent=71 // pred_region
          %1072 = vsyncadd %s1064, 0
          %s1073 = smul.addr %s31, 8
          %s1074 = scalar_lea.hbm %s13, %s1073
          %s1076 = sshll.u32 %s1067, 4
          %s1077 = int_to_ptr.vmem [resolvable:$true] %s1076
          %s1078 = sshll.u32 %s1074, 4
          %s1079 = int_to_ptr.hbm [resolvable:$true] %s1078
          %1081 = dma.vmem_to_hbm [thread:$0]  %s1077, 128, %s1079, %s1064
        $region84: #{tpu_custom_call.1} parent=71 // pred_fallthru
          _
      $region72: #{tpu_custom_call.1} parent=5 // pred_fallthru
        _
      %p1082 = scmp.le.s32.totalorder 2, %s26
      // Predicated region
      $region85: #{tpu_custom_call.1} parent=5 // pred_check
        %p1083 = pneg %p1082
      $region86: #{tpu_custom_call.1} parent=5 // pred_check_branch
        %1085 = sbr.rel (%p1083) target = $region88
      $region87: #{tpu_custom_call.1} parent=5 // pred_region
        %s1086 = ssub.s32 %s26, 2
        // Predicated region
        $region89: #{tpu_custom_call.1} parent=87 // pred_check
          %p1087 = pneg %p333
        $region90: #{tpu_custom_call.1} parent=87 // pred_check_branch
          %1089 = sbr.rel (%p1087) target = $region92
        $region91: #{tpu_custom_call.1} parent=87 // pred_region
          %s1090 = sand.u32 %s318, 1
          %s1091 = scalar_lea.sflag [#allocation4], %s1090
          %s1092 = sand.u32 %s318, 1
          %s1093 = smul.addr %s1092, 8
          %s1094 = scalar_lea.vmem [#allocation7], %s1093
          %1096 = dma.done %s1091, 128
        $region92: #{tpu_custom_call.1} parent=87 // pred_fallthru
          _
      $region88: #{tpu_custom_call.1} parent=5 // pred_fallthru
        _
    $region6: #{tpu_custom_call.1} parent=1 // loop_footer
      %s30 = sadd.s32 1, %s26
    $region7: #{tpu_custom_call.1} parent=1 // loop_footer_branch
      %25 = sbr.rel target = $region3
    $region8: #{tpu_custom_call.1} parent=1 // loop_exit
      _
    %1097 = vsyncpa [#allocation3], 1
    %s1098 = scalar_lea.sflag [#allocation3], 1
    %1099 = vsyncpa %s1098, 1
    %1100 = vsyncpa [#allocation6], 1
    %1101 = vsyncpa [#allocation4], 1
    %s1102 = scalar_lea.sflag [#allocation4], 1
    %1103 = vsyncpa %s1102, 1

// kernel: tpu_custom_call.1
$region0: #{tpu_custom_call.1}
  #allocation0 [shape = 'u32[]', space=smem, size = 0x4, offset = 0x4, fixed_abs, tag = 'smem constant byte address 0x4 - core index']
  #allocation1 [shape = 'u32[72,128]{1,0:T(1,128)}', space=vmem, size = 0x9000, scoped, tag = 'internal scratch']
  %s0 = inlined_call_operand.hbm [shape: f32[2,8,32], index: 0, kind: input, shape index: {}]
  %s1 = inlined_call_operand.hbm [shape: f32[1,32], index: 1, kind: input, shape index: {}]
  %s2 = inlined_call_operand.vmem [shape: f32[1,32], index: 2, kind: input, shape index: {}]
  %s3 = inlined_call_operand.vmem [shape: f32[32,96], index: 3, kind: input, shape index: {}]
  %s4 = inlined_call_operand.vmem [shape: f32[1,96], index: 4, kind: input, shape index: {}]
  %s5 = inlined_call_operand.vmem [shape: f32[32,32], index: 5, kind: input, shape index: {}]
  %s6 = inlined_call_operand.vmem [shape: f32[1,32], index: 6, kind: input, shape index: {}]
  %s7 = inlined_call_operand.vmem [shape: f32[1,32], index: 7, kind: input, shape index: {}]
  %s8 = inlined_call_operand.vmem [shape: f32[1,32], index: 8, kind: input, shape index: {}]
  %s9 = inlined_call_operand.vmem [shape: f32[32,64], index: 9, kind: input, shape index: {}]
  %s10 = inlined_call_operand.vmem [shape: f32[1,64], index: 10, kind: input, shape index: {}]
  %s11 = inlined_call_operand.vmem [shape: f32[64,32], index: 11, kind: input, shape index: {}]
  %s12 = inlined_call_operand.vmem [shape: f32[1,32], index: 12, kind: input, shape index: {}]
  %s13 = inlined_call_operand.hbm [shape: f32[2,8,32], index: 13, kind: output, shape index: {}]
  %s14 = sld [smem:[#allocation0]]
  $region93: #{tpu_custom_call.1} parent=0
    _
  %s16 = ssub.s32 1, %s14
  %s17 = scalar_select 0, %s16, %s14
  $region1: #{tpu_custom_call.1} parent=0
    #allocation2 [shape = 'u8[8192]{0}', space=vmem, size = 0x2000, scoped, tag = 'input window, operand 0']
    #allocation3 [shape = 's32[2]{0}', space=sflag, size = 0x8, scoped, tag = 'scoped memory for tpu_custom_call.1']
    #allocation4 [shape = 's32[2]{0}', space=sflag, size = 0x8, scoped, tag = 'scoped memory for tpu_custom_call.1']
    #allocation5 [shape = 'u8[512]{0}', space=vmem, size = 0x400, scoped, tag = 'input window, operand 1, single buffered']
    #allocation6 [shape = 's32[1]{0}', space=sflag, size = 0x4, scoped, tag = 'scoped memory for tpu_custom_call.1']
    #allocation7 [shape = 'u8[8192]{0}', space=vmem, size = 0x2000, scoped, tag = 'output window, operand 0']
    %18 = vsyncpa [#allocation3], 0
    %s19 = scalar_lea.sflag [#allocation3], 1
    %20 = vsyncpa %s19, 0
    %21 = vsyncpa [#allocation6], 0
    %22 = vsyncpa [#allocation4], 0
    %s23 = scalar_lea.sflag [#allocation4], 1
    %24 = vsyncpa %s23, 0
    loop: start=0, step=1, limit=4
    $region2: #{tpu_custom_call.1} parent=1 // loop_pre_header
      _
    $region3: #{tpu_custom_call.1} parent=1 // loop_header
      %s26 = sphi 0, %s30
      %p27 = scmp.ge.s32.totalorder %s26, 4
      %s36 = sphi 0, %s38
      %s39 = sphi 0, %s36
      %s40 = sphi 0, %s39
      %s56 = sphi 0, %s40
      %s60 = sphi 0, %s60
      %s62 = sphi 0, %s60
      %s63 = sphi 0, %s62
      %s77 = sphi 0, %s63
      %s81 = sphi 0, %s81
      %s83 = sphi 0, %s81
      %s84 = sphi 0, %s83
      %s98 = sphi 0, %s84
      %s102 = sphi 0, %s102
      %s104 = sphi 0, %s102
      %s105 = sphi 0, %s104
      %s119 = sphi 0, %s105
      %s123 = sphi 0, %s123
      %s125 = sphi 0, %s123
      %s126 = sphi 0, %s125
      %s140 = sphi 0, %s126
      %s144 = sphi 0, %s144
      %s146 = sphi 0, %s144
      %s147 = sphi 0, %s146
      %s161 = sphi 0, %s147
      %s165 = sphi 0, %s165
      %s167 = sphi 0, %s165
      %s168 = sphi 0, %s167
      %s182 = sphi 0, %s168
      %s186 = sphi 0, %s186
      %s188 = sphi 0, %s186
      %s189 = sphi 0, %s188
      %s203 = sphi 0, %s189
      %s207 = sphi 0, %s207
      %s209 = sphi 0, %s207
      %s210 = sphi 0, %s209
      %s224 = sphi 0, %s210
      %s228 = sphi 0, %s228
      %s230 = sphi 0, %s228
      %s231 = sphi 0, %s230
      %s245 = sphi 0, %s231
      %s249 = sphi 0, %s249
      %s251 = sphi 0, %s249
      %s252 = sphi 0, %s251
      %s266 = sphi 0, %s252
      %s270 = sphi 0, %s270
      %s272 = sphi 0, %s270
      %s273 = sphi 0, %s272
      %s287 = sphi 0, %s273
      %s291 = sphi 0, %s291
      %s293 = sphi 0, %s291
      %s294 = sphi 0, %s293
      %s308 = sphi 0, %s294
      %s314 = sphi 0, %s316
      %s317 = sphi 0, %s314
      %s318 = sphi 0, %s317
      %s334 = sphi 0, %s318
    $region4: #{tpu_custom_call.1} parent=1 // loop_header_branch
      %29 = sbr.rel (%p27) target = $region8
    $region5: #{tpu_custom_call.1} parent=1 // loop_body
      %s31 = ssub.s32 %s26, 1
      %s32 = ssub.s32 %s26, 2
      %s33 = sadd.s32 %s26, 1
      %s34 = ssub.s32 %s26, %s33
      %p35 = scmp.eq.s32.totalorder %s34, 0
      %s37 = sadd.s32 %s36, 1
      %s38 = scalar_select %p35, %s36, %s37
      %p41 = pneg %p35
      %p42 = scmp.eq.s32.totalorder %s26, 1
      %p43 = por %p41, %p42
      %p44 = scmp.ne.s32.totalorder %s36, %s39
      %p45 = scmp.eq.s32.totalorder %s26, 0
      %p46 = por %p44, %p45
      %p47 = scmp.ne.s32.totalorder %s36, %s39
      %p48 = scmp.eq.s32.totalorder %s31, 1
      %p49 = por %p47, %p48
      %p50 = scmp.ne.s32.totalorder %s39, %s40
      %p51 = scmp.eq.s32.totalorder %s31, 0
      %p52 = por %p50, %p51
      %p53 = scmp.ne.s32.totalorder %s39, %s40
      %p54 = scmp.eq.s32.totalorder %s32, 1
      %p55 = por %p53, %p54
      %p57 = scmp.ne.s32.totalorder %s40, %s56
      %p58 = scmp.eq.s32.totalorder %s32, 0
      %p59 = por %p57, %p58
      %s61 = sadd.s32 %s60, 1
      %p64 = scmp.eq.s32.totalorder %s26, 1
      %p65 = scmp.ne.s32.totalorder %s60, %s62
      %p66 = scmp.eq.s32.totalorder %s26, 0
      %p67 = por %p65, %p66
      %p68 = scmp.ne.s32.totalorder %s60, %s62
      %p69 = scmp.eq.s32.totalorder %s31, 1
      %p70 = por %p68, %p69
      %p71 = scmp.ne.s32.totalorder %s62, %s63
      %p72 = scmp.eq.s32.totalorder %s31, 0
      %p73 = por %p71, %p72
      %p74 = scmp.ne.s32.totalorder %s62, %s63
      %p75 = scmp.eq.s32.totalorder %s32, 1
      %p76 = por %p74, %p75
      %p78 = scmp.ne.s32.totalorder %s63, %s77
      %p79 = scmp.eq.s32.totalorder %s32, 0
      %p80 = por %p78, %p79
      %s82 = sadd.s32 %s81, 1
      %p85 = scmp.eq.s32.totalorder %s26, 1
      %p86 = scmp.ne.s32.totalorder %s81, %s83
      %p87 = scmp.eq.s32.totalorder %s26, 0
      %p88 = por %p86, %p87
      %p89 = scmp.ne.s32.totalorder %s81, %s83
      %p90 = scmp.eq.s32.totalorder %s31, 1
      %p91 = por %p89, %p90
      %p92 = scmp.ne.s32.totalorder %s83, %s84
      %p93 = scmp.eq.s32.totalorder %s31, 0
      %p94 = por %p92, %p93
      %p95 = scmp.ne.s32.totalorder %s83, %s84
      %p96 = scmp.eq.s32.totalorder %s32, 1
      %p97 = por %p95, %p96
      %p99 = scmp.ne.s32.totalorder %s84, %s98
      %p100 = scmp.eq.s32.totalorder %s32, 0
      %p101 = por %p99, %p100
      %s103 = sadd.s32 %s102, 1
      %p106 = scmp.eq.s32.totalorder %s26, 1
      %p107 = scmp.ne.s32.totalorder %s102, %s104
      %p108 = scmp.eq.s32.totalorder %s26, 0
      %p109 = por %p107, %p108
      %p110 = scmp.ne.s32.totalorder %s102, %s104
      %p111 = scmp.eq.s32.totalorder %s31, 1
      %p112 = por %p110, %p111
      %p113 = scmp.ne.s32.totalorder %s104, %s105
      %p114 = scmp.eq.s32.totalorder %s31, 0
      %p115 = por %p113, %p114
      %p116 = scmp.ne.s32.totalorder %s104, %s105
      %p117 = scmp.eq.s32.totalorder %s32, 1
      %p118 = por %p116, %p117
      %p120 = scmp.ne.s32.totalorder %s105, %s119
      %p121 = scmp.eq.s32.totalorder %s32, 0
      %p122 = por %p120, %p121
      %s124 = sadd.s32 %s123, 1
      %p127 = scmp.eq.s32.totalorder %s26, 1
      %p128 = scmp.ne.s32.totalorder %s123, %s125
      %p129 = scmp.eq.s32.totalorder %s26, 0
      %p130 = por %p128, %p129
      %p131 = scmp.ne.s32.totalorder %s123, %s125
      %p132 = scmp.eq.s32.totalorder %s31, 1
      %p133 = por %p131, %p132
      %p134 = scmp.ne.s32.totalorder %s125, %s126
      %p135 = scmp.eq.s32.totalorder %s31, 0
      %p136 = por %p134, %p135
      %p137 = scmp.ne.s32.totalorder %s125, %s126
      %p138 = scmp.eq.s32.totalorder %s32, 1
      %p139 = por %p137, %p138
      %p141 = scmp.ne.s32.totalorder %s126, %s140
      %p142 = scmp.eq.s32.totalorder %s32, 0
      %p143 = por %p141, %p142
      %s145 = sadd.s32 %s144, 1
      %p148 = scmp.eq.s32.totalorder %s26, 1
      %p149 = scmp.ne.s32.totalorder %s144, %s146
      %p150 = scmp.eq.s32.totalorder %s26, 0
      %p151 = por %p149, %p150
      %p152 = scmp.ne.s32.totalorder %s144, %s146
      %p153 = scmp.eq.s32.totalorder %s31, 1
      %p154 = por %p152, %p153
      %p155 = scmp.ne.s32.totalorder %s146, %s147
      %p156 = scmp.eq.s32.totalorder %s31, 0
      %p157 = por %p155, %p156
      %p158 = scmp.ne.s32.totalorder %s146, %s147
      %p159 = scmp.eq.s32.totalorder %s32, 1
      %p160 = por %p158, %p159
      %p162 = scmp.ne.s32.totalorder %s147, %s161
      %p163 = scmp.eq.s32.totalorder %s32, 0
      %p164 = por %p162, %p163
      %s166 = sadd.s32 %s165, 1
      %p169 = scmp.eq.s32.totalorder %s26, 1
      %p170 = scmp.ne.s32.totalorder %s165, %s167
      %p171 = scmp.eq.s32.totalorder %s26, 0
      %p172 = por %p170, %p171
      %p173 = scmp.ne.s32.totalorder %s165, %s167
      %p174 = scmp.eq.s32.totalorder %s31, 1
      %p175 = por %p173, %p174
      %p176 = scmp.ne.s32.totalorder %s167, %s168
      %p177 = scmp.eq.s32.totalorder %s31, 0
      %p178 = por %p176, %p177
      %p179 = scmp.ne.s32.totalorder %s167, %s168
      %p180 = scmp.eq.s32.totalorder %s32, 1
      %p181 = por %p179, %p180
      %p183 = scmp.ne.s32.totalorder %s168, %s182
      %p184 = scmp.eq.s32.totalorder %s32, 0
      %p185 = por %p183, %p184
      %s187 = sadd.s32 %s186, 1
      %p190 = scmp.eq.s32.totalorder %s26, 1
      %p191 = scmp.ne.s32.totalorder %s186, %s188
      %p192 = scmp.eq.s32.totalorder %s26, 0
      %p193 = por %p191, %p192
      %p194 = scmp.ne.s32.totalorder %s186, %s188
      %p195 = scmp.eq.s32.totalorder %s31, 1
      %p196 = por %p194, %p195
      %p197 = scmp.ne.s32.totalorder %s188, %s189
      %p198 = scmp.eq.s32.totalorder %s31, 0
      %p199 = por %p197, %p198
      %p200 = scmp.ne.s32.totalorder %s188, %s189
      %p201 = scmp.eq.s32.totalorder %s32, 1
      %p202 = por %p200, %p201
      %p204 = scmp.ne.s32.totalorder %s189, %s203
      %p205 = scmp.eq.s32.totalorder %s32, 0
      %p206 = por %p204, %p205
      %s208 = sadd.s32 %s207, 1
      %p211 = scmp.eq.s32.totalorder %s26, 1
      %p212 = scmp.ne.s32.totalorder %s207, %s209
      %p213 = scmp.eq.s32.totalorder %s26, 0
      %p214 = por %p212, %p213
      %p215 = scmp.ne.s32.totalorder %s207, %s209
      %p216 = scmp.eq.s32.totalorder %s31, 1
      %p217 = por %p215, %p216
      %p218 = scmp.ne.s32.totalorder %s209, %s210
      %p219 = scmp.eq.s32.totalorder %s31, 0
      %p220 = por %p218, %p219
      %p221 = scmp.ne.s32.totalorder %s209, %s210
      %p222 = scmp.eq.s32.totalorder %s32, 1
      %p223 = por %p221, %p222
      %p225 = scmp.ne.s32.totalorder %s210, %s224
      %p226 = scmp.eq.s32.totalorder %s32, 0
      %p227 = por %p225, %p226
      %s229 = sadd.s32 %s228, 1
      %p232 = scmp.eq.s32.totalorder %s26, 1
      %p233 = scmp.ne.s32.totalorder %s228, %s230
      %p234 = scmp.eq.s32.totalorder %s26, 0
      %p235 = por %p233, %p234
      %p236 = scmp.ne.s32.totalorder %s228, %s230
      %p237 = scmp.eq.s32.totalorder %s31, 1
      %p238 = por %p236, %p237
      %p239 = scmp.ne.s32.totalorder %s230, %s231
      %p240 = scmp.eq.s32.totalorder %s31, 0
      %p241 = por %p239, %p240
      %p242 = scmp.ne.s32.totalorder %s230, %s231
      %p243 = scmp.eq.s32.totalorder %s32, 1
      %p244 = por %p242, %p243
      %p246 = scmp.ne.s32.totalorder %s231, %s245
      %p247 = scmp.eq.s32.totalorder %s32, 0
      %p248 = por %p246, %p247
      %s250 = sadd.s32 %s249, 1
      %p253 = scmp.eq.s32.totalorder %s26, 1
      %p254 = scmp.ne.s32.totalorder %s249, %s251
      %p255 = scmp.eq.s32.totalorder %s26, 0
      %p256 = por %p254, %p255
      %p257 = scmp.ne.s32.totalorder %s249, %s251
      %p258 = scmp.eq.s32.totalorder %s31, 1
      %p259 = por %p257, %p258
      %p260 = scmp.ne.s32.totalorder %s251, %s252
      %p261 = scmp.eq.s32.totalorder %s31, 0
      %p262 = por %p260, %p261
      %p263 = scmp.ne.s32.totalorder %s251, %s252
      %p264 = scmp.eq.s32.totalorder %s32, 1
      %p265 = por %p263, %p264
      %p267 = scmp.ne.s32.totalorder %s252, %s266
      %p268 = scmp.eq.s32.totalorder %s32, 0
      %p269 = por %p267, %p268
      %s271 = sadd.s32 %s270, 1
      %p274 = scmp.eq.s32.totalorder %s26, 1
      %p275 = scmp.ne.s32.totalorder %s270, %s272
      %p276 = scmp.eq.s32.totalorder %s26, 0
      %p277 = por %p275, %p276
      %p278 = scmp.ne.s32.totalorder %s270, %s272
      %p279 = scmp.eq.s32.totalorder %s31, 1
      %p280 = por %p278, %p279
      %p281 = scmp.ne.s32.totalorder %s272, %s273
      %p282 = scmp.eq.s32.totalorder %s31, 0
      %p283 = por %p281, %p282
      %p284 = scmp.ne.s32.totalorder %s272, %s273
      %p285 = scmp.eq.s32.totalorder %s32, 1
      %p286 = por %p284, %p285
      %p288 = scmp.ne.s32.totalorder %s273, %s287
      %p289 = scmp.eq.s32.totalorder %s32, 0
      %p290 = por %p288, %p289
      %s292 = sadd.s32 %s291, 1
      %p295 = scmp.eq.s32.totalorder %s26, 1
      %p296 = scmp.ne.s32.totalorder %s291, %s293
      %p297 = scmp.eq.s32.totalorder %s26, 0
      %p298 = por %p296, %p297
      %p299 = scmp.ne.s32.totalorder %s291, %s293
      %p300 = scmp.eq.s32.totalorder %s31, 1
      %p301 = por %p299, %p300
      %p302 = scmp.ne.s32.totalorder %s293, %s294
      %p303 = scmp.eq.s32.totalorder %s31, 0
      %p304 = por %p302, %p303
      %p305 = scmp.ne.s32.totalorder %s293, %s294
      %p306 = scmp.eq.s32.totalorder %s32, 1
      %p307 = por %p305, %p306
      %p309 = scmp.ne.s32.totalorder %s294, %s308
      %p310 = scmp.eq.s32.totalorder %s32, 0
      %p311 = por %p309, %p310
      %s312 = ssub.s32 %s26, %s33
      %p313 = scmp.eq.s32.totalorder %s312, 0
      %s315 = sadd.s32 %s314, 1
      %s316 = scalar_select %p313, %s314, %s315
      %p319 = pneg %p313
      %p320 = scmp.eq.s32.totalorder %s26, 1
      %p321 = por %p319, %p320
      %p322 = scmp.ne.s32.totalorder %s314, %s317
      %p323 = scmp.eq.s32.totalorder %s26, 0
      %p324 = por %p322, %p323
      %p325 = scmp.ne.s32.totalorder %s314, %s317
      %p326 = scmp.eq.s32.totalorder %s31, 1
      %p327 = por %p325, %p326
      %p328 = scmp.ne.s32.totalorder %s317, %s318
      %p329 = scmp.eq.s32.totalorder %s31, 0
      %p330 = por %p328, %p329
      %p331 = scmp.ne.s32.totalorder %s317, %s318
      %p332 = scmp.eq.s32.totalorder %s32, 1
      %p333 = por %p331, %p332
      %p335 = scmp.ne.s32.totalorder %s318, %s334
      %p336 = scmp.eq.s32.totalorder %s32, 0
      %p337 = por %p335, %p336
      %p338 = scmp.le.s32.totalorder 1, %s26
      %p339 = scmp.lt.s32.totalorder %s26, 3
      %p340 = pnand %p338, %p339
      %p341 = pneg %p340
      // Predicated region
      $region9: #{tpu_custom_call.1} parent=5 // pred_check
        _
      $region10: #{tpu_custom_call.1} parent=5 // pred_check_branch
        %343 = sbr.rel (%p340) target = $region12
      $region11: #{tpu_custom_call.1} parent=5 // pred_region
        %s344 = ssub.s32 %s26, 1
        // Predicated region
        $region13: #{tpu_custom_call.1} parent=11 // pred_check
          %p345 = pneg %p73
        $region14: #{tpu_custom_call.1} parent=11 // pred_check_branch
          %347 = sbr.rel (%p345) target = $region16
        $region15: #{tpu_custom_call.1} parent=11 // pred_region
          %349 = vsyncadd [#allocation6], 0
          %s351 = sshll.u32 %s1, 4
          %s352 = int_to_ptr.hbm [resolvable:$true] %s351
          %s353 = sshll.u32 [#allocation5], 4
          %s354 = int_to_ptr.vmem [resolvable:$true] %s353
          %356 = dma.hbm_to_vmem [thread:$0]  %s352, 16, %s354, [#allocation6]
        $region16: #{tpu_custom_call.1} parent=11 // pred_fallthru
          _
        // Predicated region
        $region17: #{tpu_custom_call.1} parent=11 // pred_check
          %p357 = pneg %p94
        $region18: #{tpu_custom_call.1} parent=11 // pred_check_branch
          %359 = sbr.rel (%p357) target = $region20
        $region19: #{tpu_custom_call.1} parent=11 // pred_region
          _
        $region20: #{tpu_custom_call.1} parent=11 // pred_fallthru
          _
        // Predicated region
        $region21: #{tpu_custom_call.1} parent=11 // pred_check
          %p360 = pneg %p115
        $region22: #{tpu_custom_call.1} parent=11 // pred_check_branch
          %362 = sbr.rel (%p360) target = $region24
        $region23: #{tpu_custom_call.1} parent=11 // pred_region
          _
        $region24: #{tpu_custom_call.1} parent=11 // pred_fallthru
          _
        // Predicated region
        $region25: #{tpu_custom_call.1} parent=11 // pred_check
          %p363 = pneg %p136
        $region26: #{tpu_custom_call.1} parent=11 // pred_check_branch
          %365 = sbr.rel (%p363) target = $region28
        $region27: #{tpu_custom_call.1} parent=11 // pred_region
          _
        $region28: #{tpu_custom_call.1} parent=11 // pred_fallthru
          _
        // Predicated region
        $region29: #{tpu_custom_call.1} parent=11 // pred_check
          %p366 = pneg %p157
        $region30: #{tpu_custom_call.1} parent=11 // pred_check_branch
          %368 = sbr.rel (%p366) target = $region32
        $region31: #{tpu_custom_call.1} parent=11 // pred_region
          _
        $region32: #{tpu_custom_call.1} parent=11 // pred_fallthru
          _
        // Predicated region
        $region33: #{tpu_custom_call.1} parent=11 // pred_check
          %p369 = pneg %p178
        $region34: #{tpu_custom_call.1} parent=11 // pred_check_branch
          %371 = sbr.rel (%p369) target = $region36
        $region35: #{tpu_custom_call.1} parent=11 // pred_region
          _
        $region36: #{tpu_custom_call.1} parent=11 // pred_fallthru
          _
        // Predicated region
        $region37: #{tpu_custom_call.1} parent=11 // pred_check
          %p372 = pneg %p199
        $region38: #{tpu_custom_call.1} parent=11 // pred_check_branch
          %374 = sbr.rel (%p372) target = $region40
        $region39: #{tpu_custom_call.1} parent=11 // pred_region
          _
        $region40: #{tpu_custom_call.1} parent=11 // pred_fallthru
          _
        // Predicated region
        $region41: #{tpu_custom_call.1} parent=11 // pred_check
          %p375 = pneg %p220
        $region42: #{tpu_custom_call.1} parent=11 // pred_check_branch
          %377 = sbr.rel (%p375) target = $region44
        $region43: #{tpu_custom_call.1} parent=11 // pred_region
          _
        $region44: #{tpu_custom_call.1} parent=11 // pred_fallthru
          _
        // Predicated region
        $region45: #{tpu_custom_call.1} parent=11 // pred_check
          %p378 = pneg %p241
        $region46: #{tpu_custom_call.1} parent=11 // pred_check_branch
          %380 = sbr.rel (%p378) target = $region48
        $region47: #{tpu_custom_call.1} parent=11 // pred_region
          _
        $region48: #{tpu_custom_call.1} parent=11 // pred_fallthru
          _
        // Predicated region
        $region49: #{tpu_custom_call.1} parent=11 // pred_check
          %p381 = pneg %p262
        $region50: #{tpu_custom_call.1} parent=11 // pred_check_branch
          %383 = sbr.rel (%p381) target = $region52
        $region51: #{tpu_custom_call.1} parent=11 // pred_region
          _
        $region52: #{tpu_custom_call.1} parent=11 // pred_fallthru
          _
        // Predicated region
        $region53: #{tpu_custom_call.1} parent=11 // pred_check
          %p384 = pneg %p283
        $region54: #{tpu_custom_call.1} parent=11 // pred_check_branch
          %386 = sbr.rel (%p384) target = $region56
        $region55: #{tpu_custom_call.1} parent=11 // pred_region
          _
        $region56: #{tpu_custom_call.1} parent=11 // pred_fallthru
          _
        // Predicated region
        $region57: #{tpu_custom_call.1} parent=11 // pred_check
          %p387 = pneg %p304
        $region58: #{tpu_custom_call.1} parent=11 // pred_check_branch
          %389 = sbr.rel (%p387) target = $region60
        $region59: #{tpu_custom_call.1} parent=11 // pred_region
          _
        $region60: #{tpu_custom_call.1} parent=11 // pred_fallthru
          _
      $region12: #{tpu_custom_call.1} parent=5 // pred_fallthru
        _
      %p390 = scmp.lt.s32.totalorder %s26, 2
      // Predicated region
      $region61: #{tpu_custom_call.1} parent=5 // pred_check
        %p391 = pneg %p390
      $region62: #{tpu_custom_call.1} parent=5 // pred_check_branch
        %393 = sbr.rel (%p391) target = $region64
      $region63: #{tpu_custom_call.1} parent=5 // pred_region
        // Predicated region
        $region65: #{tpu_custom_call.1} parent=63 // pred_check
          %p394 = pneg %p46
        $region66: #{tpu_custom_call.1} parent=63 // pred_check_branch
          %396 = sbr.rel (%p394) target = $region68
        $region67: #{tpu_custom_call.1} parent=63 // pred_region
          %s397 = sand.u32 %s36, 1
          %s398 = scalar_lea.sflag [#allocation3], %s397
          %s399 = sand.u32 %s36, 1
          %s400 = smul.addr %s399, 8
          %s401 = scalar_lea.vmem [#allocation2], %s400
          %403 = vsyncadd %s398, 0
          %s404 = smul.addr %s26, 8
          %s405 = scalar_lea.hbm %s0, %s404
          %s407 = sshll.u32 %s405, 4
          %s408 = int_to_ptr.hbm [resolvable:$true] %s407
          %s409 = sshll.u32 %s401, 4
          %s410 = int_to_ptr.vmem [resolvable:$true] %s409
          %412 = dma.hbm_to_vmem [thread:$0]  %s408, 128, %s410, %s398
        $region68: #{tpu_custom_call.1} parent=63 // pred_fallthru
          _
      $region64: #{tpu_custom_call.1} parent=5 // pred_fallthru
        _
      %p413 = scmp.le.s32.totalorder 1, %s26
      %p414 = scmp.lt.s32.totalorder %s26, 3
      %p415 = pnand %p413, %p414
      %p416 = pneg %p415
      // Predicated region
      $region69: #{tpu_custom_call.1} parent=5 // pred_check
        _
      $region70: #{tpu_custom_call.1} parent=5 // pred_check_branch
        %418 = sbr.rel (%p415) target = $region72
      $region71: #{tpu_custom_call.1} parent=5 // pred_region
        %s419 = ssub.s32 %s26, 1
        %s420 = sand.u32 %s39, 1
        %s421 = scalar_lea.sflag [#allocation3], %s420
        %s422 = sand.u32 %s39, 1
        %s423 = smul.addr %s422, 8
        %s424 = scalar_lea.vmem [#allocation2], %s423
        // Predicated region
        $region73: #{tpu_custom_call.1} parent=71 // pred_check
          %p425 = pneg %p52
        $region74: #{tpu_custom_call.1} parent=71 // pred_check_branch
          %427 = sbr.rel (%p425) target = $region76
        $region75: #{tpu_custom_call.1} parent=71 // pred_region
          %429 = dma.done %s421, 128
        $region76: #{tpu_custom_call.1} parent=71 // pred_fallthru
          _
        // Predicated region
        $region77: #{tpu_custom_call.1} parent=71 // pred_check
          %p430 = pneg %p73
        $region78: #{tpu_custom_call.1} parent=71 // pred_check_branch
          %432 = sbr.rel (%p430) target = $region80
        $region79: #{tpu_custom_call.1} parent=71 // pred_region
          %434 = dma.done [#allocation6], 16
        $region80: #{tpu_custom_call.1} parent=71 // pred_fallthru
          _
        %s435 = sand.u32 %s39, 1
        %s436 = scalar_lea.sflag [#allocation3], %s435
        %s437 = sand.u32 %s39, 1
        %s438 = smul.addr %s437, 8
        %s439 = scalar_lea.vmem [#allocation2], %s438
        %p440 = pneg %p52
        %p441 = pneg %p49
        %p442 = pneg %p73
        %p443 = pneg %p70
        %p444 = pneg %p94
        %p445 = pneg %p91
        %p446 = pneg %p115
        %p447 = pneg %p112
        %p448 = pneg %p136
        %p449 = pneg %p133
        %p450 = pneg %p157
        %p451 = pneg %p154
        %p452 = pneg %p178
        %p453 = pneg %p175
        %p454 = pneg %p199
        %p455 = pneg %p196
        %p456 = pneg %p220
        %p457 = pneg %p217
        %p458 = pneg %p241
        %p459 = pneg %p238
        %p460 = pneg %p262
        %p461 = pneg %p259
        %p462 = pneg %p283
        %p463 = pneg %p280
        %p464 = pneg %p304
        %p465 = pneg %p301
        %p466 = pneg %p330
        %p467 = pneg %p327
        %s468 = sand.u32 %s317, 1
        %s469 = scalar_lea.sflag [#allocation4], %s468
        %s470 = sand.u32 %s317, 1
        %s471 = smul.addr %s470, 8
        %s472 = scalar_lea.vmem [#allocation7], %s471
        %v473 = vld [vmem:[%s424] sm:$0xff]
        %v474 = vld [vmem:[#allocation5] sm:$0x1]
        %v475 = vld [vmem:[%s2] sm:$0x1]
        %vm476 = vcmask 261120
        %v477 = vsel %vm476, %v473, 0.0
        %478 = vadd.xlane.f32.xlu0 %v477
        %v479 = vpop.xlane.xlu0 %478
        %v480 = vrcp.pop 32.0
        %v481 = vmul.f32 32.0, %v480
        %v482 = vsub.f32 1.0, %v481
        %v483 = vmul.f32 %v480, %v482
        %v484 = vadd.f32 %v480, %v483
        %vm485 = vweird.f32 %v480
        %v486 = vsel %vm485, %v480, %v484
        %v487 = vmul.f32 %v479, %v486
        %v488 = vsub.f32 %v473, %v487
        %v489 = vmul.f32 %v488, %v488
        %v490 = vsel %vm476, %v489, 0.0
        %491 = vadd.xlane.f32.xlu0 %v490
        %v492 = vpop.xlane.xlu0 %491
        %v493 = vmul.f32 %v492, %v486
        %v494 = vadd.f32 %v493, 1e-05
        %v495 = vrsqrt.pop %v494
        %v496 = vmul.f32 %v495, %v494
        %v497 = vmul.f32 %v496, %v495
        %v498 = vmul.f32 0.5, %v497
        %v499 = vsub.f32 1.5, %v498
        %v500 = vmul.f32 %v495, %v499
        %vm501 = vweird.f32 %v494
        %vm502 = vweird.f32 %v495
        %vm503 = vmor %vm501, %vm502
        %v504 = vsel %vm503, %v495, %v500
        %v505 = vmul.f32 %v488, %v504
        %v507 = vperm.slane %v474, 0
        %v509 = vmul.f32 %v505, %v507
        %v511 = vperm.slane %v475, 0
        %v513 = vadd.f32 %v509, %v511
        %v514 = vld [vmem:[%s3] sm:$0xff]
        %v515 = vld [vmem:[%s3 + $0x8] sm:$0xff]
        %v516 = vld [vmem:[%s3 + $0x10] sm:$0xff]
        %v517 = vld [vmem:[%s3 + $0x18] sm:$0xff]
        %v518 = vld [vmem:[%s4] sm:$0x1]
        %v520 = vperm.slane %v518, 0
        %v523 = vsel %vm476, %v513, 0
        %525 = vmatpush.msra.mxu0 0.0
        %526 = vmatpush.msra.mxu0 0.0
        %527 = vmatpush.msra.mxu0 0.0
        %528 = vmatpush.msra.mxu0 0.0
        %529 = vmatpush.msra.mxu0 0.0
        %530 = vmatpush.msra.mxu0 0.0
        %531 = vmatpush.msra.mxu0 0.0
        %532 = vmatpush.msra.mxu0 0.0
        %533 = vmatpush.msra.mxu0 0.0
        %534 = vmatpush.msra.mxu0 0.0
        %535 = vmatpush.msra.mxu0 0.0
        %536 = vmatpush.msra.mxu0 0.0
        %537 = vmatpush.msra.mxu0 %v517
        %538 = vmatpush.msra.mxu0 %v516
        %539 = vmatpush.msra.mxu0 %v515
        %540 = vmatpush.msra.mxu0 %v514
        %541 = vmatmul.f32.gmra.mxu0 %v523
        %v542 = vpop.f32.mrf.mxu0
        %v543 = vadd.f32 %v520, %v542
        %544 = vdwg.mxu0
        %v545 = vld [vmem:[%s5] sm:$0xff]
        %v546 = vld [vmem:[%s5 + $0x8] sm:$0xff]
        %v547 = vld [vmem:[%s5 + $0x10] sm:$0xff]
        %v548 = vld [vmem:[%s5 + $0x18] sm:$0xff]
        %550 = vrot.lane.b32.xlu0 %v543, 96
        %v551 = vpop.permute.xlu0 %550
        %vm552 = vcmask 64512
        %v553 = vsel %vm552, %v543, 0
        %v555 = vsel %vm552, %v551, 0
        %557 = vmatpush.xpose.msra.mxu0 0.0
        %558 = vmatpush.xpose.msra.mxu0 0.0
        %559 = vmatpush.xpose.msra.mxu0 0.0
        %560 = vmatpush.xpose.msra.mxu0 0.0
        %561 = vmatpush.xpose.msra.mxu0 0.0
        %562 = vmatpush.xpose.msra.mxu0 0.0
        %563 = vmatpush.xpose.msra.mxu0 0.0
        %564 = vmatpush.xpose.msra.mxu0 0.0
        %565 = vmatpush.xpose.msra.mxu0 0.0
        %566 = vmatpush.xpose.msra.mxu0 0.0
        %567 = vmatpush.xpose.msra.mxu0 0.0
        %568 = vmatpush.xpose.msra.mxu0 0.0
        %569 = vmatpush.xpose.msra.mxu0 0.0
        %570 = vmatpush.xpose.msra.mxu0 0.0
        %571 = vmatpush.xpose.msra.mxu0 0.0
        %572 = vmatpush.xpose.msra.mxu0 %v555
        %573 = vmatmul.f32.gmra.mxu0 %v553
        %v574 = vpop.f32.mrf.mxu0
        %v575 = vadd.f32 0.0, %v574
        %576 = vdwg.mxu0
        %v577 = vsel %vm552, %v575, -inf
        %578 = vmax.xlane.f32.xlu0 %v577
        %v579 = vpop.xlane.xlu0 %578
        %v580 = vsub.f32 %v575, %v579
        %v581 = vmul.f32 %v580, 1.442695
        %v582 = vpow.pop %v581
        %v583 = vsel %vm552, %v582, 0.0
        %584 = vadd.xlane.f32.xlu0 %v583
        %v585 = vpop.xlane.xlu0 %584
        %v586 = vrcp.pop %v585
        %v587 = vmul.f32 %v585, %v586
        %v588 = vsub.f32 1.0, %v587
        %v589 = vmul.f32 %v586, %v588
        %v590 = vadd.f32 %v586, %v589
        %vm591 = vweird.f32 %v585
        %vm592 = vweird.f32 %v586
        %vm593 = vmor %vm591, %vm592
        %v594 = vsel %vm593, %v586, %v590
        %v595 = vand.u32 2147483647, %v585
        %vm596 = vcmp.eq.f32.partialorder %v595, 8.507059e+37
        %v597 = vand.u32 %v585, 2147483648
        %v598 = vor.u32 1.1754944e-38, %v597
        %v599 = vsel %vm596, %v598, %v594
        %v600 = vmul.f32 %v582, %v599
        %601 = vrot.lane.b32.xlu0 %v543, 64
        %v602 = vpop.permute.xlu0 %601
        %v605 = vsel %vm552, %v600, 0
        %607 = vmatpush.msra.mxu0 0.0
        %608 = vmatpush.msra.mxu0 0.0
        %609 = vmatpush.msra.mxu0 0.0
        %610 = vmatpush.msra.mxu0 0.0
        %611 = vmatpush.msra.mxu0 0.0
        %612 = vmatpush.msra.mxu0 0.0
        %613 = vmatpush.msra.mxu0 0.0
        %614 = vmatpush.msra.mxu0 0.0
        %615 = vmatpush.msra.mxu0 0.0
        %616 = vmatpush.msra.mxu0 0.0
        %617 = vmatpush.msra.mxu0 0.0
        %618 = vmatpush.msra.mxu0 0.0
        %619 = vmatpush.msra.mxu0 0.0
        %620 = vmatpush.msra.mxu0 0.0
        %621 = vmatpush.msra.mxu0 0.0
        %622 = vmatpush.msra.mxu0 %v602
        %623 = vmatmul.f32.gmra.mxu0 %v605
        %v624 = vpop.f32.mrf.mxu0
        %v625 = vadd.f32 0.0, %v624
        %626 = vdwg.mxu0
        %627 = vrot.lane.b32.xlu0 %v543, 120
        %v628 = vpop.permute.xlu0 %627
        %629 = vrot.lane.b32.xlu0 %v543, 88
        %v630 = vpop.permute.xlu0 %629
        %v631 = vsel %vm552, %v628, 0
        %v633 = vsel %vm552, %v630, 0
        %635 = vmatpush.xpose.msra.mxu0 0.0
        %636 = vmatpush.xpose.msra.mxu0 0.0
        %637 = vmatpush.xpose.msra.mxu0 0.0
        %638 = vmatpush.xpose.msra.mxu0 0.0
        %639 = vmatpush.xpose.msra.mxu0 0.0
        %640 = vmatpush.xpose.msra.mxu0 0.0
        %641 = vmatpush.xpose.msra.mxu0 0.0
        %642 = vmatpush.xpose.msra.mxu0 0.0
        %643 = vmatpush.xpose.msra.mxu0 0.0
        %644 = vmatpush.xpose.msra.mxu0 0.0
        %645 = vmatpush.xpose.msra.mxu0 0.0
        %646 = vmatpush.xpose.msra.mxu0 0.0
        %647 = vmatpush.xpose.msra.mxu0 0.0
        %648 = vmatpush.xpose.msra.mxu0 0.0
        %649 = vmatpush.xpose.msra.mxu0 0.0
        %650 = vmatpush.xpose.msra.mxu0 %v633
        %651 = vmatmul.f32.gmra.mxu0 %v631
        %v652 = vpop.f32.mrf.mxu0
        %v653 = vadd.f32 0.0, %v652
        %654 = vdwg.mxu0
        %v655 = vsel %vm552, %v653, -inf
        %656 = vmax.xlane.f32.xlu0 %v655
        %v657 = vpop.xlane.xlu0 %656
        %v658 = vsub.f32 %v653, %v657
        %v659 = vmul.f32 %v658, 1.442695
        %v660 = vpow.pop %v659
        %v661 = vsel %vm552, %v660, 0.0
        %662 = vadd.xlane.f32.xlu0 %v661
        %v663 = vpop.xlane.xlu0 %662
        %v664 = vrcp.pop %v663
        %v665 = vmul.f32 %v663, %v664
        %v666 = vsub.f32 1.0, %v665
        %v667 = vmul.f32 %v664, %v666
        %v668 = vadd.f32 %v664, %v667
        %vm669 = vweird.f32 %v663
        %vm670 = vweird.f32 %v664
        %vm671 = vmor %vm669, %vm670
        %v672 = vsel %vm671, %v664, %v668
        %v673 = vand.u32 2147483647, %v663
        %vm674 = vcmp.eq.f32.partialorder %v673, 8.507059e+37
        %v675 = vand.u32 %v663, 2147483648
        %v676 = vor.u32 1.1754944e-38, %v675
        %v677 = vsel %vm674, %v676, %v672
        %v678 = vmul.f32 %v660, %v677
        %679 = vrot.lane.b32.xlu0 %v543, 56
        %v680 = vpop.permute.xlu0 %679
        %v683 = vsel %vm552, %v678, 0
        %685 = vmatpush.msra.mxu0 0.0
        %686 = vmatpush.msra.mxu0 0.0
        %687 = vmatpush.msra.mxu0 0.0
        %688 = vmatpush.msra.mxu0 0.0
        %689 = vmatpush.msra.mxu0 0.0
        %690 = vmatpush.msra.mxu0 0.0
        %691 = vmatpush.msra.mxu0 0.0
        %692 = vmatpush.msra.mxu0 0.0
        %693 = vmatpush.msra.mxu0 0.0
        %694 = vmatpush.msra.mxu0 0.0
        %695 = vmatpush.msra.mxu0 0.0
        %696 = vmatpush.msra.mxu0 0.0
        %697 = vmatpush.msra.mxu0 0.0
        %698 = vmatpush.msra.mxu0 0.0
        %699 = vmatpush.msra.mxu0 0.0
        %700 = vmatpush.msra.mxu0 %v680
        %701 = vmatmul.f32.gmra.mxu0 %v683
        %v702 = vpop.f32.mrf.mxu0
        %v703 = vadd.f32 0.0, %v702
        %704 = vdwg.mxu0
        %v706 = vsel %vm552, %v703, 0
        %708 = vmatpush.msra.mxu0 0.0
        %709 = vmatpush.msra.mxu0 0.0
        %710 = vmatpush.msra.mxu0 0.0
        %711 = vmatpush.msra.mxu0 0.0
        %712 = vmatpush.msra.mxu0 0.0
        %713 = vmatpush.msra.mxu0 0.0
        %714 = vmatpush.msra.mxu0 0.0
        %715 = vmatpush.msra.mxu0 0.0
        %716 = vmatpush.msra.mxu0 0.0
        %717 = vmatpush.msra.mxu0 0.0
        %718 = vmatpush.msra.mxu0 0.0
        %719 = vmatpush.msra.mxu0 0.0
        %720 = vmatpush.msra.mxu0 0.0
        %721 = vmatpush.msra.mxu0 0.0
        %722 = vmatpush.msra.mxu0 0.0
        %723 = vmatpush.msra.mxu0 %v546
        %724 = vmatmul.f32.gmra.mxu0 %v706
        %v725 = vpop.f32.mrf.mxu0
        %v726 = vadd.f32 0.0, %v725
        %727 = vdwg.mxu0
        %v729 = vsel %vm552, %v625, 0
        %731 = vmatpush.msra.mxu0 0.0
        %732 = vmatpush.msra.mxu0 0.0
        %733 = vmatpush.msra.mxu0 0.0
        %734 = vmatpush.msra.mxu0 0.0
        %735 = vmatpush.msra.mxu0 0.0
        %736 = vmatpush.msra.mxu0 0.0
        %737 = vmatpush.msra.mxu0 0.0
        %738 = vmatpush.msra.mxu0 0.0
        %739 = vmatpush.msra.mxu0 0.0
        %740 = vmatpush.msra.mxu0 0.0
        %741 = vmatpush.msra.mxu0 0.0
        %742 = vmatpush.msra.mxu0 0.0
        %743 = vmatpush.msra.mxu0 0.0
        %744 = vmatpush.msra.mxu0 0.0
        %745 = vmatpush.msra.mxu0 0.0
        %746 = vmatpush.msra.mxu0 %v545
        %747 = vmatmul.f32.gmra.mxu0 %v729
        %v748 = vpop.f32.mrf.mxu0
        %v749 = vadd.f32 %v726, %v748
        %750 = vdwg.mxu0
        %751 = vrot.lane.b32.xlu0 %v543, 112
        %v752 = vpop.permute.xlu0 %751
        %753 = vrot.lane.b32.xlu0 %v543, 80
        %v754 = vpop.permute.xlu0 %753
        %v755 = vsel %vm552, %v752, 0
        %v757 = vsel %vm552, %v754, 0
        %759 = vmatpush.xpose.msra.mxu0 0.0
        %760 = vmatpush.xpose.msra.mxu0 0.0
        %761 = vmatpush.xpose.msra.mxu0 0.0
        %762 = vmatpush.xpose.msra.mxu0 0.0
        %763 = vmatpush.xpose.msra.mxu0 0.0
        %764 = vmatpush.xpose.msra.mxu0 0.0
        %765 = vmatpush.xpose.msra.mxu0 0.0
        %766 = vmatpush.xpose.msra.mxu0 0.0
        %767 = vmatpush.xpose.msra.mxu0 0.0
        %768 = vmatpush.xpose.msra.mxu0 0.0
        %769 = vmatpush.xpose.msra.mxu0 0.0
        %770 = vmatpush.xpose.msra.mxu0 0.0
        %771 = vmatpush.xpose.msra.mxu0 0.0
        %772 = vmatpush.xpose.msra.mxu0 0.0
        %773 = vmatpush.xpose.msra.mxu0 0.0
        %774 = vmatpush.xpose.msra.mxu0 %v757
        %775 = vmatmul.f32.gmra.mxu0 %v755
        %v776 = vpop.f32.mrf.mxu0
        %v777 = vadd.f32 0.0, %v776
        %778 = vdwg.mxu0
        %v779 = vsel %vm552, %v777, -inf
        %780 = vmax.xlane.f32.xlu0 %v779
        %v781 = vpop.xlane.xlu0 %780
        %v782 = vsub.f32 %v777, %v781
        %v783 = vmul.f32 %v782, 1.442695
        %v784 = vpow.pop %v783
        %v785 = vsel %vm552, %v784, 0.0
        %786 = vadd.xlane.f32.xlu0 %v785
        %v787 = vpop.xlane.xlu0 %786
        %v788 = vrcp.pop %v787
        %v789 = vmul.f32 %v787, %v788
        %v790 = vsub.f32 1.0, %v789
        %v791 = vmul.f32 %v788, %v790
        %v792 = vadd.f32 %v788, %v791
        %vm793 = vweird.f32 %v787
        %vm794 = vweird.f32 %v788
        %vm795 = vmor %vm793, %vm794
        %v796 = vsel %vm795, %v788, %v792
        %v797 = vand.u32 2147483647, %v787
        %vm798 = vcmp.eq.f32.partialorder %v797, 8.507059e+37
        %v799 = vand.u32 %v787, 2147483648
        %v800 = vor.u32 1.1754944e-38, %v799
        %v801 = vsel %vm798, %v800, %v796
        %v802 = vmul.f32 %v784, %v801
        %803 = vrot.lane.b32.xlu0 %v543, 48
        %v804 = vpop.permute.xlu0 %803
        %v807 = vsel %vm552, %v802, 0
        %809 = vmatpush.msra.mxu0 0.0
        %810 = vmatpush.msra.mxu0 0.0
        %811 = vmatpush.msra.mxu0 0.0
        %812 = vmatpush.msra.mxu0 0.0
        %813 = vmatpush.msra.mxu0 0.0
        %814 = vmatpush.msra.mxu0 0.0
        %815 = vmatpush.msra.mxu0 0.0
        %816 = vmatpush.msra.mxu0 0.0
        %817 = vmatpush.msra.mxu0 0.0
        %818 = vmatpush.msra.mxu0 0.0
        %819 = vmatpush.msra.mxu0 0.0
        %820 = vmatpush.msra.mxu0 0.0
        %821 = vmatpush.msra.mxu0 0.0
        %822 = vmatpush.msra.mxu0 0.0
        %823 = vmatpush.msra.mxu0 0.0
        %824 = vmatpush.msra.mxu0 %v804
        %825 = vmatmul.f32.gmra.mxu0 %v807
        %v826 = vpop.f32.mrf.mxu0
        %v827 = vadd.f32 0.0, %v826
        %828 = vdwg.mxu0
        %v830 = vsel %vm552, %v827, 0
        %832 = vmatpush.msra.mxu0 0.0
        %833 = vmatpush.msra.mxu0 0.0
        %834 = vmatpush.msra.mxu0 0.0
        %835 = vmatpush.msra.mxu0 0.0
        %836 = vmatpush.msra.mxu0 0.0
        %837 = vmatpush.msra.mxu0 0.0
        %838 = vmatpush.msra.mxu0 0.0
        %839 = vmatpush.msra.mxu0 0.0
        %840 = vmatpush.msra.mxu0 0.0
        %841 = vmatpush.msra.mxu0 0.0
        %842 = vmatpush.msra.mxu0 0.0
        %843 = vmatpush.msra.mxu0 0.0
        %844 = vmatpush.msra.mxu0 0.0
        %845 = vmatpush.msra.mxu0 0.0
        %846 = vmatpush.msra.mxu0 0.0
        %847 = vmatpush.msra.mxu0 %v547
        %848 = vmatmul.f32.gmra.mxu0 %v830
        %v849 = vpop.f32.mrf.mxu0
        %v850 = vadd.f32 0.0, %v849
        %851 = vdwg.mxu0
        %v852 = vadd.f32 %v749, %v850
        %853 = vrot.lane.b32.xlu0 %v543, 104
        %v854 = vpop.permute.xlu0 %853
        %855 = vrot.lane.b32.xlu0 %v543, 72
        %v856 = vpop.permute.xlu0 %855
        %v857 = vsel %vm552, %v854, 0
        %v859 = vsel %vm552, %v856, 0
        %861 = vmatpush.xpose.msra.mxu0 0.0
        %862 = vmatpush.xpose.msra.mxu0 0.0
        %863 = vmatpush.xpose.msra.mxu0 0.0
        %864 = vmatpush.xpose.msra.mxu0 0.0
        %865 = vmatpush.xpose.msra.mxu0 0.0
        %866 = vmatpush.xpose.msra.mxu0 0.0
        %867 = vmatpush.xpose.msra.mxu0 0.0
        %868 = vmatpush.xpose.msra.mxu0 0.0
        %869 = vmatpush.xpose.msra.mxu0 0.0
        %870 = vmatpush.xpose.msra.mxu0 0.0
        %871 = vmatpush.xpose.msra.mxu0 0.0
        %872 = vmatpush.xpose.msra.mxu0 0.0
        %873 = vmatpush.xpose.msra.mxu0 0.0
        %874 = vmatpush.xpose.msra.mxu0 0.0
        %875 = vmatpush.xpose.msra.mxu0 0.0
        %876 = vmatpush.xpose.msra.mxu0 %v859
        %877 = vmatmul.f32.gmra.mxu0 %v857
        %v878 = vpop.f32.mrf.mxu0
        %v879 = vadd.f32 0.0, %v878
        %880 = vdwg.mxu0
        %v881 = vsel %vm552, %v879, -inf
        %882 = vmax.xlane.f32.xlu0 %v881
        %v883 = vpop.xlane.xlu0 %882
        %v884 = vsub.f32 %v879, %v883
        %v885 = vmul.f32 %v884, 1.442695
        %v886 = vpow.pop %v885
        %v887 = vsel %vm552, %v886, 0.0
        %888 = vadd.xlane.f32.xlu0 %v887
        %v889 = vpop.xlane.xlu0 %888
        %v890 = vrcp.pop %v889
        %v891 = vmul.f32 %v889, %v890
        %v892 = vsub.f32 1.0, %v891
        %v893 = vmul.f32 %v890, %v892
        %v894 = vadd.f32 %v890, %v893
        %vm895 = vweird.f32 %v889
        %vm896 = vweird.f32 %v890
        %vm897 = vmor %vm895, %vm896
        %v898 = vsel %vm897, %v890, %v894
        %v899 = vand.u32 2147483647, %v889
        %vm900 = vcmp.eq.f32.partialorder %v899, 8.507059e+37
        %v901 = vand.u32 %v889, 2147483648
        %v902 = vor.u32 1.1754944e-38, %v901
        %v903 = vsel %vm900, %v902, %v898
        %v904 = vmul.f32 %v886, %v903
        %905 = vrot.lane.b32.xlu0 %v543, 40
        %v906 = vpop.permute.xlu0 %905
        %v909 = vsel %vm552, %v904, 0
        %911 = vmatpush.msra.mxu0 0.0
        %912 = vmatpush.msra.mxu0 0.0
        %913 = vmatpush.msra.mxu0 0.0
        %914 = vmatpush.msra.mxu0 0.0
        %915 = vmatpush.msra.mxu0 0.0
        %916 = vmatpush.msra.mxu0 0.0
        %917 = vmatpush.msra.mxu0 0.0
        %918 = vmatpush.msra.mxu0 0.0
        %919 = vmatpush.msra.mxu0 0.0
        %920 = vmatpush.msra.mxu0 0.0
        %921 = vmatpush.msra.mxu0 0.0
        %922 = vmatpush.msra.mxu0 0.0
        %923 = vmatpush.msra.mxu0 0.0
        %924 = vmatpush.msra.mxu0 0.0
        %925 = vmatpush.msra.mxu0 0.0
        %926 = vmatpush.msra.mxu0 %v906
        %927 = vmatmul.f32.gmra.mxu0 %v909
        %v928 = vpop.f32.mrf.mxu0
        %v929 = vadd.f32 0.0, %v928
        %930 = vdwg.mxu0
        %v932 = vsel %vm552, %v929, 0
        %934 = vmatpush.msra.mxu0 0.0
        %935 = vmatpush.msra.mxu0 0.0
        %936 = vmatpush.msra.mxu0 0.0
        %937 = vmatpush.msra.mxu0 0.0
        %938 = vmatpush.msra.mxu0 0.0
        %939 = vmatpush.msra.mxu0 0.0
        %940 = vmatpush.msra.mxu0 0.0
        %941 = vmatpush.msra.mxu0 0.0
        %942 = vmatpush.msra.mxu0 0.0
        %943 = vmatpush.msra.mxu0 0.0
        %944 = vmatpush.msra.mxu0 0.0
        %945 = vmatpush.msra.mxu0 0.0
        %946 = vmatpush.msra.mxu0 0.0
        %947 = vmatpush.msra.mxu0 0.0
        %948 = vmatpush.msra.mxu0 0.0
        %949 = vmatpush.msra.mxu0 %v548
        %950 = vmatmul.f32.gmra.mxu0 %v932
        %v951 = vpop.f32.mrf.mxu0
        %v952 = vadd.f32 0.0, %v951
        %953 = vdwg.mxu0
        %v954 = vadd.f32 %v852, %v952
        %v955 = vld [vmem:[%s6] sm:$0x1]
        %v957 = vperm.slane %v955, 0
        %v959 = vadd.f32 %v954, %v957
        %v960 = vadd.f32 %v959, %v473
        %v961 = vld [vmem:[%s7] sm:$0x1]
        %v962 = vld [vmem:[%s8] sm:$0x1]
        %v963 = vsel %vm476, %v960, 0.0
        %964 = vadd.xlane.f32.xlu0 %v963
        %v965 = vpop.xlane.xlu0 %964
        %v966 = vmul.f32 %v965, %v486
        %v967 = vsub.f32 %v960, %v966
        %v968 = vmul.f32 %v967, %v967
        %v969 = vsel %vm476, %v968, 0.0
        %970 = vadd.xlane.f32.xlu0 %v969
        %v971 = vpop.xlane.xlu0 %970
        %v972 = vmul.f32 %v971, %v486
        %v973 = vadd.f32 %v972, 1e-05
        %v974 = vrsqrt.pop %v973
        %v975 = vmul.f32 %v974, %v973
        %v976 = vmul.f32 %v975, %v974
        %v977 = vmul.f32 0.5, %v976
        %v978 = vsub.f32 1.5, %v977
        %v979 = vmul.f32 %v974, %v978
        %vm980 = vweird.f32 %v973
        %vm981 = vweird.f32 %v974
        %vm982 = vmor %vm980, %vm981
        %v983 = vsel %vm982, %v974, %v979
        %v984 = vmul.f32 %v967, %v983
        %v986 = vperm.slane %v961, 0
        %v988 = vmul.f32 %v984, %v986
        %v990 = vperm.slane %v962, 0
        %v992 = vadd.f32 %v988, %v990
        %v993 = vld [vmem:[%s9] sm:$0xff]
        %v994 = vld [vmem:[%s9 + $0x8] sm:$0xff]
        %v995 = vld [vmem:[%s9 + $0x10] sm:$0xff]
        %v996 = vld [vmem:[%s9 + $0x18] sm:$0xff]
        %v997 = vld [vmem:[%s10] sm:$0x1]
        %v999 = vperm.slane %v997, 0
        %v1002 = vsel %vm476, %v992, 0
        %1004 = vmatpush.msra.mxu0 0.0
        %1005 = vmatpush.msra.mxu0 0.0
        %1006 = vmatpush.msra.mxu0 0.0
        %1007 = vmatpush.msra.mxu0 0.0
        %1008 = vmatpush.msra.mxu0 0.0
        %1009 = vmatpush.msra.mxu0 0.0
        %1010 = vmatpush.msra.mxu0 0.0
        %1011 = vmatpush.msra.mxu0 0.0
        %1012 = vmatpush.msra.mxu0 0.0
        %1013 = vmatpush.msra.mxu0 0.0
        %1014 = vmatpush.msra.mxu0 0.0
        %1015 = vmatpush.msra.mxu0 0.0
        %1016 = vmatpush.msra.mxu0 %v996
        %1017 = vmatpush.msra.mxu0 %v995
        %1018 = vmatpush.msra.mxu0 %v994
        %1019 = vmatpush.msra.mxu0 %v993
        %1020 = vmatmul.f32.gmra.mxu0 %v1002
        %v1021 = vpop.f32.mrf.mxu0
        %v1022 = vadd.f32 %v999, %v1021
        %1023 = vdwg.mxu0
        %v1024 = vmax.f32 %v1022, 0.0
        %v1025 = vld [vmem:[%s11] sm:$0xff]
        %v1026 = vld [vmem:[%s11 + $0x8] sm:$0xff]
        %v1027 = vld [vmem:[%s11 + $0x10] sm:$0xff]
        %v1028 = vld [vmem:[%s11 + $0x18] sm:$0xff]
        %v1029 = vld [vmem:[%s11 + $0x20] sm:$0xff]
        %v1030 = vld [vmem:[%s11 + $0x28] sm:$0xff]
        %v1031 = vld [vmem:[%s11 + $0x30] sm:$0xff]
        %v1032 = vld [vmem:[%s11 + $0x38] sm:$0xff]
        %v1033 = vld [vmem:[%s12] sm:$0x1]
        %v1035 = vperm.slane %v1033, 0
        %vm1037 = vcmask 523264
        %v1039 = vsel %vm1037, %v1024, 0
        %1041 = vmatpush.msra.mxu0 0.0
        %1042 = vmatpush.msra.mxu0 0.0
        %1043 = vmatpush.msra.mxu0 0.0
        %1044 = vmatpush.msra.mxu0 0.0
        %1045 = vmatpush.msra.mxu0 0.0
        %1046 = vmatpush.msra.mxu0 0.0
        %1047 = vmatpush.msra.mxu0 0.0
        %1048 = vmatpush.msra.mxu0 0.0
        %1049 = vmatpush.msra.mxu0 %v1032
        %1050 = vmatpush.msra.mxu0 %v1031
        %1051 = vmatpush.msra.mxu0 %v1030
        %1052 = vmatpush.msra.mxu0 %v1029
        %1053 = vmatpush.msra.mxu0 %v1028
        %1054 = vmatpush.msra.mxu0 %v1027
        %1055 = vmatpush.msra.mxu0 %v1026
        %1056 = vmatpush.msra.mxu0 %v1025
        %1057 = vmatmul.f32.gmra.mxu0 %v1039
        %v1058 = vpop.f32.mrf.mxu0
        %v1059 = vadd.f32 %v1035, %v1058
        %1060 = vdwg.mxu0
        %v1061 = vadd.f32 %v960, %v1059
        %1062 = vst.msk [vmem:[%s472] sm:$0xff] %vm476, %v1061
        %s1063 = sand.u32 %s317, 1
        %s1064 = scalar_lea.sflag [#allocation4], %s1063
        %s1065 = sand.u32 %s317, 1
        %s1066 = smul.addr %s1065, 8
        %s1067 = scalar_lea.vmem [#allocation7], %s1066
        // Predicated region
        $region81: #{tpu_custom_call.1} parent=71 // pred_check
          %p1068 = pneg %p327
        $region82: #{tpu_custom_call.1} parent=71 // pred_check_branch
          %1070 = sbr.rel (%p1068) target = $region84
        $region83: #{tpu_custom_call.1} parent=71 // pred_region
          %1072 = vsyncadd %s1064, 0
          %s1073 = smul.addr %s31, 8
          %s1074 = scalar_lea.hbm %s13, %s1073
          %s1076 = sshll.u32 %s1067, 4
          %s1077 = int_to_ptr.vmem [resolvable:$true] %s1076
          %s1078 = sshll.u32 %s1074, 4
          %s1079 = int_to_ptr.hbm [resolvable:$true] %s1078
          %1081 = dma.vmem_to_hbm [thread:$0]  %s1077, 128, %s1079, %s1064
        $region84: #{tpu_custom_call.1} parent=71 // pred_fallthru
          _
      $region72: #{tpu_custom_call.1} parent=5 // pred_fallthru
        _
      %p1082 = scmp.le.s32.totalorder 2, %s26
      // Predicated region
      $region85: #{tpu_custom_call.1} parent=5 // pred_check
        %p1083 = pneg %p1082
      $region86: #{tpu_custom_call.1} parent=5 // pred_check_branch
        %1085 = sbr.rel (%p1083) target = $region88
      $region87: #{tpu_custom_call.1} parent=5 // pred_region
        %s1086 = ssub.s32 %s26, 2
        // Predicated region
        $region89: #{tpu_custom_call.1} parent=87 // pred_check
          %p1087 = pneg %p333
        $region90: #{tpu_custom_call.1} parent=87 // pred_check_branch
          %1089 = sbr.rel (%p1087) target = $region92
        $region91: #{tpu_custom_call.1} parent=87 // pred_region
          %s1090 = sand.u32 %s318, 1
          %s1091 = scalar_lea.sflag [#allocation4], %s1090
          %s1092 = sand.u32 %s318, 1
          %s1093 = smul.addr %s1092, 8
          %s1094 = scalar_lea.vmem [#allocation7], %s1093
          %1096 = dma.done %s1091, 128
        $region92: #{tpu_custom_call.1} parent=87 // pred_fallthru
          _
      $region88: #{tpu_custom_call.1} parent=5 // pred_fallthru
        _
    $region6: #{tpu_custom_call.1} parent=1 // loop_footer
      %s30 = sadd.s32 1, %s26
    $region7: #{tpu_custom_call.1} parent=1 // loop_footer_branch
      %25 = sbr.rel target = $region3
    $region8: #{tpu_custom_call.1} parent=1 // loop_exit
      _
    %1097 = vsyncpa [#allocation3], 1
    %s1098 = scalar_lea.sflag [#allocation3], 1
    %1099 = vsyncpa %s1098, 1
    %1100 = vsyncpa [#allocation6], 1
    %1101 = vsyncpa [#allocation4], 1
    %s1102 = scalar_lea.sflag [#allocation4], 1
    %1103 = vsyncpa %s1102, 1

</llo_original>
